<compile_context>
chip_gen: v6e
topology: v6e:2x2x1
jax: 0.10.0
libtpu: 0.0.40
codegen_flags: <defaults>
</compile_context>

<pallas_src>
import random

import jax
import jax.numpy as jnp
from jax.experimental import pallas as pl
from jax.experimental.pallas import tpu as pltpu

# --- model hyper-parameters (small, consistent with the module) -------------
B = 2            # batch
SRC_LEN = 8      # encoder sequence length
TGT_LEN = 8      # decoder sequence length
D_MODEL = 32     # corpora.hp.hidden_units (embedding dim / projection input)
D_FF = 32        # corpora.hp.feed_forward_units (LSTM hidden) == D_MODEL here
N_LAYERS = 2     # corpora.hp.num_lstm_layers
SRC_VOCAB = 17
TGT_VOCAB = 19
V_PAD = 128      # lane-dense padded target vocab for the kernel output


# ---------------------------------------------------------------------------
# One LSTM cell step.  x_gate_term is the already-applied input transform
# (x @ W_ih), shape (B, 4H).  Everything f32.
# ---------------------------------------------------------------------------
def _lstm_cell(x_gate_term, h_prev, c_prev, w_hh, b):
    hidden = h_prev.shape[-1]
    gates = (x_gate_term
             + jnp.dot(h_prev, w_hh, preferred_element_type=jnp.float32)
             + b)                                      # (B, 4H) f32
    # one sigmoid + one tanh over the full lane-dense (B, 128) gates vreg,
    # then slice -- instead of 4 sub-slice transcendentals.
    sg = jax.nn.sigmoid(gates)
    tg = jnp.tanh(gates)
    i_g = sg[:, 0 * hidden:1 * hidden]
    f_g = sg[:, 1 * hidden:2 * hidden]
    g_g = tg[:, 2 * hidden:3 * hidden]
    o_g = sg[:, 3 * hidden:4 * hidden]
    c_new = f_g * c_prev + i_g * g_g
    h_new = o_g * jnp.tanh(c_new)
    return h_new, c_new


def _stack_step(xg0, h, c, w_ih_ref, w_hh_ref, b_ref):
    """One time step of the N_LAYERS stacked LSTM.  h, c are Python lists of
    (B, H) values (mutated in place).  xg0 is the precomputed layer-0 input
    gate term (B, 4H)."""
    xg = xg0
    for layer in range(N_LAYERS):
        if layer > 0:
            xg = jnp.dot(h[layer - 1], w_ih_ref[layer],
                         preferred_element_type=jnp.float32)
        h[layer], c[layer] = _lstm_cell(xg, h[layer], c[layer],
                                        w_hh_ref[layer], b_ref[layer])
    return h[-1]


# ---------------------------------------------------------------------------
# Fused Seq2Seq kernel: encoder time loop, then decoder time loop with
# projection, greedy argmax and teacher-forcing select.  Single grid step;
# both loops fully unrolled (S = T = 8 static).  State lives in vregs.
# ---------------------------------------------------------------------------
def _seq2seq_kernel(teach_ref,                       # SMEM (T,) i32 scalar prefetch
                    enc_x_ref,                       # (S*B, D) f32 embedded src
                    tch_emb_ref,                     # (T*B, D) f32 embedded teacher
                    enc_wih_ref, enc_whh_ref, enc_b_ref,   # (L,D,4H) (L,H,4H) (L,1,4H)
                    dec_wih_ref, dec_whh_ref, dec_b_ref,
                    emb_ref,                         # (V_PAD, D) padded tgt embedding
                    proj_ref,                        # (D, V_PAD) padded projection
                    out_ref):                        # (B, T, V_PAD) f32
    hid = D_FF

    # ---------------- encoder ----------------
    # hoisted layer-0 input transform for ALL source steps: one MXU push.
    enc_xg = jnp.dot(enc_x_ref[...], enc_wih_ref[0],
                     preferred_element_type=jnp.float32)          # (S*B, 4H)

    h = [jnp.zeros((B, hid), jnp.float32) for _ in range(N_LAYERS)]
    c = [jnp.zeros((B, hid), jnp.float32) for _ in range(N_LAYERS)]

    for t in range(SRC_LEN):                                      # static unroll
        xg0 = enc_xg[t * B:(t + 1) * B, :]
        _stack_step(xg0, h, c, enc_wih_ref, enc_whh_ref, enc_b_ref)

    # ---------------- decoder ----------------
    # hoisted layer-0 input transforms: teacher path for all steps, and the
    # whole (padded) embedding table pre-multiplied for the argmax path.
    dec_tg = jnp.dot(tch_emb_ref[...], dec_wih_ref[0],
                     preferred_element_type=jnp.float32)          # (T*B, 4H)
    emb_w = jnp.dot(emb_ref[...], dec_wih_ref[0],
                    preferred_element_type=jnp.float32)           # (V_PAD, 4H)
    proj_w = proj_ref[...]                                        # (D, V_PAD)

    # loop-invariant broadcasts for the argmax (hoisted out of the step body)
    lane_i = jax.lax.broadcasted_iota(jnp.int32, (B, V_PAD), 1)
    lane_f = lane_i.astype(jnp.float32)
    valid = lane_i < TGT_VOCAB

    xg0 = dec_tg[0:B, :]                     # embedded dec_inputs[:, 0] @ W_ih0
    for t in range(TGT_LEN):                                      # static unroll
        top_h = _stack_step(xg0, h, c, dec_wih_ref, dec_whh_ref, dec_b_ref)

        logits = jnp.dot(top_h, proj_w,
                         preferred_element_type=jnp.float32)      # (B, V_PAD)
        out_ref[:, t:t + 1, :] = logits[:, None, :]

        if t < TGT_LEN - 1:
            # greedy argmax (first-occurrence tie-break, exact f32 compare)
            masked = jnp.where(valid, logits, jnp.float32(-1e30))
            mx = jnp.max(masked, axis=-1, keepdims=True)
            tok_f = jnp.min(jnp.where(masked == mx, lane_f, jnp.float32(V_PAD)),
                            axis=-1, keepdims=True)
            onehot = (lane_f == tok_f).astype(jnp.float32)        # (B, V_PAD)
            arg_g = jnp.dot(onehot, emb_w,
                            preferred_element_type=jnp.float32)   # (B, 4H)
            teach_g = dec_tg[(t + 1) * B:(t + 2) * B, :]          # (B, 4H)
            tf = (teach_ref[t] > 0).astype(jnp.float32)           # SMEM scalar 0/1
            xg0 = tf * teach_g + (1.0 - tf) * arg_g


def seq2seq_pallas(teach_mask, enc_x, tch_emb,
                   enc_wih, enc_whh, enc_b,
                   dec_wih, dec_whh, dec_b,
                   emb_pad, proj_pad):
    """Single fused pallas_call.  Returns logits (B, TGT_LEN, V_PAD) f32."""
    full = lambda shape: pl.BlockSpec(shape, lambda i, tm: (0,) * len(shape))
    grid_spec = pltpu.PrefetchScalarGridSpec(
        num_scalar_prefetch=1,
        grid=(1,),
        in_specs=[
            full((SRC_LEN * B, D_MODEL)),
            full((TGT_LEN * B, D_MODEL)),
            full((N_LAYERS, D_MODEL, 4 * D_FF)),
            full((N_LAYERS, D_FF, 4 * D_FF)),
            full((N_LAYERS, 1, 4 * D_FF)),
            full((N_LAYERS, D_MODEL, 4 * D_FF)),
            full((N_LAYERS, D_FF, 4 * D_FF)),
            full((N_LAYERS, 1, 4 * D_FF)),
            full((V_PAD, D_MODEL)),
            full((D_MODEL, V_PAD)),
        ],
        out_specs=full((B, TGT_LEN, V_PAD)),
    )
    return pl.pallas_call(
        _seq2seq_kernel,
        out_shape=jax.ShapeDtypeStruct((B, TGT_LEN, V_PAD), jnp.float32),
        grid_spec=grid_spec,
        compiler_params=pltpu.CompilerParams(dimension_semantics=("arbitrary",)),
    )(teach_mask, enc_x, tch_emb,
      enc_wih, enc_whh, enc_b,
      dec_wih, dec_whh, dec_b,
      emb_pad, proj_pad)


# ---------------------------------------------------------------------------
# Parameters (deterministic synthetic init).  All f32; split W_ih / W_hh;
# combined bias b_ih + b_hh; gate order (i, f, g, o) like torch.nn.LSTM.
# ---------------------------------------------------------------------------
def init_params(key):
    ks = jax.random.split(key, 9)
    scale = 1.0 / jnp.sqrt(jnp.float32(D_FF))

    def u(k, shape):
        return jax.random.uniform(k, shape, jnp.float32, -scale, scale)

    src_emb = 0.1 * jax.random.normal(ks[0], (SRC_VOCAB, D_MODEL), jnp.float32)
    src_emb = src_emb.at[0].set(0.0)   # padding_idx=0
    tgt_emb = 0.1 * jax.random.normal(ks[1], (TGT_VOCAB, D_MODEL), jnp.float32)
    tgt_emb = tgt_emb.at[0].set(0.0)   # padding_idx=0

    proj_w = u(ks[8], (D_MODEL, TGT_VOCAB))   # Linear(hidden, tgt_vocab), no bias

    # lane-dense padded versions used inside the fused kernel
    tgt_emb_pad = jnp.zeros((V_PAD, D_MODEL), jnp.float32).at[:TGT_VOCAB].set(tgt_emb)
    proj_pad = jnp.zeros((D_MODEL, V_PAD), jnp.float32).at[:, :TGT_VOCAB].set(proj_w)

    return dict(
        src_emb=src_emb,
        tgt_emb=tgt_emb,
        tgt_emb_pad=tgt_emb_pad,
        enc_wih=u(ks[2], (N_LAYERS, D_MODEL, 4 * D_FF)),
        enc_whh=u(ks[3], (N_LAYERS, D_FF, 4 * D_FF)),
        enc_b=u(ks[4], (N_LAYERS, 1, 4 * D_FF)),
        dec_wih=u(ks[5], (N_LAYERS, D_MODEL, 4 * D_FF)),
        dec_whh=u(ks[6], (N_LAYERS, D_FF, 4 * D_FF)),
        dec_b=u(ks[7], (N_LAYERS, 1, 4 * D_FF)),
        proj_pad=proj_pad,
    )


# ---------------------------------------------------------------------------
# Seq2Seq.forward equivalent: one jitted function, ONE pallas_call total.
# Embedding gathers stay in the jit wrapper; teacher-forcing draws are
# precomputed host-side (stand-in for python random.random()).
# ---------------------------------------------------------------------------
@jax.jit
def seq2seq_forward(params, enc_inputs, dec_inputs, teach_mask):
    enc_x = jnp.transpose(jnp.take(params["src_emb"], enc_inputs, axis=0),
                          (1, 0, 2)).reshape(SRC_LEN * B, D_MODEL)
    tch_emb = jnp.transpose(jnp.take(params["tgt_emb"], dec_inputs, axis=0),
                            (1, 0, 2)).reshape(TGT_LEN * B, D_MODEL)

    logits_pad = seq2seq_pallas(
        teach_mask, enc_x, tch_emb,
        params["enc_wih"], params["enc_whh"], params["enc_b"],
        params["dec_wih"], params["dec_whh"], params["dec_b"],
        params["tgt_emb_pad"], params["proj_pad"])

    # kernel already emits (B, T, V_PAD); only the vocab slice remains here
    return logits_pad[:, :, :TGT_VOCAB]


if __name__ == "__main__":
    key = jax.random.PRNGKey(0)
    k_p, k_e, k_d = jax.random.split(key, 3)

    params = init_params(k_p)
    enc_inputs = jax.random.randint(k_e, (B, SRC_LEN), 1, SRC_VOCAB, dtype=jnp.int32)
    dec_inputs = jax.random.randint(k_d, (B, TGT_LEN), 1, TGT_VOCAB, dtype=jnp.int32)

    # TODO(synk): python random.random() teacher-forcing draws happen on the host;
    # precomputed here as a per-step 0/1 mask (same draw order as the reference loop).
    rnd = random.Random(0)
    teach_rate = 0.5
    teach_mask = jnp.asarray(
        [1 if rnd.random() < teach_rate else 0 for _ in range(TGT_LEN)],
        dtype=jnp.int32)

    out = seq2seq_forward(params, enc_inputs, dec_inputs, teach_mask)
    out = jax.block_until_ready(out)

    assert out.shape == (B, TGT_LEN, TGT_VOCAB), out.shape
    assert out.dtype == jnp.float32
    assert bool(jnp.all(jnp.isfinite(out)))
    print("KERNEL_OK")
</pallas_src>

<mosaic_0001>
module attributes {stable_mosaic.version = 11 : i64} {
  func.func @_seq2seq_kernel(%arg0: i32, %arg1: memref<8xi32, #tpu.memory_space<smem>>, %arg2: memref<16x32xf32, #tpu.memory_space<vmem>>, %arg3: memref<16x32xf32, #tpu.memory_space<vmem>>, %arg4: memref<2x32x128xf32, #tpu.memory_space<vmem>>, %arg5: memref<2x32x128xf32, #tpu.memory_space<vmem>>, %arg6: memref<2x1x128xf32, #tpu.memory_space<vmem>>, %arg7: memref<2x32x128xf32, #tpu.memory_space<vmem>>, %arg8: memref<2x32x128xf32, #tpu.memory_space<vmem>>, %arg9: memref<2x1x128xf32, #tpu.memory_space<vmem>>, %arg10: memref<128x32xf32, #tpu.memory_space<vmem>>, %arg11: memref<32x128xf32, #tpu.memory_space<vmem>>, %arg12: memref<2x8x128xf32, #tpu.memory_space<vmem>>) attributes {dimension_semantics = [#tpu.dimension_semantics<arbitrary>], iteration_bounds = array<i64: 1>, scalar_prefetch = 1 : i64, scratch_operands = 0 : i64, tpu.core_type = #tpu.core_type<tc>, window_params = [{pipeline_mode = #tpu.pipeline_mode<synchronous>, transform_indices = @transform_0, window_bounds = array<i64: 16, 32>}, {pipeline_mode = #tpu.pipeline_mode<synchronous>, transform_indices = @transform_1, window_bounds = array<i64: 16, 32>}, {pipeline_mode = #tpu.pipeline_mode<synchronous>, transform_indices = @transform_2, window_bounds = array<i64: 2, 32, 128>}, {pipeline_mode = #tpu.pipeline_mode<synchronous>, transform_indices = @transform_3, window_bounds = array<i64: 2, 32, 128>}, {pipeline_mode = #tpu.pipeline_mode<synchronous>, transform_indices = @transform_4, window_bounds = array<i64: 2, 1, 128>}, {pipeline_mode = #tpu.pipeline_mode<synchronous>, transform_indices = @transform_5, window_bounds = array<i64: 2, 32, 128>}, {pipeline_mode = #tpu.pipeline_mode<synchronous>, transform_indices = @transform_6, window_bounds = array<i64: 2, 32, 128>}, {pipeline_mode = #tpu.pipeline_mode<synchronous>, transform_indices = @transform_7, window_bounds = array<i64: 2, 1, 128>}, {pipeline_mode = #tpu.pipeline_mode<synchronous>, transform_indices = @transform_8, window_bounds = array<i64: 128, 32>}, {pipeline_mode = #tpu.pipeline_mode<synchronous>, transform_indices = @transform_9, window_bounds = array<i64: 32, 128>}, {pipeline_mode = #tpu.pipeline_mode<synchronous>, transform_indices = @transform_10, window_bounds = array<i64: 2, 8, 128>}]} {
    %c0 = arith.constant 0 : index
    %c0_0 = arith.constant 0 : index
    %0 = vector.load %arg2[%c0, %c0_0] : memref<16x32xf32, #tpu.memory_space<vmem>>, vector<16x32xf32>
    %c0_1 = arith.constant 0 : index
    %c0_2 = arith.constant 0 : index
    %c0_3 = arith.constant 0 : index
    %1 = vector.load %arg4[%c0_1, %c0_2, %c0_3] : memref<2x32x128xf32, #tpu.memory_space<vmem>>, vector<1x32x128xf32>
    %2 = vector.shape_cast %1 : vector<1x32x128xf32> to vector<32x128xf32>
    %cst = arith.constant dense<0.000000e+00> : vector<16x128xf32>
    %3 = tpu.matmul %0, %2, %cst {dimension_numbers = #tpu.dot_dimension_numbers<[1], [0], [0], [1], [0, 0, 1, 1], [], []>} : vector<16x32xf32>, vector<32x128xf32>, vector<16x128xf32> -> vector<16x128xf32>
    %cst_4 = arith.constant 0.000000e+00 : f32
    %4 = vector.broadcast %cst_4 : f32 to vector<2x32xf32>
    %cst_5 = arith.constant 0.000000e+00 : f32
    %5 = vector.broadcast %cst_5 : f32 to vector<2x32xf32>
    %cst_6 = arith.constant 0.000000e+00 : f32
    %6 = vector.broadcast %cst_6 : f32 to vector<2x32xf32>
    %cst_7 = arith.constant 0.000000e+00 : f32
    %7 = vector.broadcast %cst_7 : f32 to vector<2x32xf32>
    %8 = vector.extract_strided_slice %3 {offsets = [0, 0], sizes = [2, 128], strides = [1, 1]} : vector<16x128xf32> to vector<2x128xf32>
    %c0_8 = arith.constant 0 : index
    %c0_9 = arith.constant 0 : index
    %c0_10 = arith.constant 0 : index
    %9 = vector.load %arg5[%c0_8, %c0_9, %c0_10] : memref<2x32x128xf32, #tpu.memory_space<vmem>>, vector<1x32x128xf32>
    %10 = vector.shape_cast %9 : vector<1x32x128xf32> to vector<32x128xf32>
    %c0_11 = arith.constant 0 : index
    %c0_12 = arith.constant 0 : index
    %c0_13 = arith.constant 0 : index
    %11 = vector.load %arg6[%c0_11, %c0_12, %c0_13] : memref<2x1x128xf32, #tpu.memory_space<vmem>>, vector<1x1x128xf32>
    %12 = vector.shape_cast %11 : vector<1x1x128xf32> to vector<1x128xf32>
    %cst_14 = arith.constant dense<0.000000e+00> : vector<2x128xf32>
    %13 = tpu.matmul %4, %10, %cst_14 {dimension_numbers = #tpu.dot_dimension_numbers<[1], [0], [0], [1], [0, 0, 1, 1], [], []>} : vector<2x32xf32>, vector<32x128xf32>, vector<2x128xf32> -> vector<2x128xf32>
    %14 = arith.addf %8, %13 : vector<2x128xf32>
    %15 = vector.broadcast %12 : vector<1x128xf32> to vector<2x128xf32>
    %16 = arith.addf %14, %15 : vector<2x128xf32>
    %17 = arith.negf %16 : vector<2x128xf32>
    %18 = math.exp %17 : vector<2x128xf32>
    %cst_15 = arith.constant 1.000000e+00 : f32
    %19 = vector.broadcast %cst_15 : f32 to vector<2x128xf32>
    %20 = arith.addf %19, %18 : vector<2x128xf32>
    %21 = arith.divf %19, %20 : vector<2x128xf32>
    %22 = math.tanh %16 : vector<2x128xf32>
    %23 = vector.extract_strided_slice %21 {offsets = [0, 0], sizes = [2, 32], strides = [1, 1]} : vector<2x128xf32> to vector<2x32xf32>
    %24 = vector.extract_strided_slice %21 {offsets = [0, 32], sizes = [2, 32], strides = [1, 1]} : vector<2x128xf32> to vector<2x32xf32>
    %25 = vector.extract_strided_slice %22 {offsets = [0, 64], sizes = [2, 32], strides = [1, 1]} : vector<2x128xf32> to vector<2x32xf32>
    %26 = vector.extract_strided_slice %21 {offsets = [0, 96], sizes = [2, 32], strides = [1, 1]} : vector<2x128xf32> to vector<2x32xf32>
    %27 = arith.mulf %24, %6 : vector<2x32xf32>
    %28 = arith.mulf %23, %25 : vector<2x32xf32>
    %29 = arith.addf %27, %28 : vector<2x32xf32>
    %30 = math.tanh %29 : vector<2x32xf32>
    %31 = arith.mulf %26, %30 : vector<2x32xf32>
    %c1 = arith.constant 1 : index
    %c0_16 = arith.constant 0 : index
    %c0_17 = arith.constant 0 : index
    %32 = vector.load %arg4[%c1, %c0_16, %c0_17] : memref<2x32x128xf32, #tpu.memory_space<vmem>>, vector<1x32x128xf32>
    %33 = vector.shape_cast %32 : vector<1x32x128xf32> to vector<32x128xf32>
    %cst_18 = arith.constant dense<0.000000e+00> : vector<2x128xf32>
    %34 = tpu.matmul %31, %33, %cst_18 {dimension_numbers = #tpu.dot_dimension_numbers<[1], [0], [0], [1], [0, 0, 1, 1], [], []>} : vector<2x32xf32>, vector<32x128xf32>, vector<2x128xf32> -> vector<2x128xf32>
    %c1_19 = arith.constant 1 : index
    %c0_20 = arith.constant 0 : index
    %c0_21 = arith.constant 0 : index
    %35 = vector.load %arg5[%c1_19, %c0_20, %c0_21] : memref<2x32x128xf32, #tpu.memory_space<vmem>>, vector<1x32x128xf32>
    %36 = vector.shape_cast %35 : vector<1x32x128xf32> to vector<32x128xf32>
    %c1_22 = arith.constant 1 : index
    %c0_23 = arith.constant 0 : index
    %c0_24 = arith.constant 0 : index
    %37 = vector.load %arg6[%c1_22, %c0_23, %c0_24] : memref<2x1x128xf32, #tpu.memory_space<vmem>>, vector<1x1x128xf32>
    %38 = vector.shape_cast %37 : vector<1x1x128xf32> to vector<1x128xf32>
    %cst_25 = arith.constant dense<0.000000e+00> : vector<2x128xf32>
    %39 = tpu.matmul %5, %36, %cst_25 {dimension_numbers = #tpu.dot_dimension_numbers<[1], [0], [0], [1], [0, 0, 1, 1], [], []>} : vector<2x32xf32>, vector<32x128xf32>, vector<2x128xf32> -> vector<2x128xf32>
    %40 = arith.addf %34, %39 : vector<2x128xf32>
    %41 = vector.broadcast %38 : vector<1x128xf32> to vector<2x128xf32>
    %42 = arith.addf %40, %41 : vector<2x128xf32>
    %43 = arith.negf %42 : vector<2x128xf32>
    %44 = math.exp %43 : vector<2x128xf32>
    %cst_26 = arith.constant 1.000000e+00 : f32
    %45 = vector.broadcast %cst_26 : f32 to vector<2x128xf32>
    %46 = arith.addf %45, %44 : vector<2x128xf32>
    %47 = arith.divf %45, %46 : vector<2x128xf32>
    %48 = math.tanh %42 : vector<2x128xf32>
    %49 = vector.extract_strided_slice %47 {offsets = [0, 0], sizes = [2, 32], strides = [1, 1]} : vector<2x128xf32> to vector<2x32xf32>
    %50 = vector.extract_strided_slice %47 {offsets = [0, 32], sizes = [2, 32], strides = [1, 1]} : vector<2x128xf32> to vector<2x32xf32>
    %51 = vector.extract_strided_slice %48 {offsets = [0, 64], sizes = [2, 32], strides = [1, 1]} : vector<2x128xf32> to vector<2x32xf32>
    %52 = vector.extract_strided_slice %47 {offsets = [0, 96], sizes = [2, 32], strides = [1, 1]} : vector<2x128xf32> to vector<2x32xf32>
    %53 = arith.mulf %50, %7 : vector<2x32xf32>
    %54 = arith.mulf %49, %51 : vector<2x32xf32>
    %55 = arith.addf %53, %54 : vector<2x32xf32>
    %56 = math.tanh %55 : vector<2x32xf32>
    %57 = arith.mulf %52, %56 : vector<2x32xf32>
    %58 = vector.extract_strided_slice %3 {offsets = [2, 0], sizes = [2, 128], strides = [1, 1]} : vector<16x128xf32> to vector<2x128xf32>
    %c0_27 = arith.constant 0 : index
    %c0_28 = arith.constant 0 : index
    %c0_29 = arith.constant 0 : index
    %59 = vector.load %arg5[%c0_27, %c0_28, %c0_29] : memref<2x32x128xf32, #tpu.memory_space<vmem>>, vector<1x32x128xf32>
    %60 = vector.shape_cast %59 : vector<1x32x128xf32> to vector<32x128xf32>
    %c0_30 = arith.constant 0 : index
    %c0_31 = arith.constant 0 : index
    %c0_32 = arith.constant 0 : index
    %61 = vector.load %arg6[%c0_30, %c0_31, %c0_32] : memref<2x1x128xf32, #tpu.memory_space<vmem>>, vector<1x1x128xf32>
    %62 = vector.shape_cast %61 : vector<1x1x128xf32> to vector<1x128xf32>
    %cst_33 = arith.constant dense<0.000000e+00> : vector<2x128xf32>
    %63 = tpu.matmul %31, %60, %cst_33 {dimension_numbers = #tpu.dot_dimension_numbers<[1], [0], [0], [1], [0, 0, 1, 1], [], []>} : vector<2x32xf32>, vector<32x128xf32>, vector<2x128xf32> -> vector<2x128xf32>
    %64 = arith.addf %58, %63 : vector<2x128xf32>
    %65 = vector.broadcast %62 : vector<1x128xf32> to vector<2x128xf32>
    %66 = arith.addf %64, %65 : vector<2x128xf32>
    %67 = arith.negf %66 : vector<2x128xf32>
    %68 = math.exp %67 : vector<2x128xf32>
    %cst_34 = arith.constant 1.000000e+00 : f32
    %69 = vector.broadcast %cst_34 : f32 to vector<2x128xf32>
    %70 = arith.addf %69, %68 : vector<2x128xf32>
    %71 = arith.divf %69, %70 : vector<2x128xf32>
    %72 = math.tanh %66 : vector<2x128xf32>
    %73 = vector.extract_strided_slice %71 {offsets = [0, 0], sizes = [2, 32], strides = [1, 1]} : vector<2x128xf32> to vector<2x32xf32>
    %74 = vector.extract_strided_slice %71 {offsets = [0, 32], sizes = [2, 32], strides = [1, 1]} : vector<2x128xf32> to vector<2x32xf32>
    %75 = vector.extract_strided_slice %72 {offsets = [0, 64], sizes = [2, 32], strides = [1, 1]} : vector<2x128xf32> to vector<2x32xf32>
    %76 = vector.extract_strided_slice %71 {offsets = [0, 96], sizes = [2, 32], strides = [1, 1]} : vector<2x128xf32> to vector<2x32xf32>
    %77 = arith.mulf %74, %29 : vector<2x32xf32>
    %78 = arith.mulf %73, %75 : vector<2x32xf32>
    %79 = arith.addf %77, %78 : vector<2x32xf32>
    %80 = math.tanh %79 : vector<2x32xf32>
    %81 = arith.mulf %76, %80 : vector<2x32xf32>
    %c1_35 = arith.constant 1 : index
    %c0_36 = arith.constant 0 : index
    %c0_37 = arith.constant 0 : index
    %82 = vector.load %arg4[%c1_35, %c0_36, %c0_37] : memref<2x32x128xf32, #tpu.memory_space<vmem>>, vector<1x32x128xf32>
    %83 = vector.shape_cast %82 : vector<1x32x128xf32> to vector<32x128xf32>
    %cst_38 = arith.constant dense<0.000000e+00> : vector<2x128xf32>
    %84 = tpu.matmul %81, %83, %cst_38 {dimension_numbers = #tpu.dot_dimension_numbers<[1], [0], [0], [1], [0, 0, 1, 1], [], []>} : vector<2x32xf32>, vector<32x128xf32>, vector<2x128xf32> -> vector<2x128xf32>
    %c1_39 = arith.constant 1 : index
    %c0_40 = arith.constant 0 : index
    %c0_41 = arith.constant 0 : index
    %85 = vector.load %arg5[%c1_39, %c0_40, %c0_41] : memref<2x32x128xf32, #tpu.memory_space<vmem>>, vector<1x32x128xf32>
    %86 = vector.shape_cast %85 : vector<1x32x128xf32> to vector<32x128xf32>
    %c1_42 = arith.constant 1 : index
    %c0_43 = arith.constant 0 : index
    %c0_44 = arith.constant 0 : index
    %87 = vector.load %arg6[%c1_42, %c0_43, %c0_44] : memref<2x1x128xf32, #tpu.memory_space<vmem>>, vector<1x1x128xf32>
    %88 = vector.shape_cast %87 : vector<1x1x128xf32> to vector<1x128xf32>
    %cst_45 = arith.constant dense<0.000000e+00> : vector<2x128xf32>
    %89 = tpu.matmul %57, %86, %cst_45 {dimension_numbers = #tpu.dot_dimension_numbers<[1], [0], [0], [1], [0, 0, 1, 1], [], []>} : vector<2x32xf32>, vector<32x128xf32>, vector<2x128xf32> -> vector<2x128xf32>
    %90 = arith.addf %84, %89 : vector<2x128xf32>
    %91 = vector.broadcast %88 : vector<1x128xf32> to vector<2x128xf32>
    %92 = arith.addf %90, %91 : vector<2x128xf32>
    %93 = arith.negf %92 : vector<2x128xf32>
    %94 = math.exp %93 : vector<2x128xf32>
    %cst_46 = arith.constant 1.000000e+00 : f32
    %95 = vector.broadcast %cst_46 : f32 to vector<2x128xf32>
    %96 = arith.addf %95, %94 : vector<2x128xf32>
    %97 = arith.divf %95, %96 : vector<2x128xf32>
    %98 = math.tanh %92 : vector<2x128xf32>
    %99 = vector.extract_strided_slice %97 {offsets = [0, 0], sizes = [2, 32], strides = [1, 1]} : vector<2x128xf32> to vector<2x32xf32>
    %100 = vector.extract_strided_slice %97 {offsets = [0, 32], sizes = [2, 32], strides = [1, 1]} : vector<2x128xf32> to vector<2x32xf32>
    %101 = vector.extract_strided_slice %98 {offsets = [0, 64], sizes = [2, 32], strides = [1, 1]} : vector<2x128xf32> to vector<2x32xf32>
    %102 = vector.extract_strided_slice %97 {offsets = [0, 96], sizes = [2, 32], strides = [1, 1]} : vector<2x128xf32> to vector<2x32xf32>
    %103 = arith.mulf %100, %55 : vector<2x32xf32>
    %104 = arith.mulf %99, %101 : vector<2x32xf32>
    %105 = arith.addf %103, %104 : vector<2x32xf32>
    %106 = math.tanh %105 : vector<2x32xf32>
    %107 = arith.mulf %102, %106 : vector<2x32xf32>
    %108 = vector.extract_strided_slice %3 {offsets = [4, 0], sizes = [2, 128], strides = [1, 1]} : vector<16x128xf32> to vector<2x128xf32>
    %c0_47 = arith.constant 0 : index
    %c0_48 = arith.constant 0 : index
    %c0_49 = arith.constant 0 : index
    %109 = vector.load %arg5[%c0_47, %c0_48, %c0_49] : memref<2x32x128xf32, #tpu.memory_space<vmem>>, vector<1x32x128xf32>
    %110 = vector.shape_cast %109 : vector<1x32x128xf32> to vector<32x128xf32>
    %c0_50 = arith.constant 0 : index
    %c0_51 = arith.constant 0 : index
    %c0_52 = arith.constant 0 : index
    %111 = vector.load %arg6[%c0_50, %c0_51, %c0_52] : memref<2x1x128xf32, #tpu.memory_space<vmem>>, vector<1x1x128xf32>
    %112 = vector.shape_cast %111 : vector<1x1x128xf32> to vector<1x128xf32>
    %cst_53 = arith.constant dense<0.000000e+00> : vector<2x128xf32>
    %113 = tpu.matmul %81, %110, %cst_53 {dimension_numbers = #tpu.dot_dimension_numbers<[1], [0], [0], [1], [0, 0, 1, 1], [], []>} : vector<2x32xf32>, vector<32x128xf32>, vector<2x128xf32> -> vector<2x128xf32>
    %114 = arith.addf %108, %113 : vector<2x128xf32>
    %115 = vector.broadcast %112 : vector<1x128xf32> to vector<2x128xf32>
    %116 = arith.addf %114, %115 : vector<2x128xf32>
    %117 = arith.negf %116 : vector<2x128xf32>
    %118 = math.exp %117 : vector<2x128xf32>
    %cst_54 = arith.constant 1.000000e+00 : f32
    %119 = vector.broadcast %cst_54 : f32 to vector<2x128xf32>
    %120 = arith.addf %119, %118 : vector<2x128xf32>
    %121 = arith.divf %119, %120 : vector<2x128xf32>
    %122 = math.tanh %116 : vector<2x128xf32>
    %123 = vector.extract_strided_slice %121 {offsets = [0, 0], sizes = [2, 32], strides = [1, 1]} : vector<2x128xf32> to vector<2x32xf32>
    %124 = vector.extract_strided_slice %121 {offsets = [0, 32], sizes = [2, 32], strides = [1, 1]} : vector<2x128xf32> to vector<2x32xf32>
    %125 = vector.extract_strided_slice %122 {offsets = [0, 64], sizes = [2, 32], strides = [1, 1]} : vector<2x128xf32> to vector<2x32xf32>
    %126 = vector.extract_strided_slice %121 {offsets = [0, 96], sizes = [2, 32], strides = [1, 1]} : vector<2x128xf32> to vector<2x32xf32>
    %127 = arith.mulf %124, %79 : vector<2x32xf32>
    %128 = arith.mulf %123, %125 : vector<2x32xf32>
    %129 = arith.addf %127, %128 : vector<2x32xf32>
    %130 = math.tanh %129 : vector<2x32xf32>
    %131 = arith.mulf %126, %130 : vector<2x32xf32>
    %c1_55 = arith.constant 1 : index
    %c0_56 = arith.constant 0 : index
    %c0_57 = arith.constant 0 : index
    %132 = vector.load %arg4[%c1_55, %c0_56, %c0_57] : memref<2x32x128xf32, #tpu.memory_space<vmem>>, vector<1x32x128xf32>
    %133 = vector.shape_cast %132 : vector<1x32x128xf32> to vector<32x128xf32>
    %cst_58 = arith.constant dense<0.000000e+00> : vector<2x128xf32>
    %134 = tpu.matmul %131, %133, %cst_58 {dimension_numbers = #tpu.dot_dimension_numbers<[1], [0], [0], [1], [0, 0, 1, 1], [], []>} : vector<2x32xf32>, vector<32x128xf32>, vector<2x128xf32> -> vector<2x128xf32>
    %c1_59 = arith.constant 1 : index
    %c0_60 = arith.constant 0 : index
    %c0_61 = arith.constant 0 : index
    %135 = vector.load %arg5[%c1_59, %c0_60, %c0_61] : memref<2x32x128xf32, #tpu.memory_space<vmem>>, vector<1x32x128xf32>
    %136 = vector.shape_cast %135 : vector<1x32x128xf32> to vector<32x128xf32>
    %c1_62 = arith.constant 1 : index
    %c0_63 = arith.constant 0 : index
    %c0_64 = arith.constant 0 : index
    %137 = vector.load %arg6[%c1_62, %c0_63, %c0_64] : memref<2x1x128xf32, #tpu.memory_space<vmem>>, vector<1x1x128xf32>
    %138 = vector.shape_cast %137 : vector<1x1x128xf32> to vector<1x128xf32>
    %cst_65 = arith.constant dense<0.000000e+00> : vector<2x128xf32>
    %139 = tpu.matmul %107, %136, %cst_65 {dimension_numbers = #tpu.dot_dimension_numbers<[1], [0], [0], [1], [0, 0, 1, 1], [], []>} : vector<2x32xf32>, vector<32x128xf32>, vector<2x128xf32> -> vector<2x128xf32>
    %140 = arith.addf %134, %139 : vector<2x128xf32>
    %141 = vector.broadcast %138 : vector<1x128xf32> to vector<2x128xf32>
    %142 = arith.addf %140, %141 : vector<2x128xf32>
    %143 = arith.negf %142 : vector<2x128xf32>
    %144 = math.exp %143 : vector<2x128xf32>
    %cst_66 = arith.constant 1.000000e+00 : f32
    %145 = vector.broadcast %cst_66 : f32 to vector<2x128xf32>
    %146 = arith.addf %145, %144 : vector<2x128xf32>
    %147 = arith.divf %145, %146 : vector<2x128xf32>
    %148 = math.tanh %142 : vector<2x128xf32>
    %149 = vector.extract_strided_slice %147 {offsets = [0, 0], sizes = [2, 32], strides = [1, 1]} : vector<2x128xf32> to vector<2x32xf32>
    %150 = vector.extract_strided_slice %147 {offsets = [0, 32], sizes = [2, 32], strides = [1, 1]} : vector<2x128xf32> to vector<2x32xf32>
    %151 = vector.extract_strided_slice %148 {offsets = [0, 64], sizes = [2, 32], strides = [1, 1]} : vector<2x128xf32> to vector<2x32xf32>
    %152 = vector.extract_strided_slice %147 {offsets = [0, 96], sizes = [2, 32], strides = [1, 1]} : vector<2x128xf32> to vector<2x32xf32>
    %153 = arith.mulf %150, %105 : vector<2x32xf32>
    %154 = arith.mulf %149, %151 : vector<2x32xf32>
    %155 = arith.addf %153, %154 : vector<2x32xf32>
    %156 = math.tanh %155 : vector<2x32xf32>
    %157 = arith.mulf %152, %156 : vector<2x32xf32>
    %158 = vector.extract_strided_slice %3 {offsets = [6, 0], sizes = [2, 128], strides = [1, 1]} : vector<16x128xf32> to vector<2x128xf32>
    %c0_67 = arith.constant 0 : index
    %c0_68 = arith.constant 0 : index
    %c0_69 = arith.constant 0 : index
    %159 = vector.load %arg5[%c0_67, %c0_68, %c0_69] : memref<2x32x128xf32, #tpu.memory_space<vmem>>, vector<1x32x128xf32>
    %160 = vector.shape_cast %159 : vector<1x32x128xf32> to vector<32x128xf32>
    %c0_70 = arith.constant 0 : index
    %c0_71 = arith.constant 0 : index
    %c0_72 = arith.constant 0 : index
    %161 = vector.load %arg6[%c0_70, %c0_71, %c0_72] : memref<2x1x128xf32, #tpu.memory_space<vmem>>, vector<1x1x128xf32>
    %162 = vector.shape_cast %161 : vector<1x1x128xf32> to vector<1x128xf32>
    %cst_73 = arith.constant dense<0.000000e+00> : vector<2x128xf32>
    %163 = tpu.matmul %131, %160, %cst_73 {dimension_numbers = #tpu.dot_dimension_numbers<[1], [0], [0], [1], [0, 0, 1, 1], [], []>} : vector<2x32xf32>, vector<32x128xf32>, vector<2x128xf32> -> vector<2x128xf32>
    %164 = arith.addf %158, %163 : vector<2x128xf32>
    %165 = vector.broadcast %162 : vector<1x128xf32> to vector<2x128xf32>
    %166 = arith.addf %164, %165 : vector<2x128xf32>
    %167 = arith.negf %166 : vector<2x128xf32>
    %168 = math.exp %167 : vector<2x128xf32>
    %cst_74 = arith.constant 1.000000e+00 : f32
    %169 = vector.broadcast %cst_74 : f32 to vector<2x128xf32>
    %170 = arith.addf %169, %168 : vector<2x128xf32>
    %171 = arith.divf %169, %170 : vector<2x128xf32>
    %172 = math.tanh %166 : vector<2x128xf32>
    %173 = vector.extract_strided_slice %171 {offsets = [0, 0], sizes = [2, 32], strides = [1, 1]} : vector<2x128xf32> to vector<2x32xf32>
    %174 = vector.extract_strided_slice %171 {offsets = [0, 32], sizes = [2, 32], strides = [1, 1]} : vector<2x128xf32> to vector<2x32xf32>
    %175 = vector.extract_strided_slice %172 {offsets = [0, 64], sizes = [2, 32], strides = [1, 1]} : vector<2x128xf32> to vector<2x32xf32>
    %176 = vector.extract_strided_slice %171 {offsets = [0, 96], sizes = [2, 32], strides = [1, 1]} : vector<2x128xf32> to vector<2x32xf32>
    %177 = arith.mulf %174, %129 : vector<2x32xf32>
    %178 = arith.mulf %173, %175 : vector<2x32xf32>
    %179 = arith.addf %177, %178 : vector<2x32xf32>
    %180 = math.tanh %179 : vector<2x32xf32>
    %181 = arith.mulf %176, %180 : vector<2x32xf32>
    %c1_75 = arith.constant 1 : index
    %c0_76 = arith.constant 0 : index
    %c0_77 = arith.constant 0 : index
    %182 = vector.load %arg4[%c1_75, %c0_76, %c0_77] : memref<2x32x128xf32, #tpu.memory_space<vmem>>, vector<1x32x128xf32>
    %183 = vector.shape_cast %182 : vector<1x32x128xf32> to vector<32x128xf32>
    %cst_78 = arith.constant dense<0.000000e+00> : vector<2x128xf32>
    %184 = tpu.matmul %181, %183, %cst_78 {dimension_numbers = #tpu.dot_dimension_numbers<[1], [0], [0], [1], [0, 0, 1, 1], [], []>} : vector<2x32xf32>, vector<32x128xf32>, vector<2x128xf32> -> vector<2x128xf32>
    %c1_79 = arith.constant 1 : index
    %c0_80 = arith.constant 0 : index
    %c0_81 = arith.constant 0 : index
    %185 = vector.load %arg5[%c1_79, %c0_80, %c0_81] : memref<2x32x128xf32, #tpu.memory_space<vmem>>, vector<1x32x128xf32>
    %186 = vector.shape_cast %185 : vector<1x32x128xf32> to vector<32x128xf32>
    %c1_82 = arith.constant 1 : index
    %c0_83 = arith.constant 0 : index
    %c0_84 = arith.constant 0 : index
    %187 = vector.load %arg6[%c1_82, %c0_83, %c0_84] : memref<2x1x128xf32, #tpu.memory_space<vmem>>, vector<1x1x128xf32>
    %188 = vector.shape_cast %187 : vector<1x1x128xf32> to vector<1x128xf32>
    %cst_85 = arith.constant dense<0.000000e+00> : vector<2x128xf32>
    %189 = tpu.matmul %157, %186, %cst_85 {dimension_numbers = #tpu.dot_dimension_numbers<[1], [0], [0], [1], [0, 0, 1, 1], [], []>} : vector<2x32xf32>, vector<32x128xf32>, vector<2x128xf32> -> vector<2x128xf32>
    %190 = arith.addf %184, %189 : vector<2x128xf32>
    %191 = vector.broadcast %188 : vector<1x128xf32> to vector<2x128xf32>
    %192 = arith.addf %190, %191 : vector<2x128xf32>
    %193 = arith.negf %192 : vector<2x128xf32>
    %194 = math.exp %193 : vector<2x128xf32>
    %cst_86 = arith.constant 1.000000e+00 : f32
    %195 = vector.broadcast %cst_86 : f32 to vector<2x128xf32>
    %196 = arith.addf %195, %194 : vector<2x128xf32>
    %197 = arith.divf %195, %196 : vector<2x128xf32>
    %198 = math.tanh %192 : vector<2x128xf32>
    %199 = vector.extract_strided_slice %197 {offsets = [0, 0], sizes = [2, 32], strides = [1, 1]} : vector<2x128xf32> to vector<2x32xf32>
    %200 = vector.extract_strided_slice %197 {offsets = [0, 32], sizes = [2, 32], strides = [1, 1]} : vector<2x128xf32> to vector<2x32xf32>
    %201 = vector.extract_strided_slice %198 {offsets = [0, 64], sizes = [2, 32], strides = [1, 1]} : vector<2x128xf32> to vector<2x32xf32>
    %202 = vector.extract_strided_slice %197 {offsets = [0, 96], sizes = [2, 32], strides = [1, 1]} : vector<2x128xf32> to vector<2x32xf32>
    %203 = arith.mulf %200, %155 : vector<2x32xf32>
    %204 = arith.mulf %199, %201 : vector<2x32xf32>
    %205 = arith.addf %203, %204 : vector<2x32xf32>
    %206 = math.tanh %205 : vector<2x32xf32>
    %207 = arith.mulf %202, %206 : vector<2x32xf32>
    %208 = vector.extract_strided_slice %3 {offsets = [8, 0], sizes = [2, 128], strides = [1, 1]} : vector<16x128xf32> to vector<2x128xf32>
    %c0_87 = arith.constant 0 : index
    %c0_88 = arith.constant 0 : index
    %c0_89 = arith.constant 0 : index
    %209 = vector.load %arg5[%c0_87, %c0_88, %c0_89] : memref<2x32x128xf32, #tpu.memory_space<vmem>>, vector<1x32x128xf32>
    %210 = vector.shape_cast %209 : vector<1x32x128xf32> to vector<32x128xf32>
    %c0_90 = arith.constant 0 : index
    %c0_91 = arith.constant 0 : index
    %c0_92 = arith.constant 0 : index
    %211 = vector.load %arg6[%c0_90, %c0_91, %c0_92] : memref<2x1x128xf32, #tpu.memory_space<vmem>>, vector<1x1x128xf32>
    %212 = vector.shape_cast %211 : vector<1x1x128xf32> to vector<1x128xf32>
    %cst_93 = arith.constant dense<0.000000e+00> : vector<2x128xf32>
    %213 = tpu.matmul %181, %210, %cst_93 {dimension_numbers = #tpu.dot_dimension_numbers<[1], [0], [0], [1], [0, 0, 1, 1], [], []>} : vector<2x32xf32>, vector<32x128xf32>, vector<2x128xf32> -> vector<2x128xf32>
    %214 = arith.addf %208, %213 : vector<2x128xf32>
    %215 = vector.broadcast %212 : vector<1x128xf32> to vector<2x128xf32>
    %216 = arith.addf %214, %215 : vector<2x128xf32>
    %217 = arith.negf %216 : vector<2x128xf32>
    %218 = math.exp %217 : vector<2x128xf32>
    %cst_94 = arith.constant 1.000000e+00 : f32
    %219 = vector.broadcast %cst_94 : f32 to vector<2x128xf32>
    %220 = arith.addf %219, %218 : vector<2x128xf32>
    %221 = arith.divf %219, %220 : vector<2x128xf32>
    %222 = math.tanh %216 : vector<2x128xf32>
    %223 = vector.extract_strided_slice %221 {offsets = [0, 0], sizes = [2, 32], strides = [1, 1]} : vector<2x128xf32> to vector<2x32xf32>
    %224 = vector.extract_strided_slice %221 {offsets = [0, 32], sizes = [2, 32], strides = [1, 1]} : vector<2x128xf32> to vector<2x32xf32>
    %225 = vector.extract_strided_slice %222 {offsets = [0, 64], sizes = [2, 32], strides = [1, 1]} : vector<2x128xf32> to vector<2x32xf32>
    %226 = vector.extract_strided_slice %221 {offsets = [0, 96], sizes = [2, 32], strides = [1, 1]} : vector<2x128xf32> to vector<2x32xf32>
    %227 = arith.mulf %224, %179 : vector<2x32xf32>
    %228 = arith.mulf %223, %225 : vector<2x32xf32>
    %229 = arith.addf %227, %228 : vector<2x32xf32>
    %230 = math.tanh %229 : vector<2x32xf32>
    %231 = arith.mulf %226, %230 : vector<2x32xf32>
    %c1_95 = arith.constant 1 : index
    %c0_96 = arith.constant 0 : index
    %c0_97 = arith.constant 0 : index
    %232 = vector.load %arg4[%c1_95, %c0_96, %c0_97] : memref<2x32x128xf32, #tpu.memory_space<vmem>>, vector<1x32x128xf32>
    %233 = vector.shape_cast %232 : vector<1x32x128xf32> to vector<32x128xf32>
    %cst_98 = arith.constant dense<0.000000e+00> : vector<2x128xf32>
    %234 = tpu.matmul %231, %233, %cst_98 {dimension_numbers = #tpu.dot_dimension_numbers<[1], [0], [0], [1], [0, 0, 1, 1], [], []>} : vector<2x32xf32>, vector<32x128xf32>, vector<2x128xf32> -> vector<2x128xf32>
    %c1_99 = arith.constant 1 : index
    %c0_100 = arith.constant 0 : index
    %c0_101 = arith.constant 0 : index
    %235 = vector.load %arg5[%c1_99, %c0_100, %c0_101] : memref<2x32x128xf32, #tpu.memory_space<vmem>>, vector<1x32x128xf32>
    %236 = vector.shape_cast %235 : vector<1x32x128xf32> to vector<32x128xf32>
    %c1_102 = arith.constant 1 : index
    %c0_103 = arith.constant 0 : index
    %c0_104 = arith.constant 0 : index
    %237 = vector.load %arg6[%c1_102, %c0_103, %c0_104] : memref<2x1x128xf32, #tpu.memory_space<vmem>>, vector<1x1x128xf32>
    %238 = vector.shape_cast %237 : vector<1x1x128xf32> to vector<1x128xf32>
    %cst_105 = arith.constant dense<0.000000e+00> : vector<2x128xf32>
    %239 = tpu.matmul %207, %236, %cst_105 {dimension_numbers = #tpu.dot_dimension_numbers<[1], [0], [0], [1], [0, 0, 1, 1], [], []>} : vector<2x32xf32>, vector<32x128xf32>, vector<2x128xf32> -> vector<2x128xf32>
    %240 = arith.addf %234, %239 : vector<2x128xf32>
    %241 = vector.broadcast %238 : vector<1x128xf32> to vector<2x128xf32>
    %242 = arith.addf %240, %241 : vector<2x128xf32>
    %243 = arith.negf %242 : vector<2x128xf32>
    %244 = math.exp %243 : vector<2x128xf32>
    %cst_106 = arith.constant 1.000000e+00 : f32
    %245 = vector.broadcast %cst_106 : f32 to vector<2x128xf32>
    %246 = arith.addf %245, %244 : vector<2x128xf32>
    %247 = arith.divf %245, %246 : vector<2x128xf32>
    %248 = math.tanh %242 : vector<2x128xf32>
    %249 = vector.extract_strided_slice %247 {offsets = [0, 0], sizes = [2, 32], strides = [1, 1]} : vector<2x128xf32> to vector<2x32xf32>
    %250 = vector.extract_strided_slice %247 {offsets = [0, 32], sizes = [2, 32], strides = [1, 1]} : vector<2x128xf32> to vector<2x32xf32>
    %251 = vector.extract_strided_slice %248 {offsets = [0, 64], sizes = [2, 32], strides = [1, 1]} : vector<2x128xf32> to vector<2x32xf32>
    %252 = vector.extract_strided_slice %247 {offsets = [0, 96], sizes = [2, 32], strides = [1, 1]} : vector<2x128xf32> to vector<2x32xf32>
    %253 = arith.mulf %250, %205 : vector<2x32xf32>
    %254 = arith.mulf %249, %251 : vector<2x32xf32>
    %255 = arith.addf %253, %254 : vector<2x32xf32>
    %256 = math.tanh %255 : vector<2x32xf32>
    %257 = arith.mulf %252, %256 : vector<2x32xf32>
    %258 = vector.extract_strided_slice %3 {offsets = [10, 0], sizes = [2, 128], strides = [1, 1]} : vector<16x128xf32> to vector<2x128xf32>
    %c0_107 = arith.constant 0 : index
    %c0_108 = arith.constant 0 : index
    %c0_109 = arith.constant 0 : index
    %259 = vector.load %arg5[%c0_107, %c0_108, %c0_109] : memref<2x32x128xf32, #tpu.memory_space<vmem>>, vector<1x32x128xf32>
    %260 = vector.shape_cast %259 : vector<1x32x128xf32> to vector<32x128xf32>
    %c0_110 = arith.constant 0 : index
    %c0_111 = arith.constant 0 : index
    %c0_112 = arith.constant 0 : index
    %261 = vector.load %arg6[%c0_110, %c0_111, %c0_112] : memref<2x1x128xf32, #tpu.memory_space<vmem>>, vector<1x1x128xf32>
    %262 = vector.shape_cast %261 : vector<1x1x128xf32> to vector<1x128xf32>
    %cst_113 = arith.constant dense<0.000000e+00> : vector<2x128xf32>
    %263 = tpu.matmul %231, %260, %cst_113 {dimension_numbers = #tpu.dot_dimension_numbers<[1], [0], [0], [1], [0, 0, 1, 1], [], []>} : vector<2x32xf32>, vector<32x128xf32>, vector<2x128xf32> -> vector<2x128xf32>
    %264 = arith.addf %258, %263 : vector<2x128xf32>
    %265 = vector.broadcast %262 : vector<1x128xf32> to vector<2x128xf32>
    %266 = arith.addf %264, %265 : vector<2x128xf32>
    %267 = arith.negf %266 : vector<2x128xf32>
    %268 = math.exp %267 : vector<2x128xf32>
    %cst_114 = arith.constant 1.000000e+00 : f32
    %269 = vector.broadcast %cst_114 : f32 to vector<2x128xf32>
    %270 = arith.addf %269, %268 : vector<2x128xf32>
    %271 = arith.divf %269, %270 : vector<2x128xf32>
    %272 = math.tanh %266 : vector<2x128xf32>
    %273 = vector.extract_strided_slice %271 {offsets = [0, 0], sizes = [2, 32], strides = [1, 1]} : vector<2x128xf32> to vector<2x32xf32>
    %274 = vector.extract_strided_slice %271 {offsets = [0, 32], sizes = [2, 32], strides = [1, 1]} : vector<2x128xf32> to vector<2x32xf32>
    %275 = vector.extract_strided_slice %272 {offsets = [0, 64], sizes = [2, 32], strides = [1, 1]} : vector<2x128xf32> to vector<2x32xf32>
    %276 = vector.extract_strided_slice %271 {offsets = [0, 96], sizes = [2, 32], strides = [1, 1]} : vector<2x128xf32> to vector<2x32xf32>
    %277 = arith.mulf %274, %229 : vector<2x32xf32>
    %278 = arith.mulf %273, %275 : vector<2x32xf32>
    %279 = arith.addf %277, %278 : vector<2x32xf32>
    %280 = math.tanh %279 : vector<2x32xf32>
    %281 = arith.mulf %276, %280 : vector<2x32xf32>
    %c1_115 = arith.constant 1 : index
    %c0_116 = arith.constant 0 : index
    %c0_117 = arith.constant 0 : index
    %282 = vector.load %arg4[%c1_115, %c0_116, %c0_117] : memref<2x32x128xf32, #tpu.memory_space<vmem>>, vector<1x32x128xf32>
    %283 = vector.shape_cast %282 : vector<1x32x128xf32> to vector<32x128xf32>
    %cst_118 = arith.constant dense<0.000000e+00> : vector<2x128xf32>
    %284 = tpu.matmul %281, %283, %cst_118 {dimension_numbers = #tpu.dot_dimension_numbers<[1], [0], [0], [1], [0, 0, 1, 1], [], []>} : vector<2x32xf32>, vector<32x128xf32>, vector<2x128xf32> -> vector<2x128xf32>
    %c1_119 = arith.constant 1 : index
    %c0_120 = arith.constant 0 : index
    %c0_121 = arith.constant 0 : index
    %285 = vector.load %arg5[%c1_119, %c0_120, %c0_121] : memref<2x32x128xf32, #tpu.memory_space<vmem>>, vector<1x32x128xf32>
    %286 = vector.shape_cast %285 : vector<1x32x128xf32> to vector<32x128xf32>
    %c1_122 = arith.constant 1 : index
    %c0_123 = arith.constant 0 : index
    %c0_124 = arith.constant 0 : index
    %287 = vector.load %arg6[%c1_122, %c0_123, %c0_124] : memref<2x1x128xf32, #tpu.memory_space<vmem>>, vector<1x1x128xf32>
    %288 = vector.shape_cast %287 : vector<1x1x128xf32> to vector<1x128xf32>
    %cst_125 = arith.constant dense<0.000000e+00> : vector<2x128xf32>
    %289 = tpu.matmul %257, %286, %cst_125 {dimension_numbers = #tpu.dot_dimension_numbers<[1], [0], [0], [1], [0, 0, 1, 1], [], []>} : vector<2x32xf32>, vector<32x128xf32>, vector<2x128xf32> -> vector<2x128xf32>
    %290 = arith.addf %284, %289 : vector<2x128xf32>
    %291 = vector.broadcast %288 : vector<1x128xf32> to vector<2x128xf32>
    %292 = arith.addf %290, %291 : vector<2x128xf32>
    %293 = arith.negf %292 : vector<2x128xf32>
    %294 = math.exp %293 : vector<2x128xf32>
    %cst_126 = arith.constant 1.000000e+00 : f32
    %295 = vector.broadcast %cst_126 : f32 to vector<2x128xf32>
    %296 = arith.addf %295, %294 : vector<2x128xf32>
    %297 = arith.divf %295, %296 : vector<2x128xf32>
    %298 = math.tanh %292 : vector<2x128xf32>
    %299 = vector.extract_strided_slice %297 {offsets = [0, 0], sizes = [2, 32], strides = [1, 1]} : vector<2x128xf32> to vector<2x32xf32>
    %300 = vector.extract_strided_slice %297 {offsets = [0, 32], sizes = [2, 32], strides = [1, 1]} : vector<2x128xf32> to vector<2x32xf32>
    %301 = vector.extract_strided_slice %298 {offsets = [0, 64], sizes = [2, 32], strides = [1, 1]} : vector<2x128xf32> to vector<2x32xf32>
    %302 = vector.extract_strided_slice %297 {offsets = [0, 96], sizes = [2, 32], strides = [1, 1]} : vector<2x128xf32> to vector<2x32xf32>
    %303 = arith.mulf %300, %255 : vector<2x32xf32>
    %304 = arith.mulf %299, %301 : vector<2x32xf32>
    %305 = arith.addf %303, %304 : vector<2x32xf32>
    %306 = math.tanh %305 : vector<2x32xf32>
    %307 = arith.mulf %302, %306 : vector<2x32xf32>
    %308 = vector.extract_strided_slice %3 {offsets = [12, 0], sizes = [2, 128], strides = [1, 1]} : vector<16x128xf32> to vector<2x128xf32>
    %c0_127 = arith.constant 0 : index
    %c0_128 = arith.constant 0 : index
    %c0_129 = arith.constant 0 : index
    %309 = vector.load %arg5[%c0_127, %c0_128, %c0_129] : memref<2x32x128xf32, #tpu.memory_space<vmem>>, vector<1x32x128xf32>
    %310 = vector.shape_cast %309 : vector<1x32x128xf32> to vector<32x128xf32>
    %c0_130 = arith.constant 0 : index
    %c0_131 = arith.constant 0 : index
    %c0_132 = arith.constant 0 : index
    %311 = vector.load %arg6[%c0_130, %c0_131, %c0_132] : memref<2x1x128xf32, #tpu.memory_space<vmem>>, vector<1x1x128xf32>
    %312 = vector.shape_cast %311 : vector<1x1x128xf32> to vector<1x128xf32>
    %cst_133 = arith.constant dense<0.000000e+00> : vector<2x128xf32>
    %313 = tpu.matmul %281, %310, %cst_133 {dimension_numbers = #tpu.dot_dimension_numbers<[1], [0], [0], [1], [0, 0, 1, 1], [], []>} : vector<2x32xf32>, vector<32x128xf32>, vector<2x128xf32> -> vector<2x128xf32>
    %314 = arith.addf %308, %313 : vector<2x128xf32>
    %315 = vector.broadcast %312 : vector<1x128xf32> to vector<2x128xf32>
    %316 = arith.addf %314, %315 : vector<2x128xf32>
    %317 = arith.negf %316 : vector<2x128xf32>
    %318 = math.exp %317 : vector<2x128xf32>
    %cst_134 = arith.constant 1.000000e+00 : f32
    %319 = vector.broadcast %cst_134 : f32 to vector<2x128xf32>
    %320 = arith.addf %319, %318 : vector<2x128xf32>
    %321 = arith.divf %319, %320 : vector<2x128xf32>
    %322 = math.tanh %316 : vector<2x128xf32>
    %323 = vector.extract_strided_slice %321 {offsets = [0, 0], sizes = [2, 32], strides = [1, 1]} : vector<2x128xf32> to vector<2x32xf32>
    %324 = vector.extract_strided_slice %321 {offsets = [0, 32], sizes = [2, 32], strides = [1, 1]} : vector<2x128xf32> to vector<2x32xf32>
    %325 = vector.extract_strided_slice %322 {offsets = [0, 64], sizes = [2, 32], strides = [1, 1]} : vector<2x128xf32> to vector<2x32xf32>
    %326 = vector.extract_strided_slice %321 {offsets = [0, 96], sizes = [2, 32], strides = [1, 1]} : vector<2x128xf32> to vector<2x32xf32>
    %327 = arith.mulf %324, %279 : vector<2x32xf32>
    %328 = arith.mulf %323, %325 : vector<2x32xf32>
    %329 = arith.addf %327, %328 : vector<2x32xf32>
    %330 = math.tanh %329 : vector<2x32xf32>
    %331 = arith.mulf %326, %330 : vector<2x32xf32>
    %c1_135 = arith.constant 1 : index
    %c0_136 = arith.constant 0 : index
    %c0_137 = arith.constant 0 : index
    %332 = vector.load %arg4[%c1_135, %c0_136, %c0_137] : memref<2x32x128xf32, #tpu.memory_space<vmem>>, vector<1x32x128xf32>
    %333 = vector.shape_cast %332 : vector<1x32x128xf32> to vector<32x128xf32>
    %cst_138 = arith.constant dense<0.000000e+00> : vector<2x128xf32>
    %334 = tpu.matmul %331, %333, %cst_138 {dimension_numbers = #tpu.dot_dimension_numbers<[1], [0], [0], [1], [0, 0, 1, 1], [], []>} : vector<2x32xf32>, vector<32x128xf32>, vector<2x128xf32> -> vector<2x128xf32>
    %c1_139 = arith.constant 1 : index
    %c0_140 = arith.constant 0 : index
    %c0_141 = arith.constant 0 : index
    %335 = vector.load %arg5[%c1_139, %c0_140, %c0_141] : memref<2x32x128xf32, #tpu.memory_space<vmem>>, vector<1x32x128xf32>
    %336 = vector.shape_cast %335 : vector<1x32x128xf32> to vector<32x128xf32>
    %c1_142 = arith.constant 1 : index
    %c0_143 = arith.constant 0 : index
    %c0_144 = arith.constant 0 : index
    %337 = vector.load %arg6[%c1_142, %c0_143, %c0_144] : memref<2x1x128xf32, #tpu.memory_space<vmem>>, vector<1x1x128xf32>
    %338 = vector.shape_cast %337 : vector<1x1x128xf32> to vector<1x128xf32>
    %cst_145 = arith.constant dense<0.000000e+00> : vector<2x128xf32>
    %339 = tpu.matmul %307, %336, %cst_145 {dimension_numbers = #tpu.dot_dimension_numbers<[1], [0], [0], [1], [0, 0, 1, 1], [], []>} : vector<2x32xf32>, vector<32x128xf32>, vector<2x128xf32> -> vector<2x128xf32>
    %340 = arith.addf %334, %339 : vector<2x128xf32>
    %341 = vector.broadcast %338 : vector<1x128xf32> to vector<2x128xf32>
    %342 = arith.addf %340, %341 : vector<2x128xf32>
    %343 = arith.negf %342 : vector<2x128xf32>
    %344 = math.exp %343 : vector<2x128xf32>
    %cst_146 = arith.constant 1.000000e+00 : f32
    %345 = vector.broadcast %cst_146 : f32 to vector<2x128xf32>
    %346 = arith.addf %345, %344 : vector<2x128xf32>
    %347 = arith.divf %345, %346 : vector<2x128xf32>
    %348 = math.tanh %342 : vector<2x128xf32>
    %349 = vector.extract_strided_slice %347 {offsets = [0, 0], sizes = [2, 32], strides = [1, 1]} : vector<2x128xf32> to vector<2x32xf32>
    %350 = vector.extract_strided_slice %347 {offsets = [0, 32], sizes = [2, 32], strides = [1, 1]} : vector<2x128xf32> to vector<2x32xf32>
    %351 = vector.extract_strided_slice %348 {offsets = [0, 64], sizes = [2, 32], strides = [1, 1]} : vector<2x128xf32> to vector<2x32xf32>
    %352 = vector.extract_strided_slice %347 {offsets = [0, 96], sizes = [2, 32], strides = [1, 1]} : vector<2x128xf32> to vector<2x32xf32>
    %353 = arith.mulf %350, %305 : vector<2x32xf32>
    %354 = arith.mulf %349, %351 : vector<2x32xf32>
    %355 = arith.addf %353, %354 : vector<2x32xf32>
    %356 = math.tanh %355 : vector<2x32xf32>
    %357 = arith.mulf %352, %356 : vector<2x32xf32>
    %358 = vector.extract_strided_slice %3 {offsets = [14, 0], sizes = [2, 128], strides = [1, 1]} : vector<16x128xf32> to vector<2x128xf32>
    %c0_147 = arith.constant 0 : index
    %c0_148 = arith.constant 0 : index
    %c0_149 = arith.constant 0 : index
    %359 = vector.load %arg5[%c0_147, %c0_148, %c0_149] : memref<2x32x128xf32, #tpu.memory_space<vmem>>, vector<1x32x128xf32>
    %360 = vector.shape_cast %359 : vector<1x32x128xf32> to vector<32x128xf32>
    %c0_150 = arith.constant 0 : index
    %c0_151 = arith.constant 0 : index
    %c0_152 = arith.constant 0 : index
    %361 = vector.load %arg6[%c0_150, %c0_151, %c0_152] : memref<2x1x128xf32, #tpu.memory_space<vmem>>, vector<1x1x128xf32>
    %362 = vector.shape_cast %361 : vector<1x1x128xf32> to vector<1x128xf32>
    %cst_153 = arith.constant dense<0.000000e+00> : vector<2x128xf32>
    %363 = tpu.matmul %331, %360, %cst_153 {dimension_numbers = #tpu.dot_dimension_numbers<[1], [0], [0], [1], [0, 0, 1, 1], [], []>} : vector<2x32xf32>, vector<32x128xf32>, vector<2x128xf32> -> vector<2x128xf32>
    %364 = arith.addf %358, %363 : vector<2x128xf32>
    %365 = vector.broadcast %362 : vector<1x128xf32> to vector<2x128xf32>
    %366 = arith.addf %364, %365 : vector<2x128xf32>
    %367 = arith.negf %366 : vector<2x128xf32>
    %368 = math.exp %367 : vector<2x128xf32>
    %cst_154 = arith.constant 1.000000e+00 : f32
    %369 = vector.broadcast %cst_154 : f32 to vector<2x128xf32>
    %370 = arith.addf %369, %368 : vector<2x128xf32>
    %371 = arith.divf %369, %370 : vector<2x128xf32>
    %372 = math.tanh %366 : vector<2x128xf32>
    %373 = vector.extract_strided_slice %371 {offsets = [0, 0], sizes = [2, 32], strides = [1, 1]} : vector<2x128xf32> to vector<2x32xf32>
    %374 = vector.extract_strided_slice %371 {offsets = [0, 32], sizes = [2, 32], strides = [1, 1]} : vector<2x128xf32> to vector<2x32xf32>
    %375 = vector.extract_strided_slice %372 {offsets = [0, 64], sizes = [2, 32], strides = [1, 1]} : vector<2x128xf32> to vector<2x32xf32>
    %376 = vector.extract_strided_slice %371 {offsets = [0, 96], sizes = [2, 32], strides = [1, 1]} : vector<2x128xf32> to vector<2x32xf32>
    %377 = arith.mulf %374, %329 : vector<2x32xf32>
    %378 = arith.mulf %373, %375 : vector<2x32xf32>
    %379 = arith.addf %377, %378 : vector<2x32xf32>
    %380 = math.tanh %379 : vector<2x32xf32>
    %381 = arith.mulf %376, %380 : vector<2x32xf32>
    %c1_155 = arith.constant 1 : index
    %c0_156 = arith.constant 0 : index
    %c0_157 = arith.constant 0 : index
    %382 = vector.load %arg4[%c1_155, %c0_156, %c0_157] : memref<2x32x128xf32, #tpu.memory_space<vmem>>, vector<1x32x128xf32>
    %383 = vector.shape_cast %382 : vector<1x32x128xf32> to vector<32x128xf32>
    %cst_158 = arith.constant dense<0.000000e+00> : vector<2x128xf32>
    %384 = tpu.matmul %381, %383, %cst_158 {dimension_numbers = #tpu.dot_dimension_numbers<[1], [0], [0], [1], [0, 0, 1, 1], [], []>} : vector<2x32xf32>, vector<32x128xf32>, vector<2x128xf32> -> vector<2x128xf32>
    %c1_159 = arith.constant 1 : index
    %c0_160 = arith.constant 0 : index
    %c0_161 = arith.constant 0 : index
    %385 = vector.load %arg5[%c1_159, %c0_160, %c0_161] : memref<2x32x128xf32, #tpu.memory_space<vmem>>, vector<1x32x128xf32>
    %386 = vector.shape_cast %385 : vector<1x32x128xf32> to vector<32x128xf32>
    %c1_162 = arith.constant 1 : index
    %c0_163 = arith.constant 0 : index
    %c0_164 = arith.constant 0 : index
    %387 = vector.load %arg6[%c1_162, %c0_163, %c0_164] : memref<2x1x128xf32, #tpu.memory_space<vmem>>, vector<1x1x128xf32>
    %388 = vector.shape_cast %387 : vector<1x1x128xf32> to vector<1x128xf32>
    %cst_165 = arith.constant dense<0.000000e+00> : vector<2x128xf32>
    %389 = tpu.matmul %357, %386, %cst_165 {dimension_numbers = #tpu.dot_dimension_numbers<[1], [0], [0], [1], [0, 0, 1, 1], [], []>} : vector<2x32xf32>, vector<32x128xf32>, vector<2x128xf32> -> vector<2x128xf32>
    %390 = arith.addf %384, %389 : vector<2x128xf32>
    %391 = vector.broadcast %388 : vector<1x128xf32> to vector<2x128xf32>
    %392 = arith.addf %390, %391 : vector<2x128xf32>
    %393 = arith.negf %392 : vector<2x128xf32>
    %394 = math.exp %393 : vector<2x128xf32>
    %cst_166 = arith.constant 1.000000e+00 : f32
    %395 = vector.broadcast %cst_166 : f32 to vector<2x128xf32>
    %396 = arith.addf %395, %394 : vector<2x128xf32>
    %397 = arith.divf %395, %396 : vector<2x128xf32>
    %398 = math.tanh %392 : vector<2x128xf32>
    %399 = vector.extract_strided_slice %397 {offsets = [0, 0], sizes = [2, 32], strides = [1, 1]} : vector<2x128xf32> to vector<2x32xf32>
    %400 = vector.extract_strided_slice %397 {offsets = [0, 32], sizes = [2, 32], strides = [1, 1]} : vector<2x128xf32> to vector<2x32xf32>
    %401 = vector.extract_strided_slice %398 {offsets = [0, 64], sizes = [2, 32], strides = [1, 1]} : vector<2x128xf32> to vector<2x32xf32>
    %402 = vector.extract_strided_slice %397 {offsets = [0, 96], sizes = [2, 32], strides = [1, 1]} : vector<2x128xf32> to vector<2x32xf32>
    %403 = arith.mulf %400, %355 : vector<2x32xf32>
    %404 = arith.mulf %399, %401 : vector<2x32xf32>
    %405 = arith.addf %403, %404 : vector<2x32xf32>
    %406 = math.tanh %405 : vector<2x32xf32>
    %407 = arith.mulf %402, %406 : vector<2x32xf32>
    %c0_167 = arith.constant 0 : index
    %c0_168 = arith.constant 0 : index
    %408 = vector.load %arg3[%c0_167, %c0_168] : memref<16x32xf32, #tpu.memory_space<vmem>>, vector<16x32xf32>
    %c0_169 = arith.constant 0 : index
    %c0_170 = arith.constant 0 : index
    %c0_171 = arith.constant 0 : index
    %409 = vector.load %arg7[%c0_169, %c0_170, %c0_171] : memref<2x32x128xf32, #tpu.memory_space<vmem>>, vector<1x32x128xf32>
    %410 = vector.shape_cast %409 : vector<1x32x128xf32> to vector<32x128xf32>
    %cst_172 = arith.constant dense<0.000000e+00> : vector<16x128xf32>
    %411 = tpu.matmul %408, %410, %cst_172 {dimension_numbers = #tpu.dot_dimension_numbers<[1], [0], [0], [1], [0, 0, 1, 1], [], []>} : vector<16x32xf32>, vector<32x128xf32>, vector<16x128xf32> -> vector<16x128xf32>
    %c0_173 = arith.constant 0 : index
    %c0_174 = arith.constant 0 : index
    %412 = vector.load %arg10[%c0_173, %c0_174] : memref<128x32xf32, #tpu.memory_space<vmem>>, vector<128x32xf32>
    %c0_175 = arith.constant 0 : index
    %c0_176 = arith.constant 0 : index
    %c0_177 = arith.constant 0 : index
    %413 = vector.load %arg7[%c0_175, %c0_176, %c0_177] : memref<2x32x128xf32, #tpu.memory_space<vmem>>, vector<1x32x128xf32>
    %414 = vector.shape_cast %413 : vector<1x32x128xf32> to vector<32x128xf32>
    %cst_178 = arith.constant dense<0.000000e+00> : vector<128x128xf32>
    %415 = tpu.matmul %412, %414, %cst_178 {dimension_numbers = #tpu.dot_dimension_numbers<[1], [0], [0], [1], [0, 0, 1, 1], [], []>} : vector<128x32xf32>, vector<32x128xf32>, vector<128x128xf32> -> vector<128x128xf32>
    %c0_179 = arith.constant 0 : index
    %c0_180 = arith.constant 0 : index
    %416 = vector.load %arg11[%c0_179, %c0_180] : memref<32x128xf32, #tpu.memory_space<vmem>>, vector<32x128xf32>
    %417 = tpu.iota {dimensions = array<i32: 1>} : vector<2x128xi32>
    %418 = arith.sitofp %417 : vector<2x128xi32> to vector<2x128xf32>
    %c19_i32 = arith.constant 19 : i32
    %419 = vector.broadcast %c19_i32 : i32 to vector<2x128xi32>
    %420 = arith.cmpi slt, %417, %419 : vector<2x128xi32>
    %421 = vector.extract_strided_slice %411 {offsets = [0, 0], sizes = [2, 128], strides = [1, 1]} : vector<16x128xf32> to vector<2x128xf32>
    %c0_181 = arith.constant 0 : index
    %c0_182 = arith.constant 0 : index
    %c0_183 = arith.constant 0 : index
    %422 = vector.load %arg8[%c0_181, %c0_182, %c0_183] : memref<2x32x128xf32, #tpu.memory_space<vmem>>, vector<1x32x128xf32>
    %423 = vector.shape_cast %422 : vector<1x32x128xf32> to vector<32x128xf32>
    %c0_184 = arith.constant 0 : index
    %c0_185 = arith.constant 0 : index
    %c0_186 = arith.constant 0 : index
    %424 = vector.load %arg9[%c0_184, %c0_185, %c0_186] : memref<2x1x128xf32, #tpu.memory_space<vmem>>, vector<1x1x128xf32>
    %425 = vector.shape_cast %424 : vector<1x1x128xf32> to vector<1x128xf32>
    %cst_187 = arith.constant dense<0.000000e+00> : vector<2x128xf32>
    %426 = tpu.matmul %381, %423, %cst_187 {dimension_numbers = #tpu.dot_dimension_numbers<[1], [0], [0], [1], [0, 0, 1, 1], [], []>} : vector<2x32xf32>, vector<32x128xf32>, vector<2x128xf32> -> vector<2x128xf32>
    %427 = arith.addf %421, %426 : vector<2x128xf32>
    %428 = vector.broadcast %425 : vector<1x128xf32> to vector<2x128xf32>
    %429 = arith.addf %427, %428 : vector<2x128xf32>
    %430 = arith.negf %429 : vector<2x128xf32>
    %431 = math.exp %430 : vector<2x128xf32>
    %cst_188 = arith.constant 1.000000e+00 : f32
    %432 = vector.broadcast %cst_188 : f32 to vector<2x128xf32>
    %433 = arith.addf %432, %431 : vector<2x128xf32>
    %434 = arith.divf %432, %433 : vector<2x128xf32>
    %435 = math.tanh %429 : vector<2x128xf32>
    %436 = vector.extract_strided_slice %434 {offsets = [0, 0], sizes = [2, 32], strides = [1, 1]} : vector<2x128xf32> to vector<2x32xf32>
    %437 = vector.extract_strided_slice %434 {offsets = [0, 32], sizes = [2, 32], strides = [1, 1]} : vector<2x128xf32> to vector<2x32xf32>
    %438 = vector.extract_strided_slice %435 {offsets = [0, 64], sizes = [2, 32], strides = [1, 1]} : vector<2x128xf32> to vector<2x32xf32>
    %439 = vector.extract_strided_slice %434 {offsets = [0, 96], sizes = [2, 32], strides = [1, 1]} : vector<2x128xf32> to vector<2x32xf32>
    %440 = arith.mulf %437, %379 : vector<2x32xf32>
    %441 = arith.mulf %436, %438 : vector<2x32xf32>
    %442 = arith.addf %440, %441 : vector<2x32xf32>
    %443 = math.tanh %442 : vector<2x32xf32>
    %444 = arith.mulf %439, %443 : vector<2x32xf32>
    %c1_189 = arith.constant 1 : index
    %c0_190 = arith.constant 0 : index
    %c0_191 = arith.constant 0 : index
    %445 = vector.load %arg7[%c1_189, %c0_190, %c0_191] : memref<2x32x128xf32, #tpu.memory_space<vmem>>, vector<1x32x128xf32>
    %446 = vector.shape_cast %445 : vector<1x32x128xf32> to vector<32x128xf32>
    %cst_192 = arith.constant dense<0.000000e+00> : vector<2x128xf32>
    %447 = tpu.matmul %444, %446, %cst_192 {dimension_numbers = #tpu.dot_dimension_numbers<[1], [0], [0], [1], [0, 0, 1, 1], [], []>} : vector<2x32xf32>, vector<32x128xf32>, vector<2x128xf32> -> vector<2x128xf32>
    %c1_193 = arith.constant 1 : index
    %c0_194 = arith.constant 0 : index
    %c0_195 = arith.constant 0 : index
    %448 = vector.load %arg8[%c1_193, %c0_194, %c0_195] : memref<2x32x128xf32, #tpu.memory_space<vmem>>, vector<1x32x128xf32>
    %449 = vector.shape_cast %448 : vector<1x32x128xf32> to vector<32x128xf32>
    %c1_196 = arith.constant 1 : index
    %c0_197 = arith.constant 0 : index
    %c0_198 = arith.constant 0 : index
    %450 = vector.load %arg9[%c1_196, %c0_197, %c0_198] : memref<2x1x128xf32, #tpu.memory_space<vmem>>, vector<1x1x128xf32>
    %451 = vector.shape_cast %450 : vector<1x1x128xf32> to vector<1x128xf32>
    %cst_199 = arith.constant dense<0.000000e+00> : vector<2x128xf32>
    %452 = tpu.matmul %407, %449, %cst_199 {dimension_numbers = #tpu.dot_dimension_numbers<[1], [0], [0], [1], [0, 0, 1, 1], [], []>} : vector<2x32xf32>, vector<32x128xf32>, vector<2x128xf32> -> vector<2x128xf32>
    %453 = arith.addf %447, %452 : vector<2x128xf32>
    %454 = vector.broadcast %451 : vector<1x128xf32> to vector<2x128xf32>
    %455 = arith.addf %453, %454 : vector<2x128xf32>
    %456 = arith.negf %455 : vector<2x128xf32>
    %457 = math.exp %456 : vector<2x128xf32>
    %cst_200 = arith.constant 1.000000e+00 : f32
    %458 = vector.broadcast %cst_200 : f32 to vector<2x128xf32>
    %459 = arith.addf %458, %457 : vector<2x128xf32>
    %460 = arith.divf %458, %459 : vector<2x128xf32>
    %461 = math.tanh %455 : vector<2x128xf32>
    %462 = vector.extract_strided_slice %460 {offsets = [0, 0], sizes = [2, 32], strides = [1, 1]} : vector<2x128xf32> to vector<2x32xf32>
    %463 = vector.extract_strided_slice %460 {offsets = [0, 32], sizes = [2, 32], strides = [1, 1]} : vector<2x128xf32> to vector<2x32xf32>
    %464 = vector.extract_strided_slice %461 {offsets = [0, 64], sizes = [2, 32], strides = [1, 1]} : vector<2x128xf32> to vector<2x32xf32>
    %465 = vector.extract_strided_slice %460 {offsets = [0, 96], sizes = [2, 32], strides = [1, 1]} : vector<2x128xf32> to vector<2x32xf32>
    %466 = arith.mulf %463, %405 : vector<2x32xf32>
    %467 = arith.mulf %462, %464 : vector<2x32xf32>
    %468 = arith.addf %466, %467 : vector<2x32xf32>
    %469 = math.tanh %468 : vector<2x32xf32>
    %470 = arith.mulf %465, %469 : vector<2x32xf32>
    %cst_201 = arith.constant dense<0.000000e+00> : vector<2x128xf32>
    %471 = tpu.matmul %470, %416, %cst_201 {dimension_numbers = #tpu.dot_dimension_numbers<[1], [0], [0], [1], [0, 0, 1, 1], [], []>} : vector<2x32xf32>, vector<32x128xf32>, vector<2x128xf32> -> vector<2x128xf32>
    %472 = vector.shape_cast %471 : vector<2x128xf32> to vector<2x1x128xf32>
    %c0_202 = arith.constant 0 : index
    %c0_203 = arith.constant 0 : index
    %c0_204 = arith.constant 0 : index
    %473 = vector.load %arg12[%c0_202, %c0_203, %c0_204] : memref<2x8x128xf32, #tpu.memory_space<vmem>>, vector<2x1x128xf32>
    tpu.vector_store %arg12[%c0_202, %c0_203, %c0_204], %472 {strides = array<i32>} : memref<2x8x128xf32, #tpu.memory_space<vmem>>, vector<2x1x128xf32>,
    %cst_205 = arith.constant -1.000000e+30 : f32
    %474 = vector.broadcast %cst_205 : f32 to vector<2x128xf32>
    %475 = arith.select %420, %471, %474 : vector<2x128xi1>, vector<2x128xf32>
    %cst_206 = arith.constant dense<0xFF800000> : vector<2xf32>
    %476 = vector.multi_reduction <maximumf>, %475, %cst_206 [1] : vector<2x128xf32> to vector<2xf32>
    %477 = vector.shape_cast %476 : vector<2xf32> to vector<2x1xf32>
    %478 = vector.broadcast %477 : vector<2x1xf32> to vector<2x128xf32>
    %479 = arith.cmpf oeq, %475, %478 : vector<2x128xf32>
    %cst_207 = arith.constant 1.280000e+02 : f32
    %480 = vector.broadcast %cst_207 : f32 to vector<2x128xf32>
    %481 = arith.select %479, %418, %480 : vector<2x128xi1>, vector<2x128xf32>
    %cst_208 = arith.constant dense<0x7F800000> : vector<2xf32>
    %482 = vector.multi_reduction <minimumf>, %481, %cst_208 [1] : vector<2x128xf32> to vector<2xf32>
    %483 = vector.shape_cast %482 : vector<2xf32> to vector<2x1xf32>
    %484 = vector.broadcast %483 : vector<2x1xf32> to vector<2x128xf32>
    %485 = arith.cmpf oeq, %418, %484 : vector<2x128xf32>
    %486 = arith.extui %485 : vector<2x128xi1> to vector<2x128xi32>
    %487 = arith.sitofp %486 : vector<2x128xi32> to vector<2x128xf32>
    %cst_209 = arith.constant dense<0.000000e+00> : vector<2x128xf32>
    %488 = tpu.matmul %487, %415, %cst_209 {dimension_numbers = #tpu.dot_dimension_numbers<[1], [0], [0], [1], [0, 0, 1, 1], [], []>} : vector<2x128xf32>, vector<128x128xf32>, vector<2x128xf32> -> vector<2x128xf32>
    %489 = vector.extract_strided_slice %411 {offsets = [2, 0], sizes = [2, 128], strides = [1, 1]} : vector<16x128xf32> to vector<2x128xf32>
    %c0_210 = arith.constant 0 : index
    %490 = memref.load %arg1[%c0_210] : memref<8xi32, #tpu.memory_space<smem>>
    %c0_i32 = arith.constant 0 : i32
    %491 = arith.cmpi sgt, %490, %c0_i32 : i32
    %492 = arith.extui %491 : i1 to i32
    %493 = arith.sitofp %492 : i32 to f32
    %494 = vector.broadcast %493 : f32 to vector<2x128xf32>
    %495 = arith.mulf %494, %489 : vector<2x128xf32>
    %cst_211 = arith.constant 1.000000e+00 : f32
    %496 = arith.subf %cst_211, %493 : f32
    %497 = vector.broadcast %496 : f32 to vector<2x128xf32>
    %498 = arith.mulf %497, %488 : vector<2x128xf32>
    %499 = arith.addf %495, %498 : vector<2x128xf32>
    %c0_212 = arith.constant 0 : index
    %c0_213 = arith.constant 0 : index
    %c0_214 = arith.constant 0 : index
    %500 = vector.load %arg8[%c0_212, %c0_213, %c0_214] : memref<2x32x128xf32, #tpu.memory_space<vmem>>, vector<1x32x128xf32>
    %501 = vector.shape_cast %500 : vector<1x32x128xf32> to vector<32x128xf32>
    %c0_215 = arith.constant 0 : index
    %c0_216 = arith.constant 0 : index
    %c0_217 = arith.constant 0 : index
    %502 = vector.load %arg9[%c0_215, %c0_216, %c0_217] : memref<2x1x128xf32, #tpu.memory_space<vmem>>, vector<1x1x128xf32>
    %503 = vector.shape_cast %502 : vector<1x1x128xf32> to vector<1x128xf32>
    %cst_218 = arith.constant dense<0.000000e+00> : vector<2x128xf32>
    %504 = tpu.matmul %444, %501, %cst_218 {dimension_numbers = #tpu.dot_dimension_numbers<[1], [0], [0], [1], [0, 0, 1, 1], [], []>} : vector<2x32xf32>, vector<32x128xf32>, vector<2x128xf32> -> vector<2x128xf32>
    %505 = arith.addf %499, %504 : vector<2x128xf32>
    %506 = vector.broadcast %503 : vector<1x128xf32> to vector<2x128xf32>
    %507 = arith.addf %505, %506 : vector<2x128xf32>
    %508 = arith.negf %507 : vector<2x128xf32>
    %509 = math.exp %508 : vector<2x128xf32>
    %cst_219 = arith.constant 1.000000e+00 : f32
    %510 = vector.broadcast %cst_219 : f32 to vector<2x128xf32>
    %511 = arith.addf %510, %509 : vector<2x128xf32>
    %512 = arith.divf %510, %511 : vector<2x128xf32>
    %513 = math.tanh %507 : vector<2x128xf32>
    %514 = vector.extract_strided_slice %512 {offsets = [0, 0], sizes = [2, 32], strides = [1, 1]} : vector<2x128xf32> to vector<2x32xf32>
    %515 = vector.extract_strided_slice %512 {offsets = [0, 32], sizes = [2, 32], strides = [1, 1]} : vector<2x128xf32> to vector<2x32xf32>
    %516 = vector.extract_strided_slice %513 {offsets = [0, 64], sizes = [2, 32], strides = [1, 1]} : vector<2x128xf32> to vector<2x32xf32>
    %517 = vector.extract_strided_slice %512 {offsets = [0, 96], sizes = [2, 32], strides = [1, 1]} : vector<2x128xf32> to vector<2x32xf32>
    %518 = arith.mulf %515, %442 : vector<2x32xf32>
    %519 = arith.mulf %514, %516 : vector<2x32xf32>
    %520 = arith.addf %518, %519 : vector<2x32xf32>
    %521 = math.tanh %520 : vector<2x32xf32>
    %522 = arith.mulf %517, %521 : vector<2x32xf32>
    %c1_220 = arith.constant 1 : index
    %c0_221 = arith.constant 0 : index
    %c0_222 = arith.constant 0 : index
    %523 = vector.load %arg7[%c1_220, %c0_221, %c0_222] : memref<2x32x128xf32, #tpu.memory_space<vmem>>, vector<1x32x128xf32>
    %524 = vector.shape_cast %523 : vector<1x32x128xf32> to vector<32x128xf32>
    %cst_223 = arith.constant dense<0.000000e+00> : vector<2x128xf32>
    %525 = tpu.matmul %522, %524, %cst_223 {dimension_numbers = #tpu.dot_dimension_numbers<[1], [0], [0], [1], [0, 0, 1, 1], [], []>} : vector<2x32xf32>, vector<32x128xf32>, vector<2x128xf32> -> vector<2x128xf32>
    %c1_224 = arith.constant 1 : index
    %c0_225 = arith.constant 0 : index
    %c0_226 = arith.constant 0 : index
    %526 = vector.load %arg8[%c1_224, %c0_225, %c0_226] : memref<2x32x128xf32, #tpu.memory_space<vmem>>, vector<1x32x128xf32>
    %527 = vector.shape_cast %526 : vector<1x32x128xf32> to vector<32x128xf32>
    %c1_227 = arith.constant 1 : index
    %c0_228 = arith.constant 0 : index
    %c0_229 = arith.constant 0 : index
    %528 = vector.load %arg9[%c1_227, %c0_228, %c0_229] : memref<2x1x128xf32, #tpu.memory_space<vmem>>, vector<1x1x128xf32>
    %529 = vector.shape_cast %528 : vector<1x1x128xf32> to vector<1x128xf32>
    %cst_230 = arith.constant dense<0.000000e+00> : vector<2x128xf32>
    %530 = tpu.matmul %470, %527, %cst_230 {dimension_numbers = #tpu.dot_dimension_numbers<[1], [0], [0], [1], [0, 0, 1, 1], [], []>} : vector<2x32xf32>, vector<32x128xf32>, vector<2x128xf32> -> vector<2x128xf32>
    %531 = arith.addf %525, %530 : vector<2x128xf32>
    %532 = vector.broadcast %529 : vector<1x128xf32> to vector<2x128xf32>
    %533 = arith.addf %531, %532 : vector<2x128xf32>
    %534 = arith.negf %533 : vector<2x128xf32>
    %535 = math.exp %534 : vector<2x128xf32>
    %cst_231 = arith.constant 1.000000e+00 : f32
    %536 = vector.broadcast %cst_231 : f32 to vector<2x128xf32>
    %537 = arith.addf %536, %535 : vector<2x128xf32>
    %538 = arith.divf %536, %537 : vector<2x128xf32>
    %539 = math.tanh %533 : vector<2x128xf32>
    %540 = vector.extract_strided_slice %538 {offsets = [0, 0], sizes = [2, 32], strides = [1, 1]} : vector<2x128xf32> to vector<2x32xf32>
    %541 = vector.extract_strided_slice %538 {offsets = [0, 32], sizes = [2, 32], strides = [1, 1]} : vector<2x128xf32> to vector<2x32xf32>
    %542 = vector.extract_strided_slice %539 {offsets = [0, 64], sizes = [2, 32], strides = [1, 1]} : vector<2x128xf32> to vector<2x32xf32>
    %543 = vector.extract_strided_slice %538 {offsets = [0, 96], sizes = [2, 32], strides = [1, 1]} : vector<2x128xf32> to vector<2x32xf32>
    %544 = arith.mulf %541, %468 : vector<2x32xf32>
    %545 = arith.mulf %540, %542 : vector<2x32xf32>
    %546 = arith.addf %544, %545 : vector<2x32xf32>
    %547 = math.tanh %546 : vector<2x32xf32>
    %548 = arith.mulf %543, %547 : vector<2x32xf32>
    %cst_232 = arith.constant dense<0.000000e+00> : vector<2x128xf32>
    %549 = tpu.matmul %548, %416, %cst_232 {dimension_numbers = #tpu.dot_dimension_numbers<[1], [0], [0], [1], [0, 0, 1, 1], [], []>} : vector<2x32xf32>, vector<32x128xf32>, vector<2x128xf32> -> vector<2x128xf32>
    %550 = vector.shape_cast %549 : vector<2x128xf32> to vector<2x1x128xf32>
    %c0_233 = arith.constant 0 : index
    %c1_234 = arith.constant 1 : index
    %c0_235 = arith.constant 0 : index
    %551 = vector.load %arg12[%c0_233, %c1_234, %c0_235] : memref<2x8x128xf32, #tpu.memory_space<vmem>>, vector<2x1x128xf32>
    tpu.vector_store %arg12[%c0_233, %c1_234, %c0_235], %550 {strides = array<i32>} : memref<2x8x128xf32, #tpu.memory_space<vmem>>, vector<2x1x128xf32>,
    %cst_236 = arith.constant -1.000000e+30 : f32
    %552 = vector.broadcast %cst_236 : f32 to vector<2x128xf32>
    %553 = arith.select %420, %549, %552 : vector<2x128xi1>, vector<2x128xf32>
    %cst_237 = arith.constant dense<0xFF800000> : vector<2xf32>
    %554 = vector.multi_reduction <maximumf>, %553, %cst_237 [1] : vector<2x128xf32> to vector<2xf32>
    %555 = vector.shape_cast %554 : vector<2xf32> to vector<2x1xf32>
    %556 = vector.broadcast %555 : vector<2x1xf32> to vector<2x128xf32>
    %557 = arith.cmpf oeq, %553, %556 : vector<2x128xf32>
    %cst_238 = arith.constant 1.280000e+02 : f32
    %558 = vector.broadcast %cst_238 : f32 to vector<2x128xf32>
    %559 = arith.select %557, %418, %558 : vector<2x128xi1>, vector<2x128xf32>
    %cst_239 = arith.constant dense<0x7F800000> : vector<2xf32>
    %560 = vector.multi_reduction <minimumf>, %559, %cst_239 [1] : vector<2x128xf32> to vector<2xf32>
    %561 = vector.shape_cast %560 : vector<2xf32> to vector<2x1xf32>
    %562 = vector.broadcast %561 : vector<2x1xf32> to vector<2x128xf32>
    %563 = arith.cmpf oeq, %418, %562 : vector<2x128xf32>
    %564 = arith.extui %563 : vector<2x128xi1> to vector<2x128xi32>
    %565 = arith.sitofp %564 : vector<2x128xi32> to vector<2x128xf32>
    %cst_240 = arith.constant dense<0.000000e+00> : vector<2x128xf32>
    %566 = tpu.matmul %565, %415, %cst_240 {dimension_numbers = #tpu.dot_dimension_numbers<[1], [0], [0], [1], [0, 0, 1, 1], [], []>} : vector<2x128xf32>, vector<128x128xf32>, vector<2x128xf32> -> vector<2x128xf32>
    %567 = vector.extract_strided_slice %411 {offsets = [4, 0], sizes = [2, 128], strides = [1, 1]} : vector<16x128xf32> to vector<2x128xf32>
    %c1_241 = arith.constant 1 : index
    %568 = memref.load %arg1[%c1_241] : memref<8xi32, #tpu.memory_space<smem>>
    %c0_i32_242 = arith.constant 0 : i32
    %569 = arith.cmpi sgt, %568, %c0_i32_242 : i32
    %570 = arith.extui %569 : i1 to i32
    %571 = arith.sitofp %570 : i32 to f32
    %572 = vector.broadcast %571 : f32 to vector<2x128xf32>
    %573 = arith.mulf %572, %567 : vector<2x128xf32>
    %cst_243 = arith.constant 1.000000e+00 : f32
    %574 = arith.subf %cst_243, %571 : f32
    %575 = vector.broadcast %574 : f32 to vector<2x128xf32>
    %576 = arith.mulf %575, %566 : vector<2x128xf32>
    %577 = arith.addf %573, %576 : vector<2x128xf32>
    %c0_244 = arith.constant 0 : index
    %c0_245 = arith.constant 0 : index
    %c0_246 = arith.constant 0 : index
    %578 = vector.load %arg8[%c0_244, %c0_245, %c0_246] : memref<2x32x128xf32, #tpu.memory_space<vmem>>, vector<1x32x128xf32>
    %579 = vector.shape_cast %578 : vector<1x32x128xf32> to vector<32x128xf32>
    %c0_247 = arith.constant 0 : index
    %c0_248 = arith.constant 0 : index
    %c0_249 = arith.constant 0 : index
    %580 = vector.load %arg9[%c0_247, %c0_248, %c0_249] : memref<2x1x128xf32, #tpu.memory_space<vmem>>, vector<1x1x128xf32>
    %581 = vector.shape_cast %580 : vector<1x1x128xf32> to vector<1x128xf32>
    %cst_250 = arith.constant dense<0.000000e+00> : vector<2x128xf32>
    %582 = tpu.matmul %522, %579, %cst_250 {dimension_numbers = #tpu.dot_dimension_numbers<[1], [0], [0], [1], [0, 0, 1, 1], [], []>} : vector<2x32xf32>, vector<32x128xf32>, vector<2x128xf32> -> vector<2x128xf32>
    %583 = arith.addf %577, %582 : vector<2x128xf32>
    %584 = vector.broadcast %581 : vector<1x128xf32> to vector<2x128xf32>
    %585 = arith.addf %583, %584 : vector<2x128xf32>
    %586 = arith.negf %585 : vector<2x128xf32>
    %587 = math.exp %586 : vector<2x128xf32>
    %cst_251 = arith.constant 1.000000e+00 : f32
    %588 = vector.broadcast %cst_251 : f32 to vector<2x128xf32>
    %589 = arith.addf %588, %587 : vector<2x128xf32>
    %590 = arith.divf %588, %589 : vector<2x128xf32>
    %591 = math.tanh %585 : vector<2x128xf32>
    %592 = vector.extract_strided_slice %590 {offsets = [0, 0], sizes = [2, 32], strides = [1, 1]} : vector<2x128xf32> to vector<2x32xf32>
    %593 = vector.extract_strided_slice %590 {offsets = [0, 32], sizes = [2, 32], strides = [1, 1]} : vector<2x128xf32> to vector<2x32xf32>
    %594 = vector.extract_strided_slice %591 {offsets = [0, 64], sizes = [2, 32], strides = [1, 1]} : vector<2x128xf32> to vector<2x32xf32>
    %595 = vector.extract_strided_slice %590 {offsets = [0, 96], sizes = [2, 32], strides = [1, 1]} : vector<2x128xf32> to vector<2x32xf32>
    %596 = arith.mulf %593, %520 : vector<2x32xf32>
    %597 = arith.mulf %592, %594 : vector<2x32xf32>
    %598 = arith.addf %596, %597 : vector<2x32xf32>
    %599 = math.tanh %598 : vector<2x32xf32>
    %600 = arith.mulf %595, %599 : vector<2x32xf32>
    %c1_252 = arith.constant 1 : index
    %c0_253 = arith.constant 0 : index
    %c0_254 = arith.constant 0 : index
    %601 = vector.load %arg7[%c1_252, %c0_253, %c0_254] : memref<2x32x128xf32, #tpu.memory_space<vmem>>, vector<1x32x128xf32>
    %602 = vector.shape_cast %601 : vector<1x32x128xf32> to vector<32x128xf32>
    %cst_255 = arith.constant dense<0.000000e+00> : vector<2x128xf32>
    %603 = tpu.matmul %600, %602, %cst_255 {dimension_numbers = #tpu.dot_dimension_numbers<[1], [0], [0], [1], [0, 0, 1, 1], [], []>} : vector<2x32xf32>, vector<32x128xf32>, vector<2x128xf32> -> vector<2x128xf32>
    %c1_256 = arith.constant 1 : index
    %c0_257 = arith.constant 0 : index
    %c0_258 = arith.constant 0 : index
    %604 = vector.load %arg8[%c1_256, %c0_257, %c0_258] : memref<2x32x128xf32, #tpu.memory_space<vmem>>, vector<1x32x128xf32>
    %605 = vector.shape_cast %604 : vector<1x32x128xf32> to vector<32x128xf32>
    %c1_259 = arith.constant 1 : index
    %c0_260 = arith.constant 0 : index
    %c0_261 = arith.constant 0 : index
    %606 = vector.load %arg9[%c1_259, %c0_260, %c0_261] : memref<2x1x128xf32, #tpu.memory_space<vmem>>, vector<1x1x128xf32>
    %607 = vector.shape_cast %606 : vector<1x1x128xf32> to vector<1x128xf32>
    %cst_262 = arith.constant dense<0.000000e+00> : vector<2x128xf32>
    %608 = tpu.matmul %548, %605, %cst_262 {dimension_numbers = #tpu.dot_dimension_numbers<[1], [0], [0], [1], [0, 0, 1, 1], [], []>} : vector<2x32xf32>, vector<32x128xf32>, vector<2x128xf32> -> vector<2x128xf32>
    %609 = arith.addf %603, %608 : vector<2x128xf32>
    %610 = vector.broadcast %607 : vector<1x128xf32> to vector<2x128xf32>
    %611 = arith.addf %609, %610 : vector<2x128xf32>
    %612 = arith.negf %611 : vector<2x128xf32>
    %613 = math.exp %612 : vector<2x128xf32>
    %cst_263 = arith.constant 1.000000e+00 : f32
    %614 = vector.broadcast %cst_263 : f32 to vector<2x128xf32>
    %615 = arith.addf %614, %613 : vector<2x128xf32>
    %616 = arith.divf %614, %615 : vector<2x128xf32>
    %617 = math.tanh %611 : vector<2x128xf32>
    %618 = vector.extract_strided_slice %616 {offsets = [0, 0], sizes = [2, 32], strides = [1, 1]} : vector<2x128xf32> to vector<2x32xf32>
    %619 = vector.extract_strided_slice %616 {offsets = [0, 32], sizes = [2, 32], strides = [1, 1]} : vector<2x128xf32> to vector<2x32xf32>
    %620 = vector.extract_strided_slice %617 {offsets = [0, 64], sizes = [2, 32], strides = [1, 1]} : vector<2x128xf32> to vector<2x32xf32>
    %621 = vector.extract_strided_slice %616 {offsets = [0, 96], sizes = [2, 32], strides = [1, 1]} : vector<2x128xf32> to vector<2x32xf32>
    %622 = arith.mulf %619, %546 : vector<2x32xf32>
    %623 = arith.mulf %618, %620 : vector<2x32xf32>
    %624 = arith.addf %622, %623 : vector<2x32xf32>
    %625 = math.tanh %624 : vector<2x32xf32>
    %626 = arith.mulf %621, %625 : vector<2x32xf32>
    %cst_264 = arith.constant dense<0.000000e+00> : vector<2x128xf32>
    %627 = tpu.matmul %626, %416, %cst_264 {dimension_numbers = #tpu.dot_dimension_numbers<[1], [0], [0], [1], [0, 0, 1, 1], [], []>} : vector<2x32xf32>, vector<32x128xf32>, vector<2x128xf32> -> vector<2x128xf32>
    %628 = vector.shape_cast %627 : vector<2x128xf32> to vector<2x1x128xf32>
    %c0_265 = arith.constant 0 : index
    %c2 = arith.constant 2 : index
    %c0_266 = arith.constant 0 : index
    %629 = vector.load %arg12[%c0_265, %c2, %c0_266] : memref<2x8x128xf32, #tpu.memory_space<vmem>>, vector<2x1x128xf32>
    tpu.vector_store %arg12[%c0_265, %c2, %c0_266], %628 {strides = array<i32>} : memref<2x8x128xf32, #tpu.memory_space<vmem>>, vector<2x1x128xf32>,
    %cst_267 = arith.constant -1.000000e+30 : f32
    %630 = vector.broadcast %cst_267 : f32 to vector<2x128xf32>
    %631 = arith.select %420, %627, %630 : vector<2x128xi1>, vector<2x128xf32>
    %cst_268 = arith.constant dense<0xFF800000> : vector<2xf32>
    %632 = vector.multi_reduction <maximumf>, %631, %cst_268 [1] : vector<2x128xf32> to vector<2xf32>
    %633 = vector.shape_cast %632 : vector<2xf32> to vector<2x1xf32>
    %634 = vector.broadcast %633 : vector<2x1xf32> to vector<2x128xf32>
    %635 = arith.cmpf oeq, %631, %634 : vector<2x128xf32>
    %cst_269 = arith.constant 1.280000e+02 : f32
    %636 = vector.broadcast %cst_269 : f32 to vector<2x128xf32>
    %637 = arith.select %635, %418, %636 : vector<2x128xi1>, vector<2x128xf32>
    %cst_270 = arith.constant dense<0x7F800000> : vector<2xf32>
    %638 = vector.multi_reduction <minimumf>, %637, %cst_270 [1] : vector<2x128xf32> to vector<2xf32>
    %639 = vector.shape_cast %638 : vector<2xf32> to vector<2x1xf32>
    %640 = vector.broadcast %639 : vector<2x1xf32> to vector<2x128xf32>
    %641 = arith.cmpf oeq, %418, %640 : vector<2x128xf32>
    %642 = arith.extui %641 : vector<2x128xi1> to vector<2x128xi32>
    %643 = arith.sitofp %642 : vector<2x128xi32> to vector<2x128xf32>
    %cst_271 = arith.constant dense<0.000000e+00> : vector<2x128xf32>
    %644 = tpu.matmul %643, %415, %cst_271 {dimension_numbers = #tpu.dot_dimension_numbers<[1], [0], [0], [1], [0, 0, 1, 1], [], []>} : vector<2x128xf32>, vector<128x128xf32>, vector<2x128xf32> -> vector<2x128xf32>
    %645 = vector.extract_strided_slice %411 {offsets = [6, 0], sizes = [2, 128], strides = [1, 1]} : vector<16x128xf32> to vector<2x128xf32>
    %c2_272 = arith.constant 2 : index
    %646 = memref.load %arg1[%c2_272] : memref<8xi32, #tpu.memory_space<smem>>
    %c0_i32_273 = arith.constant 0 : i32
    %647 = arith.cmpi sgt, %646, %c0_i32_273 : i32
    %648 = arith.extui %647 : i1 to i32
    %649 = arith.sitofp %648 : i32 to f32
    %650 = vector.broadcast %649 : f32 to vector<2x128xf32>
    %651 = arith.mulf %650, %645 : vector<2x128xf32>
    %cst_274 = arith.constant 1.000000e+00 : f32
    %652 = arith.subf %cst_274, %649 : f32
    %653 = vector.broadcast %652 : f32 to vector<2x128xf32>
    %654 = arith.mulf %653, %644 : vector<2x128xf32>
    %655 = arith.addf %651, %654 : vector<2x128xf32>
    %c0_275 = arith.constant 0 : index
    %c0_276 = arith.constant 0 : index
    %c0_277 = arith.constant 0 : index
    %656 = vector.load %arg8[%c0_275, %c0_276, %c0_277] : memref<2x32x128xf32, #tpu.memory_space<vmem>>, vector<1x32x128xf32>
    %657 = vector.shape_cast %656 : vector<1x32x128xf32> to vector<32x128xf32>
    %c0_278 = arith.constant 0 : index
    %c0_279 = arith.constant 0 : index
    %c0_280 = arith.constant 0 : index
    %658 = vector.load %arg9[%c0_278, %c0_279, %c0_280] : memref<2x1x128xf32, #tpu.memory_space<vmem>>, vector<1x1x128xf32>
    %659 = vector.shape_cast %658 : vector<1x1x128xf32> to vector<1x128xf32>
    %cst_281 = arith.constant dense<0.000000e+00> : vector<2x128xf32>
    %660 = tpu.matmul %600, %657, %cst_281 {dimension_numbers = #tpu.dot_dimension_numbers<[1], [0], [0], [1], [0, 0, 1, 1], [], []>} : vector<2x32xf32>, vector<32x128xf32>, vector<2x128xf32> -> vector<2x128xf32>
    %661 = arith.addf %655, %660 : vector<2x128xf32>
    %662 = vector.broadcast %659 : vector<1x128xf32> to vector<2x128xf32>
    %663 = arith.addf %661, %662 : vector<2x128xf32>
    %664 = arith.negf %663 : vector<2x128xf32>
    %665 = math.exp %664 : vector<2x128xf32>
    %cst_282 = arith.constant 1.000000e+00 : f32
    %666 = vector.broadcast %cst_282 : f32 to vector<2x128xf32>
    %667 = arith.addf %666, %665 : vector<2x128xf32>
    %668 = arith.divf %666, %667 : vector<2x128xf32>
    %669 = math.tanh %663 : vector<2x128xf32>
    %670 = vector.extract_strided_slice %668 {offsets = [0, 0], sizes = [2, 32], strides = [1, 1]} : vector<2x128xf32> to vector<2x32xf32>
    %671 = vector.extract_strided_slice %668 {offsets = [0, 32], sizes = [2, 32], strides = [1, 1]} : vector<2x128xf32> to vector<2x32xf32>
    %672 = vector.extract_strided_slice %669 {offsets = [0, 64], sizes = [2, 32], strides = [1, 1]} : vector<2x128xf32> to vector<2x32xf32>
    %673 = vector.extract_strided_slice %668 {offsets = [0, 96], sizes = [2, 32], strides = [1, 1]} : vector<2x128xf32> to vector<2x32xf32>
    %674 = arith.mulf %671, %598 : vector<2x32xf32>
    %675 = arith.mulf %670, %672 : vector<2x32xf32>
    %676 = arith.addf %674, %675 : vector<2x32xf32>
    %677 = math.tanh %676 : vector<2x32xf32>
    %678 = arith.mulf %673, %677 : vector<2x32xf32>
    %c1_283 = arith.constant 1 : index
    %c0_284 = arith.constant 0 : index
    %c0_285 = arith.constant 0 : index
    %679 = vector.load %arg7[%c1_283, %c0_284, %c0_285] : memref<2x32x128xf32, #tpu.memory_space<vmem>>, vector<1x32x128xf32>
    %680 = vector.shape_cast %679 : vector<1x32x128xf32> to vector<32x128xf32>
    %cst_286 = arith.constant dense<0.000000e+00> : vector<2x128xf32>
    %681 = tpu.matmul %678, %680, %cst_286 {dimension_numbers = #tpu.dot_dimension_numbers<[1], [0], [0], [1], [0, 0, 1, 1], [], []>} : vector<2x32xf32>, vector<32x128xf32>, vector<2x128xf32> -> vector<2x128xf32>
    %c1_287 = arith.constant 1 : index
    %c0_288 = arith.constant 0 : index
    %c0_289 = arith.constant 0 : index
    %682 = vector.load %arg8[%c1_287, %c0_288, %c0_289] : memref<2x32x128xf32, #tpu.memory_space<vmem>>, vector<1x32x128xf32>
    %683 = vector.shape_cast %682 : vector<1x32x128xf32> to vector<32x128xf32>
    %c1_290 = arith.constant 1 : index
    %c0_291 = arith.constant 0 : index
    %c0_292 = arith.constant 0 : index
    %684 = vector.load %arg9[%c1_290, %c0_291, %c0_292] : memref<2x1x128xf32, #tpu.memory_space<vmem>>, vector<1x1x128xf32>
    %685 = vector.shape_cast %684 : vector<1x1x128xf32> to vector<1x128xf32>
    %cst_293 = arith.constant dense<0.000000e+00> : vector<2x128xf32>
    %686 = tpu.matmul %626, %683, %cst_293 {dimension_numbers = #tpu.dot_dimension_numbers<[1], [0], [0], [1], [0, 0, 1, 1], [], []>} : vector<2x32xf32>, vector<32x128xf32>, vector<2x128xf32> -> vector<2x128xf32>
    %687 = arith.addf %681, %686 : vector<2x128xf32>
    %688 = vector.broadcast %685 : vector<1x128xf32> to vector<2x128xf32>
    %689 = arith.addf %687, %688 : vector<2x128xf32>
    %690 = arith.negf %689 : vector<2x128xf32>
    %691 = math.exp %690 : vector<2x128xf32>
    %cst_294 = arith.constant 1.000000e+00 : f32
    %692 = vector.broadcast %cst_294 : f32 to vector<2x128xf32>
    %693 = arith.addf %692, %691 : vector<2x128xf32>
    %694 = arith.divf %692, %693 : vector<2x128xf32>
    %695 = math.tanh %689 : vector<2x128xf32>
    %696 = vector.extract_strided_slice %694 {offsets = [0, 0], sizes = [2, 32], strides = [1, 1]} : vector<2x128xf32> to vector<2x32xf32>
    %697 = vector.extract_strided_slice %694 {offsets = [0, 32], sizes = [2, 32], strides = [1, 1]} : vector<2x128xf32> to vector<2x32xf32>
    %698 = vector.extract_strided_slice %695 {offsets = [0, 64], sizes = [2, 32], strides = [1, 1]} : vector<2x128xf32> to vector<2x32xf32>
    %699 = vector.extract_strided_slice %694 {offsets = [0, 96], sizes = [2, 32], strides = [1, 1]} : vector<2x128xf32> to vector<2x32xf32>
    %700 = arith.mulf %697, %624 : vector<2x32xf32>
    %701 = arith.mulf %696, %698 : vector<2x32xf32>
    %702 = arith.addf %700, %701 : vector<2x32xf32>
    %703 = math.tanh %702 : vector<2x32xf32>
    %704 = arith.mulf %699, %703 : vector<2x32xf32>
    %cst_295 = arith.constant dense<0.000000e+00> : vector<2x128xf32>
    %705 = tpu.matmul %704, %416, %cst_295 {dimension_numbers = #tpu.dot_dimension_numbers<[1], [0], [0], [1], [0, 0, 1, 1], [], []>} : vector<2x32xf32>, vector<32x128xf32>, vector<2x128xf32> -> vector<2x128xf32>
    %706 = vector.shape_cast %705 : vector<2x128xf32> to vector<2x1x128xf32>
    %c0_296 = arith.constant 0 : index
    %c3 = arith.constant 3 : index
    %c0_297 = arith.constant 0 : index
    %707 = vector.load %arg12[%c0_296, %c3, %c0_297] : memref<2x8x128xf32, #tpu.memory_space<vmem>>, vector<2x1x128xf32>
    tpu.vector_store %arg12[%c0_296, %c3, %c0_297], %706 {strides = array<i32>} : memref<2x8x128xf32, #tpu.memory_space<vmem>>, vector<2x1x128xf32>,
    %cst_298 = arith.constant -1.000000e+30 : f32
    %708 = vector.broadcast %cst_298 : f32 to vector<2x128xf32>
    %709 = arith.select %420, %705, %708 : vector<2x128xi1>, vector<2x128xf32>
    %cst_299 = arith.constant dense<0xFF800000> : vector<2xf32>
    %710 = vector.multi_reduction <maximumf>, %709, %cst_299 [1] : vector<2x128xf32> to vector<2xf32>
    %711 = vector.shape_cast %710 : vector<2xf32> to vector<2x1xf32>
    %712 = vector.broadcast %711 : vector<2x1xf32> to vector<2x128xf32>
    %713 = arith.cmpf oeq, %709, %712 : vector<2x128xf32>
    %cst_300 = arith.constant 1.280000e+02 : f32
    %714 = vector.broadcast %cst_300 : f32 to vector<2x128xf32>
    %715 = arith.select %713, %418, %714 : vector<2x128xi1>, vector<2x128xf32>
    %cst_301 = arith.constant dense<0x7F800000> : vector<2xf32>
    %716 = vector.multi_reduction <minimumf>, %715, %cst_301 [1] : vector<2x128xf32> to vector<2xf32>
    %717 = vector.shape_cast %716 : vector<2xf32> to vector<2x1xf32>
    %718 = vector.broadcast %717 : vector<2x1xf32> to vector<2x128xf32>
    %719 = arith.cmpf oeq, %418, %718 : vector<2x128xf32>
    %720 = arith.extui %719 : vector<2x128xi1> to vector<2x128xi32>
    %721 = arith.sitofp %720 : vector<2x128xi32> to vector<2x128xf32>
    %cst_302 = arith.constant dense<0.000000e+00> : vector<2x128xf32>
    %722 = tpu.matmul %721, %415, %cst_302 {dimension_numbers = #tpu.dot_dimension_numbers<[1], [0], [0], [1], [0, 0, 1, 1], [], []>} : vector<2x128xf32>, vector<128x128xf32>, vector<2x128xf32> -> vector<2x128xf32>
    %723 = vector.extract_strided_slice %411 {offsets = [8, 0], sizes = [2, 128], strides = [1, 1]} : vector<16x128xf32> to vector<2x128xf32>
    %c3_303 = arith.constant 3 : index
    %724 = memref.load %arg1[%c3_303] : memref<8xi32, #tpu.memory_space<smem>>
    %c0_i32_304 = arith.constant 0 : i32
    %725 = arith.cmpi sgt, %724, %c0_i32_304 : i32
    %726 = arith.extui %725 : i1 to i32
    %727 = arith.sitofp %726 : i32 to f32
    %728 = vector.broadcast %727 : f32 to vector<2x128xf32>
    %729 = arith.mulf %728, %723 : vector<2x128xf32>
    %cst_305 = arith.constant 1.000000e+00 : f32
    %730 = arith.subf %cst_305, %727 : f32
    %731 = vector.broadcast %730 : f32 to vector<2x128xf32>
    %732 = arith.mulf %731, %722 : vector<2x128xf32>
    %733 = arith.addf %729, %732 : vector<2x128xf32>
    %c0_306 = arith.constant 0 : index
    %c0_307 = arith.constant 0 : index
    %c0_308 = arith.constant 0 : index
    %734 = vector.load %arg8[%c0_306, %c0_307, %c0_308] : memref<2x32x128xf32, #tpu.memory_space<vmem>>, vector<1x32x128xf32>
    %735 = vector.shape_cast %734 : vector<1x32x128xf32> to vector<32x128xf32>
    %c0_309 = arith.constant 0 : index
    %c0_310 = arith.constant 0 : index
    %c0_311 = arith.constant 0 : index
    %736 = vector.load %arg9[%c0_309, %c0_310, %c0_311] : memref<2x1x128xf32, #tpu.memory_space<vmem>>, vector<1x1x128xf32>
    %737 = vector.shape_cast %736 : vector<1x1x128xf32> to vector<1x128xf32>
    %cst_312 = arith.constant dense<0.000000e+00> : vector<2x128xf32>
    %738 = tpu.matmul %678, %735, %cst_312 {dimension_numbers = #tpu.dot_dimension_numbers<[1], [0], [0], [1], [0, 0, 1, 1], [], []>} : vector<2x32xf32>, vector<32x128xf32>, vector<2x128xf32> -> vector<2x128xf32>
    %739 = arith.addf %733, %738 : vector<2x128xf32>
    %740 = vector.broadcast %737 : vector<1x128xf32> to vector<2x128xf32>
    %741 = arith.addf %739, %740 : vector<2x128xf32>
    %742 = arith.negf %741 : vector<2x128xf32>
    %743 = math.exp %742 : vector<2x128xf32>
    %cst_313 = arith.constant 1.000000e+00 : f32
    %744 = vector.broadcast %cst_313 : f32 to vector<2x128xf32>
    %745 = arith.addf %744, %743 : vector<2x128xf32>
    %746 = arith.divf %744, %745 : vector<2x128xf32>
    %747 = math.tanh %741 : vector<2x128xf32>
    %748 = vector.extract_strided_slice %746 {offsets = [0, 0], sizes = [2, 32], strides = [1, 1]} : vector<2x128xf32> to vector<2x32xf32>
    %749 = vector.extract_strided_slice %746 {offsets = [0, 32], sizes = [2, 32], strides = [1, 1]} : vector<2x128xf32> to vector<2x32xf32>
    %750 = vector.extract_strided_slice %747 {offsets = [0, 64], sizes = [2, 32], strides = [1, 1]} : vector<2x128xf32> to vector<2x32xf32>
    %751 = vector.extract_strided_slice %746 {offsets = [0, 96], sizes = [2, 32], strides = [1, 1]} : vector<2x128xf32> to vector<2x32xf32>
    %752 = arith.mulf %749, %676 : vector<2x32xf32>
    %753 = arith.mulf %748, %750 : vector<2x32xf32>
    %754 = arith.addf %752, %753 : vector<2x32xf32>
    %755 = math.tanh %754 : vector<2x32xf32>
    %756 = arith.mulf %751, %755 : vector<2x32xf32>
    %c1_314 = arith.constant 1 : index
    %c0_315 = arith.constant 0 : index
    %c0_316 = arith.constant 0 : index
    %757 = vector.load %arg7[%c1_314, %c0_315, %c0_316] : memref<2x32x128xf32, #tpu.memory_space<vmem>>, vector<1x32x128xf32>
    %758 = vector.shape_cast %757 : vector<1x32x128xf32> to vector<32x128xf32>
    %cst_317 = arith.constant dense<0.000000e+00> : vector<2x128xf32>
    %759 = tpu.matmul %756, %758, %cst_317 {dimension_numbers = #tpu.dot_dimension_numbers<[1], [0], [0], [1], [0, 0, 1, 1], [], []>} : vector<2x32xf32>, vector<32x128xf32>, vector<2x128xf32> -> vector<2x128xf32>
    %c1_318 = arith.constant 1 : index
    %c0_319 = arith.constant 0 : index
    %c0_320 = arith.constant 0 : index
    %760 = vector.load %arg8[%c1_318, %c0_319, %c0_320] : memref<2x32x128xf32, #tpu.memory_space<vmem>>, vector<1x32x128xf32>
    %761 = vector.shape_cast %760 : vector<1x32x128xf32> to vector<32x128xf32>
    %c1_321 = arith.constant 1 : index
    %c0_322 = arith.constant 0 : index
    %c0_323 = arith.constant 0 : index
    %762 = vector.load %arg9[%c1_321, %c0_322, %c0_323] : memref<2x1x128xf32, #tpu.memory_space<vmem>>, vector<1x1x128xf32>
    %763 = vector.shape_cast %762 : vector<1x1x128xf32> to vector<1x128xf32>
    %cst_324 = arith.constant dense<0.000000e+00> : vector<2x128xf32>
    %764 = tpu.matmul %704, %761, %cst_324 {dimension_numbers = #tpu.dot_dimension_numbers<[1], [0], [0], [1], [0, 0, 1, 1], [], []>} : vector<2x32xf32>, vector<32x128xf32>, vector<2x128xf32> -> vector<2x128xf32>
    %765 = arith.addf %759, %764 : vector<2x128xf32>
    %766 = vector.broadcast %763 : vector<1x128xf32> to vector<2x128xf32>
    %767 = arith.addf %765, %766 : vector<2x128xf32>
    %768 = arith.negf %767 : vector<2x128xf32>
    %769 = math.exp %768 : vector<2x128xf32>
    %cst_325 = arith.constant 1.000000e+00 : f32
    %770 = vector.broadcast %cst_325 : f32 to vector<2x128xf32>
    %771 = arith.addf %770, %769 : vector<2x128xf32>
    %772 = arith.divf %770, %771 : vector<2x128xf32>
    %773 = math.tanh %767 : vector<2x128xf32>
    %774 = vector.extract_strided_slice %772 {offsets = [0, 0], sizes = [2, 32], strides = [1, 1]} : vector<2x128xf32> to vector<2x32xf32>
    %775 = vector.extract_strided_slice %772 {offsets = [0, 32], sizes = [2, 32], strides = [1, 1]} : vector<2x128xf32> to vector<2x32xf32>
    %776 = vector.extract_strided_slice %773 {offsets = [0, 64], sizes = [2, 32], strides = [1, 1]} : vector<2x128xf32> to vector<2x32xf32>
    %777 = vector.extract_strided_slice %772 {offsets = [0, 96], sizes = [2, 32], strides = [1, 1]} : vector<2x128xf32> to vector<2x32xf32>
    %778 = arith.mulf %775, %702 : vector<2x32xf32>
    %779 = arith.mulf %774, %776 : vector<2x32xf32>
    %780 = arith.addf %778, %779 : vector<2x32xf32>
    %781 = math.tanh %780 : vector<2x32xf32>
    %782 = arith.mulf %777, %781 : vector<2x32xf32>
    %cst_326 = arith.constant dense<0.000000e+00> : vector<2x128xf32>
    %783 = tpu.matmul %782, %416, %cst_326 {dimension_numbers = #tpu.dot_dimension_numbers<[1], [0], [0], [1], [0, 0, 1, 1], [], []>} : vector<2x32xf32>, vector<32x128xf32>, vector<2x128xf32> -> vector<2x128xf32>
    %784 = vector.shape_cast %783 : vector<2x128xf32> to vector<2x1x128xf32>
    %c0_327 = arith.constant 0 : index
    %c4 = arith.constant 4 : index
    %c0_328 = arith.constant 0 : index
    %785 = vector.load %arg12[%c0_327, %c4, %c0_328] : memref<2x8x128xf32, #tpu.memory_space<vmem>>, vector<2x1x128xf32>
    tpu.vector_store %arg12[%c0_327, %c4, %c0_328], %784 {strides = array<i32>} : memref<2x8x128xf32, #tpu.memory_space<vmem>>, vector<2x1x128xf32>,
    %cst_329 = arith.constant -1.000000e+30 : f32
    %786 = vector.broadcast %cst_329 : f32 to vector<2x128xf32>
    %787 = arith.select %420, %783, %786 : vector<2x128xi1>, vector<2x128xf32>
    %cst_330 = arith.constant dense<0xFF800000> : vector<2xf32>
    %788 = vector.multi_reduction <maximumf>, %787, %cst_330 [1] : vector<2x128xf32> to vector<2xf32>
    %789 = vector.shape_cast %788 : vector<2xf32> to vector<2x1xf32>
    %790 = vector.broadcast %789 : vector<2x1xf32> to vector<2x128xf32>
    %791 = arith.cmpf oeq, %787, %790 : vector<2x128xf32>
    %cst_331 = arith.constant 1.280000e+02 : f32
    %792 = vector.broadcast %cst_331 : f32 to vector<2x128xf32>
    %793 = arith.select %791, %418, %792 : vector<2x128xi1>, vector<2x128xf32>
    %cst_332 = arith.constant dense<0x7F800000> : vector<2xf32>
    %794 = vector.multi_reduction <minimumf>, %793, %cst_332 [1] : vector<2x128xf32> to vector<2xf32>
    %795 = vector.shape_cast %794 : vector<2xf32> to vector<2x1xf32>
    %796 = vector.broadcast %795 : vector<2x1xf32> to vector<2x128xf32>
    %797 = arith.cmpf oeq, %418, %796 : vector<2x128xf32>
    %798 = arith.extui %797 : vector<2x128xi1> to vector<2x128xi32>
    %799 = arith.sitofp %798 : vector<2x128xi32> to vector<2x128xf32>
    %cst_333 = arith.constant dense<0.000000e+00> : vector<2x128xf32>
    %800 = tpu.matmul %799, %415, %cst_333 {dimension_numbers = #tpu.dot_dimension_numbers<[1], [0], [0], [1], [0, 0, 1, 1], [], []>} : vector<2x128xf32>, vector<128x128xf32>, vector<2x128xf32> -> vector<2x128xf32>
    %801 = vector.extract_strided_slice %411 {offsets = [10, 0], sizes = [2, 128], strides = [1, 1]} : vector<16x128xf32> to vector<2x128xf32>
    %c4_334 = arith.constant 4 : index
    %802 = memref.load %arg1[%c4_334] : memref<8xi32, #tpu.memory_space<smem>>
    %c0_i32_335 = arith.constant 0 : i32
    %803 = arith.cmpi sgt, %802, %c0_i32_335 : i32
    %804 = arith.extui %803 : i1 to i32
    %805 = arith.sitofp %804 : i32 to f32
    %806 = vector.broadcast %805 : f32 to vector<2x128xf32>
    %807 = arith.mulf %806, %801 : vector<2x128xf32>
    %cst_336 = arith.constant 1.000000e+00 : f32
    %808 = arith.subf %cst_336, %805 : f32
    %809 = vector.broadcast %808 : f32 to vector<2x128xf32>
    %810 = arith.mulf %809, %800 : vector<2x128xf32>
    %811 = arith.addf %807, %810 : vector<2x128xf32>
    %c0_337 = arith.constant 0 : index
    %c0_338 = arith.constant 0 : index
    %c0_339 = arith.constant 0 : index
    %812 = vector.load %arg8[%c0_337, %c0_338, %c0_339] : memref<2x32x128xf32, #tpu.memory_space<vmem>>, vector<1x32x128xf32>
    %813 = vector.shape_cast %812 : vector<1x32x128xf32> to vector<32x128xf32>
    %c0_340 = arith.constant 0 : index
    %c0_341 = arith.constant 0 : index
    %c0_342 = arith.constant 0 : index
    %814 = vector.load %arg9[%c0_340, %c0_341, %c0_342] : memref<2x1x128xf32, #tpu.memory_space<vmem>>, vector<1x1x128xf32>
    %815 = vector.shape_cast %814 : vector<1x1x128xf32> to vector<1x128xf32>
    %cst_343 = arith.constant dense<0.000000e+00> : vector<2x128xf32>
    %816 = tpu.matmul %756, %813, %cst_343 {dimension_numbers = #tpu.dot_dimension_numbers<[1], [0], [0], [1], [0, 0, 1, 1], [], []>} : vector<2x32xf32>, vector<32x128xf32>, vector<2x128xf32> -> vector<2x128xf32>
    %817 = arith.addf %811, %816 : vector<2x128xf32>
    %818 = vector.broadcast %815 : vector<1x128xf32> to vector<2x128xf32>
    %819 = arith.addf %817, %818 : vector<2x128xf32>
    %820 = arith.negf %819 : vector<2x128xf32>
    %821 = math.exp %820 : vector<2x128xf32>
    %cst_344 = arith.constant 1.000000e+00 : f32
    %822 = vector.broadcast %cst_344 : f32 to vector<2x128xf32>
    %823 = arith.addf %822, %821 : vector<2x128xf32>
    %824 = arith.divf %822, %823 : vector<2x128xf32>
    %825 = math.tanh %819 : vector<2x128xf32>
    %826 = vector.extract_strided_slice %824 {offsets = [0, 0], sizes = [2, 32], strides = [1, 1]} : vector<2x128xf32> to vector<2x32xf32>
    %827 = vector.extract_strided_slice %824 {offsets = [0, 32], sizes = [2, 32], strides = [1, 1]} : vector<2x128xf32> to vector<2x32xf32>
    %828 = vector.extract_strided_slice %825 {offsets = [0, 64], sizes = [2, 32], strides = [1, 1]} : vector<2x128xf32> to vector<2x32xf32>
    %829 = vector.extract_strided_slice %824 {offsets = [0, 96], sizes = [2, 32], strides = [1, 1]} : vector<2x128xf32> to vector<2x32xf32>
    %830 = arith.mulf %827, %754 : vector<2x32xf32>
    %831 = arith.mulf %826, %828 : vector<2x32xf32>
    %832 = arith.addf %830, %831 : vector<2x32xf32>
    %833 = math.tanh %832 : vector<2x32xf32>
    %834 = arith.mulf %829, %833 : vector<2x32xf32>
    %c1_345 = arith.constant 1 : index
    %c0_346 = arith.constant 0 : index
    %c0_347 = arith.constant 0 : index
    %835 = vector.load %arg7[%c1_345, %c0_346, %c0_347] : memref<2x32x128xf32, #tpu.memory_space<vmem>>, vector<1x32x128xf32>
    %836 = vector.shape_cast %835 : vector<1x32x128xf32> to vector<32x128xf32>
    %cst_348 = arith.constant dense<0.000000e+00> : vector<2x128xf32>
    %837 = tpu.matmul %834, %836, %cst_348 {dimension_numbers = #tpu.dot_dimension_numbers<[1], [0], [0], [1], [0, 0, 1, 1], [], []>} : vector<2x32xf32>, vector<32x128xf32>, vector<2x128xf32> -> vector<2x128xf32>
    %c1_349 = arith.constant 1 : index
    %c0_350 = arith.constant 0 : index
    %c0_351 = arith.constant 0 : index
    %838 = vector.load %arg8[%c1_349, %c0_350, %c0_351] : memref<2x32x128xf32, #tpu.memory_space<vmem>>, vector<1x32x128xf32>
    %839 = vector.shape_cast %838 : vector<1x32x128xf32> to vector<32x128xf32>
    %c1_352 = arith.constant 1 : index
    %c0_353 = arith.constant 0 : index
    %c0_354 = arith.constant 0 : index
    %840 = vector.load %arg9[%c1_352, %c0_353, %c0_354] : memref<2x1x128xf32, #tpu.memory_space<vmem>>, vector<1x1x128xf32>
    %841 = vector.shape_cast %840 : vector<1x1x128xf32> to vector<1x128xf32>
    %cst_355 = arith.constant dense<0.000000e+00> : vector<2x128xf32>
    %842 = tpu.matmul %782, %839, %cst_355 {dimension_numbers = #tpu.dot_dimension_numbers<[1], [0], [0], [1], [0, 0, 1, 1], [], []>} : vector<2x32xf32>, vector<32x128xf32>, vector<2x128xf32> -> vector<2x128xf32>
    %843 = arith.addf %837, %842 : vector<2x128xf32>
    %844 = vector.broadcast %841 : vector<1x128xf32> to vector<2x128xf32>
    %845 = arith.addf %843, %844 : vector<2x128xf32>
    %846 = arith.negf %845 : vector<2x128xf32>
    %847 = math.exp %846 : vector<2x128xf32>
    %cst_356 = arith.constant 1.000000e+00 : f32
    %848 = vector.broadcast %cst_356 : f32 to vector<2x128xf32>
    %849 = arith.addf %848, %847 : vector<2x128xf32>
    %850 = arith.divf %848, %849 : vector<2x128xf32>
    %851 = math.tanh %845 : vector<2x128xf32>
    %852 = vector.extract_strided_slice %850 {offsets = [0, 0], sizes = [2, 32], strides = [1, 1]} : vector<2x128xf32> to vector<2x32xf32>
    %853 = vector.extract_strided_slice %850 {offsets = [0, 32], sizes = [2, 32], strides = [1, 1]} : vector<2x128xf32> to vector<2x32xf32>
    %854 = vector.extract_strided_slice %851 {offsets = [0, 64], sizes = [2, 32], strides = [1, 1]} : vector<2x128xf32> to vector<2x32xf32>
    %855 = vector.extract_strided_slice %850 {offsets = [0, 96], sizes = [2, 32], strides = [1, 1]} : vector<2x128xf32> to vector<2x32xf32>
    %856 = arith.mulf %853, %780 : vector<2x32xf32>
    %857 = arith.mulf %852, %854 : vector<2x32xf32>
    %858 = arith.addf %856, %857 : vector<2x32xf32>
    %859 = math.tanh %858 : vector<2x32xf32>
    %860 = arith.mulf %855, %859 : vector<2x32xf32>
    %cst_357 = arith.constant dense<0.000000e+00> : vector<2x128xf32>
    %861 = tpu.matmul %860, %416, %cst_357 {dimension_numbers = #tpu.dot_dimension_numbers<[1], [0], [0], [1], [0, 0, 1, 1], [], []>} : vector<2x32xf32>, vector<32x128xf32>, vector<2x128xf32> -> vector<2x128xf32>
    %862 = vector.shape_cast %861 : vector<2x128xf32> to vector<2x1x128xf32>
    %c0_358 = arith.constant 0 : index
    %c5 = arith.constant 5 : index
    %c0_359 = arith.constant 0 : index
    %863 = vector.load %arg12[%c0_358, %c5, %c0_359] : memref<2x8x128xf32, #tpu.memory_space<vmem>>, vector<2x1x128xf32>
    tpu.vector_store %arg12[%c0_358, %c5, %c0_359], %862 {strides = array<i32>} : memref<2x8x128xf32, #tpu.memory_space<vmem>>, vector<2x1x128xf32>,
    %cst_360 = arith.constant -1.000000e+30 : f32
    %864 = vector.broadcast %cst_360 : f32 to vector<2x128xf32>
    %865 = arith.select %420, %861, %864 : vector<2x128xi1>, vector<2x128xf32>
    %cst_361 = arith.constant dense<0xFF800000> : vector<2xf32>
    %866 = vector.multi_reduction <maximumf>, %865, %cst_361 [1] : vector<2x128xf32> to vector<2xf32>
    %867 = vector.shape_cast %866 : vector<2xf32> to vector<2x1xf32>
    %868 = vector.broadcast %867 : vector<2x1xf32> to vector<2x128xf32>
    %869 = arith.cmpf oeq, %865, %868 : vector<2x128xf32>
    %cst_362 = arith.constant 1.280000e+02 : f32
    %870 = vector.broadcast %cst_362 : f32 to vector<2x128xf32>
    %871 = arith.select %869, %418, %870 : vector<2x128xi1>, vector<2x128xf32>
    %cst_363 = arith.constant dense<0x7F800000> : vector<2xf32>
    %872 = vector.multi_reduction <minimumf>, %871, %cst_363 [1] : vector<2x128xf32> to vector<2xf32>
    %873 = vector.shape_cast %872 : vector<2xf32> to vector<2x1xf32>
    %874 = vector.broadcast %873 : vector<2x1xf32> to vector<2x128xf32>
    %875 = arith.cmpf oeq, %418, %874 : vector<2x128xf32>
    %876 = arith.extui %875 : vector<2x128xi1> to vector<2x128xi32>
    %877 = arith.sitofp %876 : vector<2x128xi32> to vector<2x128xf32>
    %cst_364 = arith.constant dense<0.000000e+00> : vector<2x128xf32>
    %878 = tpu.matmul %877, %415, %cst_364 {dimension_numbers = #tpu.dot_dimension_numbers<[1], [0], [0], [1], [0, 0, 1, 1], [], []>} : vector<2x128xf32>, vector<128x128xf32>, vector<2x128xf32> -> vector<2x128xf32>
    %879 = vector.extract_strided_slice %411 {offsets = [12, 0], sizes = [2, 128], strides = [1, 1]} : vector<16x128xf32> to vector<2x128xf32>
    %c5_365 = arith.constant 5 : index
    %880 = memref.load %arg1[%c5_365] : memref<8xi32, #tpu.memory_space<smem>>
    %c0_i32_366 = arith.constant 0 : i32
    %881 = arith.cmpi sgt, %880, %c0_i32_366 : i32
    %882 = arith.extui %881 : i1 to i32
    %883 = arith.sitofp %882 : i32 to f32
    %884 = vector.broadcast %883 : f32 to vector<2x128xf32>
    %885 = arith.mulf %884, %879 : vector<2x128xf32>
    %cst_367 = arith.constant 1.000000e+00 : f32
    %886 = arith.subf %cst_367, %883 : f32
    %887 = vector.broadcast %886 : f32 to vector<2x128xf32>
    %888 = arith.mulf %887, %878 : vector<2x128xf32>
    %889 = arith.addf %885, %888 : vector<2x128xf32>
    %c0_368 = arith.constant 0 : index
    %c0_369 = arith.constant 0 : index
    %c0_370 = arith.constant 0 : index
    %890 = vector.load %arg8[%c0_368, %c0_369, %c0_370] : memref<2x32x128xf32, #tpu.memory_space<vmem>>, vector<1x32x128xf32>
    %891 = vector.shape_cast %890 : vector<1x32x128xf32> to vector<32x128xf32>
    %c0_371 = arith.constant 0 : index
    %c0_372 = arith.constant 0 : index
    %c0_373 = arith.constant 0 : index
    %892 = vector.load %arg9[%c0_371, %c0_372, %c0_373] : memref<2x1x128xf32, #tpu.memory_space<vmem>>, vector<1x1x128xf32>
    %893 = vector.shape_cast %892 : vector<1x1x128xf32> to vector<1x128xf32>
    %cst_374 = arith.constant dense<0.000000e+00> : vector<2x128xf32>
    %894 = tpu.matmul %834, %891, %cst_374 {dimension_numbers = #tpu.dot_dimension_numbers<[1], [0], [0], [1], [0, 0, 1, 1], [], []>} : vector<2x32xf32>, vector<32x128xf32>, vector<2x128xf32> -> vector<2x128xf32>
    %895 = arith.addf %889, %894 : vector<2x128xf32>
    %896 = vector.broadcast %893 : vector<1x128xf32> to vector<2x128xf32>
    %897 = arith.addf %895, %896 : vector<2x128xf32>
    %898 = arith.negf %897 : vector<2x128xf32>
    %899 = math.exp %898 : vector<2x128xf32>
    %cst_375 = arith.constant 1.000000e+00 : f32
    %900 = vector.broadcast %cst_375 : f32 to vector<2x128xf32>
    %901 = arith.addf %900, %899 : vector<2x128xf32>
    %902 = arith.divf %900, %901 : vector<2x128xf32>
    %903 = math.tanh %897 : vector<2x128xf32>
    %904 = vector.extract_strided_slice %902 {offsets = [0, 0], sizes = [2, 32], strides = [1, 1]} : vector<2x128xf32> to vector<2x32xf32>
    %905 = vector.extract_strided_slice %902 {offsets = [0, 32], sizes = [2, 32], strides = [1, 1]} : vector<2x128xf32> to vector<2x32xf32>
    %906 = vector.extract_strided_slice %903 {offsets = [0, 64], sizes = [2, 32], strides = [1, 1]} : vector<2x128xf32> to vector<2x32xf32>
    %907 = vector.extract_strided_slice %902 {offsets = [0, 96], sizes = [2, 32], strides = [1, 1]} : vector<2x128xf32> to vector<2x32xf32>
    %908 = arith.mulf %905, %832 : vector<2x32xf32>
    %909 = arith.mulf %904, %906 : vector<2x32xf32>
    %910 = arith.addf %908, %909 : vector<2x32xf32>
    %911 = math.tanh %910 : vector<2x32xf32>
    %912 = arith.mulf %907, %911 : vector<2x32xf32>
    %c1_376 = arith.constant 1 : index
    %c0_377 = arith.constant 0 : index
    %c0_378 = arith.constant 0 : index
    %913 = vector.load %arg7[%c1_376, %c0_377, %c0_378] : memref<2x32x128xf32, #tpu.memory_space<vmem>>, vector<1x32x128xf32>
    %914 = vector.shape_cast %913 : vector<1x32x128xf32> to vector<32x128xf32>
    %cst_379 = arith.constant dense<0.000000e+00> : vector<2x128xf32>
    %915 = tpu.matmul %912, %914, %cst_379 {dimension_numbers = #tpu.dot_dimension_numbers<[1], [0], [0], [1], [0, 0, 1, 1], [], []>} : vector<2x32xf32>, vector<32x128xf32>, vector<2x128xf32> -> vector<2x128xf32>
    %c1_380 = arith.constant 1 : index
    %c0_381 = arith.constant 0 : index
    %c0_382 = arith.constant 0 : index
    %916 = vector.load %arg8[%c1_380, %c0_381, %c0_382] : memref<2x32x128xf32, #tpu.memory_space<vmem>>, vector<1x32x128xf32>
    %917 = vector.shape_cast %916 : vector<1x32x128xf32> to vector<32x128xf32>
    %c1_383 = arith.constant 1 : index
    %c0_384 = arith.constant 0 : index
    %c0_385 = arith.constant 0 : index
    %918 = vector.load %arg9[%c1_383, %c0_384, %c0_385] : memref<2x1x128xf32, #tpu.memory_space<vmem>>, vector<1x1x128xf32>
    %919 = vector.shape_cast %918 : vector<1x1x128xf32> to vector<1x128xf32>
    %cst_386 = arith.constant dense<0.000000e+00> : vector<2x128xf32>
    %920 = tpu.matmul %860, %917, %cst_386 {dimension_numbers = #tpu.dot_dimension_numbers<[1], [0], [0], [1], [0, 0, 1, 1], [], []>} : vector<2x32xf32>, vector<32x128xf32>, vector<2x128xf32> -> vector<2x128xf32>
    %921 = arith.addf %915, %920 : vector<2x128xf32>
    %922 = vector.broadcast %919 : vector<1x128xf32> to vector<2x128xf32>
    %923 = arith.addf %921, %922 : vector<2x128xf32>
    %924 = arith.negf %923 : vector<2x128xf32>
    %925 = math.exp %924 : vector<2x128xf32>
    %cst_387 = arith.constant 1.000000e+00 : f32
    %926 = vector.broadcast %cst_387 : f32 to vector<2x128xf32>
    %927 = arith.addf %926, %925 : vector<2x128xf32>
    %928 = arith.divf %926, %927 : vector<2x128xf32>
    %929 = math.tanh %923 : vector<2x128xf32>
    %930 = vector.extract_strided_slice %928 {offsets = [0, 0], sizes = [2, 32], strides = [1, 1]} : vector<2x128xf32> to vector<2x32xf32>
    %931 = vector.extract_strided_slice %928 {offsets = [0, 32], sizes = [2, 32], strides = [1, 1]} : vector<2x128xf32> to vector<2x32xf32>
    %932 = vector.extract_strided_slice %929 {offsets = [0, 64], sizes = [2, 32], strides = [1, 1]} : vector<2x128xf32> to vector<2x32xf32>
    %933 = vector.extract_strided_slice %928 {offsets = [0, 96], sizes = [2, 32], strides = [1, 1]} : vector<2x128xf32> to vector<2x32xf32>
    %934 = arith.mulf %931, %858 : vector<2x32xf32>
    %935 = arith.mulf %930, %932 : vector<2x32xf32>
    %936 = arith.addf %934, %935 : vector<2x32xf32>
    %937 = math.tanh %936 : vector<2x32xf32>
    %938 = arith.mulf %933, %937 : vector<2x32xf32>
    %cst_388 = arith.constant dense<0.000000e+00> : vector<2x128xf32>
    %939 = tpu.matmul %938, %416, %cst_388 {dimension_numbers = #tpu.dot_dimension_numbers<[1], [0], [0], [1], [0, 0, 1, 1], [], []>} : vector<2x32xf32>, vector<32x128xf32>, vector<2x128xf32> -> vector<2x128xf32>
    %940 = vector.shape_cast %939 : vector<2x128xf32> to vector<2x1x128xf32>
    %c0_389 = arith.constant 0 : index
    %c6 = arith.constant 6 : index
    %c0_390 = arith.constant 0 : index
    %941 = vector.load %arg12[%c0_389, %c6, %c0_390] : memref<2x8x128xf32, #tpu.memory_space<vmem>>, vector<2x1x128xf32>
    tpu.vector_store %arg12[%c0_389, %c6, %c0_390], %940 {strides = array<i32>} : memref<2x8x128xf32, #tpu.memory_space<vmem>>, vector<2x1x128xf32>,
    %cst_391 = arith.constant -1.000000e+30 : f32
    %942 = vector.broadcast %cst_391 : f32 to vector<2x128xf32>
    %943 = arith.select %420, %939, %942 : vector<2x128xi1>, vector<2x128xf32>
    %cst_392 = arith.constant dense<0xFF800000> : vector<2xf32>
    %944 = vector.multi_reduction <maximumf>, %943, %cst_392 [1] : vector<2x128xf32> to vector<2xf32>
    %945 = vector.shape_cast %944 : vector<2xf32> to vector<2x1xf32>
    %946 = vector.broadcast %945 : vector<2x1xf32> to vector<2x128xf32>
    %947 = arith.cmpf oeq, %943, %946 : vector<2x128xf32>
    %cst_393 = arith.constant 1.280000e+02 : f32
    %948 = vector.broadcast %cst_393 : f32 to vector<2x128xf32>
    %949 = arith.select %947, %418, %948 : vector<2x128xi1>, vector<2x128xf32>
    %cst_394 = arith.constant dense<0x7F800000> : vector<2xf32>
    %950 = vector.multi_reduction <minimumf>, %949, %cst_394 [1] : vector<2x128xf32> to vector<2xf32>
    %951 = vector.shape_cast %950 : vector<2xf32> to vector<2x1xf32>
    %952 = vector.broadcast %951 : vector<2x1xf32> to vector<2x128xf32>
    %953 = arith.cmpf oeq, %418, %952 : vector<2x128xf32>
    %954 = arith.extui %953 : vector<2x128xi1> to vector<2x128xi32>
    %955 = arith.sitofp %954 : vector<2x128xi32> to vector<2x128xf32>
    %cst_395 = arith.constant dense<0.000000e+00> : vector<2x128xf32>
    %956 = tpu.matmul %955, %415, %cst_395 {dimension_numbers = #tpu.dot_dimension_numbers<[1], [0], [0], [1], [0, 0, 1, 1], [], []>} : vector<2x128xf32>, vector<128x128xf32>, vector<2x128xf32> -> vector<2x128xf32>
    %957 = vector.extract_strided_slice %411 {offsets = [14, 0], sizes = [2, 128], strides = [1, 1]} : vector<16x128xf32> to vector<2x128xf32>
    %c6_396 = arith.constant 6 : index
    %958 = memref.load %arg1[%c6_396] : memref<8xi32, #tpu.memory_space<smem>>
    %c0_i32_397 = arith.constant 0 : i32
    %959 = arith.cmpi sgt, %958, %c0_i32_397 : i32
    %960 = arith.extui %959 : i1 to i32
    %961 = arith.sitofp %960 : i32 to f32
    %962 = vector.broadcast %961 : f32 to vector<2x128xf32>
    %963 = arith.mulf %962, %957 : vector<2x128xf32>
    %cst_398 = arith.constant 1.000000e+00 : f32
    %964 = arith.subf %cst_398, %961 : f32
    %965 = vector.broadcast %964 : f32 to vector<2x128xf32>
    %966 = arith.mulf %965, %956 : vector<2x128xf32>
    %967 = arith.addf %963, %966 : vector<2x128xf32>
    %c0_399 = arith.constant 0 : index
    %c0_400 = arith.constant 0 : index
    %c0_401 = arith.constant 0 : index
    %968 = vector.load %arg8[%c0_399, %c0_400, %c0_401] : memref<2x32x128xf32, #tpu.memory_space<vmem>>, vector<1x32x128xf32>
    %969 = vector.shape_cast %968 : vector<1x32x128xf32> to vector<32x128xf32>
    %c0_402 = arith.constant 0 : index
    %c0_403 = arith.constant 0 : index
    %c0_404 = arith.constant 0 : index
    %970 = vector.load %arg9[%c0_402, %c0_403, %c0_404] : memref<2x1x128xf32, #tpu.memory_space<vmem>>, vector<1x1x128xf32>
    %971 = vector.shape_cast %970 : vector<1x1x128xf32> to vector<1x128xf32>
    %cst_405 = arith.constant dense<0.000000e+00> : vector<2x128xf32>
    %972 = tpu.matmul %912, %969, %cst_405 {dimension_numbers = #tpu.dot_dimension_numbers<[1], [0], [0], [1], [0, 0, 1, 1], [], []>} : vector<2x32xf32>, vector<32x128xf32>, vector<2x128xf32> -> vector<2x128xf32>
    %973 = arith.addf %967, %972 : vector<2x128xf32>
    %974 = vector.broadcast %971 : vector<1x128xf32> to vector<2x128xf32>
    %975 = arith.addf %973, %974 : vector<2x128xf32>
    %976 = arith.negf %975 : vector<2x128xf32>
    %977 = math.exp %976 : vector<2x128xf32>
    %cst_406 = arith.constant 1.000000e+00 : f32
    %978 = vector.broadcast %cst_406 : f32 to vector<2x128xf32>
    %979 = arith.addf %978, %977 : vector<2x128xf32>
    %980 = arith.divf %978, %979 : vector<2x128xf32>
    %981 = math.tanh %975 : vector<2x128xf32>
    %982 = vector.extract_strided_slice %980 {offsets = [0, 0], sizes = [2, 32], strides = [1, 1]} : vector<2x128xf32> to vector<2x32xf32>
    %983 = vector.extract_strided_slice %980 {offsets = [0, 32], sizes = [2, 32], strides = [1, 1]} : vector<2x128xf32> to vector<2x32xf32>
    %984 = vector.extract_strided_slice %981 {offsets = [0, 64], sizes = [2, 32], strides = [1, 1]} : vector<2x128xf32> to vector<2x32xf32>
    %985 = vector.extract_strided_slice %980 {offsets = [0, 96], sizes = [2, 32], strides = [1, 1]} : vector<2x128xf32> to vector<2x32xf32>
    %986 = arith.mulf %983, %910 : vector<2x32xf32>
    %987 = arith.mulf %982, %984 : vector<2x32xf32>
    %988 = arith.addf %986, %987 : vector<2x32xf32>
    %989 = math.tanh %988 : vector<2x32xf32>
    %990 = arith.mulf %985, %989 : vector<2x32xf32>
    %c1_407 = arith.constant 1 : index
    %c0_408 = arith.constant 0 : index
    %c0_409 = arith.constant 0 : index
    %991 = vector.load %arg7[%c1_407, %c0_408, %c0_409] : memref<2x32x128xf32, #tpu.memory_space<vmem>>, vector<1x32x128xf32>
    %992 = vector.shape_cast %991 : vector<1x32x128xf32> to vector<32x128xf32>
    %cst_410 = arith.constant dense<0.000000e+00> : vector<2x128xf32>
    %993 = tpu.matmul %990, %992, %cst_410 {dimension_numbers = #tpu.dot_dimension_numbers<[1], [0], [0], [1], [0, 0, 1, 1], [], []>} : vector<2x32xf32>, vector<32x128xf32>, vector<2x128xf32> -> vector<2x128xf32>
    %c1_411 = arith.constant 1 : index
    %c0_412 = arith.constant 0 : index
    %c0_413 = arith.constant 0 : index
    %994 = vector.load %arg8[%c1_411, %c0_412, %c0_413] : memref<2x32x128xf32, #tpu.memory_space<vmem>>, vector<1x32x128xf32>
    %995 = vector.shape_cast %994 : vector<1x32x128xf32> to vector<32x128xf32>
    %c1_414 = arith.constant 1 : index
    %c0_415 = arith.constant 0 : index
    %c0_416 = arith.constant 0 : index
    %996 = vector.load %arg9[%c1_414, %c0_415, %c0_416] : memref<2x1x128xf32, #tpu.memory_space<vmem>>, vector<1x1x128xf32>
    %997 = vector.shape_cast %996 : vector<1x1x128xf32> to vector<1x128xf32>
    %cst_417 = arith.constant dense<0.000000e+00> : vector<2x128xf32>
    %998 = tpu.matmul %938, %995, %cst_417 {dimension_numbers = #tpu.dot_dimension_numbers<[1], [0], [0], [1], [0, 0, 1, 1], [], []>} : vector<2x32xf32>, vector<32x128xf32>, vector<2x128xf32> -> vector<2x128xf32>
    %999 = arith.addf %993, %998 : vector<2x128xf32>
    %1000 = vector.broadcast %997 : vector<1x128xf32> to vector<2x128xf32>
    %1001 = arith.addf %999, %1000 : vector<2x128xf32>
    %1002 = arith.negf %1001 : vector<2x128xf32>
    %1003 = math.exp %1002 : vector<2x128xf32>
    %cst_418 = arith.constant 1.000000e+00 : f32
    %1004 = vector.broadcast %cst_418 : f32 to vector<2x128xf32>
    %1005 = arith.addf %1004, %1003 : vector<2x128xf32>
    %1006 = arith.divf %1004, %1005 : vector<2x128xf32>
    %1007 = math.tanh %1001 : vector<2x128xf32>
    %1008 = vector.extract_strided_slice %1006 {offsets = [0, 0], sizes = [2, 32], strides = [1, 1]} : vector<2x128xf32> to vector<2x32xf32>
    %1009 = vector.extract_strided_slice %1006 {offsets = [0, 32], sizes = [2, 32], strides = [1, 1]} : vector<2x128xf32> to vector<2x32xf32>
    %1010 = vector.extract_strided_slice %1007 {offsets = [0, 64], sizes = [2, 32], strides = [1, 1]} : vector<2x128xf32> to vector<2x32xf32>
    %1011 = vector.extract_strided_slice %1006 {offsets = [0, 96], sizes = [2, 32], strides = [1, 1]} : vector<2x128xf32> to vector<2x32xf32>
    %1012 = arith.mulf %1009, %936 : vector<2x32xf32>
    %1013 = arith.mulf %1008, %1010 : vector<2x32xf32>
    %1014 = arith.addf %1012, %1013 : vector<2x32xf32>
    %1015 = math.tanh %1014 : vector<2x32xf32>
    %1016 = arith.mulf %1011, %1015 : vector<2x32xf32>
    %cst_419 = arith.constant dense<0.000000e+00> : vector<2x128xf32>
    %1017 = tpu.matmul %1016, %416, %cst_419 {dimension_numbers = #tpu.dot_dimension_numbers<[1], [0], [0], [1], [0, 0, 1, 1], [], []>} : vector<2x32xf32>, vector<32x128xf32>, vector<2x128xf32> -> vector<2x128xf32>
    %1018 = vector.shape_cast %1017 : vector<2x128xf32> to vector<2x1x128xf32>
    %c0_420 = arith.constant 0 : index
    %c7 = arith.constant 7 : index
    %c0_421 = arith.constant 0 : index
    %1019 = vector.load %arg12[%c0_420, %c7, %c0_421] : memref<2x8x128xf32, #tpu.memory_space<vmem>>, vector<2x1x128xf32>
    tpu.vector_store %arg12[%c0_420, %c7, %c0_421], %1018 {strides = array<i32>} : memref<2x8x128xf32, #tpu.memory_space<vmem>>, vector<2x1x128xf32>,
    return
  }
  func.func @transform_0(%arg0: i32, %arg1: memref<8xi32, #tpu.memory_space<smem>>) -> (i32, i32) {
    %c0_i32 = arith.constant 0 : i32
    %c0_i32_0 = arith.constant 0 : i32
    %c0_i32_1 = arith.constant 0 : i32
    return %c0_i32, %c0_i32_0 : i32, i32
  }
  func.func @transform_1(%arg0: i32, %arg1: memref<8xi32, #tpu.memory_space<smem>>) -> (i32, i32) {
    %c0_i32 = arith.constant 0 : i32
    %c0_i32_0 = arith.constant 0 : i32
    %c0_i32_1 = arith.constant 0 : i32
    return %c0_i32, %c0_i32_0 : i32, i32
  }
  func.func @transform_2(%arg0: i32, %arg1: memref<8xi32, #tpu.memory_space<smem>>) -> (i32, i32, i32) {
    %c0_i32 = arith.constant 0 : i32
    %c0_i32_0 = arith.constant 0 : i32
    %c0_i32_1 = arith.constant 0 : i32
    %c0_i32_2 = arith.constant 0 : i32
    return %c0_i32, %c0_i32_0, %c0_i32_1 : i32, i32, i32
  }
  func.func @transform_3(%arg0: i32, %arg1: memref<8xi32, #tpu.memory_space<smem>>) -> (i32, i32, i32) {
    %c0_i32 = arith.constant 0 : i32
    %c0_i32_0 = arith.constant 0 : i32
    %c0_i32_1 = arith.constant 0 : i32
    %c0_i32_2 = arith.constant 0 : i32
    return %c0_i32, %c0_i32_0, %c0_i32_1 : i32, i32, i32
  }
  func.func @transform_4(%arg0: i32, %arg1: memref<8xi32, #tpu.memory_space<smem>>) -> (i32, i32, i32) {
    %c0_i32 = arith.constant 0 : i32
    %c0_i32_0 = arith.constant 0 : i32
    %c0_i32_1 = arith.constant 0 : i32
    %c0_i32_2 = arith.constant 0 : i32
    return %c0_i32, %c0_i32_0, %c0_i32_1 : i32, i32, i32
  }
  func.func @transform_5(%arg0: i32, %arg1: memref<8xi32, #tpu.memory_space<smem>>) -> (i32, i32, i32) {
    %c0_i32 = arith.constant 0 : i32
    %c0_i32_0 = arith.constant 0 : i32
    %c0_i32_1 = arith.constant 0 : i32
    %c0_i32_2 = arith.constant 0 : i32
    return %c0_i32, %c0_i32_0, %c0_i32_1 : i32, i32, i32
  }
  func.func @transform_6(%arg0: i32, %arg1: memref<8xi32, #tpu.memory_space<smem>>) -> (i32, i32, i32) {
    %c0_i32 = arith.constant 0 : i32
    %c0_i32_0 = arith.constant 0 : i32
    %c0_i32_1 = arith.constant 0 : i32
    %c0_i32_2 = arith.constant 0 : i32
    return %c0_i32, %c0_i32_0, %c0_i32_1 : i32, i32, i32
  }
  func.func @transform_7(%arg0: i32, %arg1: memref<8xi32, #tpu.memory_space<smem>>) -> (i32, i32, i32) {
    %c0_i32 = arith.constant 0 : i32
    %c0_i32_0 = arith.constant 0 : i32
    %c0_i32_1 = arith.constant 0 : i32
    %c0_i32_2 = arith.constant 0 : i32
    return %c0_i32, %c0_i32_0, %c0_i32_1 : i32, i32, i32
  }
  func.func @transform_8(%arg0: i32, %arg1: memref<8xi32, #tpu.memory_space<smem>>) -> (i32, i32) {
    %c0_i32 = arith.constant 0 : i32
    %c0_i32_0 = arith.constant 0 : i32
    %c0_i32_1 = arith.constant 0 : i32
    return %c0_i32, %c0_i32_0 : i32, i32
  }
  func.func @transform_9(%arg0: i32, %arg1: memref<8xi32, #tpu.memory_space<smem>>) -> (i32, i32) {
    %c0_i32 = arith.constant 0 : i32
    %c0_i32_0 = arith.constant 0 : i32
    %c0_i32_1 = arith.constant 0 : i32
    return %c0_i32, %c0_i32_0 : i32, i32
  }
  func.func @transform_10(%arg0: i32, %arg1: memref<8xi32, #tpu.memory_space<smem>>) -> (i32, i32, i32) {
    %c0_i32 = arith.constant 0 : i32
    %c0_i32_0 = arith.constant 0 : i32
    %c0_i32_1 = arith.constant 0 : i32
    %c0_i32_2 = arith.constant 0 : i32
    return %c0_i32, %c0_i32_0, %c0_i32_1 : i32, i32, i32
  }
}

</mosaic_0001>

<llo_original>
// kernel: seq2seq_forward.1
$region0: #{seq2seq_forward.1}
  #allocation0 [shape = 'u32[]', space=smem, size = 0x4, offset = 0x4, fixed_abs, tag = 'smem constant byte address 0x4 - core index']
  #allocation1 [shape = 'u32[144,128]{1,0:T(1,128)}', space=vmem, size = 0x12000, scoped, tag = 'internal scratch']
  #allocation2 [shape = 's32[1]{0}', space=sflag, size = 0x4, scoped, tag = 'scoped memory for seq2seq_forward.1']
  #allocation3 [shape = 'u8[512]{0}', space=smem, size = 0x200, scoped, tag = 'prefetched SMEM operand 0']
  %s0 = inlined_call_operand.vmem [shape: s32[8], index: 0, kind: input, shape index: {}]
  %s1 = inlined_call_operand.vmem [shape: f32[16,32], index: 1, kind: input, shape index: {}]
  %s2 = inlined_call_operand.vmem [shape: f32[16,32], index: 2, kind: input, shape index: {}]
  %s3 = inlined_call_operand.vmem [shape: f32[2,32,128], index: 3, kind: input, shape index: {}]
  %s4 = inlined_call_operand.vmem [shape: f32[2,32,128], index: 4, kind: input, shape index: {}]
  %s5 = inlined_call_operand.vmem [shape: f32[2,1,128], index: 5, kind: input, shape index: {}]
  %s6 = inlined_call_operand.vmem [shape: f32[2,32,128], index: 6, kind: input, shape index: {}]
  %s7 = inlined_call_operand.vmem [shape: f32[2,32,128], index: 7, kind: input, shape index: {}]
  %s8 = inlined_call_operand.vmem [shape: f32[2,1,128], index: 8, kind: input, shape index: {}]
  %s9 = inlined_call_operand.vmem [shape: f32[128,32], index: 9, kind: input, shape index: {}]
  %s10 = inlined_call_operand.vmem [shape: f32[32,128], index: 10, kind: input, shape index: {}]
  %s11 = inlined_call_operand.hbm [shape: f32[2,8,128], index: 11, kind: output, shape index: {}]
  %s12 = sld [smem:[#allocation0]]
  $region50: #{seq2seq_forward.1} parent=0
    _
  %s14 = ssub.s32 1, %s12
  %s15 = scalar_select 0, %s14, %s12
  %s16 = sshll.u32 %s0, 4
  %s17 = int_to_ptr.vmem [resolvable:$true] %s16
  %19 = dma.vmem_to_smem %s17, 16, [#allocation3], [#allocation2]
  %20 = dma.done [#allocation2], 16
  %21 = sfence
  $region1: #{seq2seq_forward.1} parent=0
    #allocation4 [shape = 'u8[8192]{0}', space=vmem, size = 0x2000, scoped, tag = 'output window, operand 0, single buffered']
    #allocation5 [shape = 's32[1]{0}', space=sflag, size = 0x4, scoped, tag = 'scoped memory for seq2seq_forward.1']
    %22 = vsyncpa [#allocation5], 0
    // Predicated region
    $region2: #{seq2seq_forward.1} parent=1 // pred_check
      _
    $region3: #{seq2seq_forward.1} parent=1 // pred_check_branch
      %24 = sbr.rel (0) target = $region5
    $region4: #{seq2seq_forward.1} parent=1 // pred_region
      _
    $region5: #{seq2seq_forward.1} parent=1 // pred_fallthru
      _
    // Predicated region
    $region6: #{seq2seq_forward.1} parent=1 // pred_check
      _
    $region7: #{seq2seq_forward.1} parent=1 // pred_check_branch
      %26 = sbr.rel (0) target = $region9
    $region8: #{seq2seq_forward.1} parent=1 // pred_region
      _
    $region9: #{seq2seq_forward.1} parent=1 // pred_fallthru
      _
    // Predicated region
    $region10: #{seq2seq_forward.1} parent=1 // pred_check
      _
    $region11: #{seq2seq_forward.1} parent=1 // pred_check_branch
      %28 = sbr.rel (0) target = $region13
    $region12: #{seq2seq_forward.1} parent=1 // pred_region
      _
    $region13: #{seq2seq_forward.1} parent=1 // pred_fallthru
      _
    // Predicated region
    $region14: #{seq2seq_forward.1} parent=1 // pred_check
      _
    $region15: #{seq2seq_forward.1} parent=1 // pred_check_branch
      %30 = sbr.rel (0) target = $region17
    $region16: #{seq2seq_forward.1} parent=1 // pred_region
      _
    $region17: #{seq2seq_forward.1} parent=1 // pred_fallthru
      _
    // Predicated region
    $region18: #{seq2seq_forward.1} parent=1 // pred_check
      _
    $region19: #{seq2seq_forward.1} parent=1 // pred_check_branch
      %32 = sbr.rel (0) target = $region21
    $region20: #{seq2seq_forward.1} parent=1 // pred_region
      _
    $region21: #{seq2seq_forward.1} parent=1 // pred_fallthru
      _
    // Predicated region
    $region22: #{seq2seq_forward.1} parent=1 // pred_check
      _
    $region23: #{seq2seq_forward.1} parent=1 // pred_check_branch
      %34 = sbr.rel (0) target = $region25
    $region24: #{seq2seq_forward.1} parent=1 // pred_region
      _
    $region25: #{seq2seq_forward.1} parent=1 // pred_fallthru
      _
    // Predicated region
    $region26: #{seq2seq_forward.1} parent=1 // pred_check
      _
    $region27: #{seq2seq_forward.1} parent=1 // pred_check_branch
      %36 = sbr.rel (0) target = $region29
    $region28: #{seq2seq_forward.1} parent=1 // pred_region
      _
    $region29: #{seq2seq_forward.1} parent=1 // pred_fallthru
      _
    // Predicated region
    $region30: #{seq2seq_forward.1} parent=1 // pred_check
      _
    $region31: #{seq2seq_forward.1} parent=1 // pred_check_branch
      %38 = sbr.rel (0) target = $region33
    $region32: #{seq2seq_forward.1} parent=1 // pred_region
      _
    $region33: #{seq2seq_forward.1} parent=1 // pred_fallthru
      _
    // Predicated region
    $region34: #{seq2seq_forward.1} parent=1 // pred_check
      _
    $region35: #{seq2seq_forward.1} parent=1 // pred_check_branch
      %40 = sbr.rel (0) target = $region37
    $region36: #{seq2seq_forward.1} parent=1 // pred_region
      _
    $region37: #{seq2seq_forward.1} parent=1 // pred_fallthru
      _
    // Predicated region
    $region38: #{seq2seq_forward.1} parent=1 // pred_check
      _
    $region39: #{seq2seq_forward.1} parent=1 // pred_check_branch
      %42 = sbr.rel (0) target = $region41
    $region40: #{seq2seq_forward.1} parent=1 // pred_region
      _
    $region41: #{seq2seq_forward.1} parent=1 // pred_fallthru
      _
    %v43 = vld [vmem:[%s1] sm:$0xff]
    %v44 = vld [vmem:[%s1 + $0x8] sm:$0xff]
    %v45 = vld [vmem:[%s3] sm:$0xff]
    %v46 = vld [vmem:[%s3 + $0x8] sm:$0xff]
    %v47 = vld [vmem:[%s3 + $0x10] sm:$0xff]
    %v48 = vld [vmem:[%s3 + $0x18] sm:$0xff]
    %vm49 = vcmask 261120
    %v51 = vsel %vm49, %v43, 0
    %v54 = vsel %vm49, %v44, 0
    %56 = vmatprep.subr.mxu0 0.0
    %57 = vmatpush1.msra.mxu0 0.0
    %58 = vmatprep.subr.mxu0 0.0
    %59 = vmatpush1.msra.mxu0 0.0
    %60 = vmatprep.subr.mxu0 0.0
    %61 = vmatpush1.msra.mxu0 0.0
    %62 = vmatprep.subr.mxu0 0.0
    %63 = vmatpush1.msra.mxu0 0.0
    %64 = vmatprep.subr.mxu0 0.0
    %65 = vmatpush1.msra.mxu0 0.0
    %66 = vmatprep.subr.mxu0 0.0
    %67 = vmatpush1.msra.mxu0 0.0
    %68 = vmatprep.subr.mxu0 0.0
    %69 = vmatpush1.msra.mxu0 0.0
    %70 = vmatprep.subr.mxu0 0.0
    %71 = vmatpush1.msra.mxu0 0.0
    %72 = vmatprep.subr.mxu0 0.0
    %73 = vmatpush1.msra.mxu0 0.0
    %74 = vmatprep.subr.mxu0 0.0
    %75 = vmatpush1.msra.mxu0 0.0
    %76 = vmatprep.subr.mxu0 0.0
    %77 = vmatpush1.msra.mxu0 0.0
    %78 = vmatprep.subr.mxu0 0.0
    %79 = vmatpush1.msra.mxu0 0.0
    %80 = vmatprep.subr.mxu0 0.0
    %81 = vmatpush1.msra.mxu0 %v48
    %82 = vmatprep.subr.mxu0 0.0
    %83 = vmatpush1.msra.mxu0 %v47
    %84 = vmatprep.subr.mxu0 0.0
    %85 = vmatpush1.msra.mxu0 %v46
    %86 = vmatprep.subr.mxu0 0.0
    %87 = vmatpush1.msra.mxu0 %v45
    %88 = vmatprep.subr.mxu0 0.0
    %89 = vmatpush2.msra.mxu0 0.0
    %90 = vmatprep.subr.mxu0 0.0
    %91 = vmatpush2.msra.mxu0 0.0
    %92 = vmatprep.subr.mxu0 0.0
    %93 = vmatpush2.msra.mxu0 0.0
    %94 = vmatprep.subr.mxu0 0.0
    %95 = vmatpush2.msra.mxu0 0.0
    %96 = vmatprep.subr.mxu0 0.0
    %97 = vmatpush2.msra.mxu0 0.0
    %98 = vmatprep.subr.mxu0 0.0
    %99 = vmatpush2.msra.mxu0 0.0
    %100 = vmatprep.subr.mxu0 0.0
    %101 = vmatpush2.msra.mxu0 0.0
    %102 = vmatprep.subr.mxu0 0.0
    %103 = vmatpush2.msra.mxu0 0.0
    %104 = vmatprep.subr.mxu0 0.0
    %105 = vmatpush2.msra.mxu0 0.0
    %106 = vmatprep.subr.mxu0 0.0
    %107 = vmatpush2.msra.mxu0 0.0
    %108 = vmatprep.subr.mxu0 0.0
    %109 = vmatpush2.msra.mxu0 0.0
    %110 = vmatprep.subr.mxu0 0.0
    %111 = vmatpush2.msra.mxu0 0.0
    %112 = vmatprep.subr.mxu0 0.0
    %113 = vmatpush2.msra.mxu0 0.0
    %114 = vmatprep.subr.mxu0 0.0
    %115 = vmatpush2.msra.mxu0 0.0
    %116 = vmatprep.subr.mxu0 0.0
    %117 = vmatpush2.msra.mxu0 0.0
    %118 = vmatprep.subr.mxu0 0.0
    %119 = vmatpush2.msra.mxu0 0.0
    %120 = vmatprep.mubr.f32.mxu0 0.0
    %121 = vmatmul.mubr.f32.gmra.mxu0 %v51
    %v122 = vpop.f32.mrf.mxu0
    %v123 = vadd.f32 0.0, %v122
    %v124 = vpop.f32.mrf.mxu0
    %125 = vmatprep.mubr.f32.mxu0 0.0
    %126 = vmatmul.mubr.f32.gmra.mxu0 %v54
    %v127 = vpop.f32.mrf.mxu0
    %v128 = vadd.f32 0.0, %v127
    %v129 = vpop.f32.mrf.mxu0
    %130 = vdwg.mxu0
    %v131 = vld [vmem:[%s4] sm:$0xff]
    %v132 = vld [vmem:[%s4 + $0x8] sm:$0xff]
    %v133 = vld [vmem:[%s4 + $0x10] sm:$0xff]
    %v134 = vld [vmem:[%s4 + $0x18] sm:$0xff]
    %v135 = vld [vmem:[%s5] sm:$0x1]
    %v137 = vsel %vm49, 0.0, 0
    %139 = vmatprep.subr.mxu0 0.0
    %140 = vmatpush1.msra.mxu0 0.0
    %141 = vmatprep.subr.mxu0 0.0
    %142 = vmatpush1.msra.mxu0 0.0
    %143 = vmatprep.subr.mxu0 0.0
    %144 = vmatpush1.msra.mxu0 0.0
    %145 = vmatprep.subr.mxu0 0.0
    %146 = vmatpush1.msra.mxu0 0.0
    %147 = vmatprep.subr.mxu0 0.0
    %148 = vmatpush1.msra.mxu0 0.0
    %149 = vmatprep.subr.mxu0 0.0
    %150 = vmatpush1.msra.mxu0 0.0
    %151 = vmatprep.subr.mxu0 0.0
    %152 = vmatpush1.msra.mxu0 0.0
    %153 = vmatprep.subr.mxu0 0.0
    %154 = vmatpush1.msra.mxu0 0.0
    %155 = vmatprep.subr.mxu0 0.0
    %156 = vmatpush1.msra.mxu0 0.0
    %157 = vmatprep.subr.mxu0 0.0
    %158 = vmatpush1.msra.mxu0 0.0
    %159 = vmatprep.subr.mxu0 0.0
    %160 = vmatpush1.msra.mxu0 0.0
    %161 = vmatprep.subr.mxu0 0.0
    %162 = vmatpush1.msra.mxu0 0.0
    %163 = vmatprep.subr.mxu0 0.0
    %164 = vmatpush1.msra.mxu0 %v134
    %165 = vmatprep.subr.mxu0 0.0
    %166 = vmatpush1.msra.mxu0 %v133
    %167 = vmatprep.subr.mxu0 0.0
    %168 = vmatpush1.msra.mxu0 %v132
    %169 = vmatprep.subr.mxu0 0.0
    %170 = vmatpush1.msra.mxu0 %v131
    %171 = vmatprep.subr.mxu0 0.0
    %172 = vmatpush2.msra.mxu0 0.0
    %173 = vmatprep.subr.mxu0 0.0
    %174 = vmatpush2.msra.mxu0 0.0
    %175 = vmatprep.subr.mxu0 0.0
    %176 = vmatpush2.msra.mxu0 0.0
    %177 = vmatprep.subr.mxu0 0.0
    %178 = vmatpush2.msra.mxu0 0.0
    %179 = vmatprep.subr.mxu0 0.0
    %180 = vmatpush2.msra.mxu0 0.0
    %181 = vmatprep.subr.mxu0 0.0
    %182 = vmatpush2.msra.mxu0 0.0
    %183 = vmatprep.subr.mxu0 0.0
    %184 = vmatpush2.msra.mxu0 0.0
    %185 = vmatprep.subr.mxu0 0.0
    %186 = vmatpush2.msra.mxu0 0.0
    %187 = vmatprep.subr.mxu0 0.0
    %188 = vmatpush2.msra.mxu0 0.0
    %189 = vmatprep.subr.mxu0 0.0
    %190 = vmatpush2.msra.mxu0 0.0
    %191 = vmatprep.subr.mxu0 0.0
    %192 = vmatpush2.msra.mxu0 0.0
    %193 = vmatprep.subr.mxu0 0.0
    %194 = vmatpush2.msra.mxu0 0.0
    %195 = vmatprep.subr.mxu0 0.0
    %196 = vmatpush2.msra.mxu0 0.0
    %197 = vmatprep.subr.mxu0 0.0
    %198 = vmatpush2.msra.mxu0 0.0
    %199 = vmatprep.subr.mxu0 0.0
    %200 = vmatpush2.msra.mxu0 0.0
    %201 = vmatprep.subr.mxu0 0.0
    %202 = vmatpush2.msra.mxu0 0.0
    %203 = vmatprep.mubr.f32.mxu0 0.0
    %204 = vmatmul.mubr.f32.gmra.mxu0 %v137
    %v205 = vpop.f32.mrf.mxu0
    %v206 = vadd.f32 0.0, %v205
    %v207 = vpop.f32.mrf.mxu0
    %208 = vdwg.mxu0
    %v209 = vadd.f32 %v123, %v206
    %v211 = vlaneseq
    %v212 = vshrl.u32 %v211, 7
    %v213 = vsub.s32 0, %v212
    %v214 = vrot.slane %v135, %v213
    %v216 = vadd.f32 %v209, %v214
    %v217 = vxor.u32 %v216, 2147483648
    %v218 = vmul.f32 %v217, 1.442695
    %v219 = vpow.pop %v218
    %v220 = vadd.f32 %v219, 1.0
    %v221 = vrcp.pop %v220
    %v222 = vmul.f32 1.0, %v221
    %v223 = vtanh.pop %v216
    %v224 = vmul.f32 %v222, 0.0
    %226 = vrot.lane.b32.xlu0 %v223, 64
    %v227 = vpop.permute.xlu0 %226
    %v229 = vmul.f32 %v222, %v227
    %231 = vrot.lane.b32.xlu0 %v229, 32
    %v232 = vpop.permute.xlu0 %231
    %v234 = vadd.f32 %v224, %v232
    %v235 = vtanh.pop %v234
    %237 = vrot.lane.b32.xlu0 %v235, 64
    %v238 = vpop.permute.xlu0 %237
    %v240 = vmul.f32 %v222, %v238
    %s241 = scalar_lea.vmem %s3, 32
    %v242 = vld [vmem:[%s241] sm:$0xff]
    %v243 = vld [vmem:[%s241 + $0x8] sm:$0xff]
    %v244 = vld [vmem:[%s241 + $0x10] sm:$0xff]
    %v245 = vld [vmem:[%s241 + $0x18] sm:$0xff]
    %s246 = scalar_lea.vmem %s4, 32
    %v247 = vld [vmem:[%s246] sm:$0xff]
    %v248 = vld [vmem:[%s246 + $0x8] sm:$0xff]
    %v249 = vld [vmem:[%s246 + $0x10] sm:$0xff]
    %v250 = vld [vmem:[%s246 + $0x18] sm:$0xff]
    %s251 = scalar_lea.vmem %s5, 1
    %v252 = vld [vmem:[%s251] sm:$0x1]
    %253 = vmatprep.subr.mxu0 0.0
    %254 = vmatpush1.msra.mxu0 0.0
    %255 = vmatprep.subr.mxu0 0.0
    %256 = vmatpush1.msra.mxu0 0.0
    %257 = vmatprep.subr.mxu0 0.0
    %258 = vmatpush1.msra.mxu0 0.0
    %259 = vmatprep.subr.mxu0 0.0
    %260 = vmatpush1.msra.mxu0 0.0
    %261 = vmatprep.subr.mxu0 0.0
    %262 = vmatpush1.msra.mxu0 0.0
    %263 = vmatprep.subr.mxu0 0.0
    %264 = vmatpush1.msra.mxu0 0.0
    %265 = vmatprep.subr.mxu0 0.0
    %266 = vmatpush1.msra.mxu0 0.0
    %267 = vmatprep.subr.mxu0 0.0
    %268 = vmatpush1.msra.mxu0 0.0
    %269 = vmatprep.subr.mxu0 0.0
    %270 = vmatpush1.msra.mxu0 0.0
    %271 = vmatprep.subr.mxu0 0.0
    %272 = vmatpush1.msra.mxu0 0.0
    %273 = vmatprep.subr.mxu0 0.0
    %274 = vmatpush1.msra.mxu0 0.0
    %275 = vmatprep.subr.mxu0 0.0
    %276 = vmatpush1.msra.mxu0 0.0
    %277 = vmatprep.subr.mxu0 0.0
    %278 = vmatpush1.msra.mxu0 %v250
    %279 = vmatprep.subr.mxu0 0.0
    %280 = vmatpush1.msra.mxu0 %v249
    %281 = vmatprep.subr.mxu0 0.0
    %282 = vmatpush1.msra.mxu0 %v248
    %283 = vmatprep.subr.mxu0 0.0
    %284 = vmatpush1.msra.mxu0 %v247
    %285 = vmatprep.subr.mxu0 0.0
    %286 = vmatpush2.msra.mxu0 0.0
    %287 = vmatprep.subr.mxu0 0.0
    %288 = vmatpush2.msra.mxu0 0.0
    %289 = vmatprep.subr.mxu0 0.0
    %290 = vmatpush2.msra.mxu0 0.0
    %291 = vmatprep.subr.mxu0 0.0
    %292 = vmatpush2.msra.mxu0 0.0
    %293 = vmatprep.subr.mxu0 0.0
    %294 = vmatpush2.msra.mxu0 0.0
    %295 = vmatprep.subr.mxu0 0.0
    %296 = vmatpush2.msra.mxu0 0.0
    %297 = vmatprep.subr.mxu0 0.0
    %298 = vmatpush2.msra.mxu0 0.0
    %299 = vmatprep.subr.mxu0 0.0
    %300 = vmatpush2.msra.mxu0 0.0
    %301 = vmatprep.subr.mxu0 0.0
    %302 = vmatpush2.msra.mxu0 0.0
    %303 = vmatprep.subr.mxu0 0.0
    %304 = vmatpush2.msra.mxu0 0.0
    %305 = vmatprep.subr.mxu0 0.0
    %306 = vmatpush2.msra.mxu0 0.0
    %307 = vmatprep.subr.mxu0 0.0
    %308 = vmatpush2.msra.mxu0 0.0
    %309 = vmatprep.subr.mxu0 0.0
    %310 = vmatpush2.msra.mxu0 0.0
    %311 = vmatprep.subr.mxu0 0.0
    %312 = vmatpush2.msra.mxu0 0.0
    %313 = vmatprep.subr.mxu0 0.0
    %314 = vmatpush2.msra.mxu0 0.0
    %315 = vmatprep.subr.mxu0 0.0
    %316 = vmatpush2.msra.mxu0 0.0
    %317 = vmatprep.mubr.f32.mxu0 0.0
    %318 = vmatmul.mubr.f32.gmra.mxu0 %v137
    %v319 = vpop.f32.mrf.mxu0
    %v320 = vadd.f32 0.0, %v319
    %v321 = vpop.f32.mrf.mxu0
    %322 = vdwg.mxu0
    %324 = vrot.lane.b32.xlu0 %v240, 32
    %v325 = vpop.permute.xlu0 %324
    %v326 = vsel %vm49, %v325, 0
    %328 = vmatprep.subr.mxu0 0.0
    %329 = vmatpush1.msra.mxu0 0.0
    %330 = vmatprep.subr.mxu0 0.0
    %331 = vmatpush1.msra.mxu0 0.0
    %332 = vmatprep.subr.mxu0 0.0
    %333 = vmatpush1.msra.mxu0 0.0
    %334 = vmatprep.subr.mxu0 0.0
    %335 = vmatpush1.msra.mxu0 0.0
    %336 = vmatprep.subr.mxu0 0.0
    %337 = vmatpush1.msra.mxu0 0.0
    %338 = vmatprep.subr.mxu0 0.0
    %339 = vmatpush1.msra.mxu0 0.0
    %340 = vmatprep.subr.mxu0 0.0
    %341 = vmatpush1.msra.mxu0 0.0
    %342 = vmatprep.subr.mxu0 0.0
    %343 = vmatpush1.msra.mxu0 0.0
    %344 = vmatprep.subr.mxu0 0.0
    %345 = vmatpush1.msra.mxu0 0.0
    %346 = vmatprep.subr.mxu0 0.0
    %347 = vmatpush1.msra.mxu0 0.0
    %348 = vmatprep.subr.mxu0 0.0
    %349 = vmatpush1.msra.mxu0 0.0
    %350 = vmatprep.subr.mxu0 0.0
    %351 = vmatpush1.msra.mxu0 0.0
    %352 = vmatprep.subr.mxu0 0.0
    %353 = vmatpush1.msra.mxu0 %v245
    %354 = vmatprep.subr.mxu0 0.0
    %355 = vmatpush1.msra.mxu0 %v244
    %356 = vmatprep.subr.mxu0 0.0
    %357 = vmatpush1.msra.mxu0 %v243
    %358 = vmatprep.subr.mxu0 0.0
    %359 = vmatpush1.msra.mxu0 %v242
    %360 = vmatprep.subr.mxu0 0.0
    %361 = vmatpush2.msra.mxu0 0.0
    %362 = vmatprep.subr.mxu0 0.0
    %363 = vmatpush2.msra.mxu0 0.0
    %364 = vmatprep.subr.mxu0 0.0
    %365 = vmatpush2.msra.mxu0 0.0
    %366 = vmatprep.subr.mxu0 0.0
    %367 = vmatpush2.msra.mxu0 0.0
    %368 = vmatprep.subr.mxu0 0.0
    %369 = vmatpush2.msra.mxu0 0.0
    %370 = vmatprep.subr.mxu0 0.0
    %371 = vmatpush2.msra.mxu0 0.0
    %372 = vmatprep.subr.mxu0 0.0
    %373 = vmatpush2.msra.mxu0 0.0
    %374 = vmatprep.subr.mxu0 0.0
    %375 = vmatpush2.msra.mxu0 0.0
    %376 = vmatprep.subr.mxu0 0.0
    %377 = vmatpush2.msra.mxu0 0.0
    %378 = vmatprep.subr.mxu0 0.0
    %379 = vmatpush2.msra.mxu0 0.0
    %380 = vmatprep.subr.mxu0 0.0
    %381 = vmatpush2.msra.mxu0 0.0
    %382 = vmatprep.subr.mxu0 0.0
    %383 = vmatpush2.msra.mxu0 0.0
    %384 = vmatprep.subr.mxu0 0.0
    %385 = vmatpush2.msra.mxu0 0.0
    %386 = vmatprep.subr.mxu0 0.0
    %387 = vmatpush2.msra.mxu0 0.0
    %388 = vmatprep.subr.mxu0 0.0
    %389 = vmatpush2.msra.mxu0 0.0
    %390 = vmatprep.subr.mxu0 0.0
    %391 = vmatpush2.msra.mxu0 0.0
    %392 = vmatprep.mubr.f32.mxu0 0.0
    %393 = vmatmul.mubr.f32.gmra.mxu0 %v326
    %v394 = vpop.f32.mrf.mxu0
    %v395 = vadd.f32 %v320, %v394
    %v396 = vpop.f32.mrf.mxu0
    %397 = vdwg.mxu0
    %v399 = vlaneseq
    %v400 = vshrl.u32 %v399, 7
    %v401 = vsub.s32 0, %v400
    %v402 = vrot.slane %v252, %v401
    %v404 = vadd.f32 %v395, %v402
    %v405 = vxor.u32 %v404, 2147483648
    %v406 = vmul.f32 %v405, 1.442695
    %v407 = vpow.pop %v406
    %v408 = vadd.f32 %v407, 1.0
    %v409 = vrcp.pop %v408
    %v410 = vmul.f32 1.0, %v409
    %v411 = vtanh.pop %v404
    %v412 = vmul.f32 %v410, 0.0
    %414 = vrot.lane.b32.xlu0 %v411, 64
    %v415 = vpop.permute.xlu0 %414
    %v417 = vmul.f32 %v410, %v415
    %419 = vrot.lane.b32.xlu0 %v417, 32
    %v420 = vpop.permute.xlu0 %419
    %v422 = vadd.f32 %v412, %v420
    %v423 = vtanh.pop %v422
    %425 = vrot.lane.b32.xlu0 %v423, 64
    %v426 = vpop.permute.xlu0 %425
    %v428 = vmul.f32 %v410, %v426
    %429 = vmatprep.subr.mxu0 0.0
    %430 = vmatpush1.msra.mxu0 0.0
    %431 = vmatprep.subr.mxu0 0.0
    %432 = vmatpush1.msra.mxu0 0.0
    %433 = vmatprep.subr.mxu0 0.0
    %434 = vmatpush1.msra.mxu0 0.0
    %435 = vmatprep.subr.mxu0 0.0
    %436 = vmatpush1.msra.mxu0 0.0
    %437 = vmatprep.subr.mxu0 0.0
    %438 = vmatpush1.msra.mxu0 0.0
    %439 = vmatprep.subr.mxu0 0.0
    %440 = vmatpush1.msra.mxu0 0.0
    %441 = vmatprep.subr.mxu0 0.0
    %442 = vmatpush1.msra.mxu0 0.0
    %443 = vmatprep.subr.mxu0 0.0
    %444 = vmatpush1.msra.mxu0 0.0
    %445 = vmatprep.subr.mxu0 0.0
    %446 = vmatpush1.msra.mxu0 0.0
    %447 = vmatprep.subr.mxu0 0.0
    %448 = vmatpush1.msra.mxu0 0.0
    %449 = vmatprep.subr.mxu0 0.0
    %450 = vmatpush1.msra.mxu0 0.0
    %451 = vmatprep.subr.mxu0 0.0
    %452 = vmatpush1.msra.mxu0 0.0
    %453 = vmatprep.subr.mxu0 0.0
    %454 = vmatpush1.msra.mxu0 %v134
    %455 = vmatprep.subr.mxu0 0.0
    %456 = vmatpush1.msra.mxu0 %v133
    %457 = vmatprep.subr.mxu0 0.0
    %458 = vmatpush1.msra.mxu0 %v132
    %459 = vmatprep.subr.mxu0 0.0
    %460 = vmatpush1.msra.mxu0 %v131
    %461 = vmatprep.subr.mxu0 0.0
    %462 = vmatpush2.msra.mxu0 0.0
    %463 = vmatprep.subr.mxu0 0.0
    %464 = vmatpush2.msra.mxu0 0.0
    %465 = vmatprep.subr.mxu0 0.0
    %466 = vmatpush2.msra.mxu0 0.0
    %467 = vmatprep.subr.mxu0 0.0
    %468 = vmatpush2.msra.mxu0 0.0
    %469 = vmatprep.subr.mxu0 0.0
    %470 = vmatpush2.msra.mxu0 0.0
    %471 = vmatprep.subr.mxu0 0.0
    %472 = vmatpush2.msra.mxu0 0.0
    %473 = vmatprep.subr.mxu0 0.0
    %474 = vmatpush2.msra.mxu0 0.0
    %475 = vmatprep.subr.mxu0 0.0
    %476 = vmatpush2.msra.mxu0 0.0
    %477 = vmatprep.subr.mxu0 0.0
    %478 = vmatpush2.msra.mxu0 0.0
    %479 = vmatprep.subr.mxu0 0.0
    %480 = vmatpush2.msra.mxu0 0.0
    %481 = vmatprep.subr.mxu0 0.0
    %482 = vmatpush2.msra.mxu0 0.0
    %483 = vmatprep.subr.mxu0 0.0
    %484 = vmatpush2.msra.mxu0 0.0
    %485 = vmatprep.subr.mxu0 0.0
    %486 = vmatpush2.msra.mxu0 0.0
    %487 = vmatprep.subr.mxu0 0.0
    %488 = vmatpush2.msra.mxu0 0.0
    %489 = vmatprep.subr.mxu0 0.0
    %490 = vmatpush2.msra.mxu0 0.0
    %491 = vmatprep.subr.mxu0 0.0
    %492 = vmatpush2.msra.mxu0 0.0
    %493 = vmatprep.mubr.f32.mxu0 0.0
    %494 = vmatmul.mubr.f32.gmra.mxu0 %v326
    %v495 = vpop.f32.mrf.mxu0
    %v496 = vadd.f32 0.0, %v495
    %v497 = vpop.f32.mrf.mxu0
    %498 = vdwg.mxu0
    %v500 = vrot.slane %v496, 6
    %v502 = vadd.f32 %v123, %v500
    %v503 = vadd.f32 %v502, %v214
    %v504 = vxor.u32 %v503, 2147483648
    %v505 = vmul.f32 %v504, 1.442695
    %v506 = vpow.pop %v505
    %v507 = vadd.f32 %v506, 1.0
    %v508 = vrcp.pop %v507
    %v509 = vmul.f32 1.0, %v508
    %v510 = vtanh.pop %v503
    %v512 = vrot.slane %v234, 6
    %v514 = vmul.f32 %v509, %v512
    %516 = vrot.lane.b32.xlu0 %v510, 64
    %v517 = vpop.permute.xlu0 %516
    %v519 = vmul.f32 %v509, %v517
    %521 = vrot.lane.b32.xlu0 %v519, 32
    %v522 = vpop.permute.xlu0 %521
    %v524 = vadd.f32 %v514, %v522
    %v525 = vtanh.pop %v524
    %527 = vrot.lane.b32.xlu0 %v525, 64
    %v528 = vpop.permute.xlu0 %527
    %v530 = vmul.f32 %v509, %v528
    %532 = vrot.lane.b32.xlu0 %v428, 32
    %v533 = vpop.permute.xlu0 %532
    %v534 = vsel %vm49, %v533, 0
    %536 = vmatprep.subr.mxu0 0.0
    %537 = vmatpush1.msra.mxu0 0.0
    %538 = vmatprep.subr.mxu0 0.0
    %539 = vmatpush1.msra.mxu0 0.0
    %540 = vmatprep.subr.mxu0 0.0
    %541 = vmatpush1.msra.mxu0 0.0
    %542 = vmatprep.subr.mxu0 0.0
    %543 = vmatpush1.msra.mxu0 0.0
    %544 = vmatprep.subr.mxu0 0.0
    %545 = vmatpush1.msra.mxu0 0.0
    %546 = vmatprep.subr.mxu0 0.0
    %547 = vmatpush1.msra.mxu0 0.0
    %548 = vmatprep.subr.mxu0 0.0
    %549 = vmatpush1.msra.mxu0 0.0
    %550 = vmatprep.subr.mxu0 0.0
    %551 = vmatpush1.msra.mxu0 0.0
    %552 = vmatprep.subr.mxu0 0.0
    %553 = vmatpush1.msra.mxu0 0.0
    %554 = vmatprep.subr.mxu0 0.0
    %555 = vmatpush1.msra.mxu0 0.0
    %556 = vmatprep.subr.mxu0 0.0
    %557 = vmatpush1.msra.mxu0 0.0
    %558 = vmatprep.subr.mxu0 0.0
    %559 = vmatpush1.msra.mxu0 0.0
    %560 = vmatprep.subr.mxu0 0.0
    %561 = vmatpush1.msra.mxu0 %v250
    %562 = vmatprep.subr.mxu0 0.0
    %563 = vmatpush1.msra.mxu0 %v249
    %564 = vmatprep.subr.mxu0 0.0
    %565 = vmatpush1.msra.mxu0 %v248
    %566 = vmatprep.subr.mxu0 0.0
    %567 = vmatpush1.msra.mxu0 %v247
    %568 = vmatprep.subr.mxu0 0.0
    %569 = vmatpush2.msra.mxu0 0.0
    %570 = vmatprep.subr.mxu0 0.0
    %571 = vmatpush2.msra.mxu0 0.0
    %572 = vmatprep.subr.mxu0 0.0
    %573 = vmatpush2.msra.mxu0 0.0
    %574 = vmatprep.subr.mxu0 0.0
    %575 = vmatpush2.msra.mxu0 0.0
    %576 = vmatprep.subr.mxu0 0.0
    %577 = vmatpush2.msra.mxu0 0.0
    %578 = vmatprep.subr.mxu0 0.0
    %579 = vmatpush2.msra.mxu0 0.0
    %580 = vmatprep.subr.mxu0 0.0
    %581 = vmatpush2.msra.mxu0 0.0
    %582 = vmatprep.subr.mxu0 0.0
    %583 = vmatpush2.msra.mxu0 0.0
    %584 = vmatprep.subr.mxu0 0.0
    %585 = vmatpush2.msra.mxu0 0.0
    %586 = vmatprep.subr.mxu0 0.0
    %587 = vmatpush2.msra.mxu0 0.0
    %588 = vmatprep.subr.mxu0 0.0
    %589 = vmatpush2.msra.mxu0 0.0
    %590 = vmatprep.subr.mxu0 0.0
    %591 = vmatpush2.msra.mxu0 0.0
    %592 = vmatprep.subr.mxu0 0.0
    %593 = vmatpush2.msra.mxu0 0.0
    %594 = vmatprep.subr.mxu0 0.0
    %595 = vmatpush2.msra.mxu0 0.0
    %596 = vmatprep.subr.mxu0 0.0
    %597 = vmatpush2.msra.mxu0 0.0
    %598 = vmatprep.subr.mxu0 0.0
    %599 = vmatpush2.msra.mxu0 0.0
    %600 = vmatprep.mubr.f32.mxu0 0.0
    %601 = vmatmul.mubr.f32.gmra.mxu0 %v534
    %v602 = vpop.f32.mrf.mxu0
    %v603 = vadd.f32 0.0, %v602
    %v604 = vpop.f32.mrf.mxu0
    %605 = vdwg.mxu0
    %v607 = vrot.slane %v530, 2
    %608 = vrot.lane.b32.xlu0 %v607, 32
    %v609 = vpop.permute.xlu0 %608
    %v610 = vsel %vm49, %v609, 0
    %612 = vmatprep.subr.mxu0 0.0
    %613 = vmatpush1.msra.mxu0 0.0
    %614 = vmatprep.subr.mxu0 0.0
    %615 = vmatpush1.msra.mxu0 0.0
    %616 = vmatprep.subr.mxu0 0.0
    %617 = vmatpush1.msra.mxu0 0.0
    %618 = vmatprep.subr.mxu0 0.0
    %619 = vmatpush1.msra.mxu0 0.0
    %620 = vmatprep.subr.mxu0 0.0
    %621 = vmatpush1.msra.mxu0 0.0
    %622 = vmatprep.subr.mxu0 0.0
    %623 = vmatpush1.msra.mxu0 0.0
    %624 = vmatprep.subr.mxu0 0.0
    %625 = vmatpush1.msra.mxu0 0.0
    %626 = vmatprep.subr.mxu0 0.0
    %627 = vmatpush1.msra.mxu0 0.0
    %628 = vmatprep.subr.mxu0 0.0
    %629 = vmatpush1.msra.mxu0 0.0
    %630 = vmatprep.subr.mxu0 0.0
    %631 = vmatpush1.msra.mxu0 0.0
    %632 = vmatprep.subr.mxu0 0.0
    %633 = vmatpush1.msra.mxu0 0.0
    %634 = vmatprep.subr.mxu0 0.0
    %635 = vmatpush1.msra.mxu0 0.0
    %636 = vmatprep.subr.mxu0 0.0
    %637 = vmatpush1.msra.mxu0 %v245
    %638 = vmatprep.subr.mxu0 0.0
    %639 = vmatpush1.msra.mxu0 %v244
    %640 = vmatprep.subr.mxu0 0.0
    %641 = vmatpush1.msra.mxu0 %v243
    %642 = vmatprep.subr.mxu0 0.0
    %643 = vmatpush1.msra.mxu0 %v242
    %644 = vmatprep.subr.mxu0 0.0
    %645 = vmatpush2.msra.mxu0 0.0
    %646 = vmatprep.subr.mxu0 0.0
    %647 = vmatpush2.msra.mxu0 0.0
    %648 = vmatprep.subr.mxu0 0.0
    %649 = vmatpush2.msra.mxu0 0.0
    %650 = vmatprep.subr.mxu0 0.0
    %651 = vmatpush2.msra.mxu0 0.0
    %652 = vmatprep.subr.mxu0 0.0
    %653 = vmatpush2.msra.mxu0 0.0
    %654 = vmatprep.subr.mxu0 0.0
    %655 = vmatpush2.msra.mxu0 0.0
    %656 = vmatprep.subr.mxu0 0.0
    %657 = vmatpush2.msra.mxu0 0.0
    %658 = vmatprep.subr.mxu0 0.0
    %659 = vmatpush2.msra.mxu0 0.0
    %660 = vmatprep.subr.mxu0 0.0
    %661 = vmatpush2.msra.mxu0 0.0
    %662 = vmatprep.subr.mxu0 0.0
    %663 = vmatpush2.msra.mxu0 0.0
    %664 = vmatprep.subr.mxu0 0.0
    %665 = vmatpush2.msra.mxu0 0.0
    %666 = vmatprep.subr.mxu0 0.0
    %667 = vmatpush2.msra.mxu0 0.0
    %668 = vmatprep.subr.mxu0 0.0
    %669 = vmatpush2.msra.mxu0 0.0
    %670 = vmatprep.subr.mxu0 0.0
    %671 = vmatpush2.msra.mxu0 0.0
    %672 = vmatprep.subr.mxu0 0.0
    %673 = vmatpush2.msra.mxu0 0.0
    %674 = vmatprep.subr.mxu0 0.0
    %675 = vmatpush2.msra.mxu0 0.0
    %676 = vmatprep.mubr.f32.mxu0 0.0
    %677 = vmatmul.mubr.f32.gmra.mxu0 %v610
    %v678 = vpop.f32.mrf.mxu0
    %v679 = vadd.f32 %v603, %v678
    %v680 = vpop.f32.mrf.mxu0
    %681 = vdwg.mxu0
    %v682 = vadd.f32 %v679, %v402
    %v683 = vxor.u32 %v682, 2147483648
    %v684 = vmul.f32 %v683, 1.442695
    %v685 = vpow.pop %v684
    %v686 = vadd.f32 %v685, 1.0
    %v687 = vrcp.pop %v686
    %v688 = vmul.f32 1.0, %v687
    %v689 = vtanh.pop %v682
    %v690 = vmul.f32 %v688, %v422
    %692 = vrot.lane.b32.xlu0 %v689, 64
    %v693 = vpop.permute.xlu0 %692
    %v695 = vmul.f32 %v688, %v693
    %697 = vrot.lane.b32.xlu0 %v695, 32
    %v698 = vpop.permute.xlu0 %697
    %v700 = vadd.f32 %v690, %v698
    %v701 = vtanh.pop %v700
    %703 = vrot.lane.b32.xlu0 %v701, 64
    %v704 = vpop.permute.xlu0 %703
    %v706 = vmul.f32 %v688, %v704
    %707 = vmatprep.subr.mxu0 0.0
    %708 = vmatpush1.msra.mxu0 0.0
    %709 = vmatprep.subr.mxu0 0.0
    %710 = vmatpush1.msra.mxu0 0.0
    %711 = vmatprep.subr.mxu0 0.0
    %712 = vmatpush1.msra.mxu0 0.0
    %713 = vmatprep.subr.mxu0 0.0
    %714 = vmatpush1.msra.mxu0 0.0
    %715 = vmatprep.subr.mxu0 0.0
    %716 = vmatpush1.msra.mxu0 0.0
    %717 = vmatprep.subr.mxu0 0.0
    %718 = vmatpush1.msra.mxu0 0.0
    %719 = vmatprep.subr.mxu0 0.0
    %720 = vmatpush1.msra.mxu0 0.0
    %721 = vmatprep.subr.mxu0 0.0
    %722 = vmatpush1.msra.mxu0 0.0
    %723 = vmatprep.subr.mxu0 0.0
    %724 = vmatpush1.msra.mxu0 0.0
    %725 = vmatprep.subr.mxu0 0.0
    %726 = vmatpush1.msra.mxu0 0.0
    %727 = vmatprep.subr.mxu0 0.0
    %728 = vmatpush1.msra.mxu0 0.0
    %729 = vmatprep.subr.mxu0 0.0
    %730 = vmatpush1.msra.mxu0 0.0
    %731 = vmatprep.subr.mxu0 0.0
    %732 = vmatpush1.msra.mxu0 %v134
    %733 = vmatprep.subr.mxu0 0.0
    %734 = vmatpush1.msra.mxu0 %v133
    %735 = vmatprep.subr.mxu0 0.0
    %736 = vmatpush1.msra.mxu0 %v132
    %737 = vmatprep.subr.mxu0 0.0
    %738 = vmatpush1.msra.mxu0 %v131
    %739 = vmatprep.subr.mxu0 0.0
    %740 = vmatpush2.msra.mxu0 0.0
    %741 = vmatprep.subr.mxu0 0.0
    %742 = vmatpush2.msra.mxu0 0.0
    %743 = vmatprep.subr.mxu0 0.0
    %744 = vmatpush2.msra.mxu0 0.0
    %745 = vmatprep.subr.mxu0 0.0
    %746 = vmatpush2.msra.mxu0 0.0
    %747 = vmatprep.subr.mxu0 0.0
    %748 = vmatpush2.msra.mxu0 0.0
    %749 = vmatprep.subr.mxu0 0.0
    %750 = vmatpush2.msra.mxu0 0.0
    %751 = vmatprep.subr.mxu0 0.0
    %752 = vmatpush2.msra.mxu0 0.0
    %753 = vmatprep.subr.mxu0 0.0
    %754 = vmatpush2.msra.mxu0 0.0
    %755 = vmatprep.subr.mxu0 0.0
    %756 = vmatpush2.msra.mxu0 0.0
    %757 = vmatprep.subr.mxu0 0.0
    %758 = vmatpush2.msra.mxu0 0.0
    %759 = vmatprep.subr.mxu0 0.0
    %760 = vmatpush2.msra.mxu0 0.0
    %761 = vmatprep.subr.mxu0 0.0
    %762 = vmatpush2.msra.mxu0 0.0
    %763 = vmatprep.subr.mxu0 0.0
    %764 = vmatpush2.msra.mxu0 0.0
    %765 = vmatprep.subr.mxu0 0.0
    %766 = vmatpush2.msra.mxu0 0.0
    %767 = vmatprep.subr.mxu0 0.0
    %768 = vmatpush2.msra.mxu0 0.0
    %769 = vmatprep.subr.mxu0 0.0
    %770 = vmatpush2.msra.mxu0 0.0
    %771 = vmatprep.mubr.f32.mxu0 0.0
    %772 = vmatmul.mubr.f32.gmra.mxu0 %v610
    %v773 = vpop.f32.mrf.mxu0
    %v774 = vadd.f32 0.0, %v773
    %v775 = vpop.f32.mrf.mxu0
    %776 = vdwg.mxu0
    %v778 = vrot.slane %v774, 4
    %v780 = vadd.f32 %v123, %v778
    %v781 = vadd.f32 %v780, %v214
    %v782 = vxor.u32 %v781, 2147483648
    %v783 = vmul.f32 %v782, 1.442695
    %v784 = vpow.pop %v783
    %v785 = vadd.f32 %v784, 1.0
    %v786 = vrcp.pop %v785
    %v787 = vmul.f32 1.0, %v786
    %v788 = vtanh.pop %v781
    %v790 = vrot.slane %v524, 6
    %v792 = vmul.f32 %v787, %v790
    %794 = vrot.lane.b32.xlu0 %v788, 64
    %v795 = vpop.permute.xlu0 %794
    %v797 = vmul.f32 %v787, %v795
    %799 = vrot.lane.b32.xlu0 %v797, 32
    %v800 = vpop.permute.xlu0 %799
    %v802 = vadd.f32 %v792, %v800
    %v803 = vtanh.pop %v802
    %805 = vrot.lane.b32.xlu0 %v803, 64
    %v806 = vpop.permute.xlu0 %805
    %v808 = vmul.f32 %v787, %v806
    %810 = vrot.lane.b32.xlu0 %v706, 32
    %v811 = vpop.permute.xlu0 %810
    %v812 = vsel %vm49, %v811, 0
    %814 = vmatprep.subr.mxu0 0.0
    %815 = vmatpush1.msra.mxu0 0.0
    %816 = vmatprep.subr.mxu0 0.0
    %817 = vmatpush1.msra.mxu0 0.0
    %818 = vmatprep.subr.mxu0 0.0
    %819 = vmatpush1.msra.mxu0 0.0
    %820 = vmatprep.subr.mxu0 0.0
    %821 = vmatpush1.msra.mxu0 0.0
    %822 = vmatprep.subr.mxu0 0.0
    %823 = vmatpush1.msra.mxu0 0.0
    %824 = vmatprep.subr.mxu0 0.0
    %825 = vmatpush1.msra.mxu0 0.0
    %826 = vmatprep.subr.mxu0 0.0
    %827 = vmatpush1.msra.mxu0 0.0
    %828 = vmatprep.subr.mxu0 0.0
    %829 = vmatpush1.msra.mxu0 0.0
    %830 = vmatprep.subr.mxu0 0.0
    %831 = vmatpush1.msra.mxu0 0.0
    %832 = vmatprep.subr.mxu0 0.0
    %833 = vmatpush1.msra.mxu0 0.0
    %834 = vmatprep.subr.mxu0 0.0
    %835 = vmatpush1.msra.mxu0 0.0
    %836 = vmatprep.subr.mxu0 0.0
    %837 = vmatpush1.msra.mxu0 0.0
    %838 = vmatprep.subr.mxu0 0.0
    %839 = vmatpush1.msra.mxu0 %v250
    %840 = vmatprep.subr.mxu0 0.0
    %841 = vmatpush1.msra.mxu0 %v249
    %842 = vmatprep.subr.mxu0 0.0
    %843 = vmatpush1.msra.mxu0 %v248
    %844 = vmatprep.subr.mxu0 0.0
    %845 = vmatpush1.msra.mxu0 %v247
    %846 = vmatprep.subr.mxu0 0.0
    %847 = vmatpush2.msra.mxu0 0.0
    %848 = vmatprep.subr.mxu0 0.0
    %849 = vmatpush2.msra.mxu0 0.0
    %850 = vmatprep.subr.mxu0 0.0
    %851 = vmatpush2.msra.mxu0 0.0
    %852 = vmatprep.subr.mxu0 0.0
    %853 = vmatpush2.msra.mxu0 0.0
    %854 = vmatprep.subr.mxu0 0.0
    %855 = vmatpush2.msra.mxu0 0.0
    %856 = vmatprep.subr.mxu0 0.0
    %857 = vmatpush2.msra.mxu0 0.0
    %858 = vmatprep.subr.mxu0 0.0
    %859 = vmatpush2.msra.mxu0 0.0
    %860 = vmatprep.subr.mxu0 0.0
    %861 = vmatpush2.msra.mxu0 0.0
    %862 = vmatprep.subr.mxu0 0.0
    %863 = vmatpush2.msra.mxu0 0.0
    %864 = vmatprep.subr.mxu0 0.0
    %865 = vmatpush2.msra.mxu0 0.0
    %866 = vmatprep.subr.mxu0 0.0
    %867 = vmatpush2.msra.mxu0 0.0
    %868 = vmatprep.subr.mxu0 0.0
    %869 = vmatpush2.msra.mxu0 0.0
    %870 = vmatprep.subr.mxu0 0.0
    %871 = vmatpush2.msra.mxu0 0.0
    %872 = vmatprep.subr.mxu0 0.0
    %873 = vmatpush2.msra.mxu0 0.0
    %874 = vmatprep.subr.mxu0 0.0
    %875 = vmatpush2.msra.mxu0 0.0
    %876 = vmatprep.subr.mxu0 0.0
    %877 = vmatpush2.msra.mxu0 0.0
    %878 = vmatprep.mubr.f32.mxu0 0.0
    %879 = vmatmul.mubr.f32.gmra.mxu0 %v812
    %v880 = vpop.f32.mrf.mxu0
    %v881 = vadd.f32 0.0, %v880
    %v882 = vpop.f32.mrf.mxu0
    %883 = vdwg.mxu0
    %v885 = vrot.slane %v808, 4
    %886 = vrot.lane.b32.xlu0 %v885, 32
    %v887 = vpop.permute.xlu0 %886
    %v888 = vsel %vm49, %v887, 0
    %890 = vmatprep.subr.mxu0 0.0
    %891 = vmatpush1.msra.mxu0 0.0
    %892 = vmatprep.subr.mxu0 0.0
    %893 = vmatpush1.msra.mxu0 0.0
    %894 = vmatprep.subr.mxu0 0.0
    %895 = vmatpush1.msra.mxu0 0.0
    %896 = vmatprep.subr.mxu0 0.0
    %897 = vmatpush1.msra.mxu0 0.0
    %898 = vmatprep.subr.mxu0 0.0
    %899 = vmatpush1.msra.mxu0 0.0
    %900 = vmatprep.subr.mxu0 0.0
    %901 = vmatpush1.msra.mxu0 0.0
    %902 = vmatprep.subr.mxu0 0.0
    %903 = vmatpush1.msra.mxu0 0.0
    %904 = vmatprep.subr.mxu0 0.0
    %905 = vmatpush1.msra.mxu0 0.0
    %906 = vmatprep.subr.mxu0 0.0
    %907 = vmatpush1.msra.mxu0 0.0
    %908 = vmatprep.subr.mxu0 0.0
    %909 = vmatpush1.msra.mxu0 0.0
    %910 = vmatprep.subr.mxu0 0.0
    %911 = vmatpush1.msra.mxu0 0.0
    %912 = vmatprep.subr.mxu0 0.0
    %913 = vmatpush1.msra.mxu0 0.0
    %914 = vmatprep.subr.mxu0 0.0
    %915 = vmatpush1.msra.mxu0 %v245
    %916 = vmatprep.subr.mxu0 0.0
    %917 = vmatpush1.msra.mxu0 %v244
    %918 = vmatprep.subr.mxu0 0.0
    %919 = vmatpush1.msra.mxu0 %v243
    %920 = vmatprep.subr.mxu0 0.0
    %921 = vmatpush1.msra.mxu0 %v242
    %922 = vmatprep.subr.mxu0 0.0
    %923 = vmatpush2.msra.mxu0 0.0
    %924 = vmatprep.subr.mxu0 0.0
    %925 = vmatpush2.msra.mxu0 0.0
    %926 = vmatprep.subr.mxu0 0.0
    %927 = vmatpush2.msra.mxu0 0.0
    %928 = vmatprep.subr.mxu0 0.0
    %929 = vmatpush2.msra.mxu0 0.0
    %930 = vmatprep.subr.mxu0 0.0
    %931 = vmatpush2.msra.mxu0 0.0
    %932 = vmatprep.subr.mxu0 0.0
    %933 = vmatpush2.msra.mxu0 0.0
    %934 = vmatprep.subr.mxu0 0.0
    %935 = vmatpush2.msra.mxu0 0.0
    %936 = vmatprep.subr.mxu0 0.0
    %937 = vmatpush2.msra.mxu0 0.0
    %938 = vmatprep.subr.mxu0 0.0
    %939 = vmatpush2.msra.mxu0 0.0
    %940 = vmatprep.subr.mxu0 0.0
    %941 = vmatpush2.msra.mxu0 0.0
    %942 = vmatprep.subr.mxu0 0.0
    %943 = vmatpush2.msra.mxu0 0.0
    %944 = vmatprep.subr.mxu0 0.0
    %945 = vmatpush2.msra.mxu0 0.0
    %946 = vmatprep.subr.mxu0 0.0
    %947 = vmatpush2.msra.mxu0 0.0
    %948 = vmatprep.subr.mxu0 0.0
    %949 = vmatpush2.msra.mxu0 0.0
    %950 = vmatprep.subr.mxu0 0.0
    %951 = vmatpush2.msra.mxu0 0.0
    %952 = vmatprep.subr.mxu0 0.0
    %953 = vmatpush2.msra.mxu0 0.0
    %954 = vmatprep.mubr.f32.mxu0 0.0
    %955 = vmatmul.mubr.f32.gmra.mxu0 %v888
    %v956 = vpop.f32.mrf.mxu0
    %v957 = vadd.f32 %v881, %v956
    %v958 = vpop.f32.mrf.mxu0
    %959 = vdwg.mxu0
    %v960 = vadd.f32 %v957, %v402
    %v961 = vxor.u32 %v960, 2147483648
    %v962 = vmul.f32 %v961, 1.442695
    %v963 = vpow.pop %v962
    %v964 = vadd.f32 %v963, 1.0
    %v965 = vrcp.pop %v964
    %v966 = vmul.f32 1.0, %v965
    %v967 = vtanh.pop %v960
    %v968 = vmul.f32 %v966, %v700
    %970 = vrot.lane.b32.xlu0 %v967, 64
    %v971 = vpop.permute.xlu0 %970
    %v973 = vmul.f32 %v966, %v971
    %975 = vrot.lane.b32.xlu0 %v973, 32
    %v976 = vpop.permute.xlu0 %975
    %v978 = vadd.f32 %v968, %v976
    %v979 = vtanh.pop %v978
    %981 = vrot.lane.b32.xlu0 %v979, 64
    %v982 = vpop.permute.xlu0 %981
    %v984 = vmul.f32 %v966, %v982
    %985 = vmatprep.subr.mxu0 0.0
    %986 = vmatpush1.msra.mxu0 0.0
    %987 = vmatprep.subr.mxu0 0.0
    %988 = vmatpush1.msra.mxu0 0.0
    %989 = vmatprep.subr.mxu0 0.0
    %990 = vmatpush1.msra.mxu0 0.0
    %991 = vmatprep.subr.mxu0 0.0
    %992 = vmatpush1.msra.mxu0 0.0
    %993 = vmatprep.subr.mxu0 0.0
    %994 = vmatpush1.msra.mxu0 0.0
    %995 = vmatprep.subr.mxu0 0.0
    %996 = vmatpush1.msra.mxu0 0.0
    %997 = vmatprep.subr.mxu0 0.0
    %998 = vmatpush1.msra.mxu0 0.0
    %999 = vmatprep.subr.mxu0 0.0
    %1000 = vmatpush1.msra.mxu0 0.0
    %1001 = vmatprep.subr.mxu0 0.0
    %1002 = vmatpush1.msra.mxu0 0.0
    %1003 = vmatprep.subr.mxu0 0.0
    %1004 = vmatpush1.msra.mxu0 0.0
    %1005 = vmatprep.subr.mxu0 0.0
    %1006 = vmatpush1.msra.mxu0 0.0
    %1007 = vmatprep.subr.mxu0 0.0
    %1008 = vmatpush1.msra.mxu0 0.0
    %1009 = vmatprep.subr.mxu0 0.0
    %1010 = vmatpush1.msra.mxu0 %v134
    %1011 = vmatprep.subr.mxu0 0.0
    %1012 = vmatpush1.msra.mxu0 %v133
    %1013 = vmatprep.subr.mxu0 0.0
    %1014 = vmatpush1.msra.mxu0 %v132
    %1015 = vmatprep.subr.mxu0 0.0
    %1016 = vmatpush1.msra.mxu0 %v131
    %1017 = vmatprep.subr.mxu0 0.0
    %1018 = vmatpush2.msra.mxu0 0.0
    %1019 = vmatprep.subr.mxu0 0.0
    %1020 = vmatpush2.msra.mxu0 0.0
    %1021 = vmatprep.subr.mxu0 0.0
    %1022 = vmatpush2.msra.mxu0 0.0
    %1023 = vmatprep.subr.mxu0 0.0
    %1024 = vmatpush2.msra.mxu0 0.0
    %1025 = vmatprep.subr.mxu0 0.0
    %1026 = vmatpush2.msra.mxu0 0.0
    %1027 = vmatprep.subr.mxu0 0.0
    %1028 = vmatpush2.msra.mxu0 0.0
    %1029 = vmatprep.subr.mxu0 0.0
    %1030 = vmatpush2.msra.mxu0 0.0
    %1031 = vmatprep.subr.mxu0 0.0
    %1032 = vmatpush2.msra.mxu0 0.0
    %1033 = vmatprep.subr.mxu0 0.0
    %1034 = vmatpush2.msra.mxu0 0.0
    %1035 = vmatprep.subr.mxu0 0.0
    %1036 = vmatpush2.msra.mxu0 0.0
    %1037 = vmatprep.subr.mxu0 0.0
    %1038 = vmatpush2.msra.mxu0 0.0
    %1039 = vmatprep.subr.mxu0 0.0
    %1040 = vmatpush2.msra.mxu0 0.0
    %1041 = vmatprep.subr.mxu0 0.0
    %1042 = vmatpush2.msra.mxu0 0.0
    %1043 = vmatprep.subr.mxu0 0.0
    %1044 = vmatpush2.msra.mxu0 0.0
    %1045 = vmatprep.subr.mxu0 0.0
    %1046 = vmatpush2.msra.mxu0 0.0
    %1047 = vmatprep.subr.mxu0 0.0
    %1048 = vmatpush2.msra.mxu0 0.0
    %1049 = vmatprep.mubr.f32.mxu0 0.0
    %1050 = vmatmul.mubr.f32.gmra.mxu0 %v888
    %v1051 = vpop.f32.mrf.mxu0
    %v1052 = vadd.f32 0.0, %v1051
    %v1053 = vpop.f32.mrf.mxu0
    %1054 = vdwg.mxu0
    %v1056 = vrot.slane %v1052, 2
    %v1058 = vadd.f32 %v123, %v1056
    %v1059 = vadd.f32 %v1058, %v214
    %v1060 = vxor.u32 %v1059, 2147483648
    %v1061 = vmul.f32 %v1060, 1.442695
    %v1062 = vpow.pop %v1061
    %v1063 = vadd.f32 %v1062, 1.0
    %v1064 = vrcp.pop %v1063
    %v1065 = vmul.f32 1.0, %v1064
    %v1066 = vtanh.pop %v1059
    %v1068 = vrot.slane %v802, 6
    %v1070 = vmul.f32 %v1065, %v1068
    %1072 = vrot.lane.b32.xlu0 %v1066, 64
    %v1073 = vpop.permute.xlu0 %1072
    %v1075 = vmul.f32 %v1065, %v1073
    %1077 = vrot.lane.b32.xlu0 %v1075, 32
    %v1078 = vpop.permute.xlu0 %1077
    %v1080 = vadd.f32 %v1070, %v1078
    %v1081 = vtanh.pop %v1080
    %1083 = vrot.lane.b32.xlu0 %v1081, 64
    %v1084 = vpop.permute.xlu0 %1083
    %v1086 = vmul.f32 %v1065, %v1084
    %1088 = vrot.lane.b32.xlu0 %v984, 32
    %v1089 = vpop.permute.xlu0 %1088
    %v1090 = vsel %vm49, %v1089, 0
    %1092 = vmatprep.subr.mxu0 0.0
    %1093 = vmatpush1.msra.mxu0 0.0
    %1094 = vmatprep.subr.mxu0 0.0
    %1095 = vmatpush1.msra.mxu0 0.0
    %1096 = vmatprep.subr.mxu0 0.0
    %1097 = vmatpush1.msra.mxu0 0.0
    %1098 = vmatprep.subr.mxu0 0.0
    %1099 = vmatpush1.msra.mxu0 0.0
    %1100 = vmatprep.subr.mxu0 0.0
    %1101 = vmatpush1.msra.mxu0 0.0
    %1102 = vmatprep.subr.mxu0 0.0
    %1103 = vmatpush1.msra.mxu0 0.0
    %1104 = vmatprep.subr.mxu0 0.0
    %1105 = vmatpush1.msra.mxu0 0.0
    %1106 = vmatprep.subr.mxu0 0.0
    %1107 = vmatpush1.msra.mxu0 0.0
    %1108 = vmatprep.subr.mxu0 0.0
    %1109 = vmatpush1.msra.mxu0 0.0
    %1110 = vmatprep.subr.mxu0 0.0
    %1111 = vmatpush1.msra.mxu0 0.0
    %1112 = vmatprep.subr.mxu0 0.0
    %1113 = vmatpush1.msra.mxu0 0.0
    %1114 = vmatprep.subr.mxu0 0.0
    %1115 = vmatpush1.msra.mxu0 0.0
    %1116 = vmatprep.subr.mxu0 0.0
    %1117 = vmatpush1.msra.mxu0 %v250
    %1118 = vmatprep.subr.mxu0 0.0
    %1119 = vmatpush1.msra.mxu0 %v249
    %1120 = vmatprep.subr.mxu0 0.0
    %1121 = vmatpush1.msra.mxu0 %v248
    %1122 = vmatprep.subr.mxu0 0.0
    %1123 = vmatpush1.msra.mxu0 %v247
    %1124 = vmatprep.subr.mxu0 0.0
    %1125 = vmatpush2.msra.mxu0 0.0
    %1126 = vmatprep.subr.mxu0 0.0
    %1127 = vmatpush2.msra.mxu0 0.0
    %1128 = vmatprep.subr.mxu0 0.0
    %1129 = vmatpush2.msra.mxu0 0.0
    %1130 = vmatprep.subr.mxu0 0.0
    %1131 = vmatpush2.msra.mxu0 0.0
    %1132 = vmatprep.subr.mxu0 0.0
    %1133 = vmatpush2.msra.mxu0 0.0
    %1134 = vmatprep.subr.mxu0 0.0
    %1135 = vmatpush2.msra.mxu0 0.0
    %1136 = vmatprep.subr.mxu0 0.0
    %1137 = vmatpush2.msra.mxu0 0.0
    %1138 = vmatprep.subr.mxu0 0.0
    %1139 = vmatpush2.msra.mxu0 0.0
    %1140 = vmatprep.subr.mxu0 0.0
    %1141 = vmatpush2.msra.mxu0 0.0
    %1142 = vmatprep.subr.mxu0 0.0
    %1143 = vmatpush2.msra.mxu0 0.0
    %1144 = vmatprep.subr.mxu0 0.0
    %1145 = vmatpush2.msra.mxu0 0.0
    %1146 = vmatprep.subr.mxu0 0.0
    %1147 = vmatpush2.msra.mxu0 0.0
    %1148 = vmatprep.subr.mxu0 0.0
    %1149 = vmatpush2.msra.mxu0 0.0
    %1150 = vmatprep.subr.mxu0 0.0
    %1151 = vmatpush2.msra.mxu0 0.0
    %1152 = vmatprep.subr.mxu0 0.0
    %1153 = vmatpush2.msra.mxu0 0.0
    %1154 = vmatprep.subr.mxu0 0.0
    %1155 = vmatpush2.msra.mxu0 0.0
    %1156 = vmatprep.mubr.f32.mxu0 0.0
    %1157 = vmatmul.mubr.f32.gmra.mxu0 %v1090
    %v1158 = vpop.f32.mrf.mxu0
    %v1159 = vadd.f32 0.0, %v1158
    %v1160 = vpop.f32.mrf.mxu0
    %1161 = vdwg.mxu0
    %v1163 = vrot.slane %v1086, 6
    %1164 = vrot.lane.b32.xlu0 %v1163, 32
    %v1165 = vpop.permute.xlu0 %1164
    %v1166 = vsel %vm49, %v1165, 0
    %1168 = vmatprep.subr.mxu0 0.0
    %1169 = vmatpush1.msra.mxu0 0.0
    %1170 = vmatprep.subr.mxu0 0.0
    %1171 = vmatpush1.msra.mxu0 0.0
    %1172 = vmatprep.subr.mxu0 0.0
    %1173 = vmatpush1.msra.mxu0 0.0
    %1174 = vmatprep.subr.mxu0 0.0
    %1175 = vmatpush1.msra.mxu0 0.0
    %1176 = vmatprep.subr.mxu0 0.0
    %1177 = vmatpush1.msra.mxu0 0.0
    %1178 = vmatprep.subr.mxu0 0.0
    %1179 = vmatpush1.msra.mxu0 0.0
    %1180 = vmatprep.subr.mxu0 0.0
    %1181 = vmatpush1.msra.mxu0 0.0
    %1182 = vmatprep.subr.mxu0 0.0
    %1183 = vmatpush1.msra.mxu0 0.0
    %1184 = vmatprep.subr.mxu0 0.0
    %1185 = vmatpush1.msra.mxu0 0.0
    %1186 = vmatprep.subr.mxu0 0.0
    %1187 = vmatpush1.msra.mxu0 0.0
    %1188 = vmatprep.subr.mxu0 0.0
    %1189 = vmatpush1.msra.mxu0 0.0
    %1190 = vmatprep.subr.mxu0 0.0
    %1191 = vmatpush1.msra.mxu0 0.0
    %1192 = vmatprep.subr.mxu0 0.0
    %1193 = vmatpush1.msra.mxu0 %v245
    %1194 = vmatprep.subr.mxu0 0.0
    %1195 = vmatpush1.msra.mxu0 %v244
    %1196 = vmatprep.subr.mxu0 0.0
    %1197 = vmatpush1.msra.mxu0 %v243
    %1198 = vmatprep.subr.mxu0 0.0
    %1199 = vmatpush1.msra.mxu0 %v242
    %1200 = vmatprep.subr.mxu0 0.0
    %1201 = vmatpush2.msra.mxu0 0.0
    %1202 = vmatprep.subr.mxu0 0.0
    %1203 = vmatpush2.msra.mxu0 0.0
    %1204 = vmatprep.subr.mxu0 0.0
    %1205 = vmatpush2.msra.mxu0 0.0
    %1206 = vmatprep.subr.mxu0 0.0
    %1207 = vmatpush2.msra.mxu0 0.0
    %1208 = vmatprep.subr.mxu0 0.0
    %1209 = vmatpush2.msra.mxu0 0.0
    %1210 = vmatprep.subr.mxu0 0.0
    %1211 = vmatpush2.msra.mxu0 0.0
    %1212 = vmatprep.subr.mxu0 0.0
    %1213 = vmatpush2.msra.mxu0 0.0
    %1214 = vmatprep.subr.mxu0 0.0
    %1215 = vmatpush2.msra.mxu0 0.0
    %1216 = vmatprep.subr.mxu0 0.0
    %1217 = vmatpush2.msra.mxu0 0.0
    %1218 = vmatprep.subr.mxu0 0.0
    %1219 = vmatpush2.msra.mxu0 0.0
    %1220 = vmatprep.subr.mxu0 0.0
    %1221 = vmatpush2.msra.mxu0 0.0
    %1222 = vmatprep.subr.mxu0 0.0
    %1223 = vmatpush2.msra.mxu0 0.0
    %1224 = vmatprep.subr.mxu0 0.0
    %1225 = vmatpush2.msra.mxu0 0.0
    %1226 = vmatprep.subr.mxu0 0.0
    %1227 = vmatpush2.msra.mxu0 0.0
    %1228 = vmatprep.subr.mxu0 0.0
    %1229 = vmatpush2.msra.mxu0 0.0
    %1230 = vmatprep.subr.mxu0 0.0
    %1231 = vmatpush2.msra.mxu0 0.0
    %1232 = vmatprep.mubr.f32.mxu0 0.0
    %1233 = vmatmul.mubr.f32.gmra.mxu0 %v1166
    %v1234 = vpop.f32.mrf.mxu0
    %v1235 = vadd.f32 %v1159, %v1234
    %v1236 = vpop.f32.mrf.mxu0
    %1237 = vdwg.mxu0
    %v1238 = vadd.f32 %v1235, %v402
    %v1239 = vxor.u32 %v1238, 2147483648
    %v1240 = vmul.f32 %v1239, 1.442695
    %v1241 = vpow.pop %v1240
    %v1242 = vadd.f32 %v1241, 1.0
    %v1243 = vrcp.pop %v1242
    %v1244 = vmul.f32 1.0, %v1243
    %v1245 = vtanh.pop %v1238
    %v1246 = vmul.f32 %v1244, %v978
    %1248 = vrot.lane.b32.xlu0 %v1245, 64
    %v1249 = vpop.permute.xlu0 %1248
    %v1251 = vmul.f32 %v1244, %v1249
    %1253 = vrot.lane.b32.xlu0 %v1251, 32
    %v1254 = vpop.permute.xlu0 %1253
    %v1256 = vadd.f32 %v1246, %v1254
    %v1257 = vtanh.pop %v1256
    %1259 = vrot.lane.b32.xlu0 %v1257, 64
    %v1260 = vpop.permute.xlu0 %1259
    %v1262 = vmul.f32 %v1244, %v1260
    %1263 = vmatprep.subr.mxu0 0.0
    %1264 = vmatpush1.msra.mxu0 0.0
    %1265 = vmatprep.subr.mxu0 0.0
    %1266 = vmatpush1.msra.mxu0 0.0
    %1267 = vmatprep.subr.mxu0 0.0
    %1268 = vmatpush1.msra.mxu0 0.0
    %1269 = vmatprep.subr.mxu0 0.0
    %1270 = vmatpush1.msra.mxu0 0.0
    %1271 = vmatprep.subr.mxu0 0.0
    %1272 = vmatpush1.msra.mxu0 0.0
    %1273 = vmatprep.subr.mxu0 0.0
    %1274 = vmatpush1.msra.mxu0 0.0
    %1275 = vmatprep.subr.mxu0 0.0
    %1276 = vmatpush1.msra.mxu0 0.0
    %1277 = vmatprep.subr.mxu0 0.0
    %1278 = vmatpush1.msra.mxu0 0.0
    %1279 = vmatprep.subr.mxu0 0.0
    %1280 = vmatpush1.msra.mxu0 0.0
    %1281 = vmatprep.subr.mxu0 0.0
    %1282 = vmatpush1.msra.mxu0 0.0
    %1283 = vmatprep.subr.mxu0 0.0
    %1284 = vmatpush1.msra.mxu0 0.0
    %1285 = vmatprep.subr.mxu0 0.0
    %1286 = vmatpush1.msra.mxu0 0.0
    %1287 = vmatprep.subr.mxu0 0.0
    %1288 = vmatpush1.msra.mxu0 %v134
    %1289 = vmatprep.subr.mxu0 0.0
    %1290 = vmatpush1.msra.mxu0 %v133
    %1291 = vmatprep.subr.mxu0 0.0
    %1292 = vmatpush1.msra.mxu0 %v132
    %1293 = vmatprep.subr.mxu0 0.0
    %1294 = vmatpush1.msra.mxu0 %v131
    %1295 = vmatprep.subr.mxu0 0.0
    %1296 = vmatpush2.msra.mxu0 0.0
    %1297 = vmatprep.subr.mxu0 0.0
    %1298 = vmatpush2.msra.mxu0 0.0
    %1299 = vmatprep.subr.mxu0 0.0
    %1300 = vmatpush2.msra.mxu0 0.0
    %1301 = vmatprep.subr.mxu0 0.0
    %1302 = vmatpush2.msra.mxu0 0.0
    %1303 = vmatprep.subr.mxu0 0.0
    %1304 = vmatpush2.msra.mxu0 0.0
    %1305 = vmatprep.subr.mxu0 0.0
    %1306 = vmatpush2.msra.mxu0 0.0
    %1307 = vmatprep.subr.mxu0 0.0
    %1308 = vmatpush2.msra.mxu0 0.0
    %1309 = vmatprep.subr.mxu0 0.0
    %1310 = vmatpush2.msra.mxu0 0.0
    %1311 = vmatprep.subr.mxu0 0.0
    %1312 = vmatpush2.msra.mxu0 0.0
    %1313 = vmatprep.subr.mxu0 0.0
    %1314 = vmatpush2.msra.mxu0 0.0
    %1315 = vmatprep.subr.mxu0 0.0
    %1316 = vmatpush2.msra.mxu0 0.0
    %1317 = vmatprep.subr.mxu0 0.0
    %1318 = vmatpush2.msra.mxu0 0.0
    %1319 = vmatprep.subr.mxu0 0.0
    %1320 = vmatpush2.msra.mxu0 0.0
    %1321 = vmatprep.subr.mxu0 0.0
    %1322 = vmatpush2.msra.mxu0 0.0
    %1323 = vmatprep.subr.mxu0 0.0
    %1324 = vmatpush2.msra.mxu0 0.0
    %1325 = vmatprep.subr.mxu0 0.0
    %1326 = vmatpush2.msra.mxu0 0.0
    %1327 = vmatprep.mubr.f32.mxu0 0.0
    %1328 = vmatmul.mubr.f32.gmra.mxu0 %v1166
    %v1329 = vpop.f32.mrf.mxu0
    %v1330 = vadd.f32 0.0, %v1329
    %v1331 = vpop.f32.mrf.mxu0
    %1332 = vdwg.mxu0
    %v1333 = vadd.f32 %v128, %v1330
    %v1334 = vadd.f32 %v1333, %v214
    %v1335 = vxor.u32 %v1334, 2147483648
    %v1336 = vmul.f32 %v1335, 1.442695
    %v1337 = vpow.pop %v1336
    %v1338 = vadd.f32 %v1337, 1.0
    %v1339 = vrcp.pop %v1338
    %v1340 = vmul.f32 1.0, %v1339
    %v1341 = vtanh.pop %v1334
    %v1343 = vrot.slane %v1080, 6
    %v1345 = vmul.f32 %v1340, %v1343
    %1347 = vrot.lane.b32.xlu0 %v1341, 64
    %v1348 = vpop.permute.xlu0 %1347
    %v1350 = vmul.f32 %v1340, %v1348
    %1352 = vrot.lane.b32.xlu0 %v1350, 32
    %v1353 = vpop.permute.xlu0 %1352
    %v1355 = vadd.f32 %v1345, %v1353
    %v1356 = vtanh.pop %v1355
    %1358 = vrot.lane.b32.xlu0 %v1356, 64
    %v1359 = vpop.permute.xlu0 %1358
    %v1361 = vmul.f32 %v1340, %v1359
    %1363 = vrot.lane.b32.xlu0 %v1262, 32
    %v1364 = vpop.permute.xlu0 %1363
    %v1365 = vsel %vm49, %v1364, 0
    %1367 = vmatprep.subr.mxu0 0.0
    %1368 = vmatpush1.msra.mxu0 0.0
    %1369 = vmatprep.subr.mxu0 0.0
    %1370 = vmatpush1.msra.mxu0 0.0
    %1371 = vmatprep.subr.mxu0 0.0
    %1372 = vmatpush1.msra.mxu0 0.0
    %1373 = vmatprep.subr.mxu0 0.0
    %1374 = vmatpush1.msra.mxu0 0.0
    %1375 = vmatprep.subr.mxu0 0.0
    %1376 = vmatpush1.msra.mxu0 0.0
    %1377 = vmatprep.subr.mxu0 0.0
    %1378 = vmatpush1.msra.mxu0 0.0
    %1379 = vmatprep.subr.mxu0 0.0
    %1380 = vmatpush1.msra.mxu0 0.0
    %1381 = vmatprep.subr.mxu0 0.0
    %1382 = vmatpush1.msra.mxu0 0.0
    %1383 = vmatprep.subr.mxu0 0.0
    %1384 = vmatpush1.msra.mxu0 0.0
    %1385 = vmatprep.subr.mxu0 0.0
    %1386 = vmatpush1.msra.mxu0 0.0
    %1387 = vmatprep.subr.mxu0 0.0
    %1388 = vmatpush1.msra.mxu0 0.0
    %1389 = vmatprep.subr.mxu0 0.0
    %1390 = vmatpush1.msra.mxu0 0.0
    %1391 = vmatprep.subr.mxu0 0.0
    %1392 = vmatpush1.msra.mxu0 %v250
    %1393 = vmatprep.subr.mxu0 0.0
    %1394 = vmatpush1.msra.mxu0 %v249
    %1395 = vmatprep.subr.mxu0 0.0
    %1396 = vmatpush1.msra.mxu0 %v248
    %1397 = vmatprep.subr.mxu0 0.0
    %1398 = vmatpush1.msra.mxu0 %v247
    %1399 = vmatprep.subr.mxu0 0.0
    %1400 = vmatpush2.msra.mxu0 0.0
    %1401 = vmatprep.subr.mxu0 0.0
    %1402 = vmatpush2.msra.mxu0 0.0
    %1403 = vmatprep.subr.mxu0 0.0
    %1404 = vmatpush2.msra.mxu0 0.0
    %1405 = vmatprep.subr.mxu0 0.0
    %1406 = vmatpush2.msra.mxu0 0.0
    %1407 = vmatprep.subr.mxu0 0.0
    %1408 = vmatpush2.msra.mxu0 0.0
    %1409 = vmatprep.subr.mxu0 0.0
    %1410 = vmatpush2.msra.mxu0 0.0
    %1411 = vmatprep.subr.mxu0 0.0
    %1412 = vmatpush2.msra.mxu0 0.0
    %1413 = vmatprep.subr.mxu0 0.0
    %1414 = vmatpush2.msra.mxu0 0.0
    %1415 = vmatprep.subr.mxu0 0.0
    %1416 = vmatpush2.msra.mxu0 0.0
    %1417 = vmatprep.subr.mxu0 0.0
    %1418 = vmatpush2.msra.mxu0 0.0
    %1419 = vmatprep.subr.mxu0 0.0
    %1420 = vmatpush2.msra.mxu0 0.0
    %1421 = vmatprep.subr.mxu0 0.0
    %1422 = vmatpush2.msra.mxu0 0.0
    %1423 = vmatprep.subr.mxu0 0.0
    %1424 = vmatpush2.msra.mxu0 0.0
    %1425 = vmatprep.subr.mxu0 0.0
    %1426 = vmatpush2.msra.mxu0 0.0
    %1427 = vmatprep.subr.mxu0 0.0
    %1428 = vmatpush2.msra.mxu0 0.0
    %1429 = vmatprep.subr.mxu0 0.0
    %1430 = vmatpush2.msra.mxu0 0.0
    %1431 = vmatprep.mubr.f32.mxu0 0.0
    %1432 = vmatmul.mubr.f32.gmra.mxu0 %v1365
    %v1433 = vpop.f32.mrf.mxu0
    %v1434 = vadd.f32 0.0, %v1433
    %v1435 = vpop.f32.mrf.mxu0
    %1436 = vdwg.mxu0
    %1438 = vrot.lane.b32.xlu0 %v1361, 32
    %v1439 = vpop.permute.xlu0 %1438
    %v1440 = vsel %vm49, %v1439, 0
    %1442 = vmatprep.subr.mxu0 0.0
    %1443 = vmatpush1.msra.mxu0 0.0
    %1444 = vmatprep.subr.mxu0 0.0
    %1445 = vmatpush1.msra.mxu0 0.0
    %1446 = vmatprep.subr.mxu0 0.0
    %1447 = vmatpush1.msra.mxu0 0.0
    %1448 = vmatprep.subr.mxu0 0.0
    %1449 = vmatpush1.msra.mxu0 0.0
    %1450 = vmatprep.subr.mxu0 0.0
    %1451 = vmatpush1.msra.mxu0 0.0
    %1452 = vmatprep.subr.mxu0 0.0
    %1453 = vmatpush1.msra.mxu0 0.0
    %1454 = vmatprep.subr.mxu0 0.0
    %1455 = vmatpush1.msra.mxu0 0.0
    %1456 = vmatprep.subr.mxu0 0.0
    %1457 = vmatpush1.msra.mxu0 0.0
    %1458 = vmatprep.subr.mxu0 0.0
    %1459 = vmatpush1.msra.mxu0 0.0
    %1460 = vmatprep.subr.mxu0 0.0
    %1461 = vmatpush1.msra.mxu0 0.0
    %1462 = vmatprep.subr.mxu0 0.0
    %1463 = vmatpush1.msra.mxu0 0.0
    %1464 = vmatprep.subr.mxu0 0.0
    %1465 = vmatpush1.msra.mxu0 0.0
    %1466 = vmatprep.subr.mxu0 0.0
    %1467 = vmatpush1.msra.mxu0 %v245
    %1468 = vmatprep.subr.mxu0 0.0
    %1469 = vmatpush1.msra.mxu0 %v244
    %1470 = vmatprep.subr.mxu0 0.0
    %1471 = vmatpush1.msra.mxu0 %v243
    %1472 = vmatprep.subr.mxu0 0.0
    %1473 = vmatpush1.msra.mxu0 %v242
    %1474 = vmatprep.subr.mxu0 0.0
    %1475 = vmatpush2.msra.mxu0 0.0
    %1476 = vmatprep.subr.mxu0 0.0
    %1477 = vmatpush2.msra.mxu0 0.0
    %1478 = vmatprep.subr.mxu0 0.0
    %1479 = vmatpush2.msra.mxu0 0.0
    %1480 = vmatprep.subr.mxu0 0.0
    %1481 = vmatpush2.msra.mxu0 0.0
    %1482 = vmatprep.subr.mxu0 0.0
    %1483 = vmatpush2.msra.mxu0 0.0
    %1484 = vmatprep.subr.mxu0 0.0
    %1485 = vmatpush2.msra.mxu0 0.0
    %1486 = vmatprep.subr.mxu0 0.0
    %1487 = vmatpush2.msra.mxu0 0.0
    %1488 = vmatprep.subr.mxu0 0.0
    %1489 = vmatpush2.msra.mxu0 0.0
    %1490 = vmatprep.subr.mxu0 0.0
    %1491 = vmatpush2.msra.mxu0 0.0
    %1492 = vmatprep.subr.mxu0 0.0
    %1493 = vmatpush2.msra.mxu0 0.0
    %1494 = vmatprep.subr.mxu0 0.0
    %1495 = vmatpush2.msra.mxu0 0.0
    %1496 = vmatprep.subr.mxu0 0.0
    %1497 = vmatpush2.msra.mxu0 0.0
    %1498 = vmatprep.subr.mxu0 0.0
    %1499 = vmatpush2.msra.mxu0 0.0
    %1500 = vmatprep.subr.mxu0 0.0
    %1501 = vmatpush2.msra.mxu0 0.0
    %1502 = vmatprep.subr.mxu0 0.0
    %1503 = vmatpush2.msra.mxu0 0.0
    %1504 = vmatprep.subr.mxu0 0.0
    %1505 = vmatpush2.msra.mxu0 0.0
    %1506 = vmatprep.mubr.f32.mxu0 0.0
    %1507 = vmatmul.mubr.f32.gmra.mxu0 %v1440
    %v1508 = vpop.f32.mrf.mxu0
    %v1509 = vadd.f32 %v1434, %v1508
    %v1510 = vpop.f32.mrf.mxu0
    %1511 = vdwg.mxu0
    %v1512 = vadd.f32 %v1509, %v402
    %v1513 = vxor.u32 %v1512, 2147483648
    %v1514 = vmul.f32 %v1513, 1.442695
    %v1515 = vpow.pop %v1514
    %v1516 = vadd.f32 %v1515, 1.0
    %v1517 = vrcp.pop %v1516
    %v1518 = vmul.f32 1.0, %v1517
    %v1519 = vtanh.pop %v1512
    %v1520 = vmul.f32 %v1518, %v1256
    %1522 = vrot.lane.b32.xlu0 %v1519, 64
    %v1523 = vpop.permute.xlu0 %1522
    %v1525 = vmul.f32 %v1518, %v1523
    %1527 = vrot.lane.b32.xlu0 %v1525, 32
    %v1528 = vpop.permute.xlu0 %1527
    %v1530 = vadd.f32 %v1520, %v1528
    %v1531 = vtanh.pop %v1530
    %1533 = vrot.lane.b32.xlu0 %v1531, 64
    %v1534 = vpop.permute.xlu0 %1533
    %v1536 = vmul.f32 %v1518, %v1534
    %1537 = vmatprep.subr.mxu0 0.0
    %1538 = vmatpush1.msra.mxu0 0.0
    %1539 = vmatprep.subr.mxu0 0.0
    %1540 = vmatpush1.msra.mxu0 0.0
    %1541 = vmatprep.subr.mxu0 0.0
    %1542 = vmatpush1.msra.mxu0 0.0
    %1543 = vmatprep.subr.mxu0 0.0
    %1544 = vmatpush1.msra.mxu0 0.0
    %1545 = vmatprep.subr.mxu0 0.0
    %1546 = vmatpush1.msra.mxu0 0.0
    %1547 = vmatprep.subr.mxu0 0.0
    %1548 = vmatpush1.msra.mxu0 0.0
    %1549 = vmatprep.subr.mxu0 0.0
    %1550 = vmatpush1.msra.mxu0 0.0
    %1551 = vmatprep.subr.mxu0 0.0
    %1552 = vmatpush1.msra.mxu0 0.0
    %1553 = vmatprep.subr.mxu0 0.0
    %1554 = vmatpush1.msra.mxu0 0.0
    %1555 = vmatprep.subr.mxu0 0.0
    %1556 = vmatpush1.msra.mxu0 0.0
    %1557 = vmatprep.subr.mxu0 0.0
    %1558 = vmatpush1.msra.mxu0 0.0
    %1559 = vmatprep.subr.mxu0 0.0
    %1560 = vmatpush1.msra.mxu0 0.0
    %1561 = vmatprep.subr.mxu0 0.0
    %1562 = vmatpush1.msra.mxu0 %v134
    %1563 = vmatprep.subr.mxu0 0.0
    %1564 = vmatpush1.msra.mxu0 %v133
    %1565 = vmatprep.subr.mxu0 0.0
    %1566 = vmatpush1.msra.mxu0 %v132
    %1567 = vmatprep.subr.mxu0 0.0
    %1568 = vmatpush1.msra.mxu0 %v131
    %1569 = vmatprep.subr.mxu0 0.0
    %1570 = vmatpush2.msra.mxu0 0.0
    %1571 = vmatprep.subr.mxu0 0.0
    %1572 = vmatpush2.msra.mxu0 0.0
    %1573 = vmatprep.subr.mxu0 0.0
    %1574 = vmatpush2.msra.mxu0 0.0
    %1575 = vmatprep.subr.mxu0 0.0
    %1576 = vmatpush2.msra.mxu0 0.0
    %1577 = vmatprep.subr.mxu0 0.0
    %1578 = vmatpush2.msra.mxu0 0.0
    %1579 = vmatprep.subr.mxu0 0.0
    %1580 = vmatpush2.msra.mxu0 0.0
    %1581 = vmatprep.subr.mxu0 0.0
    %1582 = vmatpush2.msra.mxu0 0.0
    %1583 = vmatprep.subr.mxu0 0.0
    %1584 = vmatpush2.msra.mxu0 0.0
    %1585 = vmatprep.subr.mxu0 0.0
    %1586 = vmatpush2.msra.mxu0 0.0
    %1587 = vmatprep.subr.mxu0 0.0
    %1588 = vmatpush2.msra.mxu0 0.0
    %1589 = vmatprep.subr.mxu0 0.0
    %1590 = vmatpush2.msra.mxu0 0.0
    %1591 = vmatprep.subr.mxu0 0.0
    %1592 = vmatpush2.msra.mxu0 0.0
    %1593 = vmatprep.subr.mxu0 0.0
    %1594 = vmatpush2.msra.mxu0 0.0
    %1595 = vmatprep.subr.mxu0 0.0
    %1596 = vmatpush2.msra.mxu0 0.0
    %1597 = vmatprep.subr.mxu0 0.0
    %1598 = vmatpush2.msra.mxu0 0.0
    %1599 = vmatprep.subr.mxu0 0.0
    %1600 = vmatpush2.msra.mxu0 0.0
    %1601 = vmatprep.mubr.f32.mxu0 0.0
    %1602 = vmatmul.mubr.f32.gmra.mxu0 %v1440
    %v1603 = vpop.f32.mrf.mxu0
    %v1604 = vadd.f32 0.0, %v1603
    %v1605 = vpop.f32.mrf.mxu0
    %1606 = vdwg.mxu0
    %v1608 = vrot.slane %v1604, 6
    %v1610 = vadd.f32 %v128, %v1608
    %v1611 = vadd.f32 %v1610, %v214
    %v1612 = vxor.u32 %v1611, 2147483648
    %v1613 = vmul.f32 %v1612, 1.442695
    %v1614 = vpow.pop %v1613
    %v1615 = vadd.f32 %v1614, 1.0
    %v1616 = vrcp.pop %v1615
    %v1617 = vmul.f32 1.0, %v1616
    %v1618 = vtanh.pop %v1611
    %v1620 = vrot.slane %v1355, 6
    %v1622 = vmul.f32 %v1617, %v1620
    %1624 = vrot.lane.b32.xlu0 %v1618, 64
    %v1625 = vpop.permute.xlu0 %1624
    %v1627 = vmul.f32 %v1617, %v1625
    %1629 = vrot.lane.b32.xlu0 %v1627, 32
    %v1630 = vpop.permute.xlu0 %1629
    %v1632 = vadd.f32 %v1622, %v1630
    %v1633 = vtanh.pop %v1632
    %1635 = vrot.lane.b32.xlu0 %v1633, 64
    %v1636 = vpop.permute.xlu0 %1635
    %v1638 = vmul.f32 %v1617, %v1636
    %1640 = vrot.lane.b32.xlu0 %v1536, 32
    %v1641 = vpop.permute.xlu0 %1640
    %v1642 = vsel %vm49, %v1641, 0
    %1644 = vmatprep.subr.mxu0 0.0
    %1645 = vmatpush1.msra.mxu0 0.0
    %1646 = vmatprep.subr.mxu0 0.0
    %1647 = vmatpush1.msra.mxu0 0.0
    %1648 = vmatprep.subr.mxu0 0.0
    %1649 = vmatpush1.msra.mxu0 0.0
    %1650 = vmatprep.subr.mxu0 0.0
    %1651 = vmatpush1.msra.mxu0 0.0
    %1652 = vmatprep.subr.mxu0 0.0
    %1653 = vmatpush1.msra.mxu0 0.0
    %1654 = vmatprep.subr.mxu0 0.0
    %1655 = vmatpush1.msra.mxu0 0.0
    %1656 = vmatprep.subr.mxu0 0.0
    %1657 = vmatpush1.msra.mxu0 0.0
    %1658 = vmatprep.subr.mxu0 0.0
    %1659 = vmatpush1.msra.mxu0 0.0
    %1660 = vmatprep.subr.mxu0 0.0
    %1661 = vmatpush1.msra.mxu0 0.0
    %1662 = vmatprep.subr.mxu0 0.0
    %1663 = vmatpush1.msra.mxu0 0.0
    %1664 = vmatprep.subr.mxu0 0.0
    %1665 = vmatpush1.msra.mxu0 0.0
    %1666 = vmatprep.subr.mxu0 0.0
    %1667 = vmatpush1.msra.mxu0 0.0
    %1668 = vmatprep.subr.mxu0 0.0
    %1669 = vmatpush1.msra.mxu0 %v250
    %1670 = vmatprep.subr.mxu0 0.0
    %1671 = vmatpush1.msra.mxu0 %v249
    %1672 = vmatprep.subr.mxu0 0.0
    %1673 = vmatpush1.msra.mxu0 %v248
    %1674 = vmatprep.subr.mxu0 0.0
    %1675 = vmatpush1.msra.mxu0 %v247
    %1676 = vmatprep.subr.mxu0 0.0
    %1677 = vmatpush2.msra.mxu0 0.0
    %1678 = vmatprep.subr.mxu0 0.0
    %1679 = vmatpush2.msra.mxu0 0.0
    %1680 = vmatprep.subr.mxu0 0.0
    %1681 = vmatpush2.msra.mxu0 0.0
    %1682 = vmatprep.subr.mxu0 0.0
    %1683 = vmatpush2.msra.mxu0 0.0
    %1684 = vmatprep.subr.mxu0 0.0
    %1685 = vmatpush2.msra.mxu0 0.0
    %1686 = vmatprep.subr.mxu0 0.0
    %1687 = vmatpush2.msra.mxu0 0.0
    %1688 = vmatprep.subr.mxu0 0.0
    %1689 = vmatpush2.msra.mxu0 0.0
    %1690 = vmatprep.subr.mxu0 0.0
    %1691 = vmatpush2.msra.mxu0 0.0
    %1692 = vmatprep.subr.mxu0 0.0
    %1693 = vmatpush2.msra.mxu0 0.0
    %1694 = vmatprep.subr.mxu0 0.0
    %1695 = vmatpush2.msra.mxu0 0.0
    %1696 = vmatprep.subr.mxu0 0.0
    %1697 = vmatpush2.msra.mxu0 0.0
    %1698 = vmatprep.subr.mxu0 0.0
    %1699 = vmatpush2.msra.mxu0 0.0
    %1700 = vmatprep.subr.mxu0 0.0
    %1701 = vmatpush2.msra.mxu0 0.0
    %1702 = vmatprep.subr.mxu0 0.0
    %1703 = vmatpush2.msra.mxu0 0.0
    %1704 = vmatprep.subr.mxu0 0.0
    %1705 = vmatpush2.msra.mxu0 0.0
    %1706 = vmatprep.subr.mxu0 0.0
    %1707 = vmatpush2.msra.mxu0 0.0
    %1708 = vmatprep.mubr.f32.mxu0 0.0
    %1709 = vmatmul.mubr.f32.gmra.mxu0 %v1642
    %v1710 = vpop.f32.mrf.mxu0
    %v1711 = vadd.f32 0.0, %v1710
    %v1712 = vpop.f32.mrf.mxu0
    %1713 = vdwg.mxu0
    %v1715 = vrot.slane %v1638, 2
    %1716 = vrot.lane.b32.xlu0 %v1715, 32
    %v1717 = vpop.permute.xlu0 %1716
    %v1718 = vsel %vm49, %v1717, 0
    %1720 = vmatprep.subr.mxu0 0.0
    %1721 = vmatpush1.msra.mxu0 0.0
    %1722 = vmatprep.subr.mxu0 0.0
    %1723 = vmatpush1.msra.mxu0 0.0
    %1724 = vmatprep.subr.mxu0 0.0
    %1725 = vmatpush1.msra.mxu0 0.0
    %1726 = vmatprep.subr.mxu0 0.0
    %1727 = vmatpush1.msra.mxu0 0.0
    %1728 = vmatprep.subr.mxu0 0.0
    %1729 = vmatpush1.msra.mxu0 0.0
    %1730 = vmatprep.subr.mxu0 0.0
    %1731 = vmatpush1.msra.mxu0 0.0
    %1732 = vmatprep.subr.mxu0 0.0
    %1733 = vmatpush1.msra.mxu0 0.0
    %1734 = vmatprep.subr.mxu0 0.0
    %1735 = vmatpush1.msra.mxu0 0.0
    %1736 = vmatprep.subr.mxu0 0.0
    %1737 = vmatpush1.msra.mxu0 0.0
    %1738 = vmatprep.subr.mxu0 0.0
    %1739 = vmatpush1.msra.mxu0 0.0
    %1740 = vmatprep.subr.mxu0 0.0
    %1741 = vmatpush1.msra.mxu0 0.0
    %1742 = vmatprep.subr.mxu0 0.0
    %1743 = vmatpush1.msra.mxu0 0.0
    %1744 = vmatprep.subr.mxu0 0.0
    %1745 = vmatpush1.msra.mxu0 %v245
    %1746 = vmatprep.subr.mxu0 0.0
    %1747 = vmatpush1.msra.mxu0 %v244
    %1748 = vmatprep.subr.mxu0 0.0
    %1749 = vmatpush1.msra.mxu0 %v243
    %1750 = vmatprep.subr.mxu0 0.0
    %1751 = vmatpush1.msra.mxu0 %v242
    %1752 = vmatprep.subr.mxu0 0.0
    %1753 = vmatpush2.msra.mxu0 0.0
    %1754 = vmatprep.subr.mxu0 0.0
    %1755 = vmatpush2.msra.mxu0 0.0
    %1756 = vmatprep.subr.mxu0 0.0
    %1757 = vmatpush2.msra.mxu0 0.0
    %1758 = vmatprep.subr.mxu0 0.0
    %1759 = vmatpush2.msra.mxu0 0.0
    %1760 = vmatprep.subr.mxu0 0.0
    %1761 = vmatpush2.msra.mxu0 0.0
    %1762 = vmatprep.subr.mxu0 0.0
    %1763 = vmatpush2.msra.mxu0 0.0
    %1764 = vmatprep.subr.mxu0 0.0
    %1765 = vmatpush2.msra.mxu0 0.0
    %1766 = vmatprep.subr.mxu0 0.0
    %1767 = vmatpush2.msra.mxu0 0.0
    %1768 = vmatprep.subr.mxu0 0.0
    %1769 = vmatpush2.msra.mxu0 0.0
    %1770 = vmatprep.subr.mxu0 0.0
    %1771 = vmatpush2.msra.mxu0 0.0
    %1772 = vmatprep.subr.mxu0 0.0
    %1773 = vmatpush2.msra.mxu0 0.0
    %1774 = vmatprep.subr.mxu0 0.0
    %1775 = vmatpush2.msra.mxu0 0.0
    %1776 = vmatprep.subr.mxu0 0.0
    %1777 = vmatpush2.msra.mxu0 0.0
    %1778 = vmatprep.subr.mxu0 0.0
    %1779 = vmatpush2.msra.mxu0 0.0
    %1780 = vmatprep.subr.mxu0 0.0
    %1781 = vmatpush2.msra.mxu0 0.0
    %1782 = vmatprep.subr.mxu0 0.0
    %1783 = vmatpush2.msra.mxu0 0.0
    %1784 = vmatprep.mubr.f32.mxu0 0.0
    %1785 = vmatmul.mubr.f32.gmra.mxu0 %v1718
    %v1786 = vpop.f32.mrf.mxu0
    %v1787 = vadd.f32 %v1711, %v1786
    %v1788 = vpop.f32.mrf.mxu0
    %1789 = vdwg.mxu0
    %v1790 = vadd.f32 %v1787, %v402
    %v1791 = vxor.u32 %v1790, 2147483648
    %v1792 = vmul.f32 %v1791, 1.442695
    %v1793 = vpow.pop %v1792
    %v1794 = vadd.f32 %v1793, 1.0
    %v1795 = vrcp.pop %v1794
    %v1796 = vmul.f32 1.0, %v1795
    %v1797 = vtanh.pop %v1790
    %v1798 = vmul.f32 %v1796, %v1530
    %1800 = vrot.lane.b32.xlu0 %v1797, 64
    %v1801 = vpop.permute.xlu0 %1800
    %v1803 = vmul.f32 %v1796, %v1801
    %1805 = vrot.lane.b32.xlu0 %v1803, 32
    %v1806 = vpop.permute.xlu0 %1805
    %v1808 = vadd.f32 %v1798, %v1806
    %v1809 = vtanh.pop %v1808
    %1811 = vrot.lane.b32.xlu0 %v1809, 64
    %v1812 = vpop.permute.xlu0 %1811
    %v1814 = vmul.f32 %v1796, %v1812
    %1815 = vmatprep.subr.mxu0 0.0
    %1816 = vmatpush1.msra.mxu0 0.0
    %1817 = vmatprep.subr.mxu0 0.0
    %1818 = vmatpush1.msra.mxu0 0.0
    %1819 = vmatprep.subr.mxu0 0.0
    %1820 = vmatpush1.msra.mxu0 0.0
    %1821 = vmatprep.subr.mxu0 0.0
    %1822 = vmatpush1.msra.mxu0 0.0
    %1823 = vmatprep.subr.mxu0 0.0
    %1824 = vmatpush1.msra.mxu0 0.0
    %1825 = vmatprep.subr.mxu0 0.0
    %1826 = vmatpush1.msra.mxu0 0.0
    %1827 = vmatprep.subr.mxu0 0.0
    %1828 = vmatpush1.msra.mxu0 0.0
    %1829 = vmatprep.subr.mxu0 0.0
    %1830 = vmatpush1.msra.mxu0 0.0
    %1831 = vmatprep.subr.mxu0 0.0
    %1832 = vmatpush1.msra.mxu0 0.0
    %1833 = vmatprep.subr.mxu0 0.0
    %1834 = vmatpush1.msra.mxu0 0.0
    %1835 = vmatprep.subr.mxu0 0.0
    %1836 = vmatpush1.msra.mxu0 0.0
    %1837 = vmatprep.subr.mxu0 0.0
    %1838 = vmatpush1.msra.mxu0 0.0
    %1839 = vmatprep.subr.mxu0 0.0
    %1840 = vmatpush1.msra.mxu0 %v134
    %1841 = vmatprep.subr.mxu0 0.0
    %1842 = vmatpush1.msra.mxu0 %v133
    %1843 = vmatprep.subr.mxu0 0.0
    %1844 = vmatpush1.msra.mxu0 %v132
    %1845 = vmatprep.subr.mxu0 0.0
    %1846 = vmatpush1.msra.mxu0 %v131
    %1847 = vmatprep.subr.mxu0 0.0
    %1848 = vmatpush2.msra.mxu0 0.0
    %1849 = vmatprep.subr.mxu0 0.0
    %1850 = vmatpush2.msra.mxu0 0.0
    %1851 = vmatprep.subr.mxu0 0.0
    %1852 = vmatpush2.msra.mxu0 0.0
    %1853 = vmatprep.subr.mxu0 0.0
    %1854 = vmatpush2.msra.mxu0 0.0
    %1855 = vmatprep.subr.mxu0 0.0
    %1856 = vmatpush2.msra.mxu0 0.0
    %1857 = vmatprep.subr.mxu0 0.0
    %1858 = vmatpush2.msra.mxu0 0.0
    %1859 = vmatprep.subr.mxu0 0.0
    %1860 = vmatpush2.msra.mxu0 0.0
    %1861 = vmatprep.subr.mxu0 0.0
    %1862 = vmatpush2.msra.mxu0 0.0
    %1863 = vmatprep.subr.mxu0 0.0
    %1864 = vmatpush2.msra.mxu0 0.0
    %1865 = vmatprep.subr.mxu0 0.0
    %1866 = vmatpush2.msra.mxu0 0.0
    %1867 = vmatprep.subr.mxu0 0.0
    %1868 = vmatpush2.msra.mxu0 0.0
    %1869 = vmatprep.subr.mxu0 0.0
    %1870 = vmatpush2.msra.mxu0 0.0
    %1871 = vmatprep.subr.mxu0 0.0
    %1872 = vmatpush2.msra.mxu0 0.0
    %1873 = vmatprep.subr.mxu0 0.0
    %1874 = vmatpush2.msra.mxu0 0.0
    %1875 = vmatprep.subr.mxu0 0.0
    %1876 = vmatpush2.msra.mxu0 0.0
    %1877 = vmatprep.subr.mxu0 0.0
    %1878 = vmatpush2.msra.mxu0 0.0
    %1879 = vmatprep.mubr.f32.mxu0 0.0
    %1880 = vmatmul.mubr.f32.gmra.mxu0 %v1718
    %v1881 = vpop.f32.mrf.mxu0
    %v1882 = vadd.f32 0.0, %v1881
    %v1883 = vpop.f32.mrf.mxu0
    %1884 = vdwg.mxu0
    %v1886 = vrot.slane %v1882, 4
    %v1888 = vadd.f32 %v128, %v1886
    %v1889 = vadd.f32 %v1888, %v214
    %v1890 = vxor.u32 %v1889, 2147483648
    %v1891 = vmul.f32 %v1890, 1.442695
    %v1892 = vpow.pop %v1891
    %v1893 = vadd.f32 %v1892, 1.0
    %v1894 = vrcp.pop %v1893
    %v1895 = vmul.f32 1.0, %v1894
    %v1896 = vtanh.pop %v1889
    %v1898 = vrot.slane %v1632, 6
    %v1900 = vmul.f32 %v1895, %v1898
    %1902 = vrot.lane.b32.xlu0 %v1896, 64
    %v1903 = vpop.permute.xlu0 %1902
    %v1905 = vmul.f32 %v1895, %v1903
    %1907 = vrot.lane.b32.xlu0 %v1905, 32
    %v1908 = vpop.permute.xlu0 %1907
    %v1910 = vadd.f32 %v1900, %v1908
    %v1911 = vtanh.pop %v1910
    %1913 = vrot.lane.b32.xlu0 %v1911, 64
    %v1914 = vpop.permute.xlu0 %1913
    %v1916 = vmul.f32 %v1895, %v1914
    %1918 = vrot.lane.b32.xlu0 %v1814, 32
    %v1919 = vpop.permute.xlu0 %1918
    %v1920 = vsel %vm49, %v1919, 0
    %1922 = vmatprep.subr.mxu0 0.0
    %1923 = vmatpush1.msra.mxu0 0.0
    %1924 = vmatprep.subr.mxu0 0.0
    %1925 = vmatpush1.msra.mxu0 0.0
    %1926 = vmatprep.subr.mxu0 0.0
    %1927 = vmatpush1.msra.mxu0 0.0
    %1928 = vmatprep.subr.mxu0 0.0
    %1929 = vmatpush1.msra.mxu0 0.0
    %1930 = vmatprep.subr.mxu0 0.0
    %1931 = vmatpush1.msra.mxu0 0.0
    %1932 = vmatprep.subr.mxu0 0.0
    %1933 = vmatpush1.msra.mxu0 0.0
    %1934 = vmatprep.subr.mxu0 0.0
    %1935 = vmatpush1.msra.mxu0 0.0
    %1936 = vmatprep.subr.mxu0 0.0
    %1937 = vmatpush1.msra.mxu0 0.0
    %1938 = vmatprep.subr.mxu0 0.0
    %1939 = vmatpush1.msra.mxu0 0.0
    %1940 = vmatprep.subr.mxu0 0.0
    %1941 = vmatpush1.msra.mxu0 0.0
    %1942 = vmatprep.subr.mxu0 0.0
    %1943 = vmatpush1.msra.mxu0 0.0
    %1944 = vmatprep.subr.mxu0 0.0
    %1945 = vmatpush1.msra.mxu0 0.0
    %1946 = vmatprep.subr.mxu0 0.0
    %1947 = vmatpush1.msra.mxu0 %v250
    %1948 = vmatprep.subr.mxu0 0.0
    %1949 = vmatpush1.msra.mxu0 %v249
    %1950 = vmatprep.subr.mxu0 0.0
    %1951 = vmatpush1.msra.mxu0 %v248
    %1952 = vmatprep.subr.mxu0 0.0
    %1953 = vmatpush1.msra.mxu0 %v247
    %1954 = vmatprep.subr.mxu0 0.0
    %1955 = vmatpush2.msra.mxu0 0.0
    %1956 = vmatprep.subr.mxu0 0.0
    %1957 = vmatpush2.msra.mxu0 0.0
    %1958 = vmatprep.subr.mxu0 0.0
    %1959 = vmatpush2.msra.mxu0 0.0
    %1960 = vmatprep.subr.mxu0 0.0
    %1961 = vmatpush2.msra.mxu0 0.0
    %1962 = vmatprep.subr.mxu0 0.0
    %1963 = vmatpush2.msra.mxu0 0.0
    %1964 = vmatprep.subr.mxu0 0.0
    %1965 = vmatpush2.msra.mxu0 0.0
    %1966 = vmatprep.subr.mxu0 0.0
    %1967 = vmatpush2.msra.mxu0 0.0
    %1968 = vmatprep.subr.mxu0 0.0
    %1969 = vmatpush2.msra.mxu0 0.0
    %1970 = vmatprep.subr.mxu0 0.0
    %1971 = vmatpush2.msra.mxu0 0.0
    %1972 = vmatprep.subr.mxu0 0.0
    %1973 = vmatpush2.msra.mxu0 0.0
    %1974 = vmatprep.subr.mxu0 0.0
    %1975 = vmatpush2.msra.mxu0 0.0
    %1976 = vmatprep.subr.mxu0 0.0
    %1977 = vmatpush2.msra.mxu0 0.0
    %1978 = vmatprep.subr.mxu0 0.0
    %1979 = vmatpush2.msra.mxu0 0.0
    %1980 = vmatprep.subr.mxu0 0.0
    %1981 = vmatpush2.msra.mxu0 0.0
    %1982 = vmatprep.subr.mxu0 0.0
    %1983 = vmatpush2.msra.mxu0 0.0
    %1984 = vmatprep.subr.mxu0 0.0
    %1985 = vmatpush2.msra.mxu0 0.0
    %1986 = vmatprep.mubr.f32.mxu0 0.0
    %1987 = vmatmul.mubr.f32.gmra.mxu0 %v1920
    %v1988 = vpop.f32.mrf.mxu0
    %v1989 = vadd.f32 0.0, %v1988
    %v1990 = vpop.f32.mrf.mxu0
    %1991 = vdwg.mxu0
    %v1993 = vrot.slane %v1916, 4
    %1994 = vrot.lane.b32.xlu0 %v1993, 32
    %v1995 = vpop.permute.xlu0 %1994
    %v1996 = vsel %vm49, %v1995, 0
    %1998 = vmatprep.subr.mxu0 0.0
    %1999 = vmatpush1.msra.mxu0 0.0
    %2000 = vmatprep.subr.mxu0 0.0
    %2001 = vmatpush1.msra.mxu0 0.0
    %2002 = vmatprep.subr.mxu0 0.0
    %2003 = vmatpush1.msra.mxu0 0.0
    %2004 = vmatprep.subr.mxu0 0.0
    %2005 = vmatpush1.msra.mxu0 0.0
    %2006 = vmatprep.subr.mxu0 0.0
    %2007 = vmatpush1.msra.mxu0 0.0
    %2008 = vmatprep.subr.mxu0 0.0
    %2009 = vmatpush1.msra.mxu0 0.0
    %2010 = vmatprep.subr.mxu0 0.0
    %2011 = vmatpush1.msra.mxu0 0.0
    %2012 = vmatprep.subr.mxu0 0.0
    %2013 = vmatpush1.msra.mxu0 0.0
    %2014 = vmatprep.subr.mxu0 0.0
    %2015 = vmatpush1.msra.mxu0 0.0
    %2016 = vmatprep.subr.mxu0 0.0
    %2017 = vmatpush1.msra.mxu0 0.0
    %2018 = vmatprep.subr.mxu0 0.0
    %2019 = vmatpush1.msra.mxu0 0.0
    %2020 = vmatprep.subr.mxu0 0.0
    %2021 = vmatpush1.msra.mxu0 0.0
    %2022 = vmatprep.subr.mxu0 0.0
    %2023 = vmatpush1.msra.mxu0 %v245
    %2024 = vmatprep.subr.mxu0 0.0
    %2025 = vmatpush1.msra.mxu0 %v244
    %2026 = vmatprep.subr.mxu0 0.0
    %2027 = vmatpush1.msra.mxu0 %v243
    %2028 = vmatprep.subr.mxu0 0.0
    %2029 = vmatpush1.msra.mxu0 %v242
    %2030 = vmatprep.subr.mxu0 0.0
    %2031 = vmatpush2.msra.mxu0 0.0
    %2032 = vmatprep.subr.mxu0 0.0
    %2033 = vmatpush2.msra.mxu0 0.0
    %2034 = vmatprep.subr.mxu0 0.0
    %2035 = vmatpush2.msra.mxu0 0.0
    %2036 = vmatprep.subr.mxu0 0.0
    %2037 = vmatpush2.msra.mxu0 0.0
    %2038 = vmatprep.subr.mxu0 0.0
    %2039 = vmatpush2.msra.mxu0 0.0
    %2040 = vmatprep.subr.mxu0 0.0
    %2041 = vmatpush2.msra.mxu0 0.0
    %2042 = vmatprep.subr.mxu0 0.0
    %2043 = vmatpush2.msra.mxu0 0.0
    %2044 = vmatprep.subr.mxu0 0.0
    %2045 = vmatpush2.msra.mxu0 0.0
    %2046 = vmatprep.subr.mxu0 0.0
    %2047 = vmatpush2.msra.mxu0 0.0
    %2048 = vmatprep.subr.mxu0 0.0
    %2049 = vmatpush2.msra.mxu0 0.0
    %2050 = vmatprep.subr.mxu0 0.0
    %2051 = vmatpush2.msra.mxu0 0.0
    %2052 = vmatprep.subr.mxu0 0.0
    %2053 = vmatpush2.msra.mxu0 0.0
    %2054 = vmatprep.subr.mxu0 0.0
    %2055 = vmatpush2.msra.mxu0 0.0
    %2056 = vmatprep.subr.mxu0 0.0
    %2057 = vmatpush2.msra.mxu0 0.0
    %2058 = vmatprep.subr.mxu0 0.0
    %2059 = vmatpush2.msra.mxu0 0.0
    %2060 = vmatprep.subr.mxu0 0.0
    %2061 = vmatpush2.msra.mxu0 0.0
    %2062 = vmatprep.mubr.f32.mxu0 0.0
    %2063 = vmatmul.mubr.f32.gmra.mxu0 %v1996
    %v2064 = vpop.f32.mrf.mxu0
    %v2065 = vadd.f32 %v1989, %v2064
    %v2066 = vpop.f32.mrf.mxu0
    %2067 = vdwg.mxu0
    %v2068 = vadd.f32 %v2065, %v402
    %v2069 = vxor.u32 %v2068, 2147483648
    %v2070 = vmul.f32 %v2069, 1.442695
    %v2071 = vpow.pop %v2070
    %v2072 = vadd.f32 %v2071, 1.0
    %v2073 = vrcp.pop %v2072
    %v2074 = vmul.f32 1.0, %v2073
    %v2075 = vtanh.pop %v2068
    %v2076 = vmul.f32 %v2074, %v1808
    %2078 = vrot.lane.b32.xlu0 %v2075, 64
    %v2079 = vpop.permute.xlu0 %2078
    %v2081 = vmul.f32 %v2074, %v2079
    %2083 = vrot.lane.b32.xlu0 %v2081, 32
    %v2084 = vpop.permute.xlu0 %2083
    %v2086 = vadd.f32 %v2076, %v2084
    %v2087 = vtanh.pop %v2086
    %2089 = vrot.lane.b32.xlu0 %v2087, 64
    %v2090 = vpop.permute.xlu0 %2089
    %v2092 = vmul.f32 %v2074, %v2090
    %2093 = vmatprep.subr.mxu0 0.0
    %2094 = vmatpush1.msra.mxu0 0.0
    %2095 = vmatprep.subr.mxu0 0.0
    %2096 = vmatpush1.msra.mxu0 0.0
    %2097 = vmatprep.subr.mxu0 0.0
    %2098 = vmatpush1.msra.mxu0 0.0
    %2099 = vmatprep.subr.mxu0 0.0
    %2100 = vmatpush1.msra.mxu0 0.0
    %2101 = vmatprep.subr.mxu0 0.0
    %2102 = vmatpush1.msra.mxu0 0.0
    %2103 = vmatprep.subr.mxu0 0.0
    %2104 = vmatpush1.msra.mxu0 0.0
    %2105 = vmatprep.subr.mxu0 0.0
    %2106 = vmatpush1.msra.mxu0 0.0
    %2107 = vmatprep.subr.mxu0 0.0
    %2108 = vmatpush1.msra.mxu0 0.0
    %2109 = vmatprep.subr.mxu0 0.0
    %2110 = vmatpush1.msra.mxu0 0.0
    %2111 = vmatprep.subr.mxu0 0.0
    %2112 = vmatpush1.msra.mxu0 0.0
    %2113 = vmatprep.subr.mxu0 0.0
    %2114 = vmatpush1.msra.mxu0 0.0
    %2115 = vmatprep.subr.mxu0 0.0
    %2116 = vmatpush1.msra.mxu0 0.0
    %2117 = vmatprep.subr.mxu0 0.0
    %2118 = vmatpush1.msra.mxu0 %v134
    %2119 = vmatprep.subr.mxu0 0.0
    %2120 = vmatpush1.msra.mxu0 %v133
    %2121 = vmatprep.subr.mxu0 0.0
    %2122 = vmatpush1.msra.mxu0 %v132
    %2123 = vmatprep.subr.mxu0 0.0
    %2124 = vmatpush1.msra.mxu0 %v131
    %2125 = vmatprep.subr.mxu0 0.0
    %2126 = vmatpush2.msra.mxu0 0.0
    %2127 = vmatprep.subr.mxu0 0.0
    %2128 = vmatpush2.msra.mxu0 0.0
    %2129 = vmatprep.subr.mxu0 0.0
    %2130 = vmatpush2.msra.mxu0 0.0
    %2131 = vmatprep.subr.mxu0 0.0
    %2132 = vmatpush2.msra.mxu0 0.0
    %2133 = vmatprep.subr.mxu0 0.0
    %2134 = vmatpush2.msra.mxu0 0.0
    %2135 = vmatprep.subr.mxu0 0.0
    %2136 = vmatpush2.msra.mxu0 0.0
    %2137 = vmatprep.subr.mxu0 0.0
    %2138 = vmatpush2.msra.mxu0 0.0
    %2139 = vmatprep.subr.mxu0 0.0
    %2140 = vmatpush2.msra.mxu0 0.0
    %2141 = vmatprep.subr.mxu0 0.0
    %2142 = vmatpush2.msra.mxu0 0.0
    %2143 = vmatprep.subr.mxu0 0.0
    %2144 = vmatpush2.msra.mxu0 0.0
    %2145 = vmatprep.subr.mxu0 0.0
    %2146 = vmatpush2.msra.mxu0 0.0
    %2147 = vmatprep.subr.mxu0 0.0
    %2148 = vmatpush2.msra.mxu0 0.0
    %2149 = vmatprep.subr.mxu0 0.0
    %2150 = vmatpush2.msra.mxu0 0.0
    %2151 = vmatprep.subr.mxu0 0.0
    %2152 = vmatpush2.msra.mxu0 0.0
    %2153 = vmatprep.subr.mxu0 0.0
    %2154 = vmatpush2.msra.mxu0 0.0
    %2155 = vmatprep.subr.mxu0 0.0
    %2156 = vmatpush2.msra.mxu0 0.0
    %2157 = vmatprep.mubr.f32.mxu0 0.0
    %2158 = vmatmul.mubr.f32.gmra.mxu0 %v1996
    %v2159 = vpop.f32.mrf.mxu0
    %v2160 = vadd.f32 0.0, %v2159
    %v2161 = vpop.f32.mrf.mxu0
    %2162 = vdwg.mxu0
    %v2164 = vrot.slane %v2160, 2
    %v2166 = vadd.f32 %v128, %v2164
    %v2167 = vadd.f32 %v2166, %v214
    %v2168 = vxor.u32 %v2167, 2147483648
    %v2169 = vmul.f32 %v2168, 1.442695
    %v2170 = vpow.pop %v2169
    %v2171 = vadd.f32 %v2170, 1.0
    %v2172 = vrcp.pop %v2171
    %v2173 = vmul.f32 1.0, %v2172
    %v2174 = vtanh.pop %v2167
    %v2176 = vrot.slane %v1910, 6
    %v2178 = vmul.f32 %v2173, %v2176
    %2180 = vrot.lane.b32.xlu0 %v2174, 64
    %v2181 = vpop.permute.xlu0 %2180
    %v2183 = vmul.f32 %v2173, %v2181
    %2185 = vrot.lane.b32.xlu0 %v2183, 32
    %v2186 = vpop.permute.xlu0 %2185
    %v2188 = vadd.f32 %v2178, %v2186
    %v2189 = vtanh.pop %v2188
    %2191 = vrot.lane.b32.xlu0 %v2189, 64
    %v2192 = vpop.permute.xlu0 %2191
    %v2194 = vmul.f32 %v2173, %v2192
    %2196 = vrot.lane.b32.xlu0 %v2092, 32
    %v2197 = vpop.permute.xlu0 %2196
    %v2198 = vsel %vm49, %v2197, 0
    %2200 = vmatprep.subr.mxu0 0.0
    %2201 = vmatpush1.msra.mxu0 0.0
    %2202 = vmatprep.subr.mxu0 0.0
    %2203 = vmatpush1.msra.mxu0 0.0
    %2204 = vmatprep.subr.mxu0 0.0
    %2205 = vmatpush1.msra.mxu0 0.0
    %2206 = vmatprep.subr.mxu0 0.0
    %2207 = vmatpush1.msra.mxu0 0.0
    %2208 = vmatprep.subr.mxu0 0.0
    %2209 = vmatpush1.msra.mxu0 0.0
    %2210 = vmatprep.subr.mxu0 0.0
    %2211 = vmatpush1.msra.mxu0 0.0
    %2212 = vmatprep.subr.mxu0 0.0
    %2213 = vmatpush1.msra.mxu0 0.0
    %2214 = vmatprep.subr.mxu0 0.0
    %2215 = vmatpush1.msra.mxu0 0.0
    %2216 = vmatprep.subr.mxu0 0.0
    %2217 = vmatpush1.msra.mxu0 0.0
    %2218 = vmatprep.subr.mxu0 0.0
    %2219 = vmatpush1.msra.mxu0 0.0
    %2220 = vmatprep.subr.mxu0 0.0
    %2221 = vmatpush1.msra.mxu0 0.0
    %2222 = vmatprep.subr.mxu0 0.0
    %2223 = vmatpush1.msra.mxu0 0.0
    %2224 = vmatprep.subr.mxu0 0.0
    %2225 = vmatpush1.msra.mxu0 %v250
    %2226 = vmatprep.subr.mxu0 0.0
    %2227 = vmatpush1.msra.mxu0 %v249
    %2228 = vmatprep.subr.mxu0 0.0
    %2229 = vmatpush1.msra.mxu0 %v248
    %2230 = vmatprep.subr.mxu0 0.0
    %2231 = vmatpush1.msra.mxu0 %v247
    %2232 = vmatprep.subr.mxu0 0.0
    %2233 = vmatpush2.msra.mxu0 0.0
    %2234 = vmatprep.subr.mxu0 0.0
    %2235 = vmatpush2.msra.mxu0 0.0
    %2236 = vmatprep.subr.mxu0 0.0
    %2237 = vmatpush2.msra.mxu0 0.0
    %2238 = vmatprep.subr.mxu0 0.0
    %2239 = vmatpush2.msra.mxu0 0.0
    %2240 = vmatprep.subr.mxu0 0.0
    %2241 = vmatpush2.msra.mxu0 0.0
    %2242 = vmatprep.subr.mxu0 0.0
    %2243 = vmatpush2.msra.mxu0 0.0
    %2244 = vmatprep.subr.mxu0 0.0
    %2245 = vmatpush2.msra.mxu0 0.0
    %2246 = vmatprep.subr.mxu0 0.0
    %2247 = vmatpush2.msra.mxu0 0.0
    %2248 = vmatprep.subr.mxu0 0.0
    %2249 = vmatpush2.msra.mxu0 0.0
    %2250 = vmatprep.subr.mxu0 0.0
    %2251 = vmatpush2.msra.mxu0 0.0
    %2252 = vmatprep.subr.mxu0 0.0
    %2253 = vmatpush2.msra.mxu0 0.0
    %2254 = vmatprep.subr.mxu0 0.0
    %2255 = vmatpush2.msra.mxu0 0.0
    %2256 = vmatprep.subr.mxu0 0.0
    %2257 = vmatpush2.msra.mxu0 0.0
    %2258 = vmatprep.subr.mxu0 0.0
    %2259 = vmatpush2.msra.mxu0 0.0
    %2260 = vmatprep.subr.mxu0 0.0
    %2261 = vmatpush2.msra.mxu0 0.0
    %2262 = vmatprep.subr.mxu0 0.0
    %2263 = vmatpush2.msra.mxu0 0.0
    %2264 = vmatprep.mubr.f32.mxu0 0.0
    %2265 = vmatmul.mubr.f32.gmra.mxu0 %v2198
    %v2266 = vpop.f32.mrf.mxu0
    %v2267 = vadd.f32 0.0, %v2266
    %v2268 = vpop.f32.mrf.mxu0
    %2269 = vdwg.mxu0
    %v2271 = vrot.slane %v2194, 6
    %2272 = vrot.lane.b32.xlu0 %v2271, 32
    %v2273 = vpop.permute.xlu0 %2272
    %v2274 = vsel %vm49, %v2273, 0
    %2276 = vmatprep.subr.mxu0 0.0
    %2277 = vmatpush1.msra.mxu0 0.0
    %2278 = vmatprep.subr.mxu0 0.0
    %2279 = vmatpush1.msra.mxu0 0.0
    %2280 = vmatprep.subr.mxu0 0.0
    %2281 = vmatpush1.msra.mxu0 0.0
    %2282 = vmatprep.subr.mxu0 0.0
    %2283 = vmatpush1.msra.mxu0 0.0
    %2284 = vmatprep.subr.mxu0 0.0
    %2285 = vmatpush1.msra.mxu0 0.0
    %2286 = vmatprep.subr.mxu0 0.0
    %2287 = vmatpush1.msra.mxu0 0.0
    %2288 = vmatprep.subr.mxu0 0.0
    %2289 = vmatpush1.msra.mxu0 0.0
    %2290 = vmatprep.subr.mxu0 0.0
    %2291 = vmatpush1.msra.mxu0 0.0
    %2292 = vmatprep.subr.mxu0 0.0
    %2293 = vmatpush1.msra.mxu0 0.0
    %2294 = vmatprep.subr.mxu0 0.0
    %2295 = vmatpush1.msra.mxu0 0.0
    %2296 = vmatprep.subr.mxu0 0.0
    %2297 = vmatpush1.msra.mxu0 0.0
    %2298 = vmatprep.subr.mxu0 0.0
    %2299 = vmatpush1.msra.mxu0 0.0
    %2300 = vmatprep.subr.mxu0 0.0
    %2301 = vmatpush1.msra.mxu0 %v245
    %2302 = vmatprep.subr.mxu0 0.0
    %2303 = vmatpush1.msra.mxu0 %v244
    %2304 = vmatprep.subr.mxu0 0.0
    %2305 = vmatpush1.msra.mxu0 %v243
    %2306 = vmatprep.subr.mxu0 0.0
    %2307 = vmatpush1.msra.mxu0 %v242
    %2308 = vmatprep.subr.mxu0 0.0
    %2309 = vmatpush2.msra.mxu0 0.0
    %2310 = vmatprep.subr.mxu0 0.0
    %2311 = vmatpush2.msra.mxu0 0.0
    %2312 = vmatprep.subr.mxu0 0.0
    %2313 = vmatpush2.msra.mxu0 0.0
    %2314 = vmatprep.subr.mxu0 0.0
    %2315 = vmatpush2.msra.mxu0 0.0
    %2316 = vmatprep.subr.mxu0 0.0
    %2317 = vmatpush2.msra.mxu0 0.0
    %2318 = vmatprep.subr.mxu0 0.0
    %2319 = vmatpush2.msra.mxu0 0.0
    %2320 = vmatprep.subr.mxu0 0.0
    %2321 = vmatpush2.msra.mxu0 0.0
    %2322 = vmatprep.subr.mxu0 0.0
    %2323 = vmatpush2.msra.mxu0 0.0
    %2324 = vmatprep.subr.mxu0 0.0
    %2325 = vmatpush2.msra.mxu0 0.0
    %2326 = vmatprep.subr.mxu0 0.0
    %2327 = vmatpush2.msra.mxu0 0.0
    %2328 = vmatprep.subr.mxu0 0.0
    %2329 = vmatpush2.msra.mxu0 0.0
    %2330 = vmatprep.subr.mxu0 0.0
    %2331 = vmatpush2.msra.mxu0 0.0
    %2332 = vmatprep.subr.mxu0 0.0
    %2333 = vmatpush2.msra.mxu0 0.0
    %2334 = vmatprep.subr.mxu0 0.0
    %2335 = vmatpush2.msra.mxu0 0.0
    %2336 = vmatprep.subr.mxu0 0.0
    %2337 = vmatpush2.msra.mxu0 0.0
    %2338 = vmatprep.subr.mxu0 0.0
    %2339 = vmatpush2.msra.mxu0 0.0
    %2340 = vmatprep.mubr.f32.mxu0 0.0
    %2341 = vmatmul.mubr.f32.gmra.mxu0 %v2274
    %v2342 = vpop.f32.mrf.mxu0
    %v2343 = vadd.f32 %v2267, %v2342
    %v2344 = vpop.f32.mrf.mxu0
    %2345 = vdwg.mxu0
    %v2346 = vadd.f32 %v2343, %v402
    %v2347 = vxor.u32 %v2346, 2147483648
    %v2348 = vmul.f32 %v2347, 1.442695
    %v2349 = vpow.pop %v2348
    %v2350 = vadd.f32 %v2349, 1.0
    %v2351 = vrcp.pop %v2350
    %v2352 = vmul.f32 1.0, %v2351
    %v2353 = vtanh.pop %v2346
    %v2354 = vmul.f32 %v2352, %v2086
    %2356 = vrot.lane.b32.xlu0 %v2353, 64
    %v2357 = vpop.permute.xlu0 %2356
    %v2359 = vmul.f32 %v2352, %v2357
    %2361 = vrot.lane.b32.xlu0 %v2359, 32
    %v2362 = vpop.permute.xlu0 %2361
    %v2364 = vadd.f32 %v2354, %v2362
    %v2365 = vtanh.pop %v2364
    %2367 = vrot.lane.b32.xlu0 %v2365, 64
    %v2368 = vpop.permute.xlu0 %2367
    %v2370 = vmul.f32 %v2352, %v2368
    %v2371 = vld [vmem:[%s2] sm:$0xff]
    %v2372 = vld [vmem:[%s2 + $0x8] sm:$0xff]
    %v2373 = vld [vmem:[%s6] sm:$0xff]
    %v2374 = vld [vmem:[%s6 + $0x8] sm:$0xff]
    %v2375 = vld [vmem:[%s6 + $0x10] sm:$0xff]
    %v2376 = vld [vmem:[%s6 + $0x18] sm:$0xff]
    %v2378 = vsel %vm49, %v2371, 0
    %v2381 = vsel %vm49, %v2372, 0
    %2383 = vmatprep.subr.mxu0 0.0
    %2384 = vmatpush1.msra.mxu0 0.0
    %2385 = vmatprep.subr.mxu0 0.0
    %2386 = vmatpush1.msra.mxu0 0.0
    %2387 = vmatprep.subr.mxu0 0.0
    %2388 = vmatpush1.msra.mxu0 0.0
    %2389 = vmatprep.subr.mxu0 0.0
    %2390 = vmatpush1.msra.mxu0 0.0
    %2391 = vmatprep.subr.mxu0 0.0
    %2392 = vmatpush1.msra.mxu0 0.0
    %2393 = vmatprep.subr.mxu0 0.0
    %2394 = vmatpush1.msra.mxu0 0.0
    %2395 = vmatprep.subr.mxu0 0.0
    %2396 = vmatpush1.msra.mxu0 0.0
    %2397 = vmatprep.subr.mxu0 0.0
    %2398 = vmatpush1.msra.mxu0 0.0
    %2399 = vmatprep.subr.mxu0 0.0
    %2400 = vmatpush1.msra.mxu0 0.0
    %2401 = vmatprep.subr.mxu0 0.0
    %2402 = vmatpush1.msra.mxu0 0.0
    %2403 = vmatprep.subr.mxu0 0.0
    %2404 = vmatpush1.msra.mxu0 0.0
    %2405 = vmatprep.subr.mxu0 0.0
    %2406 = vmatpush1.msra.mxu0 0.0
    %2407 = vmatprep.subr.mxu0 0.0
    %2408 = vmatpush1.msra.mxu0 %v2376
    %2409 = vmatprep.subr.mxu0 0.0
    %2410 = vmatpush1.msra.mxu0 %v2375
    %2411 = vmatprep.subr.mxu0 0.0
    %2412 = vmatpush1.msra.mxu0 %v2374
    %2413 = vmatprep.subr.mxu0 0.0
    %2414 = vmatpush1.msra.mxu0 %v2373
    %2415 = vmatprep.subr.mxu0 0.0
    %2416 = vmatpush2.msra.mxu0 0.0
    %2417 = vmatprep.subr.mxu0 0.0
    %2418 = vmatpush2.msra.mxu0 0.0
    %2419 = vmatprep.subr.mxu0 0.0
    %2420 = vmatpush2.msra.mxu0 0.0
    %2421 = vmatprep.subr.mxu0 0.0
    %2422 = vmatpush2.msra.mxu0 0.0
    %2423 = vmatprep.subr.mxu0 0.0
    %2424 = vmatpush2.msra.mxu0 0.0
    %2425 = vmatprep.subr.mxu0 0.0
    %2426 = vmatpush2.msra.mxu0 0.0
    %2427 = vmatprep.subr.mxu0 0.0
    %2428 = vmatpush2.msra.mxu0 0.0
    %2429 = vmatprep.subr.mxu0 0.0
    %2430 = vmatpush2.msra.mxu0 0.0
    %2431 = vmatprep.subr.mxu0 0.0
    %2432 = vmatpush2.msra.mxu0 0.0
    %2433 = vmatprep.subr.mxu0 0.0
    %2434 = vmatpush2.msra.mxu0 0.0
    %2435 = vmatprep.subr.mxu0 0.0
    %2436 = vmatpush2.msra.mxu0 0.0
    %2437 = vmatprep.subr.mxu0 0.0
    %2438 = vmatpush2.msra.mxu0 0.0
    %2439 = vmatprep.subr.mxu0 0.0
    %2440 = vmatpush2.msra.mxu0 0.0
    %2441 = vmatprep.subr.mxu0 0.0
    %2442 = vmatpush2.msra.mxu0 0.0
    %2443 = vmatprep.subr.mxu0 0.0
    %2444 = vmatpush2.msra.mxu0 0.0
    %2445 = vmatprep.subr.mxu0 0.0
    %2446 = vmatpush2.msra.mxu0 0.0
    %2447 = vmatprep.mubr.f32.mxu0 0.0
    %2448 = vmatmul.mubr.f32.gmra.mxu0 %v2378
    %v2449 = vpop.f32.mrf.mxu0
    %v2450 = vadd.f32 0.0, %v2449
    %v2451 = vpop.f32.mrf.mxu0
    %2452 = vmatprep.mubr.f32.mxu0 0.0
    %2453 = vmatmul.mubr.f32.gmra.mxu0 %v2381
    %v2454 = vpop.f32.mrf.mxu0
    %v2455 = vadd.f32 0.0, %v2454
    %v2456 = vpop.f32.mrf.mxu0
    %2457 = vdwg.mxu0
    %v2458 = vld [vmem:[%s9] sm:$0xff]
    %v2459 = vld [vmem:[%s9 + $0x8] sm:$0xff]
    %v2460 = vld [vmem:[%s9 + $0x10] sm:$0xff]
    %v2461 = vld [vmem:[%s9 + $0x18] sm:$0xff]
    %v2462 = vld [vmem:[%s9 + $0x20] sm:$0xff]
    %v2463 = vld [vmem:[%s9 + $0x28] sm:$0xff]
    %v2464 = vld [vmem:[%s9 + $0x30] sm:$0xff]
    %v2465 = vld [vmem:[%s9 + $0x38] sm:$0xff]
    %v2466 = vld [vmem:[%s9 + $0x40] sm:$0xff]
    %v2467 = vld [vmem:[%s9 + $0x48] sm:$0xff]
    %v2468 = vld [vmem:[%s9 + $0x50] sm:$0xff]
    %v2469 = vld [vmem:[%s9 + $0x58] sm:$0xff]
    %v2470 = vld [vmem:[%s9 + $0x60] sm:$0xff]
    %v2471 = vld [vmem:[%s9 + $0x68] sm:$0xff]
    %v2472 = vld [vmem:[%s9 + $0x70] sm:$0xff]
    %v2473 = vld [vmem:[%s9 + $0x78] sm:$0xff]
    %v2475 = vsel %vm49, %v2458, 0
    %v2478 = vsel %vm49, %v2459, 0
    %v2481 = vsel %vm49, %v2460, 0
    %v2484 = vsel %vm49, %v2461, 0
    %v2487 = vsel %vm49, %v2462, 0
    %v2490 = vsel %vm49, %v2463, 0
    %v2493 = vsel %vm49, %v2464, 0
    %v2496 = vsel %vm49, %v2465, 0
    %v2499 = vsel %vm49, %v2466, 0
    %v2502 = vsel %vm49, %v2467, 0
    %v2505 = vsel %vm49, %v2468, 0
    %v2508 = vsel %vm49, %v2469, 0
    %v2511 = vsel %vm49, %v2470, 0
    %v2514 = vsel %vm49, %v2471, 0
    %v2517 = vsel %vm49, %v2472, 0
    %v2520 = vsel %vm49, %v2473, 0
    %2522 = vmatprep.subr.mxu0 0.0
    %2523 = vmatpush1.msra.mxu0 0.0
    %2524 = vmatprep.subr.mxu0 0.0
    %2525 = vmatpush1.msra.mxu0 0.0
    %2526 = vmatprep.subr.mxu0 0.0
    %2527 = vmatpush1.msra.mxu0 0.0
    %2528 = vmatprep.subr.mxu0 0.0
    %2529 = vmatpush1.msra.mxu0 0.0
    %2530 = vmatprep.subr.mxu0 0.0
    %2531 = vmatpush1.msra.mxu0 0.0
    %2532 = vmatprep.subr.mxu0 0.0
    %2533 = vmatpush1.msra.mxu0 0.0
    %2534 = vmatprep.subr.mxu0 0.0
    %2535 = vmatpush1.msra.mxu0 0.0
    %2536 = vmatprep.subr.mxu0 0.0
    %2537 = vmatpush1.msra.mxu0 0.0
    %2538 = vmatprep.subr.mxu0 0.0
    %2539 = vmatpush1.msra.mxu0 0.0
    %2540 = vmatprep.subr.mxu0 0.0
    %2541 = vmatpush1.msra.mxu0 0.0
    %2542 = vmatprep.subr.mxu0 0.0
    %2543 = vmatpush1.msra.mxu0 0.0
    %2544 = vmatprep.subr.mxu0 0.0
    %2545 = vmatpush1.msra.mxu0 0.0
    %2546 = vmatprep.subr.mxu0 0.0
    %2547 = vmatpush1.msra.mxu0 %v2376
    %2548 = vmatprep.subr.mxu0 0.0
    %2549 = vmatpush1.msra.mxu0 %v2375
    %2550 = vmatprep.subr.mxu0 0.0
    %2551 = vmatpush1.msra.mxu0 %v2374
    %2552 = vmatprep.subr.mxu0 0.0
    %2553 = vmatpush1.msra.mxu0 %v2373
    %2554 = vmatprep.subr.mxu0 0.0
    %2555 = vmatpush2.msra.mxu0 0.0
    %2556 = vmatprep.subr.mxu0 0.0
    %2557 = vmatpush2.msra.mxu0 0.0
    %2558 = vmatprep.subr.mxu0 0.0
    %2559 = vmatpush2.msra.mxu0 0.0
    %2560 = vmatprep.subr.mxu0 0.0
    %2561 = vmatpush2.msra.mxu0 0.0
    %2562 = vmatprep.subr.mxu0 0.0
    %2563 = vmatpush2.msra.mxu0 0.0
    %2564 = vmatprep.subr.mxu0 0.0
    %2565 = vmatpush2.msra.mxu0 0.0
    %2566 = vmatprep.subr.mxu0 0.0
    %2567 = vmatpush2.msra.mxu0 0.0
    %2568 = vmatprep.subr.mxu0 0.0
    %2569 = vmatpush2.msra.mxu0 0.0
    %2570 = vmatprep.subr.mxu0 0.0
    %2571 = vmatpush2.msra.mxu0 0.0
    %2572 = vmatprep.subr.mxu0 0.0
    %2573 = vmatpush2.msra.mxu0 0.0
    %2574 = vmatprep.subr.mxu0 0.0
    %2575 = vmatpush2.msra.mxu0 0.0
    %2576 = vmatprep.subr.mxu0 0.0
    %2577 = vmatpush2.msra.mxu0 0.0
    %2578 = vmatprep.subr.mxu0 0.0
    %2579 = vmatpush2.msra.mxu0 0.0
    %2580 = vmatprep.subr.mxu0 0.0
    %2581 = vmatpush2.msra.mxu0 0.0
    %2582 = vmatprep.subr.mxu0 0.0
    %2583 = vmatpush2.msra.mxu0 0.0
    %2584 = vmatprep.subr.mxu0 0.0
    %2585 = vmatpush2.msra.mxu0 0.0
    %2586 = vmatprep.mubr.f32.mxu0 0.0
    %2587 = vmatmul.mubr.f32.gmra.mxu0 %v2475
    %v2588 = vpop.f32.mrf.mxu0
    %v2589 = vadd.f32 0.0, %v2588
    %v2590 = vpop.f32.mrf.mxu0
    %2591 = vmatprep.mubr.f32.mxu0 0.0
    %2592 = vmatmul.mubr.f32.gmra.mxu0 %v2478
    %v2593 = vpop.f32.mrf.mxu0
    %v2594 = vadd.f32 0.0, %v2593
    %v2595 = vpop.f32.mrf.mxu0
    %2596 = vmatprep.mubr.f32.mxu0 0.0
    %2597 = vmatmul.mubr.f32.gmra.mxu0 %v2481
    %v2598 = vpop.f32.mrf.mxu0
    %v2599 = vadd.f32 0.0, %v2598
    %v2600 = vpop.f32.mrf.mxu0
    %2601 = vmatprep.mubr.f32.mxu0 0.0
    %2602 = vmatmul.mubr.f32.gmra.mxu0 %v2484
    %v2603 = vpop.f32.mrf.mxu0
    %v2604 = vadd.f32 0.0, %v2603
    %v2605 = vpop.f32.mrf.mxu0
    %2606 = vmatprep.mubr.f32.mxu0 0.0
    %2607 = vmatmul.mubr.f32.gmra.mxu0 %v2487
    %v2608 = vpop.f32.mrf.mxu0
    %v2609 = vadd.f32 0.0, %v2608
    %v2610 = vpop.f32.mrf.mxu0
    %2611 = vmatprep.mubr.f32.mxu0 0.0
    %2612 = vmatmul.mubr.f32.gmra.mxu0 %v2490
    %v2613 = vpop.f32.mrf.mxu0
    %v2614 = vadd.f32 0.0, %v2613
    %v2615 = vpop.f32.mrf.mxu0
    %2616 = vmatprep.mubr.f32.mxu0 0.0
    %2617 = vmatmul.mubr.f32.gmra.mxu0 %v2493
    %v2618 = vpop.f32.mrf.mxu0
    %v2619 = vadd.f32 0.0, %v2618
    %v2620 = vpop.f32.mrf.mxu0
    %2621 = vmatprep.mubr.f32.mxu0 0.0
    %2622 = vmatmul.mubr.f32.gmra.mxu0 %v2496
    %v2623 = vpop.f32.mrf.mxu0
    %v2624 = vadd.f32 0.0, %v2623
    %v2625 = vpop.f32.mrf.mxu0
    %2626 = vmatprep.mubr.f32.mxu0 0.0
    %2627 = vmatmul.mubr.f32.gmra.mxu0 %v2499
    %v2628 = vpop.f32.mrf.mxu0
    %v2629 = vadd.f32 0.0, %v2628
    %v2630 = vpop.f32.mrf.mxu0
    %2631 = vmatprep.mubr.f32.mxu0 0.0
    %2632 = vmatmul.mubr.f32.gmra.mxu0 %v2502
    %v2633 = vpop.f32.mrf.mxu0
    %v2634 = vadd.f32 0.0, %v2633
    %v2635 = vpop.f32.mrf.mxu0
    %2636 = vmatprep.mubr.f32.mxu0 0.0
    %2637 = vmatmul.mubr.f32.gmra.mxu0 %v2505
    %v2638 = vpop.f32.mrf.mxu0
    %v2639 = vadd.f32 0.0, %v2638
    %v2640 = vpop.f32.mrf.mxu0
    %2641 = vmatprep.mubr.f32.mxu0 0.0
    %2642 = vmatmul.mubr.f32.gmra.mxu0 %v2508
    %v2643 = vpop.f32.mrf.mxu0
    %v2644 = vadd.f32 0.0, %v2643
    %v2645 = vpop.f32.mrf.mxu0
    %2646 = vmatprep.mubr.f32.mxu0 0.0
    %2647 = vmatmul.mubr.f32.gmra.mxu0 %v2511
    %v2648 = vpop.f32.mrf.mxu0
    %v2649 = vadd.f32 0.0, %v2648
    %v2650 = vpop.f32.mrf.mxu0
    %2651 = vmatprep.mubr.f32.mxu0 0.0
    %2652 = vmatmul.mubr.f32.gmra.mxu0 %v2514
    %v2653 = vpop.f32.mrf.mxu0
    %v2654 = vadd.f32 0.0, %v2653
    %v2655 = vpop.f32.mrf.mxu0
    %2656 = vmatprep.mubr.f32.mxu0 0.0
    %2657 = vmatmul.mubr.f32.gmra.mxu0 %v2517
    %v2658 = vpop.f32.mrf.mxu0
    %v2659 = vadd.f32 0.0, %v2658
    %v2660 = vpop.f32.mrf.mxu0
    %2661 = vmatprep.mubr.f32.mxu0 0.0
    %2662 = vmatmul.mubr.f32.gmra.mxu0 %v2520
    %v2663 = vpop.f32.mrf.mxu0
    %v2664 = vadd.f32 0.0, %v2663
    %v2665 = vpop.f32.mrf.mxu0
    %2666 = vdwg.mxu0
    %v2667 = vld [vmem:[%s10] sm:$0xff]
    %v2668 = vld [vmem:[%s10 + $0x8] sm:$0xff]
    %v2669 = vld [vmem:[%s10 + $0x10] sm:$0xff]
    %v2670 = vld [vmem:[%s10 + $0x18] sm:$0xff]
    %v2671 = vlaneseq
    %v2672 = vand.u32 %v2671, 127
    %v2673 = vcvt.s32.f32 %v2672
    %vm2674 = vcmp.lt.s32.totalorder %v2672, 19
    %v2675 = vld [vmem:[%s7] sm:$0xff]
    %v2676 = vld [vmem:[%s7 + $0x8] sm:$0xff]
    %v2677 = vld [vmem:[%s7 + $0x10] sm:$0xff]
    %v2678 = vld [vmem:[%s7 + $0x18] sm:$0xff]
    %v2679 = vld [vmem:[%s8] sm:$0x1]
    %2680 = vmatprep.subr.mxu0 0.0
    %2681 = vmatpush1.msra.mxu0 0.0
    %2682 = vmatprep.subr.mxu0 0.0
    %2683 = vmatpush1.msra.mxu0 0.0
    %2684 = vmatprep.subr.mxu0 0.0
    %2685 = vmatpush1.msra.mxu0 0.0
    %2686 = vmatprep.subr.mxu0 0.0
    %2687 = vmatpush1.msra.mxu0 0.0
    %2688 = vmatprep.subr.mxu0 0.0
    %2689 = vmatpush1.msra.mxu0 0.0
    %2690 = vmatprep.subr.mxu0 0.0
    %2691 = vmatpush1.msra.mxu0 0.0
    %2692 = vmatprep.subr.mxu0 0.0
    %2693 = vmatpush1.msra.mxu0 0.0
    %2694 = vmatprep.subr.mxu0 0.0
    %2695 = vmatpush1.msra.mxu0 0.0
    %2696 = vmatprep.subr.mxu0 0.0
    %2697 = vmatpush1.msra.mxu0 0.0
    %2698 = vmatprep.subr.mxu0 0.0
    %2699 = vmatpush1.msra.mxu0 0.0
    %2700 = vmatprep.subr.mxu0 0.0
    %2701 = vmatpush1.msra.mxu0 0.0
    %2702 = vmatprep.subr.mxu0 0.0
    %2703 = vmatpush1.msra.mxu0 0.0
    %2704 = vmatprep.subr.mxu0 0.0
    %2705 = vmatpush1.msra.mxu0 %v2678
    %2706 = vmatprep.subr.mxu0 0.0
    %2707 = vmatpush1.msra.mxu0 %v2677
    %2708 = vmatprep.subr.mxu0 0.0
    %2709 = vmatpush1.msra.mxu0 %v2676
    %2710 = vmatprep.subr.mxu0 0.0
    %2711 = vmatpush1.msra.mxu0 %v2675
    %2712 = vmatprep.subr.mxu0 0.0
    %2713 = vmatpush2.msra.mxu0 0.0
    %2714 = vmatprep.subr.mxu0 0.0
    %2715 = vmatpush2.msra.mxu0 0.0
    %2716 = vmatprep.subr.mxu0 0.0
    %2717 = vmatpush2.msra.mxu0 0.0
    %2718 = vmatprep.subr.mxu0 0.0
    %2719 = vmatpush2.msra.mxu0 0.0
    %2720 = vmatprep.subr.mxu0 0.0
    %2721 = vmatpush2.msra.mxu0 0.0
    %2722 = vmatprep.subr.mxu0 0.0
    %2723 = vmatpush2.msra.mxu0 0.0
    %2724 = vmatprep.subr.mxu0 0.0
    %2725 = vmatpush2.msra.mxu0 0.0
    %2726 = vmatprep.subr.mxu0 0.0
    %2727 = vmatpush2.msra.mxu0 0.0
    %2728 = vmatprep.subr.mxu0 0.0
    %2729 = vmatpush2.msra.mxu0 0.0
    %2730 = vmatprep.subr.mxu0 0.0
    %2731 = vmatpush2.msra.mxu0 0.0
    %2732 = vmatprep.subr.mxu0 0.0
    %2733 = vmatpush2.msra.mxu0 0.0
    %2734 = vmatprep.subr.mxu0 0.0
    %2735 = vmatpush2.msra.mxu0 0.0
    %2736 = vmatprep.subr.mxu0 0.0
    %2737 = vmatpush2.msra.mxu0 0.0
    %2738 = vmatprep.subr.mxu0 0.0
    %2739 = vmatpush2.msra.mxu0 0.0
    %2740 = vmatprep.subr.mxu0 0.0
    %2741 = vmatpush2.msra.mxu0 0.0
    %2742 = vmatprep.subr.mxu0 0.0
    %2743 = vmatpush2.msra.mxu0 0.0
    %2744 = vmatprep.mubr.f32.mxu0 0.0
    %2745 = vmatmul.mubr.f32.gmra.mxu0 %v2274
    %v2746 = vpop.f32.mrf.mxu0
    %v2747 = vadd.f32 0.0, %v2746
    %v2748 = vpop.f32.mrf.mxu0
    %2749 = vdwg.mxu0
    %v2750 = vadd.f32 %v2450, %v2747
    %v2752 = vlaneseq
    %v2753 = vshrl.u32 %v2752, 7
    %v2754 = vsub.s32 0, %v2753
    %v2755 = vrot.slane %v2679, %v2754
    %v2757 = vadd.f32 %v2750, %v2755
    %v2758 = vxor.u32 %v2757, 2147483648
    %v2759 = vmul.f32 %v2758, 1.442695
    %v2760 = vpow.pop %v2759
    %v2761 = vadd.f32 %v2760, 1.0
    %v2762 = vrcp.pop %v2761
    %v2763 = vmul.f32 1.0, %v2762
    %v2764 = vtanh.pop %v2757
    %v2766 = vrot.slane %v2188, 6
    %v2768 = vmul.f32 %v2763, %v2766
    %2770 = vrot.lane.b32.xlu0 %v2764, 64
    %v2771 = vpop.permute.xlu0 %2770
    %v2773 = vmul.f32 %v2763, %v2771
    %2775 = vrot.lane.b32.xlu0 %v2773, 32
    %v2776 = vpop.permute.xlu0 %2775
    %v2778 = vadd.f32 %v2768, %v2776
    %v2779 = vtanh.pop %v2778
    %2781 = vrot.lane.b32.xlu0 %v2779, 64
    %v2782 = vpop.permute.xlu0 %2781
    %v2784 = vmul.f32 %v2763, %v2782
    %s2785 = scalar_lea.vmem %s6, 32
    %v2786 = vld [vmem:[%s2785] sm:$0xff]
    %v2787 = vld [vmem:[%s2785 + $0x8] sm:$0xff]
    %v2788 = vld [vmem:[%s2785 + $0x10] sm:$0xff]
    %v2789 = vld [vmem:[%s2785 + $0x18] sm:$0xff]
    %s2790 = scalar_lea.vmem %s7, 32
    %v2791 = vld [vmem:[%s2790] sm:$0xff]
    %v2792 = vld [vmem:[%s2790 + $0x8] sm:$0xff]
    %v2793 = vld [vmem:[%s2790 + $0x10] sm:$0xff]
    %v2794 = vld [vmem:[%s2790 + $0x18] sm:$0xff]
    %s2795 = scalar_lea.vmem %s8, 1
    %v2796 = vld [vmem:[%s2795] sm:$0x1]
    %2798 = vrot.lane.b32.xlu0 %v2370, 32
    %v2799 = vpop.permute.xlu0 %2798
    %v2800 = vsel %vm49, %v2799, 0
    %2802 = vmatprep.subr.mxu0 0.0
    %2803 = vmatpush1.msra.mxu0 0.0
    %2804 = vmatprep.subr.mxu0 0.0
    %2805 = vmatpush1.msra.mxu0 0.0
    %2806 = vmatprep.subr.mxu0 0.0
    %2807 = vmatpush1.msra.mxu0 0.0
    %2808 = vmatprep.subr.mxu0 0.0
    %2809 = vmatpush1.msra.mxu0 0.0
    %2810 = vmatprep.subr.mxu0 0.0
    %2811 = vmatpush1.msra.mxu0 0.0
    %2812 = vmatprep.subr.mxu0 0.0
    %2813 = vmatpush1.msra.mxu0 0.0
    %2814 = vmatprep.subr.mxu0 0.0
    %2815 = vmatpush1.msra.mxu0 0.0
    %2816 = vmatprep.subr.mxu0 0.0
    %2817 = vmatpush1.msra.mxu0 0.0
    %2818 = vmatprep.subr.mxu0 0.0
    %2819 = vmatpush1.msra.mxu0 0.0
    %2820 = vmatprep.subr.mxu0 0.0
    %2821 = vmatpush1.msra.mxu0 0.0
    %2822 = vmatprep.subr.mxu0 0.0
    %2823 = vmatpush1.msra.mxu0 0.0
    %2824 = vmatprep.subr.mxu0 0.0
    %2825 = vmatpush1.msra.mxu0 0.0
    %2826 = vmatprep.subr.mxu0 0.0
    %2827 = vmatpush1.msra.mxu0 %v2794
    %2828 = vmatprep.subr.mxu0 0.0
    %2829 = vmatpush1.msra.mxu0 %v2793
    %2830 = vmatprep.subr.mxu0 0.0
    %2831 = vmatpush1.msra.mxu0 %v2792
    %2832 = vmatprep.subr.mxu0 0.0
    %2833 = vmatpush1.msra.mxu0 %v2791
    %2834 = vmatprep.subr.mxu0 0.0
    %2835 = vmatpush2.msra.mxu0 0.0
    %2836 = vmatprep.subr.mxu0 0.0
    %2837 = vmatpush2.msra.mxu0 0.0
    %2838 = vmatprep.subr.mxu0 0.0
    %2839 = vmatpush2.msra.mxu0 0.0
    %2840 = vmatprep.subr.mxu0 0.0
    %2841 = vmatpush2.msra.mxu0 0.0
    %2842 = vmatprep.subr.mxu0 0.0
    %2843 = vmatpush2.msra.mxu0 0.0
    %2844 = vmatprep.subr.mxu0 0.0
    %2845 = vmatpush2.msra.mxu0 0.0
    %2846 = vmatprep.subr.mxu0 0.0
    %2847 = vmatpush2.msra.mxu0 0.0
    %2848 = vmatprep.subr.mxu0 0.0
    %2849 = vmatpush2.msra.mxu0 0.0
    %2850 = vmatprep.subr.mxu0 0.0
    %2851 = vmatpush2.msra.mxu0 0.0
    %2852 = vmatprep.subr.mxu0 0.0
    %2853 = vmatpush2.msra.mxu0 0.0
    %2854 = vmatprep.subr.mxu0 0.0
    %2855 = vmatpush2.msra.mxu0 0.0
    %2856 = vmatprep.subr.mxu0 0.0
    %2857 = vmatpush2.msra.mxu0 0.0
    %2858 = vmatprep.subr.mxu0 0.0
    %2859 = vmatpush2.msra.mxu0 0.0
    %2860 = vmatprep.subr.mxu0 0.0
    %2861 = vmatpush2.msra.mxu0 0.0
    %2862 = vmatprep.subr.mxu0 0.0
    %2863 = vmatpush2.msra.mxu0 0.0
    %2864 = vmatprep.subr.mxu0 0.0
    %2865 = vmatpush2.msra.mxu0 0.0
    %2866 = vmatprep.mubr.f32.mxu0 0.0
    %2867 = vmatmul.mubr.f32.gmra.mxu0 %v2800
    %v2868 = vpop.f32.mrf.mxu0
    %v2869 = vadd.f32 0.0, %v2868
    %v2870 = vpop.f32.mrf.mxu0
    %2871 = vdwg.mxu0
    %2873 = vrot.lane.b32.xlu0 %v2784, 32
    %v2874 = vpop.permute.xlu0 %2873
    %v2875 = vsel %vm49, %v2874, 0
    %2877 = vmatprep.subr.mxu0 0.0
    %2878 = vmatpush1.msra.mxu0 0.0
    %2879 = vmatprep.subr.mxu0 0.0
    %2880 = vmatpush1.msra.mxu0 0.0
    %2881 = vmatprep.subr.mxu0 0.0
    %2882 = vmatpush1.msra.mxu0 0.0
    %2883 = vmatprep.subr.mxu0 0.0
    %2884 = vmatpush1.msra.mxu0 0.0
    %2885 = vmatprep.subr.mxu0 0.0
    %2886 = vmatpush1.msra.mxu0 0.0
    %2887 = vmatprep.subr.mxu0 0.0
    %2888 = vmatpush1.msra.mxu0 0.0
    %2889 = vmatprep.subr.mxu0 0.0
    %2890 = vmatpush1.msra.mxu0 0.0
    %2891 = vmatprep.subr.mxu0 0.0
    %2892 = vmatpush1.msra.mxu0 0.0
    %2893 = vmatprep.subr.mxu0 0.0
    %2894 = vmatpush1.msra.mxu0 0.0
    %2895 = vmatprep.subr.mxu0 0.0
    %2896 = vmatpush1.msra.mxu0 0.0
    %2897 = vmatprep.subr.mxu0 0.0
    %2898 = vmatpush1.msra.mxu0 0.0
    %2899 = vmatprep.subr.mxu0 0.0
    %2900 = vmatpush1.msra.mxu0 0.0
    %2901 = vmatprep.subr.mxu0 0.0
    %2902 = vmatpush1.msra.mxu0 %v2789
    %2903 = vmatprep.subr.mxu0 0.0
    %2904 = vmatpush1.msra.mxu0 %v2788
    %2905 = vmatprep.subr.mxu0 0.0
    %2906 = vmatpush1.msra.mxu0 %v2787
    %2907 = vmatprep.subr.mxu0 0.0
    %2908 = vmatpush1.msra.mxu0 %v2786
    %2909 = vmatprep.subr.mxu0 0.0
    %2910 = vmatpush2.msra.mxu0 0.0
    %2911 = vmatprep.subr.mxu0 0.0
    %2912 = vmatpush2.msra.mxu0 0.0
    %2913 = vmatprep.subr.mxu0 0.0
    %2914 = vmatpush2.msra.mxu0 0.0
    %2915 = vmatprep.subr.mxu0 0.0
    %2916 = vmatpush2.msra.mxu0 0.0
    %2917 = vmatprep.subr.mxu0 0.0
    %2918 = vmatpush2.msra.mxu0 0.0
    %2919 = vmatprep.subr.mxu0 0.0
    %2920 = vmatpush2.msra.mxu0 0.0
    %2921 = vmatprep.subr.mxu0 0.0
    %2922 = vmatpush2.msra.mxu0 0.0
    %2923 = vmatprep.subr.mxu0 0.0
    %2924 = vmatpush2.msra.mxu0 0.0
    %2925 = vmatprep.subr.mxu0 0.0
    %2926 = vmatpush2.msra.mxu0 0.0
    %2927 = vmatprep.subr.mxu0 0.0
    %2928 = vmatpush2.msra.mxu0 0.0
    %2929 = vmatprep.subr.mxu0 0.0
    %2930 = vmatpush2.msra.mxu0 0.0
    %2931 = vmatprep.subr.mxu0 0.0
    %2932 = vmatpush2.msra.mxu0 0.0
    %2933 = vmatprep.subr.mxu0 0.0
    %2934 = vmatpush2.msra.mxu0 0.0
    %2935 = vmatprep.subr.mxu0 0.0
    %2936 = vmatpush2.msra.mxu0 0.0
    %2937 = vmatprep.subr.mxu0 0.0
    %2938 = vmatpush2.msra.mxu0 0.0
    %2939 = vmatprep.subr.mxu0 0.0
    %2940 = vmatpush2.msra.mxu0 0.0
    %2941 = vmatprep.mubr.f32.mxu0 0.0
    %2942 = vmatmul.mubr.f32.gmra.mxu0 %v2875
    %v2943 = vpop.f32.mrf.mxu0
    %v2944 = vadd.f32 %v2869, %v2943
    %v2945 = vpop.f32.mrf.mxu0
    %2946 = vdwg.mxu0
    %v2948 = vlaneseq
    %v2949 = vshrl.u32 %v2948, 7
    %v2950 = vsub.s32 0, %v2949
    %v2951 = vrot.slane %v2796, %v2950
    %v2953 = vadd.f32 %v2944, %v2951
    %v2954 = vxor.u32 %v2953, 2147483648
    %v2955 = vmul.f32 %v2954, 1.442695
    %v2956 = vpow.pop %v2955
    %v2957 = vadd.f32 %v2956, 1.0
    %v2958 = vrcp.pop %v2957
    %v2959 = vmul.f32 1.0, %v2958
    %v2960 = vtanh.pop %v2953
    %v2961 = vmul.f32 %v2959, %v2364
    %2963 = vrot.lane.b32.xlu0 %v2960, 64
    %v2964 = vpop.permute.xlu0 %2963
    %v2966 = vmul.f32 %v2959, %v2964
    %2968 = vrot.lane.b32.xlu0 %v2966, 32
    %v2969 = vpop.permute.xlu0 %2968
    %v2971 = vadd.f32 %v2961, %v2969
    %v2972 = vtanh.pop %v2971
    %2974 = vrot.lane.b32.xlu0 %v2972, 64
    %v2975 = vpop.permute.xlu0 %2974
    %v2977 = vmul.f32 %v2959, %v2975
    %2979 = vrot.lane.b32.xlu0 %v2977, 32
    %v2980 = vpop.permute.xlu0 %2979
    %v2981 = vsel %vm49, %v2980, 0
    %2983 = vmatprep.subr.mxu0 0.0
    %2984 = vmatpush1.msra.mxu0 0.0
    %2985 = vmatprep.subr.mxu0 0.0
    %2986 = vmatpush1.msra.mxu0 0.0
    %2987 = vmatprep.subr.mxu0 0.0
    %2988 = vmatpush1.msra.mxu0 0.0
    %2989 = vmatprep.subr.mxu0 0.0
    %2990 = vmatpush1.msra.mxu0 0.0
    %2991 = vmatprep.subr.mxu0 0.0
    %2992 = vmatpush1.msra.mxu0 0.0
    %2993 = vmatprep.subr.mxu0 0.0
    %2994 = vmatpush1.msra.mxu0 0.0
    %2995 = vmatprep.subr.mxu0 0.0
    %2996 = vmatpush1.msra.mxu0 0.0
    %2997 = vmatprep.subr.mxu0 0.0
    %2998 = vmatpush1.msra.mxu0 0.0
    %2999 = vmatprep.subr.mxu0 0.0
    %3000 = vmatpush1.msra.mxu0 0.0
    %3001 = vmatprep.subr.mxu0 0.0
    %3002 = vmatpush1.msra.mxu0 0.0
    %3003 = vmatprep.subr.mxu0 0.0
    %3004 = vmatpush1.msra.mxu0 0.0
    %3005 = vmatprep.subr.mxu0 0.0
    %3006 = vmatpush1.msra.mxu0 0.0
    %3007 = vmatprep.subr.mxu0 0.0
    %3008 = vmatpush1.msra.mxu0 %v2670
    %3009 = vmatprep.subr.mxu0 0.0
    %3010 = vmatpush1.msra.mxu0 %v2669
    %3011 = vmatprep.subr.mxu0 0.0
    %3012 = vmatpush1.msra.mxu0 %v2668
    %3013 = vmatprep.subr.mxu0 0.0
    %3014 = vmatpush1.msra.mxu0 %v2667
    %3015 = vmatprep.subr.mxu0 0.0
    %3016 = vmatpush2.msra.mxu0 0.0
    %3017 = vmatprep.subr.mxu0 0.0
    %3018 = vmatpush2.msra.mxu0 0.0
    %3019 = vmatprep.subr.mxu0 0.0
    %3020 = vmatpush2.msra.mxu0 0.0
    %3021 = vmatprep.subr.mxu0 0.0
    %3022 = vmatpush2.msra.mxu0 0.0
    %3023 = vmatprep.subr.mxu0 0.0
    %3024 = vmatpush2.msra.mxu0 0.0
    %3025 = vmatprep.subr.mxu0 0.0
    %3026 = vmatpush2.msra.mxu0 0.0
    %3027 = vmatprep.subr.mxu0 0.0
    %3028 = vmatpush2.msra.mxu0 0.0
    %3029 = vmatprep.subr.mxu0 0.0
    %3030 = vmatpush2.msra.mxu0 0.0
    %3031 = vmatprep.subr.mxu0 0.0
    %3032 = vmatpush2.msra.mxu0 0.0
    %3033 = vmatprep.subr.mxu0 0.0
    %3034 = vmatpush2.msra.mxu0 0.0
    %3035 = vmatprep.subr.mxu0 0.0
    %3036 = vmatpush2.msra.mxu0 0.0
    %3037 = vmatprep.subr.mxu0 0.0
    %3038 = vmatpush2.msra.mxu0 0.0
    %3039 = vmatprep.subr.mxu0 0.0
    %3040 = vmatpush2.msra.mxu0 0.0
    %3041 = vmatprep.subr.mxu0 0.0
    %3042 = vmatpush2.msra.mxu0 0.0
    %3043 = vmatprep.subr.mxu0 0.0
    %3044 = vmatpush2.msra.mxu0 0.0
    %3045 = vmatprep.subr.mxu0 0.0
    %3046 = vmatpush2.msra.mxu0 0.0
    %3047 = vmatprep.mubr.f32.mxu0 0.0
    %3048 = vmatmul.mubr.f32.gmra.mxu0 %v2981
    %v3049 = vpop.f32.mrf.mxu0
    %v3050 = vadd.f32 0.0, %v3049
    %v3051 = vpop.f32.mrf.mxu0
    %3052 = vdwg.mxu0
    %v3055 = vunpack.c.l.s4 1966171168
    %v3056 = vunpack.c.0.s8 %v3055
    %v3057 = vlaneseq
    %v3058 = vshrl.u32 %v3057, 7
    %v3059 = vsub.s32 %v3056, %v3058
    %v3060 = vrot.slane %v3050, %v3059
    %v3061 = vcombine.high %v3060, %v3060
    %v3063 = vunpack.c.l.s4 1966171168
    %v3064 = vunpack.c.0.s8 %v3063
    %v3065 = vlaneseq
    %v3066 = vshrl.u32 %v3065, 7
    %v3067 = vsub.s32 %v3064, %v3066
    %v3068 = vrot.slane %v3060, %v3067
    %v3070 = vunpack.c.l.s4 1966171168
    %v3071 = vunpack.c.0.s8 %v3070
    %v3072 = vlaneseq
    %v3073 = vshrl.u32 %v3072, 7
    %v3074 = vsub.s32 %v3071, %v3073
    %v3075 = vrot.slane %v3061, %v3074
    %3078 = vst [vmem:[#allocation4] sm:$0x1] %v3068
    %3079 = vst [vmem:[#allocation4 + $0x8] sm:$0x1] %v3075
    %v3080 = vsel %vm2674, %v3050, -1e+30
    %vm3081 = vcmask 1041408
    %v3082 = vsel %vm3081, %v3080, -inf
    %3083 = vmax.xlane.f32.xlu0 %v3082
    %v3084 = vpop.xlane.xlu0 %3083
    %vm3085 = vcmp.eq.f32.partialorder %v3080, %v3084
    %v3086 = vsel %vm3085, %v2673, 128.0
    %v3087 = vsel %vm3081, %v3086, inf
    %3088 = vmin.xlane.f32.xlu0 %v3087
    %v3089 = vpop.xlane.xlu0 %3088
    %vm3090 = vcmp.eq.f32.partialorder %v2673, %v3089
    %v3091 = vsel %vm3090, 1, 0
    %v3092 = vcvt.s32.f32 %v3091
    %3093 = vmatprep.subr.mxu0 0.0
    %3094 = vmatpush1.msra.mxu0 %v2664
    %3095 = vmatprep.subr.mxu0 0.0
    %3096 = vmatpush1.msra.mxu0 %v2659
    %3097 = vmatprep.subr.mxu0 0.0
    %3098 = vmatpush1.msra.mxu0 %v2654
    %3099 = vmatprep.subr.mxu0 0.0
    %3100 = vmatpush1.msra.mxu0 %v2649
    %3101 = vmatprep.subr.mxu0 0.0
    %3102 = vmatpush1.msra.mxu0 %v2644
    %3103 = vmatprep.subr.mxu0 0.0
    %3104 = vmatpush1.msra.mxu0 %v2639
    %3105 = vmatprep.subr.mxu0 0.0
    %3106 = vmatpush1.msra.mxu0 %v2634
    %3107 = vmatprep.subr.mxu0 0.0
    %3108 = vmatpush1.msra.mxu0 %v2629
    %3109 = vmatprep.subr.mxu0 0.0
    %3110 = vmatpush1.msra.mxu0 %v2624
    %3111 = vmatprep.subr.mxu0 0.0
    %3112 = vmatpush1.msra.mxu0 %v2619
    %3113 = vmatprep.subr.mxu0 0.0
    %3114 = vmatpush1.msra.mxu0 %v2614
    %3115 = vmatprep.subr.mxu0 0.0
    %3116 = vmatpush1.msra.mxu0 %v2609
    %3117 = vmatprep.subr.mxu0 0.0
    %3118 = vmatpush1.msra.mxu0 %v2604
    %3119 = vmatprep.subr.mxu0 0.0
    %3120 = vmatpush1.msra.mxu0 %v2599
    %3121 = vmatprep.subr.mxu0 0.0
    %3122 = vmatpush1.msra.mxu0 %v2594
    %3123 = vmatprep.subr.mxu0 0.0
    %3124 = vmatpush1.msra.mxu0 %v2589
    %3125 = vmatprep.subr.mxu0 0.0
    %3126 = vmatpush2.msra.mxu0 0.0
    %3127 = vmatprep.subr.mxu0 0.0
    %3128 = vmatpush2.msra.mxu0 0.0
    %3129 = vmatprep.subr.mxu0 0.0
    %3130 = vmatpush2.msra.mxu0 0.0
    %3131 = vmatprep.subr.mxu0 0.0
    %3132 = vmatpush2.msra.mxu0 0.0
    %3133 = vmatprep.subr.mxu0 0.0
    %3134 = vmatpush2.msra.mxu0 0.0
    %3135 = vmatprep.subr.mxu0 0.0
    %3136 = vmatpush2.msra.mxu0 0.0
    %3137 = vmatprep.subr.mxu0 0.0
    %3138 = vmatpush2.msra.mxu0 0.0
    %3139 = vmatprep.subr.mxu0 0.0
    %3140 = vmatpush2.msra.mxu0 0.0
    %3141 = vmatprep.subr.mxu0 0.0
    %3142 = vmatpush2.msra.mxu0 0.0
    %3143 = vmatprep.subr.mxu0 0.0
    %3144 = vmatpush2.msra.mxu0 0.0
    %3145 = vmatprep.subr.mxu0 0.0
    %3146 = vmatpush2.msra.mxu0 0.0
    %3147 = vmatprep.subr.mxu0 0.0
    %3148 = vmatpush2.msra.mxu0 0.0
    %3149 = vmatprep.subr.mxu0 0.0
    %3150 = vmatpush2.msra.mxu0 0.0
    %3151 = vmatprep.subr.mxu0 0.0
    %3152 = vmatpush2.msra.mxu0 0.0
    %3153 = vmatprep.subr.mxu0 0.0
    %3154 = vmatpush2.msra.mxu0 0.0
    %3155 = vmatprep.subr.mxu0 0.0
    %3156 = vmatpush2.msra.mxu0 0.0
    %3157 = vmatprep.mubr.f32.mxu0 0.0
    %3158 = vmatmul.mubr.f32.gmra.mxu0 %v3092
    %v3159 = vpop.f32.mrf.mxu0
    %v3160 = vadd.f32 0.0, %v3159
    %v3161 = vpop.f32.mrf.mxu0
    %3162 = vdwg.mxu0
    %s3163 = sld [smem:[#allocation3]]
    %p3164 = scmp.gt.s32.totalorder %s3163, 0
    %s3165 = scalar_select %p3164, 1, 0
    %s3166 = scvt.s32.f32 %s3165
    %v3167 = vstv %s3166
    %v3168 = vmul.f32 %v3167, %v2450
    %s3169 = ssub.f32 1.0, %s3166
    %v3170 = vstv %s3169
    %v3171 = vmul.f32 %v3170, %v3160
    %v3173 = vrot.slane %v3171, 6
    %v3175 = vadd.f32 %v3168, %v3173
    %v3176 = vld [vmem:[%s7] sm:$0xff]
    %v3177 = vld [vmem:[%s7 + $0x8] sm:$0xff]
    %v3178 = vld [vmem:[%s7 + $0x10] sm:$0xff]
    %v3179 = vld [vmem:[%s7 + $0x18] sm:$0xff]
    %v3180 = vld [vmem:[%s8] sm:$0x1]
    %3181 = vmatprep.subr.mxu0 0.0
    %3182 = vmatpush1.msra.mxu0 0.0
    %3183 = vmatprep.subr.mxu0 0.0
    %3184 = vmatpush1.msra.mxu0 0.0
    %3185 = vmatprep.subr.mxu0 0.0
    %3186 = vmatpush1.msra.mxu0 0.0
    %3187 = vmatprep.subr.mxu0 0.0
    %3188 = vmatpush1.msra.mxu0 0.0
    %3189 = vmatprep.subr.mxu0 0.0
    %3190 = vmatpush1.msra.mxu0 0.0
    %3191 = vmatprep.subr.mxu0 0.0
    %3192 = vmatpush1.msra.mxu0 0.0
    %3193 = vmatprep.subr.mxu0 0.0
    %3194 = vmatpush1.msra.mxu0 0.0
    %3195 = vmatprep.subr.mxu0 0.0
    %3196 = vmatpush1.msra.mxu0 0.0
    %3197 = vmatprep.subr.mxu0 0.0
    %3198 = vmatpush1.msra.mxu0 0.0
    %3199 = vmatprep.subr.mxu0 0.0
    %3200 = vmatpush1.msra.mxu0 0.0
    %3201 = vmatprep.subr.mxu0 0.0
    %3202 = vmatpush1.msra.mxu0 0.0
    %3203 = vmatprep.subr.mxu0 0.0
    %3204 = vmatpush1.msra.mxu0 0.0
    %3205 = vmatprep.subr.mxu0 0.0
    %3206 = vmatpush1.msra.mxu0 %v3179
    %3207 = vmatprep.subr.mxu0 0.0
    %3208 = vmatpush1.msra.mxu0 %v3178
    %3209 = vmatprep.subr.mxu0 0.0
    %3210 = vmatpush1.msra.mxu0 %v3177
    %3211 = vmatprep.subr.mxu0 0.0
    %3212 = vmatpush1.msra.mxu0 %v3176
    %3213 = vmatprep.subr.mxu0 0.0
    %3214 = vmatpush2.msra.mxu0 0.0
    %3215 = vmatprep.subr.mxu0 0.0
    %3216 = vmatpush2.msra.mxu0 0.0
    %3217 = vmatprep.subr.mxu0 0.0
    %3218 = vmatpush2.msra.mxu0 0.0
    %3219 = vmatprep.subr.mxu0 0.0
    %3220 = vmatpush2.msra.mxu0 0.0
    %3221 = vmatprep.subr.mxu0 0.0
    %3222 = vmatpush2.msra.mxu0 0.0
    %3223 = vmatprep.subr.mxu0 0.0
    %3224 = vmatpush2.msra.mxu0 0.0
    %3225 = vmatprep.subr.mxu0 0.0
    %3226 = vmatpush2.msra.mxu0 0.0
    %3227 = vmatprep.subr.mxu0 0.0
    %3228 = vmatpush2.msra.mxu0 0.0
    %3229 = vmatprep.subr.mxu0 0.0
    %3230 = vmatpush2.msra.mxu0 0.0
    %3231 = vmatprep.subr.mxu0 0.0
    %3232 = vmatpush2.msra.mxu0 0.0
    %3233 = vmatprep.subr.mxu0 0.0
    %3234 = vmatpush2.msra.mxu0 0.0
    %3235 = vmatprep.subr.mxu0 0.0
    %3236 = vmatpush2.msra.mxu0 0.0
    %3237 = vmatprep.subr.mxu0 0.0
    %3238 = vmatpush2.msra.mxu0 0.0
    %3239 = vmatprep.subr.mxu0 0.0
    %3240 = vmatpush2.msra.mxu0 0.0
    %3241 = vmatprep.subr.mxu0 0.0
    %3242 = vmatpush2.msra.mxu0 0.0
    %3243 = vmatprep.subr.mxu0 0.0
    %3244 = vmatpush2.msra.mxu0 0.0
    %3245 = vmatprep.mubr.f32.mxu0 0.0
    %3246 = vmatmul.mubr.f32.gmra.mxu0 %v2875
    %v3247 = vpop.f32.mrf.mxu0
    %v3248 = vadd.f32 0.0, %v3247
    %v3249 = vpop.f32.mrf.mxu0
    %3250 = vdwg.mxu0
    %v3252 = vrot.slane %v3248, 6
    %v3254 = vadd.f32 %v3175, %v3252
    %v3256 = vlaneseq
    %v3257 = vshrl.u32 %v3256, 7
    %v3258 = vsub.s32 0, %v3257
    %v3259 = vrot.slane %v3180, %v3258
    %v3261 = vadd.f32 %v3254, %v3259
    %v3262 = vxor.u32 %v3261, 2147483648
    %v3263 = vmul.f32 %v3262, 1.442695
    %v3264 = vpow.pop %v3263
    %v3265 = vadd.f32 %v3264, 1.0
    %v3266 = vrcp.pop %v3265
    %v3267 = vmul.f32 1.0, %v3266
    %v3268 = vtanh.pop %v3261
    %v3270 = vrot.slane %v2778, 6
    %v3272 = vmul.f32 %v3267, %v3270
    %3274 = vrot.lane.b32.xlu0 %v3268, 64
    %v3275 = vpop.permute.xlu0 %3274
    %v3277 = vmul.f32 %v3267, %v3275
    %3279 = vrot.lane.b32.xlu0 %v3277, 32
    %v3280 = vpop.permute.xlu0 %3279
    %v3282 = vadd.f32 %v3272, %v3280
    %v3283 = vtanh.pop %v3282
    %3285 = vrot.lane.b32.xlu0 %v3283, 64
    %v3286 = vpop.permute.xlu0 %3285
    %v3288 = vmul.f32 %v3267, %v3286
    %v3289 = vld [vmem:[%s2785] sm:$0xff]
    %v3290 = vld [vmem:[%s2785 + $0x8] sm:$0xff]
    %v3291 = vld [vmem:[%s2785 + $0x10] sm:$0xff]
    %v3292 = vld [vmem:[%s2785 + $0x18] sm:$0xff]
    %v3293 = vld [vmem:[%s2790] sm:$0xff]
    %v3294 = vld [vmem:[%s2790 + $0x8] sm:$0xff]
    %v3295 = vld [vmem:[%s2790 + $0x10] sm:$0xff]
    %v3296 = vld [vmem:[%s2790 + $0x18] sm:$0xff]
    %v3297 = vld [vmem:[%s2795] sm:$0x1]
    %3298 = vmatprep.subr.mxu0 0.0
    %3299 = vmatpush1.msra.mxu0 0.0
    %3300 = vmatprep.subr.mxu0 0.0
    %3301 = vmatpush1.msra.mxu0 0.0
    %3302 = vmatprep.subr.mxu0 0.0
    %3303 = vmatpush1.msra.mxu0 0.0
    %3304 = vmatprep.subr.mxu0 0.0
    %3305 = vmatpush1.msra.mxu0 0.0
    %3306 = vmatprep.subr.mxu0 0.0
    %3307 = vmatpush1.msra.mxu0 0.0
    %3308 = vmatprep.subr.mxu0 0.0
    %3309 = vmatpush1.msra.mxu0 0.0
    %3310 = vmatprep.subr.mxu0 0.0
    %3311 = vmatpush1.msra.mxu0 0.0
    %3312 = vmatprep.subr.mxu0 0.0
    %3313 = vmatpush1.msra.mxu0 0.0
    %3314 = vmatprep.subr.mxu0 0.0
    %3315 = vmatpush1.msra.mxu0 0.0
    %3316 = vmatprep.subr.mxu0 0.0
    %3317 = vmatpush1.msra.mxu0 0.0
    %3318 = vmatprep.subr.mxu0 0.0
    %3319 = vmatpush1.msra.mxu0 0.0
    %3320 = vmatprep.subr.mxu0 0.0
    %3321 = vmatpush1.msra.mxu0 0.0
    %3322 = vmatprep.subr.mxu0 0.0
    %3323 = vmatpush1.msra.mxu0 %v3296
    %3324 = vmatprep.subr.mxu0 0.0
    %3325 = vmatpush1.msra.mxu0 %v3295
    %3326 = vmatprep.subr.mxu0 0.0
    %3327 = vmatpush1.msra.mxu0 %v3294
    %3328 = vmatprep.subr.mxu0 0.0
    %3329 = vmatpush1.msra.mxu0 %v3293
    %3330 = vmatprep.subr.mxu0 0.0
    %3331 = vmatpush2.msra.mxu0 0.0
    %3332 = vmatprep.subr.mxu0 0.0
    %3333 = vmatpush2.msra.mxu0 0.0
    %3334 = vmatprep.subr.mxu0 0.0
    %3335 = vmatpush2.msra.mxu0 0.0
    %3336 = vmatprep.subr.mxu0 0.0
    %3337 = vmatpush2.msra.mxu0 0.0
    %3338 = vmatprep.subr.mxu0 0.0
    %3339 = vmatpush2.msra.mxu0 0.0
    %3340 = vmatprep.subr.mxu0 0.0
    %3341 = vmatpush2.msra.mxu0 0.0
    %3342 = vmatprep.subr.mxu0 0.0
    %3343 = vmatpush2.msra.mxu0 0.0
    %3344 = vmatprep.subr.mxu0 0.0
    %3345 = vmatpush2.msra.mxu0 0.0
    %3346 = vmatprep.subr.mxu0 0.0
    %3347 = vmatpush2.msra.mxu0 0.0
    %3348 = vmatprep.subr.mxu0 0.0
    %3349 = vmatpush2.msra.mxu0 0.0
    %3350 = vmatprep.subr.mxu0 0.0
    %3351 = vmatpush2.msra.mxu0 0.0
    %3352 = vmatprep.subr.mxu0 0.0
    %3353 = vmatpush2.msra.mxu0 0.0
    %3354 = vmatprep.subr.mxu0 0.0
    %3355 = vmatpush2.msra.mxu0 0.0
    %3356 = vmatprep.subr.mxu0 0.0
    %3357 = vmatpush2.msra.mxu0 0.0
    %3358 = vmatprep.subr.mxu0 0.0
    %3359 = vmatpush2.msra.mxu0 0.0
    %3360 = vmatprep.subr.mxu0 0.0
    %3361 = vmatpush2.msra.mxu0 0.0
    %3362 = vmatprep.mubr.f32.mxu0 0.0
    %3363 = vmatmul.mubr.f32.gmra.mxu0 %v2981
    %v3364 = vpop.f32.mrf.mxu0
    %v3365 = vadd.f32 0.0, %v3364
    %v3366 = vpop.f32.mrf.mxu0
    %3367 = vdwg.mxu0
    %v3369 = vrot.slane %v3288, 2
    %3370 = vrot.lane.b32.xlu0 %v3369, 32
    %v3371 = vpop.permute.xlu0 %3370
    %v3372 = vsel %vm49, %v3371, 0
    %3374 = vmatprep.subr.mxu0 0.0
    %3375 = vmatpush1.msra.mxu0 0.0
    %3376 = vmatprep.subr.mxu0 0.0
    %3377 = vmatpush1.msra.mxu0 0.0
    %3378 = vmatprep.subr.mxu0 0.0
    %3379 = vmatpush1.msra.mxu0 0.0
    %3380 = vmatprep.subr.mxu0 0.0
    %3381 = vmatpush1.msra.mxu0 0.0
    %3382 = vmatprep.subr.mxu0 0.0
    %3383 = vmatpush1.msra.mxu0 0.0
    %3384 = vmatprep.subr.mxu0 0.0
    %3385 = vmatpush1.msra.mxu0 0.0
    %3386 = vmatprep.subr.mxu0 0.0
    %3387 = vmatpush1.msra.mxu0 0.0
    %3388 = vmatprep.subr.mxu0 0.0
    %3389 = vmatpush1.msra.mxu0 0.0
    %3390 = vmatprep.subr.mxu0 0.0
    %3391 = vmatpush1.msra.mxu0 0.0
    %3392 = vmatprep.subr.mxu0 0.0
    %3393 = vmatpush1.msra.mxu0 0.0
    %3394 = vmatprep.subr.mxu0 0.0
    %3395 = vmatpush1.msra.mxu0 0.0
    %3396 = vmatprep.subr.mxu0 0.0
    %3397 = vmatpush1.msra.mxu0 0.0
    %3398 = vmatprep.subr.mxu0 0.0
    %3399 = vmatpush1.msra.mxu0 %v3292
    %3400 = vmatprep.subr.mxu0 0.0
    %3401 = vmatpush1.msra.mxu0 %v3291
    %3402 = vmatprep.subr.mxu0 0.0
    %3403 = vmatpush1.msra.mxu0 %v3290
    %3404 = vmatprep.subr.mxu0 0.0
    %3405 = vmatpush1.msra.mxu0 %v3289
    %3406 = vmatprep.subr.mxu0 0.0
    %3407 = vmatpush2.msra.mxu0 0.0
    %3408 = vmatprep.subr.mxu0 0.0
    %3409 = vmatpush2.msra.mxu0 0.0
    %3410 = vmatprep.subr.mxu0 0.0
    %3411 = vmatpush2.msra.mxu0 0.0
    %3412 = vmatprep.subr.mxu0 0.0
    %3413 = vmatpush2.msra.mxu0 0.0
    %3414 = vmatprep.subr.mxu0 0.0
    %3415 = vmatpush2.msra.mxu0 0.0
    %3416 = vmatprep.subr.mxu0 0.0
    %3417 = vmatpush2.msra.mxu0 0.0
    %3418 = vmatprep.subr.mxu0 0.0
    %3419 = vmatpush2.msra.mxu0 0.0
    %3420 = vmatprep.subr.mxu0 0.0
    %3421 = vmatpush2.msra.mxu0 0.0
    %3422 = vmatprep.subr.mxu0 0.0
    %3423 = vmatpush2.msra.mxu0 0.0
    %3424 = vmatprep.subr.mxu0 0.0
    %3425 = vmatpush2.msra.mxu0 0.0
    %3426 = vmatprep.subr.mxu0 0.0
    %3427 = vmatpush2.msra.mxu0 0.0
    %3428 = vmatprep.subr.mxu0 0.0
    %3429 = vmatpush2.msra.mxu0 0.0
    %3430 = vmatprep.subr.mxu0 0.0
    %3431 = vmatpush2.msra.mxu0 0.0
    %3432 = vmatprep.subr.mxu0 0.0
    %3433 = vmatpush2.msra.mxu0 0.0
    %3434 = vmatprep.subr.mxu0 0.0
    %3435 = vmatpush2.msra.mxu0 0.0
    %3436 = vmatprep.subr.mxu0 0.0
    %3437 = vmatpush2.msra.mxu0 0.0
    %3438 = vmatprep.mubr.f32.mxu0 0.0
    %3439 = vmatmul.mubr.f32.gmra.mxu0 %v3372
    %v3440 = vpop.f32.mrf.mxu0
    %v3441 = vadd.f32 %v3365, %v3440
    %v3442 = vpop.f32.mrf.mxu0
    %3443 = vdwg.mxu0
    %v3445 = vlaneseq
    %v3446 = vshrl.u32 %v3445, 7
    %v3447 = vsub.s32 0, %v3446
    %v3448 = vrot.slane %v3297, %v3447
    %v3450 = vadd.f32 %v3441, %v3448
    %v3451 = vxor.u32 %v3450, 2147483648
    %v3452 = vmul.f32 %v3451, 1.442695
    %v3453 = vpow.pop %v3452
    %v3454 = vadd.f32 %v3453, 1.0
    %v3455 = vrcp.pop %v3454
    %v3456 = vmul.f32 1.0, %v3455
    %v3457 = vtanh.pop %v3450
    %v3458 = vmul.f32 %v3456, %v2971
    %3460 = vrot.lane.b32.xlu0 %v3457, 64
    %v3461 = vpop.permute.xlu0 %3460
    %v3463 = vmul.f32 %v3456, %v3461
    %3465 = vrot.lane.b32.xlu0 %v3463, 32
    %v3466 = vpop.permute.xlu0 %3465
    %v3468 = vadd.f32 %v3458, %v3466
    %v3469 = vtanh.pop %v3468
    %3471 = vrot.lane.b32.xlu0 %v3469, 64
    %v3472 = vpop.permute.xlu0 %3471
    %v3474 = vmul.f32 %v3456, %v3472
    %3476 = vrot.lane.b32.xlu0 %v3474, 32
    %v3477 = vpop.permute.xlu0 %3476
    %v3478 = vsel %vm49, %v3477, 0
    %3480 = vmatprep.subr.mxu0 0.0
    %3481 = vmatpush1.msra.mxu0 0.0
    %3482 = vmatprep.subr.mxu0 0.0
    %3483 = vmatpush1.msra.mxu0 0.0
    %3484 = vmatprep.subr.mxu0 0.0
    %3485 = vmatpush1.msra.mxu0 0.0
    %3486 = vmatprep.subr.mxu0 0.0
    %3487 = vmatpush1.msra.mxu0 0.0
    %3488 = vmatprep.subr.mxu0 0.0
    %3489 = vmatpush1.msra.mxu0 0.0
    %3490 = vmatprep.subr.mxu0 0.0
    %3491 = vmatpush1.msra.mxu0 0.0
    %3492 = vmatprep.subr.mxu0 0.0
    %3493 = vmatpush1.msra.mxu0 0.0
    %3494 = vmatprep.subr.mxu0 0.0
    %3495 = vmatpush1.msra.mxu0 0.0
    %3496 = vmatprep.subr.mxu0 0.0
    %3497 = vmatpush1.msra.mxu0 0.0
    %3498 = vmatprep.subr.mxu0 0.0
    %3499 = vmatpush1.msra.mxu0 0.0
    %3500 = vmatprep.subr.mxu0 0.0
    %3501 = vmatpush1.msra.mxu0 0.0
    %3502 = vmatprep.subr.mxu0 0.0
    %3503 = vmatpush1.msra.mxu0 0.0
    %3504 = vmatprep.subr.mxu0 0.0
    %3505 = vmatpush1.msra.mxu0 %v2670
    %3506 = vmatprep.subr.mxu0 0.0
    %3507 = vmatpush1.msra.mxu0 %v2669
    %3508 = vmatprep.subr.mxu0 0.0
    %3509 = vmatpush1.msra.mxu0 %v2668
    %3510 = vmatprep.subr.mxu0 0.0
    %3511 = vmatpush1.msra.mxu0 %v2667
    %3512 = vmatprep.subr.mxu0 0.0
    %3513 = vmatpush2.msra.mxu0 0.0
    %3514 = vmatprep.subr.mxu0 0.0
    %3515 = vmatpush2.msra.mxu0 0.0
    %3516 = vmatprep.subr.mxu0 0.0
    %3517 = vmatpush2.msra.mxu0 0.0
    %3518 = vmatprep.subr.mxu0 0.0
    %3519 = vmatpush2.msra.mxu0 0.0
    %3520 = vmatprep.subr.mxu0 0.0
    %3521 = vmatpush2.msra.mxu0 0.0
    %3522 = vmatprep.subr.mxu0 0.0
    %3523 = vmatpush2.msra.mxu0 0.0
    %3524 = vmatprep.subr.mxu0 0.0
    %3525 = vmatpush2.msra.mxu0 0.0
    %3526 = vmatprep.subr.mxu0 0.0
    %3527 = vmatpush2.msra.mxu0 0.0
    %3528 = vmatprep.subr.mxu0 0.0
    %3529 = vmatpush2.msra.mxu0 0.0
    %3530 = vmatprep.subr.mxu0 0.0
    %3531 = vmatpush2.msra.mxu0 0.0
    %3532 = vmatprep.subr.mxu0 0.0
    %3533 = vmatpush2.msra.mxu0 0.0
    %3534 = vmatprep.subr.mxu0 0.0
    %3535 = vmatpush2.msra.mxu0 0.0
    %3536 = vmatprep.subr.mxu0 0.0
    %3537 = vmatpush2.msra.mxu0 0.0
    %3538 = vmatprep.subr.mxu0 0.0
    %3539 = vmatpush2.msra.mxu0 0.0
    %3540 = vmatprep.subr.mxu0 0.0
    %3541 = vmatpush2.msra.mxu0 0.0
    %3542 = vmatprep.subr.mxu0 0.0
    %3543 = vmatpush2.msra.mxu0 0.0
    %3544 = vmatprep.mubr.f32.mxu0 0.0
    %3545 = vmatmul.mubr.f32.gmra.mxu0 %v3478
    %v3546 = vpop.f32.mrf.mxu0
    %v3547 = vadd.f32 0.0, %v3546
    %v3548 = vpop.f32.mrf.mxu0
    %3549 = vdwg.mxu0
    %v3552 = vunpack.c.l.s4 1966171168
    %v3553 = vunpack.c.0.s8 %v3552
    %v3554 = vlaneseq
    %v3555 = vshrl.u32 %v3554, 7
    %v3556 = vsub.s32 %v3553, %v3555
    %v3557 = vrot.slane %v3547, %v3556
    %v3558 = vcombine.high %v3557, %v3557
    %v3560 = vunpack.c.l.s4 1966171168
    %v3561 = vunpack.c.0.s8 %v3560
    %v3562 = vlaneseq
    %v3563 = vshrl.u32 %v3562, 7
    %v3564 = vsub.s32 %v3561, %v3563
    %v3565 = vrot.slane %v3557, %v3564
    %v3567 = vunpack.c.l.s4 1966171168
    %v3568 = vunpack.c.0.s8 %v3567
    %v3569 = vlaneseq
    %v3570 = vshrl.u32 %v3569, 7
    %v3571 = vsub.s32 %v3568, %v3570
    %v3572 = vrot.slane %v3558, %v3571
    %3575 = vst [vmem:[#allocation4 + $0x1] sm:$0x1] %v3565
    %3576 = vst [vmem:[#allocation4 + $0x9] sm:$0x1] %v3572
    %v3577 = vsel %vm2674, %v3547, -1e+30
    %v3578 = vsel %vm3081, %v3577, -inf
    %3579 = vmax.xlane.f32.xlu0 %v3578
    %v3580 = vpop.xlane.xlu0 %3579
    %vm3581 = vcmp.eq.f32.partialorder %v3577, %v3580
    %v3582 = vsel %vm3581, %v2673, 128.0
    %v3583 = vsel %vm3081, %v3582, inf
    %3584 = vmin.xlane.f32.xlu0 %v3583
    %v3585 = vpop.xlane.xlu0 %3584
    %vm3586 = vcmp.eq.f32.partialorder %v2673, %v3585
    %v3587 = vsel %vm3586, 1, 0
    %v3588 = vcvt.s32.f32 %v3587
    %3589 = vmatprep.subr.mxu0 0.0
    %3590 = vmatpush1.msra.mxu0 %v2664
    %3591 = vmatprep.subr.mxu0 0.0
    %3592 = vmatpush1.msra.mxu0 %v2659
    %3593 = vmatprep.subr.mxu0 0.0
    %3594 = vmatpush1.msra.mxu0 %v2654
    %3595 = vmatprep.subr.mxu0 0.0
    %3596 = vmatpush1.msra.mxu0 %v2649
    %3597 = vmatprep.subr.mxu0 0.0
    %3598 = vmatpush1.msra.mxu0 %v2644
    %3599 = vmatprep.subr.mxu0 0.0
    %3600 = vmatpush1.msra.mxu0 %v2639
    %3601 = vmatprep.subr.mxu0 0.0
    %3602 = vmatpush1.msra.mxu0 %v2634
    %3603 = vmatprep.subr.mxu0 0.0
    %3604 = vmatpush1.msra.mxu0 %v2629
    %3605 = vmatprep.subr.mxu0 0.0
    %3606 = vmatpush1.msra.mxu0 %v2624
    %3607 = vmatprep.subr.mxu0 0.0
    %3608 = vmatpush1.msra.mxu0 %v2619
    %3609 = vmatprep.subr.mxu0 0.0
    %3610 = vmatpush1.msra.mxu0 %v2614
    %3611 = vmatprep.subr.mxu0 0.0
    %3612 = vmatpush1.msra.mxu0 %v2609
    %3613 = vmatprep.subr.mxu0 0.0
    %3614 = vmatpush1.msra.mxu0 %v2604
    %3615 = vmatprep.subr.mxu0 0.0
    %3616 = vmatpush1.msra.mxu0 %v2599
    %3617 = vmatprep.subr.mxu0 0.0
    %3618 = vmatpush1.msra.mxu0 %v2594
    %3619 = vmatprep.subr.mxu0 0.0
    %3620 = vmatpush1.msra.mxu0 %v2589
    %3621 = vmatprep.subr.mxu0 0.0
    %3622 = vmatpush2.msra.mxu0 0.0
    %3623 = vmatprep.subr.mxu0 0.0
    %3624 = vmatpush2.msra.mxu0 0.0
    %3625 = vmatprep.subr.mxu0 0.0
    %3626 = vmatpush2.msra.mxu0 0.0
    %3627 = vmatprep.subr.mxu0 0.0
    %3628 = vmatpush2.msra.mxu0 0.0
    %3629 = vmatprep.subr.mxu0 0.0
    %3630 = vmatpush2.msra.mxu0 0.0
    %3631 = vmatprep.subr.mxu0 0.0
    %3632 = vmatpush2.msra.mxu0 0.0
    %3633 = vmatprep.subr.mxu0 0.0
    %3634 = vmatpush2.msra.mxu0 0.0
    %3635 = vmatprep.subr.mxu0 0.0
    %3636 = vmatpush2.msra.mxu0 0.0
    %3637 = vmatprep.subr.mxu0 0.0
    %3638 = vmatpush2.msra.mxu0 0.0
    %3639 = vmatprep.subr.mxu0 0.0
    %3640 = vmatpush2.msra.mxu0 0.0
    %3641 = vmatprep.subr.mxu0 0.0
    %3642 = vmatpush2.msra.mxu0 0.0
    %3643 = vmatprep.subr.mxu0 0.0
    %3644 = vmatpush2.msra.mxu0 0.0
    %3645 = vmatprep.subr.mxu0 0.0
    %3646 = vmatpush2.msra.mxu0 0.0
    %3647 = vmatprep.subr.mxu0 0.0
    %3648 = vmatpush2.msra.mxu0 0.0
    %3649 = vmatprep.subr.mxu0 0.0
    %3650 = vmatpush2.msra.mxu0 0.0
    %3651 = vmatprep.subr.mxu0 0.0
    %3652 = vmatpush2.msra.mxu0 0.0
    %3653 = vmatprep.mubr.f32.mxu0 0.0
    %3654 = vmatmul.mubr.f32.gmra.mxu0 %v3588
    %v3655 = vpop.f32.mrf.mxu0
    %v3656 = vadd.f32 0.0, %v3655
    %v3657 = vpop.f32.mrf.mxu0
    %3658 = vdwg.mxu0
    %s3659 = sld [smem:[#allocation3 + $0x1]]
    %p3660 = scmp.gt.s32.totalorder %s3659, 0
    %s3661 = scalar_select %p3660, 1, 0
    %s3662 = scvt.s32.f32 %s3661
    %v3663 = vstv %s3662
    %v3664 = vmul.f32 %v3663, %v2450
    %s3665 = ssub.f32 1.0, %s3662
    %v3666 = vstv %s3665
    %v3667 = vmul.f32 %v3666, %v3656
    %v3669 = vrot.slane %v3667, 4
    %v3671 = vadd.f32 %v3664, %v3669
    %v3672 = vld [vmem:[%s7] sm:$0xff]
    %v3673 = vld [vmem:[%s7 + $0x8] sm:$0xff]
    %v3674 = vld [vmem:[%s7 + $0x10] sm:$0xff]
    %v3675 = vld [vmem:[%s7 + $0x18] sm:$0xff]
    %v3676 = vld [vmem:[%s8] sm:$0x1]
    %3677 = vmatprep.subr.mxu0 0.0
    %3678 = vmatpush1.msra.mxu0 0.0
    %3679 = vmatprep.subr.mxu0 0.0
    %3680 = vmatpush1.msra.mxu0 0.0
    %3681 = vmatprep.subr.mxu0 0.0
    %3682 = vmatpush1.msra.mxu0 0.0
    %3683 = vmatprep.subr.mxu0 0.0
    %3684 = vmatpush1.msra.mxu0 0.0
    %3685 = vmatprep.subr.mxu0 0.0
    %3686 = vmatpush1.msra.mxu0 0.0
    %3687 = vmatprep.subr.mxu0 0.0
    %3688 = vmatpush1.msra.mxu0 0.0
    %3689 = vmatprep.subr.mxu0 0.0
    %3690 = vmatpush1.msra.mxu0 0.0
    %3691 = vmatprep.subr.mxu0 0.0
    %3692 = vmatpush1.msra.mxu0 0.0
    %3693 = vmatprep.subr.mxu0 0.0
    %3694 = vmatpush1.msra.mxu0 0.0
    %3695 = vmatprep.subr.mxu0 0.0
    %3696 = vmatpush1.msra.mxu0 0.0
    %3697 = vmatprep.subr.mxu0 0.0
    %3698 = vmatpush1.msra.mxu0 0.0
    %3699 = vmatprep.subr.mxu0 0.0
    %3700 = vmatpush1.msra.mxu0 0.0
    %3701 = vmatprep.subr.mxu0 0.0
    %3702 = vmatpush1.msra.mxu0 %v3675
    %3703 = vmatprep.subr.mxu0 0.0
    %3704 = vmatpush1.msra.mxu0 %v3674
    %3705 = vmatprep.subr.mxu0 0.0
    %3706 = vmatpush1.msra.mxu0 %v3673
    %3707 = vmatprep.subr.mxu0 0.0
    %3708 = vmatpush1.msra.mxu0 %v3672
    %3709 = vmatprep.subr.mxu0 0.0
    %3710 = vmatpush2.msra.mxu0 0.0
    %3711 = vmatprep.subr.mxu0 0.0
    %3712 = vmatpush2.msra.mxu0 0.0
    %3713 = vmatprep.subr.mxu0 0.0
    %3714 = vmatpush2.msra.mxu0 0.0
    %3715 = vmatprep.subr.mxu0 0.0
    %3716 = vmatpush2.msra.mxu0 0.0
    %3717 = vmatprep.subr.mxu0 0.0
    %3718 = vmatpush2.msra.mxu0 0.0
    %3719 = vmatprep.subr.mxu0 0.0
    %3720 = vmatpush2.msra.mxu0 0.0
    %3721 = vmatprep.subr.mxu0 0.0
    %3722 = vmatpush2.msra.mxu0 0.0
    %3723 = vmatprep.subr.mxu0 0.0
    %3724 = vmatpush2.msra.mxu0 0.0
    %3725 = vmatprep.subr.mxu0 0.0
    %3726 = vmatpush2.msra.mxu0 0.0
    %3727 = vmatprep.subr.mxu0 0.0
    %3728 = vmatpush2.msra.mxu0 0.0
    %3729 = vmatprep.subr.mxu0 0.0
    %3730 = vmatpush2.msra.mxu0 0.0
    %3731 = vmatprep.subr.mxu0 0.0
    %3732 = vmatpush2.msra.mxu0 0.0
    %3733 = vmatprep.subr.mxu0 0.0
    %3734 = vmatpush2.msra.mxu0 0.0
    %3735 = vmatprep.subr.mxu0 0.0
    %3736 = vmatpush2.msra.mxu0 0.0
    %3737 = vmatprep.subr.mxu0 0.0
    %3738 = vmatpush2.msra.mxu0 0.0
    %3739 = vmatprep.subr.mxu0 0.0
    %3740 = vmatpush2.msra.mxu0 0.0
    %3741 = vmatprep.mubr.f32.mxu0 0.0
    %3742 = vmatmul.mubr.f32.gmra.mxu0 %v3372
    %v3743 = vpop.f32.mrf.mxu0
    %v3744 = vadd.f32 0.0, %v3743
    %v3745 = vpop.f32.mrf.mxu0
    %3746 = vdwg.mxu0
    %v3748 = vrot.slane %v3744, 4
    %v3750 = vadd.f32 %v3671, %v3748
    %v3752 = vlaneseq
    %v3753 = vshrl.u32 %v3752, 7
    %v3754 = vsub.s32 0, %v3753
    %v3755 = vrot.slane %v3676, %v3754
    %v3757 = vadd.f32 %v3750, %v3755
    %v3758 = vxor.u32 %v3757, 2147483648
    %v3759 = vmul.f32 %v3758, 1.442695
    %v3760 = vpow.pop %v3759
    %v3761 = vadd.f32 %v3760, 1.0
    %v3762 = vrcp.pop %v3761
    %v3763 = vmul.f32 1.0, %v3762
    %v3764 = vtanh.pop %v3757
    %v3766 = vrot.slane %v3282, 6
    %v3768 = vmul.f32 %v3763, %v3766
    %3770 = vrot.lane.b32.xlu0 %v3764, 64
    %v3771 = vpop.permute.xlu0 %3770
    %v3773 = vmul.f32 %v3763, %v3771
    %3775 = vrot.lane.b32.xlu0 %v3773, 32
    %v3776 = vpop.permute.xlu0 %3775
    %v3778 = vadd.f32 %v3768, %v3776
    %v3779 = vtanh.pop %v3778
    %3781 = vrot.lane.b32.xlu0 %v3779, 64
    %v3782 = vpop.permute.xlu0 %3781
    %v3784 = vmul.f32 %v3763, %v3782
    %v3785 = vld [vmem:[%s2785] sm:$0xff]
    %v3786 = vld [vmem:[%s2785 + $0x8] sm:$0xff]
    %v3787 = vld [vmem:[%s2785 + $0x10] sm:$0xff]
    %v3788 = vld [vmem:[%s2785 + $0x18] sm:$0xff]
    %v3789 = vld [vmem:[%s2790] sm:$0xff]
    %v3790 = vld [vmem:[%s2790 + $0x8] sm:$0xff]
    %v3791 = vld [vmem:[%s2790 + $0x10] sm:$0xff]
    %v3792 = vld [vmem:[%s2790 + $0x18] sm:$0xff]
    %v3793 = vld [vmem:[%s2795] sm:$0x1]
    %3794 = vmatprep.subr.mxu0 0.0
    %3795 = vmatpush1.msra.mxu0 0.0
    %3796 = vmatprep.subr.mxu0 0.0
    %3797 = vmatpush1.msra.mxu0 0.0
    %3798 = vmatprep.subr.mxu0 0.0
    %3799 = vmatpush1.msra.mxu0 0.0
    %3800 = vmatprep.subr.mxu0 0.0
    %3801 = vmatpush1.msra.mxu0 0.0
    %3802 = vmatprep.subr.mxu0 0.0
    %3803 = vmatpush1.msra.mxu0 0.0
    %3804 = vmatprep.subr.mxu0 0.0
    %3805 = vmatpush1.msra.mxu0 0.0
    %3806 = vmatprep.subr.mxu0 0.0
    %3807 = vmatpush1.msra.mxu0 0.0
    %3808 = vmatprep.subr.mxu0 0.0
    %3809 = vmatpush1.msra.mxu0 0.0
    %3810 = vmatprep.subr.mxu0 0.0
    %3811 = vmatpush1.msra.mxu0 0.0
    %3812 = vmatprep.subr.mxu0 0.0
    %3813 = vmatpush1.msra.mxu0 0.0
    %3814 = vmatprep.subr.mxu0 0.0
    %3815 = vmatpush1.msra.mxu0 0.0
    %3816 = vmatprep.subr.mxu0 0.0
    %3817 = vmatpush1.msra.mxu0 0.0
    %3818 = vmatprep.subr.mxu0 0.0
    %3819 = vmatpush1.msra.mxu0 %v3792
    %3820 = vmatprep.subr.mxu0 0.0
    %3821 = vmatpush1.msra.mxu0 %v3791
    %3822 = vmatprep.subr.mxu0 0.0
    %3823 = vmatpush1.msra.mxu0 %v3790
    %3824 = vmatprep.subr.mxu0 0.0
    %3825 = vmatpush1.msra.mxu0 %v3789
    %3826 = vmatprep.subr.mxu0 0.0
    %3827 = vmatpush2.msra.mxu0 0.0
    %3828 = vmatprep.subr.mxu0 0.0
    %3829 = vmatpush2.msra.mxu0 0.0
    %3830 = vmatprep.subr.mxu0 0.0
    %3831 = vmatpush2.msra.mxu0 0.0
    %3832 = vmatprep.subr.mxu0 0.0
    %3833 = vmatpush2.msra.mxu0 0.0
    %3834 = vmatprep.subr.mxu0 0.0
    %3835 = vmatpush2.msra.mxu0 0.0
    %3836 = vmatprep.subr.mxu0 0.0
    %3837 = vmatpush2.msra.mxu0 0.0
    %3838 = vmatprep.subr.mxu0 0.0
    %3839 = vmatpush2.msra.mxu0 0.0
    %3840 = vmatprep.subr.mxu0 0.0
    %3841 = vmatpush2.msra.mxu0 0.0
    %3842 = vmatprep.subr.mxu0 0.0
    %3843 = vmatpush2.msra.mxu0 0.0
    %3844 = vmatprep.subr.mxu0 0.0
    %3845 = vmatpush2.msra.mxu0 0.0
    %3846 = vmatprep.subr.mxu0 0.0
    %3847 = vmatpush2.msra.mxu0 0.0
    %3848 = vmatprep.subr.mxu0 0.0
    %3849 = vmatpush2.msra.mxu0 0.0
    %3850 = vmatprep.subr.mxu0 0.0
    %3851 = vmatpush2.msra.mxu0 0.0
    %3852 = vmatprep.subr.mxu0 0.0
    %3853 = vmatpush2.msra.mxu0 0.0
    %3854 = vmatprep.subr.mxu0 0.0
    %3855 = vmatpush2.msra.mxu0 0.0
    %3856 = vmatprep.subr.mxu0 0.0
    %3857 = vmatpush2.msra.mxu0 0.0
    %3858 = vmatprep.mubr.f32.mxu0 0.0
    %3859 = vmatmul.mubr.f32.gmra.mxu0 %v3478
    %v3860 = vpop.f32.mrf.mxu0
    %v3861 = vadd.f32 0.0, %v3860
    %v3862 = vpop.f32.mrf.mxu0
    %3863 = vdwg.mxu0
    %v3865 = vrot.slane %v3784, 4
    %3866 = vrot.lane.b32.xlu0 %v3865, 32
    %v3867 = vpop.permute.xlu0 %3866
    %v3868 = vsel %vm49, %v3867, 0
    %3870 = vmatprep.subr.mxu0 0.0
    %3871 = vmatpush1.msra.mxu0 0.0
    %3872 = vmatprep.subr.mxu0 0.0
    %3873 = vmatpush1.msra.mxu0 0.0
    %3874 = vmatprep.subr.mxu0 0.0
    %3875 = vmatpush1.msra.mxu0 0.0
    %3876 = vmatprep.subr.mxu0 0.0
    %3877 = vmatpush1.msra.mxu0 0.0
    %3878 = vmatprep.subr.mxu0 0.0
    %3879 = vmatpush1.msra.mxu0 0.0
    %3880 = vmatprep.subr.mxu0 0.0
    %3881 = vmatpush1.msra.mxu0 0.0
    %3882 = vmatprep.subr.mxu0 0.0
    %3883 = vmatpush1.msra.mxu0 0.0
    %3884 = vmatprep.subr.mxu0 0.0
    %3885 = vmatpush1.msra.mxu0 0.0
    %3886 = vmatprep.subr.mxu0 0.0
    %3887 = vmatpush1.msra.mxu0 0.0
    %3888 = vmatprep.subr.mxu0 0.0
    %3889 = vmatpush1.msra.mxu0 0.0
    %3890 = vmatprep.subr.mxu0 0.0
    %3891 = vmatpush1.msra.mxu0 0.0
    %3892 = vmatprep.subr.mxu0 0.0
    %3893 = vmatpush1.msra.mxu0 0.0
    %3894 = vmatprep.subr.mxu0 0.0
    %3895 = vmatpush1.msra.mxu0 %v3788
    %3896 = vmatprep.subr.mxu0 0.0
    %3897 = vmatpush1.msra.mxu0 %v3787
    %3898 = vmatprep.subr.mxu0 0.0
    %3899 = vmatpush1.msra.mxu0 %v3786
    %3900 = vmatprep.subr.mxu0 0.0
    %3901 = vmatpush1.msra.mxu0 %v3785
    %3902 = vmatprep.subr.mxu0 0.0
    %3903 = vmatpush2.msra.mxu0 0.0
    %3904 = vmatprep.subr.mxu0 0.0
    %3905 = vmatpush2.msra.mxu0 0.0
    %3906 = vmatprep.subr.mxu0 0.0
    %3907 = vmatpush2.msra.mxu0 0.0
    %3908 = vmatprep.subr.mxu0 0.0
    %3909 = vmatpush2.msra.mxu0 0.0
    %3910 = vmatprep.subr.mxu0 0.0
    %3911 = vmatpush2.msra.mxu0 0.0
    %3912 = vmatprep.subr.mxu0 0.0
    %3913 = vmatpush2.msra.mxu0 0.0
    %3914 = vmatprep.subr.mxu0 0.0
    %3915 = vmatpush2.msra.mxu0 0.0
    %3916 = vmatprep.subr.mxu0 0.0
    %3917 = vmatpush2.msra.mxu0 0.0
    %3918 = vmatprep.subr.mxu0 0.0
    %3919 = vmatpush2.msra.mxu0 0.0
    %3920 = vmatprep.subr.mxu0 0.0
    %3921 = vmatpush2.msra.mxu0 0.0
    %3922 = vmatprep.subr.mxu0 0.0
    %3923 = vmatpush2.msra.mxu0 0.0
    %3924 = vmatprep.subr.mxu0 0.0
    %3925 = vmatpush2.msra.mxu0 0.0
    %3926 = vmatprep.subr.mxu0 0.0
    %3927 = vmatpush2.msra.mxu0 0.0
    %3928 = vmatprep.subr.mxu0 0.0
    %3929 = vmatpush2.msra.mxu0 0.0
    %3930 = vmatprep.subr.mxu0 0.0
    %3931 = vmatpush2.msra.mxu0 0.0
    %3932 = vmatprep.subr.mxu0 0.0
    %3933 = vmatpush2.msra.mxu0 0.0
    %3934 = vmatprep.mubr.f32.mxu0 0.0
    %3935 = vmatmul.mubr.f32.gmra.mxu0 %v3868
    %v3936 = vpop.f32.mrf.mxu0
    %v3937 = vadd.f32 %v3861, %v3936
    %v3938 = vpop.f32.mrf.mxu0
    %3939 = vdwg.mxu0
    %v3941 = vlaneseq
    %v3942 = vshrl.u32 %v3941, 7
    %v3943 = vsub.s32 0, %v3942
    %v3944 = vrot.slane %v3793, %v3943
    %v3946 = vadd.f32 %v3937, %v3944
    %v3947 = vxor.u32 %v3946, 2147483648
    %v3948 = vmul.f32 %v3947, 1.442695
    %v3949 = vpow.pop %v3948
    %v3950 = vadd.f32 %v3949, 1.0
    %v3951 = vrcp.pop %v3950
    %v3952 = vmul.f32 1.0, %v3951
    %v3953 = vtanh.pop %v3946
    %v3954 = vmul.f32 %v3952, %v3468
    %3956 = vrot.lane.b32.xlu0 %v3953, 64
    %v3957 = vpop.permute.xlu0 %3956
    %v3959 = vmul.f32 %v3952, %v3957
    %3961 = vrot.lane.b32.xlu0 %v3959, 32
    %v3962 = vpop.permute.xlu0 %3961
    %v3964 = vadd.f32 %v3954, %v3962
    %v3965 = vtanh.pop %v3964
    %3967 = vrot.lane.b32.xlu0 %v3965, 64
    %v3968 = vpop.permute.xlu0 %3967
    %v3970 = vmul.f32 %v3952, %v3968
    %3972 = vrot.lane.b32.xlu0 %v3970, 32
    %v3973 = vpop.permute.xlu0 %3972
    %v3974 = vsel %vm49, %v3973, 0
    %3976 = vmatprep.subr.mxu0 0.0
    %3977 = vmatpush1.msra.mxu0 0.0
    %3978 = vmatprep.subr.mxu0 0.0
    %3979 = vmatpush1.msra.mxu0 0.0
    %3980 = vmatprep.subr.mxu0 0.0
    %3981 = vmatpush1.msra.mxu0 0.0
    %3982 = vmatprep.subr.mxu0 0.0
    %3983 = vmatpush1.msra.mxu0 0.0
    %3984 = vmatprep.subr.mxu0 0.0
    %3985 = vmatpush1.msra.mxu0 0.0
    %3986 = vmatprep.subr.mxu0 0.0
    %3987 = vmatpush1.msra.mxu0 0.0
    %3988 = vmatprep.subr.mxu0 0.0
    %3989 = vmatpush1.msra.mxu0 0.0
    %3990 = vmatprep.subr.mxu0 0.0
    %3991 = vmatpush1.msra.mxu0 0.0
    %3992 = vmatprep.subr.mxu0 0.0
    %3993 = vmatpush1.msra.mxu0 0.0
    %3994 = vmatprep.subr.mxu0 0.0
    %3995 = vmatpush1.msra.mxu0 0.0
    %3996 = vmatprep.subr.mxu0 0.0
    %3997 = vmatpush1.msra.mxu0 0.0
    %3998 = vmatprep.subr.mxu0 0.0
    %3999 = vmatpush1.msra.mxu0 0.0
    %4000 = vmatprep.subr.mxu0 0.0
    %4001 = vmatpush1.msra.mxu0 %v2670
    %4002 = vmatprep.subr.mxu0 0.0
    %4003 = vmatpush1.msra.mxu0 %v2669
    %4004 = vmatprep.subr.mxu0 0.0
    %4005 = vmatpush1.msra.mxu0 %v2668
    %4006 = vmatprep.subr.mxu0 0.0
    %4007 = vmatpush1.msra.mxu0 %v2667
    %4008 = vmatprep.subr.mxu0 0.0
    %4009 = vmatpush2.msra.mxu0 0.0
    %4010 = vmatprep.subr.mxu0 0.0
    %4011 = vmatpush2.msra.mxu0 0.0
    %4012 = vmatprep.subr.mxu0 0.0
    %4013 = vmatpush2.msra.mxu0 0.0
    %4014 = vmatprep.subr.mxu0 0.0
    %4015 = vmatpush2.msra.mxu0 0.0
    %4016 = vmatprep.subr.mxu0 0.0
    %4017 = vmatpush2.msra.mxu0 0.0
    %4018 = vmatprep.subr.mxu0 0.0
    %4019 = vmatpush2.msra.mxu0 0.0
    %4020 = vmatprep.subr.mxu0 0.0
    %4021 = vmatpush2.msra.mxu0 0.0
    %4022 = vmatprep.subr.mxu0 0.0
    %4023 = vmatpush2.msra.mxu0 0.0
    %4024 = vmatprep.subr.mxu0 0.0
    %4025 = vmatpush2.msra.mxu0 0.0
    %4026 = vmatprep.subr.mxu0 0.0
    %4027 = vmatpush2.msra.mxu0 0.0
    %4028 = vmatprep.subr.mxu0 0.0
    %4029 = vmatpush2.msra.mxu0 0.0
    %4030 = vmatprep.subr.mxu0 0.0
    %4031 = vmatpush2.msra.mxu0 0.0
    %4032 = vmatprep.subr.mxu0 0.0
    %4033 = vmatpush2.msra.mxu0 0.0
    %4034 = vmatprep.subr.mxu0 0.0
    %4035 = vmatpush2.msra.mxu0 0.0
    %4036 = vmatprep.subr.mxu0 0.0
    %4037 = vmatpush2.msra.mxu0 0.0
    %4038 = vmatprep.subr.mxu0 0.0
    %4039 = vmatpush2.msra.mxu0 0.0
    %4040 = vmatprep.mubr.f32.mxu0 0.0
    %4041 = vmatmul.mubr.f32.gmra.mxu0 %v3974
    %v4042 = vpop.f32.mrf.mxu0
    %v4043 = vadd.f32 0.0, %v4042
    %v4044 = vpop.f32.mrf.mxu0
    %4045 = vdwg.mxu0
    %v4048 = vunpack.c.l.s4 1966171168
    %v4049 = vunpack.c.0.s8 %v4048
    %v4050 = vlaneseq
    %v4051 = vshrl.u32 %v4050, 7
    %v4052 = vsub.s32 %v4049, %v4051
    %v4053 = vrot.slane %v4043, %v4052
    %v4054 = vcombine.high %v4053, %v4053
    %v4056 = vunpack.c.l.s4 1966171168
    %v4057 = vunpack.c.0.s8 %v4056
    %v4058 = vlaneseq
    %v4059 = vshrl.u32 %v4058, 7
    %v4060 = vsub.s32 %v4057, %v4059
    %v4061 = vrot.slane %v4053, %v4060
    %v4063 = vunpack.c.l.s4 1966171168
    %v4064 = vunpack.c.0.s8 %v4063
    %v4065 = vlaneseq
    %v4066 = vshrl.u32 %v4065, 7
    %v4067 = vsub.s32 %v4064, %v4066
    %v4068 = vrot.slane %v4054, %v4067
    %4071 = vst [vmem:[#allocation4 + $0x2] sm:$0x1] %v4061
    %4072 = vst [vmem:[#allocation4 + $0xa] sm:$0x1] %v4068
    %v4073 = vsel %vm2674, %v4043, -1e+30
    %v4074 = vsel %vm3081, %v4073, -inf
    %4075 = vmax.xlane.f32.xlu0 %v4074
    %v4076 = vpop.xlane.xlu0 %4075
    %vm4077 = vcmp.eq.f32.partialorder %v4073, %v4076
    %v4078 = vsel %vm4077, %v2673, 128.0
    %v4079 = vsel %vm3081, %v4078, inf
    %4080 = vmin.xlane.f32.xlu0 %v4079
    %v4081 = vpop.xlane.xlu0 %4080
    %vm4082 = vcmp.eq.f32.partialorder %v2673, %v4081
    %v4083 = vsel %vm4082, 1, 0
    %v4084 = vcvt.s32.f32 %v4083
    %4085 = vmatprep.subr.mxu0 0.0
    %4086 = vmatpush1.msra.mxu0 %v2664
    %4087 = vmatprep.subr.mxu0 0.0
    %4088 = vmatpush1.msra.mxu0 %v2659
    %4089 = vmatprep.subr.mxu0 0.0
    %4090 = vmatpush1.msra.mxu0 %v2654
    %4091 = vmatprep.subr.mxu0 0.0
    %4092 = vmatpush1.msra.mxu0 %v2649
    %4093 = vmatprep.subr.mxu0 0.0
    %4094 = vmatpush1.msra.mxu0 %v2644
    %4095 = vmatprep.subr.mxu0 0.0
    %4096 = vmatpush1.msra.mxu0 %v2639
    %4097 = vmatprep.subr.mxu0 0.0
    %4098 = vmatpush1.msra.mxu0 %v2634
    %4099 = vmatprep.subr.mxu0 0.0
    %4100 = vmatpush1.msra.mxu0 %v2629
    %4101 = vmatprep.subr.mxu0 0.0
    %4102 = vmatpush1.msra.mxu0 %v2624
    %4103 = vmatprep.subr.mxu0 0.0
    %4104 = vmatpush1.msra.mxu0 %v2619
    %4105 = vmatprep.subr.mxu0 0.0
    %4106 = vmatpush1.msra.mxu0 %v2614
    %4107 = vmatprep.subr.mxu0 0.0
    %4108 = vmatpush1.msra.mxu0 %v2609
    %4109 = vmatprep.subr.mxu0 0.0
    %4110 = vmatpush1.msra.mxu0 %v2604
    %4111 = vmatprep.subr.mxu0 0.0
    %4112 = vmatpush1.msra.mxu0 %v2599
    %4113 = vmatprep.subr.mxu0 0.0
    %4114 = vmatpush1.msra.mxu0 %v2594
    %4115 = vmatprep.subr.mxu0 0.0
    %4116 = vmatpush1.msra.mxu0 %v2589
    %4117 = vmatprep.subr.mxu0 0.0
    %4118 = vmatpush2.msra.mxu0 0.0
    %4119 = vmatprep.subr.mxu0 0.0
    %4120 = vmatpush2.msra.mxu0 0.0
    %4121 = vmatprep.subr.mxu0 0.0
    %4122 = vmatpush2.msra.mxu0 0.0
    %4123 = vmatprep.subr.mxu0 0.0
    %4124 = vmatpush2.msra.mxu0 0.0
    %4125 = vmatprep.subr.mxu0 0.0
    %4126 = vmatpush2.msra.mxu0 0.0
    %4127 = vmatprep.subr.mxu0 0.0
    %4128 = vmatpush2.msra.mxu0 0.0
    %4129 = vmatprep.subr.mxu0 0.0
    %4130 = vmatpush2.msra.mxu0 0.0
    %4131 = vmatprep.subr.mxu0 0.0
    %4132 = vmatpush2.msra.mxu0 0.0
    %4133 = vmatprep.subr.mxu0 0.0
    %4134 = vmatpush2.msra.mxu0 0.0
    %4135 = vmatprep.subr.mxu0 0.0
    %4136 = vmatpush2.msra.mxu0 0.0
    %4137 = vmatprep.subr.mxu0 0.0
    %4138 = vmatpush2.msra.mxu0 0.0
    %4139 = vmatprep.subr.mxu0 0.0
    %4140 = vmatpush2.msra.mxu0 0.0
    %4141 = vmatprep.subr.mxu0 0.0
    %4142 = vmatpush2.msra.mxu0 0.0
    %4143 = vmatprep.subr.mxu0 0.0
    %4144 = vmatpush2.msra.mxu0 0.0
    %4145 = vmatprep.subr.mxu0 0.0
    %4146 = vmatpush2.msra.mxu0 0.0
    %4147 = vmatprep.subr.mxu0 0.0
    %4148 = vmatpush2.msra.mxu0 0.0
    %4149 = vmatprep.mubr.f32.mxu0 0.0
    %4150 = vmatmul.mubr.f32.gmra.mxu0 %v4084
    %v4151 = vpop.f32.mrf.mxu0
    %v4152 = vadd.f32 0.0, %v4151
    %v4153 = vpop.f32.mrf.mxu0
    %4154 = vdwg.mxu0
    %s4155 = sld [smem:[#allocation3 + $0x2]]
    %p4156 = scmp.gt.s32.totalorder %s4155, 0
    %s4157 = scalar_select %p4156, 1, 0
    %s4158 = scvt.s32.f32 %s4157
    %v4159 = vstv %s4158
    %v4160 = vmul.f32 %v4159, %v2450
    %s4161 = ssub.f32 1.0, %s4158
    %v4162 = vstv %s4161
    %v4163 = vmul.f32 %v4162, %v4152
    %v4165 = vrot.slane %v4163, 2
    %v4167 = vadd.f32 %v4160, %v4165
    %v4168 = vld [vmem:[%s7] sm:$0xff]
    %v4169 = vld [vmem:[%s7 + $0x8] sm:$0xff]
    %v4170 = vld [vmem:[%s7 + $0x10] sm:$0xff]
    %v4171 = vld [vmem:[%s7 + $0x18] sm:$0xff]
    %v4172 = vld [vmem:[%s8] sm:$0x1]
    %4173 = vmatprep.subr.mxu0 0.0
    %4174 = vmatpush1.msra.mxu0 0.0
    %4175 = vmatprep.subr.mxu0 0.0
    %4176 = vmatpush1.msra.mxu0 0.0
    %4177 = vmatprep.subr.mxu0 0.0
    %4178 = vmatpush1.msra.mxu0 0.0
    %4179 = vmatprep.subr.mxu0 0.0
    %4180 = vmatpush1.msra.mxu0 0.0
    %4181 = vmatprep.subr.mxu0 0.0
    %4182 = vmatpush1.msra.mxu0 0.0
    %4183 = vmatprep.subr.mxu0 0.0
    %4184 = vmatpush1.msra.mxu0 0.0
    %4185 = vmatprep.subr.mxu0 0.0
    %4186 = vmatpush1.msra.mxu0 0.0
    %4187 = vmatprep.subr.mxu0 0.0
    %4188 = vmatpush1.msra.mxu0 0.0
    %4189 = vmatprep.subr.mxu0 0.0
    %4190 = vmatpush1.msra.mxu0 0.0
    %4191 = vmatprep.subr.mxu0 0.0
    %4192 = vmatpush1.msra.mxu0 0.0
    %4193 = vmatprep.subr.mxu0 0.0
    %4194 = vmatpush1.msra.mxu0 0.0
    %4195 = vmatprep.subr.mxu0 0.0
    %4196 = vmatpush1.msra.mxu0 0.0
    %4197 = vmatprep.subr.mxu0 0.0
    %4198 = vmatpush1.msra.mxu0 %v4171
    %4199 = vmatprep.subr.mxu0 0.0
    %4200 = vmatpush1.msra.mxu0 %v4170
    %4201 = vmatprep.subr.mxu0 0.0
    %4202 = vmatpush1.msra.mxu0 %v4169
    %4203 = vmatprep.subr.mxu0 0.0
    %4204 = vmatpush1.msra.mxu0 %v4168
    %4205 = vmatprep.subr.mxu0 0.0
    %4206 = vmatpush2.msra.mxu0 0.0
    %4207 = vmatprep.subr.mxu0 0.0
    %4208 = vmatpush2.msra.mxu0 0.0
    %4209 = vmatprep.subr.mxu0 0.0
    %4210 = vmatpush2.msra.mxu0 0.0
    %4211 = vmatprep.subr.mxu0 0.0
    %4212 = vmatpush2.msra.mxu0 0.0
    %4213 = vmatprep.subr.mxu0 0.0
    %4214 = vmatpush2.msra.mxu0 0.0
    %4215 = vmatprep.subr.mxu0 0.0
    %4216 = vmatpush2.msra.mxu0 0.0
    %4217 = vmatprep.subr.mxu0 0.0
    %4218 = vmatpush2.msra.mxu0 0.0
    %4219 = vmatprep.subr.mxu0 0.0
    %4220 = vmatpush2.msra.mxu0 0.0
    %4221 = vmatprep.subr.mxu0 0.0
    %4222 = vmatpush2.msra.mxu0 0.0
    %4223 = vmatprep.subr.mxu0 0.0
    %4224 = vmatpush2.msra.mxu0 0.0
    %4225 = vmatprep.subr.mxu0 0.0
    %4226 = vmatpush2.msra.mxu0 0.0
    %4227 = vmatprep.subr.mxu0 0.0
    %4228 = vmatpush2.msra.mxu0 0.0
    %4229 = vmatprep.subr.mxu0 0.0
    %4230 = vmatpush2.msra.mxu0 0.0
    %4231 = vmatprep.subr.mxu0 0.0
    %4232 = vmatpush2.msra.mxu0 0.0
    %4233 = vmatprep.subr.mxu0 0.0
    %4234 = vmatpush2.msra.mxu0 0.0
    %4235 = vmatprep.subr.mxu0 0.0
    %4236 = vmatpush2.msra.mxu0 0.0
    %4237 = vmatprep.mubr.f32.mxu0 0.0
    %4238 = vmatmul.mubr.f32.gmra.mxu0 %v3868
    %v4239 = vpop.f32.mrf.mxu0
    %v4240 = vadd.f32 0.0, %v4239
    %v4241 = vpop.f32.mrf.mxu0
    %4242 = vdwg.mxu0
    %v4244 = vrot.slane %v4240, 2
    %v4246 = vadd.f32 %v4167, %v4244
    %v4248 = vlaneseq
    %v4249 = vshrl.u32 %v4248, 7
    %v4250 = vsub.s32 0, %v4249
    %v4251 = vrot.slane %v4172, %v4250
    %v4253 = vadd.f32 %v4246, %v4251
    %v4254 = vxor.u32 %v4253, 2147483648
    %v4255 = vmul.f32 %v4254, 1.442695
    %v4256 = vpow.pop %v4255
    %v4257 = vadd.f32 %v4256, 1.0
    %v4258 = vrcp.pop %v4257
    %v4259 = vmul.f32 1.0, %v4258
    %v4260 = vtanh.pop %v4253
    %v4262 = vrot.slane %v3778, 6
    %v4264 = vmul.f32 %v4259, %v4262
    %4266 = vrot.lane.b32.xlu0 %v4260, 64
    %v4267 = vpop.permute.xlu0 %4266
    %v4269 = vmul.f32 %v4259, %v4267
    %4271 = vrot.lane.b32.xlu0 %v4269, 32
    %v4272 = vpop.permute.xlu0 %4271
    %v4274 = vadd.f32 %v4264, %v4272
    %v4275 = vtanh.pop %v4274
    %4277 = vrot.lane.b32.xlu0 %v4275, 64
    %v4278 = vpop.permute.xlu0 %4277
    %v4280 = vmul.f32 %v4259, %v4278
    %v4281 = vld [vmem:[%s2785] sm:$0xff]
    %v4282 = vld [vmem:[%s2785 + $0x8] sm:$0xff]
    %v4283 = vld [vmem:[%s2785 + $0x10] sm:$0xff]
    %v4284 = vld [vmem:[%s2785 + $0x18] sm:$0xff]
    %v4285 = vld [vmem:[%s2790] sm:$0xff]
    %v4286 = vld [vmem:[%s2790 + $0x8] sm:$0xff]
    %v4287 = vld [vmem:[%s2790 + $0x10] sm:$0xff]
    %v4288 = vld [vmem:[%s2790 + $0x18] sm:$0xff]
    %v4289 = vld [vmem:[%s2795] sm:$0x1]
    %4290 = vmatprep.subr.mxu0 0.0
    %4291 = vmatpush1.msra.mxu0 0.0
    %4292 = vmatprep.subr.mxu0 0.0
    %4293 = vmatpush1.msra.mxu0 0.0
    %4294 = vmatprep.subr.mxu0 0.0
    %4295 = vmatpush1.msra.mxu0 0.0
    %4296 = vmatprep.subr.mxu0 0.0
    %4297 = vmatpush1.msra.mxu0 0.0
    %4298 = vmatprep.subr.mxu0 0.0
    %4299 = vmatpush1.msra.mxu0 0.0
    %4300 = vmatprep.subr.mxu0 0.0
    %4301 = vmatpush1.msra.mxu0 0.0
    %4302 = vmatprep.subr.mxu0 0.0
    %4303 = vmatpush1.msra.mxu0 0.0
    %4304 = vmatprep.subr.mxu0 0.0
    %4305 = vmatpush1.msra.mxu0 0.0
    %4306 = vmatprep.subr.mxu0 0.0
    %4307 = vmatpush1.msra.mxu0 0.0
    %4308 = vmatprep.subr.mxu0 0.0
    %4309 = vmatpush1.msra.mxu0 0.0
    %4310 = vmatprep.subr.mxu0 0.0
    %4311 = vmatpush1.msra.mxu0 0.0
    %4312 = vmatprep.subr.mxu0 0.0
    %4313 = vmatpush1.msra.mxu0 0.0
    %4314 = vmatprep.subr.mxu0 0.0
    %4315 = vmatpush1.msra.mxu0 %v4288
    %4316 = vmatprep.subr.mxu0 0.0
    %4317 = vmatpush1.msra.mxu0 %v4287
    %4318 = vmatprep.subr.mxu0 0.0
    %4319 = vmatpush1.msra.mxu0 %v4286
    %4320 = vmatprep.subr.mxu0 0.0
    %4321 = vmatpush1.msra.mxu0 %v4285
    %4322 = vmatprep.subr.mxu0 0.0
    %4323 = vmatpush2.msra.mxu0 0.0
    %4324 = vmatprep.subr.mxu0 0.0
    %4325 = vmatpush2.msra.mxu0 0.0
    %4326 = vmatprep.subr.mxu0 0.0
    %4327 = vmatpush2.msra.mxu0 0.0
    %4328 = vmatprep.subr.mxu0 0.0
    %4329 = vmatpush2.msra.mxu0 0.0
    %4330 = vmatprep.subr.mxu0 0.0
    %4331 = vmatpush2.msra.mxu0 0.0
    %4332 = vmatprep.subr.mxu0 0.0
    %4333 = vmatpush2.msra.mxu0 0.0
    %4334 = vmatprep.subr.mxu0 0.0
    %4335 = vmatpush2.msra.mxu0 0.0
    %4336 = vmatprep.subr.mxu0 0.0
    %4337 = vmatpush2.msra.mxu0 0.0
    %4338 = vmatprep.subr.mxu0 0.0
    %4339 = vmatpush2.msra.mxu0 0.0
    %4340 = vmatprep.subr.mxu0 0.0
    %4341 = vmatpush2.msra.mxu0 0.0
    %4342 = vmatprep.subr.mxu0 0.0
    %4343 = vmatpush2.msra.mxu0 0.0
    %4344 = vmatprep.subr.mxu0 0.0
    %4345 = vmatpush2.msra.mxu0 0.0
    %4346 = vmatprep.subr.mxu0 0.0
    %4347 = vmatpush2.msra.mxu0 0.0
    %4348 = vmatprep.subr.mxu0 0.0
    %4349 = vmatpush2.msra.mxu0 0.0
    %4350 = vmatprep.subr.mxu0 0.0
    %4351 = vmatpush2.msra.mxu0 0.0
    %4352 = vmatprep.subr.mxu0 0.0
    %4353 = vmatpush2.msra.mxu0 0.0
    %4354 = vmatprep.mubr.f32.mxu0 0.0
    %4355 = vmatmul.mubr.f32.gmra.mxu0 %v3974
    %v4356 = vpop.f32.mrf.mxu0
    %v4357 = vadd.f32 0.0, %v4356
    %v4358 = vpop.f32.mrf.mxu0
    %4359 = vdwg.mxu0
    %v4361 = vrot.slane %v4280, 6
    %4362 = vrot.lane.b32.xlu0 %v4361, 32
    %v4363 = vpop.permute.xlu0 %4362
    %v4364 = vsel %vm49, %v4363, 0
    %4366 = vmatprep.subr.mxu0 0.0
    %4367 = vmatpush1.msra.mxu0 0.0
    %4368 = vmatprep.subr.mxu0 0.0
    %4369 = vmatpush1.msra.mxu0 0.0
    %4370 = vmatprep.subr.mxu0 0.0
    %4371 = vmatpush1.msra.mxu0 0.0
    %4372 = vmatprep.subr.mxu0 0.0
    %4373 = vmatpush1.msra.mxu0 0.0
    %4374 = vmatprep.subr.mxu0 0.0
    %4375 = vmatpush1.msra.mxu0 0.0
    %4376 = vmatprep.subr.mxu0 0.0
    %4377 = vmatpush1.msra.mxu0 0.0
    %4378 = vmatprep.subr.mxu0 0.0
    %4379 = vmatpush1.msra.mxu0 0.0
    %4380 = vmatprep.subr.mxu0 0.0
    %4381 = vmatpush1.msra.mxu0 0.0
    %4382 = vmatprep.subr.mxu0 0.0
    %4383 = vmatpush1.msra.mxu0 0.0
    %4384 = vmatprep.subr.mxu0 0.0
    %4385 = vmatpush1.msra.mxu0 0.0
    %4386 = vmatprep.subr.mxu0 0.0
    %4387 = vmatpush1.msra.mxu0 0.0
    %4388 = vmatprep.subr.mxu0 0.0
    %4389 = vmatpush1.msra.mxu0 0.0
    %4390 = vmatprep.subr.mxu0 0.0
    %4391 = vmatpush1.msra.mxu0 %v4284
    %4392 = vmatprep.subr.mxu0 0.0
    %4393 = vmatpush1.msra.mxu0 %v4283
    %4394 = vmatprep.subr.mxu0 0.0
    %4395 = vmatpush1.msra.mxu0 %v4282
    %4396 = vmatprep.subr.mxu0 0.0
    %4397 = vmatpush1.msra.mxu0 %v4281
    %4398 = vmatprep.subr.mxu0 0.0
    %4399 = vmatpush2.msra.mxu0 0.0
    %4400 = vmatprep.subr.mxu0 0.0
    %4401 = vmatpush2.msra.mxu0 0.0
    %4402 = vmatprep.subr.mxu0 0.0
    %4403 = vmatpush2.msra.mxu0 0.0
    %4404 = vmatprep.subr.mxu0 0.0
    %4405 = vmatpush2.msra.mxu0 0.0
    %4406 = vmatprep.subr.mxu0 0.0
    %4407 = vmatpush2.msra.mxu0 0.0
    %4408 = vmatprep.subr.mxu0 0.0
    %4409 = vmatpush2.msra.mxu0 0.0
    %4410 = vmatprep.subr.mxu0 0.0
    %4411 = vmatpush2.msra.mxu0 0.0
    %4412 = vmatprep.subr.mxu0 0.0
    %4413 = vmatpush2.msra.mxu0 0.0
    %4414 = vmatprep.subr.mxu0 0.0
    %4415 = vmatpush2.msra.mxu0 0.0
    %4416 = vmatprep.subr.mxu0 0.0
    %4417 = vmatpush2.msra.mxu0 0.0
    %4418 = vmatprep.subr.mxu0 0.0
    %4419 = vmatpush2.msra.mxu0 0.0
    %4420 = vmatprep.subr.mxu0 0.0
    %4421 = vmatpush2.msra.mxu0 0.0
    %4422 = vmatprep.subr.mxu0 0.0
    %4423 = vmatpush2.msra.mxu0 0.0
    %4424 = vmatprep.subr.mxu0 0.0
    %4425 = vmatpush2.msra.mxu0 0.0
    %4426 = vmatprep.subr.mxu0 0.0
    %4427 = vmatpush2.msra.mxu0 0.0
    %4428 = vmatprep.subr.mxu0 0.0
    %4429 = vmatpush2.msra.mxu0 0.0
    %4430 = vmatprep.mubr.f32.mxu0 0.0
    %4431 = vmatmul.mubr.f32.gmra.mxu0 %v4364
    %v4432 = vpop.f32.mrf.mxu0
    %v4433 = vadd.f32 %v4357, %v4432
    %v4434 = vpop.f32.mrf.mxu0
    %4435 = vdwg.mxu0
    %v4437 = vlaneseq
    %v4438 = vshrl.u32 %v4437, 7
    %v4439 = vsub.s32 0, %v4438
    %v4440 = vrot.slane %v4289, %v4439
    %v4442 = vadd.f32 %v4433, %v4440
    %v4443 = vxor.u32 %v4442, 2147483648
    %v4444 = vmul.f32 %v4443, 1.442695
    %v4445 = vpow.pop %v4444
    %v4446 = vadd.f32 %v4445, 1.0
    %v4447 = vrcp.pop %v4446
    %v4448 = vmul.f32 1.0, %v4447
    %v4449 = vtanh.pop %v4442
    %v4450 = vmul.f32 %v4448, %v3964
    %4452 = vrot.lane.b32.xlu0 %v4449, 64
    %v4453 = vpop.permute.xlu0 %4452
    %v4455 = vmul.f32 %v4448, %v4453
    %4457 = vrot.lane.b32.xlu0 %v4455, 32
    %v4458 = vpop.permute.xlu0 %4457
    %v4460 = vadd.f32 %v4450, %v4458
    %v4461 = vtanh.pop %v4460
    %4463 = vrot.lane.b32.xlu0 %v4461, 64
    %v4464 = vpop.permute.xlu0 %4463
    %v4466 = vmul.f32 %v4448, %v4464
    %4468 = vrot.lane.b32.xlu0 %v4466, 32
    %v4469 = vpop.permute.xlu0 %4468
    %v4470 = vsel %vm49, %v4469, 0
    %4472 = vmatprep.subr.mxu0 0.0
    %4473 = vmatpush1.msra.mxu0 0.0
    %4474 = vmatprep.subr.mxu0 0.0
    %4475 = vmatpush1.msra.mxu0 0.0
    %4476 = vmatprep.subr.mxu0 0.0
    %4477 = vmatpush1.msra.mxu0 0.0
    %4478 = vmatprep.subr.mxu0 0.0
    %4479 = vmatpush1.msra.mxu0 0.0
    %4480 = vmatprep.subr.mxu0 0.0
    %4481 = vmatpush1.msra.mxu0 0.0
    %4482 = vmatprep.subr.mxu0 0.0
    %4483 = vmatpush1.msra.mxu0 0.0
    %4484 = vmatprep.subr.mxu0 0.0
    %4485 = vmatpush1.msra.mxu0 0.0
    %4486 = vmatprep.subr.mxu0 0.0
    %4487 = vmatpush1.msra.mxu0 0.0
    %4488 = vmatprep.subr.mxu0 0.0
    %4489 = vmatpush1.msra.mxu0 0.0
    %4490 = vmatprep.subr.mxu0 0.0
    %4491 = vmatpush1.msra.mxu0 0.0
    %4492 = vmatprep.subr.mxu0 0.0
    %4493 = vmatpush1.msra.mxu0 0.0
    %4494 = vmatprep.subr.mxu0 0.0
    %4495 = vmatpush1.msra.mxu0 0.0
    %4496 = vmatprep.subr.mxu0 0.0
    %4497 = vmatpush1.msra.mxu0 %v2670
    %4498 = vmatprep.subr.mxu0 0.0
    %4499 = vmatpush1.msra.mxu0 %v2669
    %4500 = vmatprep.subr.mxu0 0.0
    %4501 = vmatpush1.msra.mxu0 %v2668
    %4502 = vmatprep.subr.mxu0 0.0
    %4503 = vmatpush1.msra.mxu0 %v2667
    %4504 = vmatprep.subr.mxu0 0.0
    %4505 = vmatpush2.msra.mxu0 0.0
    %4506 = vmatprep.subr.mxu0 0.0
    %4507 = vmatpush2.msra.mxu0 0.0
    %4508 = vmatprep.subr.mxu0 0.0
    %4509 = vmatpush2.msra.mxu0 0.0
    %4510 = vmatprep.subr.mxu0 0.0
    %4511 = vmatpush2.msra.mxu0 0.0
    %4512 = vmatprep.subr.mxu0 0.0
    %4513 = vmatpush2.msra.mxu0 0.0
    %4514 = vmatprep.subr.mxu0 0.0
    %4515 = vmatpush2.msra.mxu0 0.0
    %4516 = vmatprep.subr.mxu0 0.0
    %4517 = vmatpush2.msra.mxu0 0.0
    %4518 = vmatprep.subr.mxu0 0.0
    %4519 = vmatpush2.msra.mxu0 0.0
    %4520 = vmatprep.subr.mxu0 0.0
    %4521 = vmatpush2.msra.mxu0 0.0
    %4522 = vmatprep.subr.mxu0 0.0
    %4523 = vmatpush2.msra.mxu0 0.0
    %4524 = vmatprep.subr.mxu0 0.0
    %4525 = vmatpush2.msra.mxu0 0.0
    %4526 = vmatprep.subr.mxu0 0.0
    %4527 = vmatpush2.msra.mxu0 0.0
    %4528 = vmatprep.subr.mxu0 0.0
    %4529 = vmatpush2.msra.mxu0 0.0
    %4530 = vmatprep.subr.mxu0 0.0
    %4531 = vmatpush2.msra.mxu0 0.0
    %4532 = vmatprep.subr.mxu0 0.0
    %4533 = vmatpush2.msra.mxu0 0.0
    %4534 = vmatprep.subr.mxu0 0.0
    %4535 = vmatpush2.msra.mxu0 0.0
    %4536 = vmatprep.mubr.f32.mxu0 0.0
    %4537 = vmatmul.mubr.f32.gmra.mxu0 %v4470
    %v4538 = vpop.f32.mrf.mxu0
    %v4539 = vadd.f32 0.0, %v4538
    %v4540 = vpop.f32.mrf.mxu0
    %4541 = vdwg.mxu0
    %v4544 = vunpack.c.l.s4 1966171168
    %v4545 = vunpack.c.0.s8 %v4544
    %v4546 = vlaneseq
    %v4547 = vshrl.u32 %v4546, 7
    %v4548 = vsub.s32 %v4545, %v4547
    %v4549 = vrot.slane %v4539, %v4548
    %v4550 = vcombine.high %v4549, %v4549
    %v4552 = vunpack.c.l.s4 1966171168
    %v4553 = vunpack.c.0.s8 %v4552
    %v4554 = vlaneseq
    %v4555 = vshrl.u32 %v4554, 7
    %v4556 = vsub.s32 %v4553, %v4555
    %v4557 = vrot.slane %v4549, %v4556
    %v4559 = vunpack.c.l.s4 1966171168
    %v4560 = vunpack.c.0.s8 %v4559
    %v4561 = vlaneseq
    %v4562 = vshrl.u32 %v4561, 7
    %v4563 = vsub.s32 %v4560, %v4562
    %v4564 = vrot.slane %v4550, %v4563
    %4567 = vst [vmem:[#allocation4 + $0x3] sm:$0x1] %v4557
    %4568 = vst [vmem:[#allocation4 + $0xb] sm:$0x1] %v4564
    %v4569 = vsel %vm2674, %v4539, -1e+30
    %v4570 = vsel %vm3081, %v4569, -inf
    %4571 = vmax.xlane.f32.xlu0 %v4570
    %v4572 = vpop.xlane.xlu0 %4571
    %vm4573 = vcmp.eq.f32.partialorder %v4569, %v4572
    %v4574 = vsel %vm4573, %v2673, 128.0
    %v4575 = vsel %vm3081, %v4574, inf
    %4576 = vmin.xlane.f32.xlu0 %v4575
    %v4577 = vpop.xlane.xlu0 %4576
    %vm4578 = vcmp.eq.f32.partialorder %v2673, %v4577
    %v4579 = vsel %vm4578, 1, 0
    %v4580 = vcvt.s32.f32 %v4579
    %4581 = vmatprep.subr.mxu0 0.0
    %4582 = vmatpush1.msra.mxu0 %v2664
    %4583 = vmatprep.subr.mxu0 0.0
    %4584 = vmatpush1.msra.mxu0 %v2659
    %4585 = vmatprep.subr.mxu0 0.0
    %4586 = vmatpush1.msra.mxu0 %v2654
    %4587 = vmatprep.subr.mxu0 0.0
    %4588 = vmatpush1.msra.mxu0 %v2649
    %4589 = vmatprep.subr.mxu0 0.0
    %4590 = vmatpush1.msra.mxu0 %v2644
    %4591 = vmatprep.subr.mxu0 0.0
    %4592 = vmatpush1.msra.mxu0 %v2639
    %4593 = vmatprep.subr.mxu0 0.0
    %4594 = vmatpush1.msra.mxu0 %v2634
    %4595 = vmatprep.subr.mxu0 0.0
    %4596 = vmatpush1.msra.mxu0 %v2629
    %4597 = vmatprep.subr.mxu0 0.0
    %4598 = vmatpush1.msra.mxu0 %v2624
    %4599 = vmatprep.subr.mxu0 0.0
    %4600 = vmatpush1.msra.mxu0 %v2619
    %4601 = vmatprep.subr.mxu0 0.0
    %4602 = vmatpush1.msra.mxu0 %v2614
    %4603 = vmatprep.subr.mxu0 0.0
    %4604 = vmatpush1.msra.mxu0 %v2609
    %4605 = vmatprep.subr.mxu0 0.0
    %4606 = vmatpush1.msra.mxu0 %v2604
    %4607 = vmatprep.subr.mxu0 0.0
    %4608 = vmatpush1.msra.mxu0 %v2599
    %4609 = vmatprep.subr.mxu0 0.0
    %4610 = vmatpush1.msra.mxu0 %v2594
    %4611 = vmatprep.subr.mxu0 0.0
    %4612 = vmatpush1.msra.mxu0 %v2589
    %4613 = vmatprep.subr.mxu0 0.0
    %4614 = vmatpush2.msra.mxu0 0.0
    %4615 = vmatprep.subr.mxu0 0.0
    %4616 = vmatpush2.msra.mxu0 0.0
    %4617 = vmatprep.subr.mxu0 0.0
    %4618 = vmatpush2.msra.mxu0 0.0
    %4619 = vmatprep.subr.mxu0 0.0
    %4620 = vmatpush2.msra.mxu0 0.0
    %4621 = vmatprep.subr.mxu0 0.0
    %4622 = vmatpush2.msra.mxu0 0.0
    %4623 = vmatprep.subr.mxu0 0.0
    %4624 = vmatpush2.msra.mxu0 0.0
    %4625 = vmatprep.subr.mxu0 0.0
    %4626 = vmatpush2.msra.mxu0 0.0
    %4627 = vmatprep.subr.mxu0 0.0
    %4628 = vmatpush2.msra.mxu0 0.0
    %4629 = vmatprep.subr.mxu0 0.0
    %4630 = vmatpush2.msra.mxu0 0.0
    %4631 = vmatprep.subr.mxu0 0.0
    %4632 = vmatpush2.msra.mxu0 0.0
    %4633 = vmatprep.subr.mxu0 0.0
    %4634 = vmatpush2.msra.mxu0 0.0
    %4635 = vmatprep.subr.mxu0 0.0
    %4636 = vmatpush2.msra.mxu0 0.0
    %4637 = vmatprep.subr.mxu0 0.0
    %4638 = vmatpush2.msra.mxu0 0.0
    %4639 = vmatprep.subr.mxu0 0.0
    %4640 = vmatpush2.msra.mxu0 0.0
    %4641 = vmatprep.subr.mxu0 0.0
    %4642 = vmatpush2.msra.mxu0 0.0
    %4643 = vmatprep.subr.mxu0 0.0
    %4644 = vmatpush2.msra.mxu0 0.0
    %4645 = vmatprep.mubr.f32.mxu0 0.0
    %4646 = vmatmul.mubr.f32.gmra.mxu0 %v4580
    %v4647 = vpop.f32.mrf.mxu0
    %v4648 = vadd.f32 0.0, %v4647
    %v4649 = vpop.f32.mrf.mxu0
    %4650 = vdwg.mxu0
    %s4651 = sld [smem:[#allocation3 + $0x3]]
    %p4652 = scmp.gt.s32.totalorder %s4651, 0
    %s4653 = scalar_select %p4652, 1, 0
    %s4654 = scvt.s32.f32 %s4653
    %v4655 = vstv %s4654
    %v4656 = vmul.f32 %v4655, %v2455
    %s4657 = ssub.f32 1.0, %s4654
    %v4658 = vstv %s4657
    %v4659 = vmul.f32 %v4658, %v4648
    %v4660 = vadd.f32 %v4656, %v4659
    %v4661 = vld [vmem:[%s7] sm:$0xff]
    %v4662 = vld [vmem:[%s7 + $0x8] sm:$0xff]
    %v4663 = vld [vmem:[%s7 + $0x10] sm:$0xff]
    %v4664 = vld [vmem:[%s7 + $0x18] sm:$0xff]
    %v4665 = vld [vmem:[%s8] sm:$0x1]
    %4666 = vmatprep.subr.mxu0 0.0
    %4667 = vmatpush1.msra.mxu0 0.0
    %4668 = vmatprep.subr.mxu0 0.0
    %4669 = vmatpush1.msra.mxu0 0.0
    %4670 = vmatprep.subr.mxu0 0.0
    %4671 = vmatpush1.msra.mxu0 0.0
    %4672 = vmatprep.subr.mxu0 0.0
    %4673 = vmatpush1.msra.mxu0 0.0
    %4674 = vmatprep.subr.mxu0 0.0
    %4675 = vmatpush1.msra.mxu0 0.0
    %4676 = vmatprep.subr.mxu0 0.0
    %4677 = vmatpush1.msra.mxu0 0.0
    %4678 = vmatprep.subr.mxu0 0.0
    %4679 = vmatpush1.msra.mxu0 0.0
    %4680 = vmatprep.subr.mxu0 0.0
    %4681 = vmatpush1.msra.mxu0 0.0
    %4682 = vmatprep.subr.mxu0 0.0
    %4683 = vmatpush1.msra.mxu0 0.0
    %4684 = vmatprep.subr.mxu0 0.0
    %4685 = vmatpush1.msra.mxu0 0.0
    %4686 = vmatprep.subr.mxu0 0.0
    %4687 = vmatpush1.msra.mxu0 0.0
    %4688 = vmatprep.subr.mxu0 0.0
    %4689 = vmatpush1.msra.mxu0 0.0
    %4690 = vmatprep.subr.mxu0 0.0
    %4691 = vmatpush1.msra.mxu0 %v4664
    %4692 = vmatprep.subr.mxu0 0.0
    %4693 = vmatpush1.msra.mxu0 %v4663
    %4694 = vmatprep.subr.mxu0 0.0
    %4695 = vmatpush1.msra.mxu0 %v4662
    %4696 = vmatprep.subr.mxu0 0.0
    %4697 = vmatpush1.msra.mxu0 %v4661
    %4698 = vmatprep.subr.mxu0 0.0
    %4699 = vmatpush2.msra.mxu0 0.0
    %4700 = vmatprep.subr.mxu0 0.0
    %4701 = vmatpush2.msra.mxu0 0.0
    %4702 = vmatprep.subr.mxu0 0.0
    %4703 = vmatpush2.msra.mxu0 0.0
    %4704 = vmatprep.subr.mxu0 0.0
    %4705 = vmatpush2.msra.mxu0 0.0
    %4706 = vmatprep.subr.mxu0 0.0
    %4707 = vmatpush2.msra.mxu0 0.0
    %4708 = vmatprep.subr.mxu0 0.0
    %4709 = vmatpush2.msra.mxu0 0.0
    %4710 = vmatprep.subr.mxu0 0.0
    %4711 = vmatpush2.msra.mxu0 0.0
    %4712 = vmatprep.subr.mxu0 0.0
    %4713 = vmatpush2.msra.mxu0 0.0
    %4714 = vmatprep.subr.mxu0 0.0
    %4715 = vmatpush2.msra.mxu0 0.0
    %4716 = vmatprep.subr.mxu0 0.0
    %4717 = vmatpush2.msra.mxu0 0.0
    %4718 = vmatprep.subr.mxu0 0.0
    %4719 = vmatpush2.msra.mxu0 0.0
    %4720 = vmatprep.subr.mxu0 0.0
    %4721 = vmatpush2.msra.mxu0 0.0
    %4722 = vmatprep.subr.mxu0 0.0
    %4723 = vmatpush2.msra.mxu0 0.0
    %4724 = vmatprep.subr.mxu0 0.0
    %4725 = vmatpush2.msra.mxu0 0.0
    %4726 = vmatprep.subr.mxu0 0.0
    %4727 = vmatpush2.msra.mxu0 0.0
    %4728 = vmatprep.subr.mxu0 0.0
    %4729 = vmatpush2.msra.mxu0 0.0
    %4730 = vmatprep.mubr.f32.mxu0 0.0
    %4731 = vmatmul.mubr.f32.gmra.mxu0 %v4364
    %v4732 = vpop.f32.mrf.mxu0
    %v4733 = vadd.f32 0.0, %v4732
    %v4734 = vpop.f32.mrf.mxu0
    %4735 = vdwg.mxu0
    %v4736 = vadd.f32 %v4660, %v4733
    %v4738 = vlaneseq
    %v4739 = vshrl.u32 %v4738, 7
    %v4740 = vsub.s32 0, %v4739
    %v4741 = vrot.slane %v4665, %v4740
    %v4743 = vadd.f32 %v4736, %v4741
    %v4744 = vxor.u32 %v4743, 2147483648
    %v4745 = vmul.f32 %v4744, 1.442695
    %v4746 = vpow.pop %v4745
    %v4747 = vadd.f32 %v4746, 1.0
    %v4748 = vrcp.pop %v4747
    %v4749 = vmul.f32 1.0, %v4748
    %v4750 = vtanh.pop %v4743
    %v4752 = vrot.slane %v4274, 6
    %v4754 = vmul.f32 %v4749, %v4752
    %4756 = vrot.lane.b32.xlu0 %v4750, 64
    %v4757 = vpop.permute.xlu0 %4756
    %v4759 = vmul.f32 %v4749, %v4757
    %4761 = vrot.lane.b32.xlu0 %v4759, 32
    %v4762 = vpop.permute.xlu0 %4761
    %v4764 = vadd.f32 %v4754, %v4762
    %v4765 = vtanh.pop %v4764
    %4767 = vrot.lane.b32.xlu0 %v4765, 64
    %v4768 = vpop.permute.xlu0 %4767
    %v4770 = vmul.f32 %v4749, %v4768
    %v4771 = vld [vmem:[%s2785] sm:$0xff]
    %v4772 = vld [vmem:[%s2785 + $0x8] sm:$0xff]
    %v4773 = vld [vmem:[%s2785 + $0x10] sm:$0xff]
    %v4774 = vld [vmem:[%s2785 + $0x18] sm:$0xff]
    %v4775 = vld [vmem:[%s2790] sm:$0xff]
    %v4776 = vld [vmem:[%s2790 + $0x8] sm:$0xff]
    %v4777 = vld [vmem:[%s2790 + $0x10] sm:$0xff]
    %v4778 = vld [vmem:[%s2790 + $0x18] sm:$0xff]
    %v4779 = vld [vmem:[%s2795] sm:$0x1]
    %4780 = vmatprep.subr.mxu0 0.0
    %4781 = vmatpush1.msra.mxu0 0.0
    %4782 = vmatprep.subr.mxu0 0.0
    %4783 = vmatpush1.msra.mxu0 0.0
    %4784 = vmatprep.subr.mxu0 0.0
    %4785 = vmatpush1.msra.mxu0 0.0
    %4786 = vmatprep.subr.mxu0 0.0
    %4787 = vmatpush1.msra.mxu0 0.0
    %4788 = vmatprep.subr.mxu0 0.0
    %4789 = vmatpush1.msra.mxu0 0.0
    %4790 = vmatprep.subr.mxu0 0.0
    %4791 = vmatpush1.msra.mxu0 0.0
    %4792 = vmatprep.subr.mxu0 0.0
    %4793 = vmatpush1.msra.mxu0 0.0
    %4794 = vmatprep.subr.mxu0 0.0
    %4795 = vmatpush1.msra.mxu0 0.0
    %4796 = vmatprep.subr.mxu0 0.0
    %4797 = vmatpush1.msra.mxu0 0.0
    %4798 = vmatprep.subr.mxu0 0.0
    %4799 = vmatpush1.msra.mxu0 0.0
    %4800 = vmatprep.subr.mxu0 0.0
    %4801 = vmatpush1.msra.mxu0 0.0
    %4802 = vmatprep.subr.mxu0 0.0
    %4803 = vmatpush1.msra.mxu0 0.0
    %4804 = vmatprep.subr.mxu0 0.0
    %4805 = vmatpush1.msra.mxu0 %v4778
    %4806 = vmatprep.subr.mxu0 0.0
    %4807 = vmatpush1.msra.mxu0 %v4777
    %4808 = vmatprep.subr.mxu0 0.0
    %4809 = vmatpush1.msra.mxu0 %v4776
    %4810 = vmatprep.subr.mxu0 0.0
    %4811 = vmatpush1.msra.mxu0 %v4775
    %4812 = vmatprep.subr.mxu0 0.0
    %4813 = vmatpush2.msra.mxu0 0.0
    %4814 = vmatprep.subr.mxu0 0.0
    %4815 = vmatpush2.msra.mxu0 0.0
    %4816 = vmatprep.subr.mxu0 0.0
    %4817 = vmatpush2.msra.mxu0 0.0
    %4818 = vmatprep.subr.mxu0 0.0
    %4819 = vmatpush2.msra.mxu0 0.0
    %4820 = vmatprep.subr.mxu0 0.0
    %4821 = vmatpush2.msra.mxu0 0.0
    %4822 = vmatprep.subr.mxu0 0.0
    %4823 = vmatpush2.msra.mxu0 0.0
    %4824 = vmatprep.subr.mxu0 0.0
    %4825 = vmatpush2.msra.mxu0 0.0
    %4826 = vmatprep.subr.mxu0 0.0
    %4827 = vmatpush2.msra.mxu0 0.0
    %4828 = vmatprep.subr.mxu0 0.0
    %4829 = vmatpush2.msra.mxu0 0.0
    %4830 = vmatprep.subr.mxu0 0.0
    %4831 = vmatpush2.msra.mxu0 0.0
    %4832 = vmatprep.subr.mxu0 0.0
    %4833 = vmatpush2.msra.mxu0 0.0
    %4834 = vmatprep.subr.mxu0 0.0
    %4835 = vmatpush2.msra.mxu0 0.0
    %4836 = vmatprep.subr.mxu0 0.0
    %4837 = vmatpush2.msra.mxu0 0.0
    %4838 = vmatprep.subr.mxu0 0.0
    %4839 = vmatpush2.msra.mxu0 0.0
    %4840 = vmatprep.subr.mxu0 0.0
    %4841 = vmatpush2.msra.mxu0 0.0
    %4842 = vmatprep.subr.mxu0 0.0
    %4843 = vmatpush2.msra.mxu0 0.0
    %4844 = vmatprep.mubr.f32.mxu0 0.0
    %4845 = vmatmul.mubr.f32.gmra.mxu0 %v4470
    %v4846 = vpop.f32.mrf.mxu0
    %v4847 = vadd.f32 0.0, %v4846
    %v4848 = vpop.f32.mrf.mxu0
    %4849 = vdwg.mxu0
    %4851 = vrot.lane.b32.xlu0 %v4770, 32
    %v4852 = vpop.permute.xlu0 %4851
    %v4853 = vsel %vm49, %v4852, 0
    %4855 = vmatprep.subr.mxu0 0.0
    %4856 = vmatpush1.msra.mxu0 0.0
    %4857 = vmatprep.subr.mxu0 0.0
    %4858 = vmatpush1.msra.mxu0 0.0
    %4859 = vmatprep.subr.mxu0 0.0
    %4860 = vmatpush1.msra.mxu0 0.0
    %4861 = vmatprep.subr.mxu0 0.0
    %4862 = vmatpush1.msra.mxu0 0.0
    %4863 = vmatprep.subr.mxu0 0.0
    %4864 = vmatpush1.msra.mxu0 0.0
    %4865 = vmatprep.subr.mxu0 0.0
    %4866 = vmatpush1.msra.mxu0 0.0
    %4867 = vmatprep.subr.mxu0 0.0
    %4868 = vmatpush1.msra.mxu0 0.0
    %4869 = vmatprep.subr.mxu0 0.0
    %4870 = vmatpush1.msra.mxu0 0.0
    %4871 = vmatprep.subr.mxu0 0.0
    %4872 = vmatpush1.msra.mxu0 0.0
    %4873 = vmatprep.subr.mxu0 0.0
    %4874 = vmatpush1.msra.mxu0 0.0
    %4875 = vmatprep.subr.mxu0 0.0
    %4876 = vmatpush1.msra.mxu0 0.0
    %4877 = vmatprep.subr.mxu0 0.0
    %4878 = vmatpush1.msra.mxu0 0.0
    %4879 = vmatprep.subr.mxu0 0.0
    %4880 = vmatpush1.msra.mxu0 %v4774
    %4881 = vmatprep.subr.mxu0 0.0
    %4882 = vmatpush1.msra.mxu0 %v4773
    %4883 = vmatprep.subr.mxu0 0.0
    %4884 = vmatpush1.msra.mxu0 %v4772
    %4885 = vmatprep.subr.mxu0 0.0
    %4886 = vmatpush1.msra.mxu0 %v4771
    %4887 = vmatprep.subr.mxu0 0.0
    %4888 = vmatpush2.msra.mxu0 0.0
    %4889 = vmatprep.subr.mxu0 0.0
    %4890 = vmatpush2.msra.mxu0 0.0
    %4891 = vmatprep.subr.mxu0 0.0
    %4892 = vmatpush2.msra.mxu0 0.0
    %4893 = vmatprep.subr.mxu0 0.0
    %4894 = vmatpush2.msra.mxu0 0.0
    %4895 = vmatprep.subr.mxu0 0.0
    %4896 = vmatpush2.msra.mxu0 0.0
    %4897 = vmatprep.subr.mxu0 0.0
    %4898 = vmatpush2.msra.mxu0 0.0
    %4899 = vmatprep.subr.mxu0 0.0
    %4900 = vmatpush2.msra.mxu0 0.0
    %4901 = vmatprep.subr.mxu0 0.0
    %4902 = vmatpush2.msra.mxu0 0.0
    %4903 = vmatprep.subr.mxu0 0.0
    %4904 = vmatpush2.msra.mxu0 0.0
    %4905 = vmatprep.subr.mxu0 0.0
    %4906 = vmatpush2.msra.mxu0 0.0
    %4907 = vmatprep.subr.mxu0 0.0
    %4908 = vmatpush2.msra.mxu0 0.0
    %4909 = vmatprep.subr.mxu0 0.0
    %4910 = vmatpush2.msra.mxu0 0.0
    %4911 = vmatprep.subr.mxu0 0.0
    %4912 = vmatpush2.msra.mxu0 0.0
    %4913 = vmatprep.subr.mxu0 0.0
    %4914 = vmatpush2.msra.mxu0 0.0
    %4915 = vmatprep.subr.mxu0 0.0
    %4916 = vmatpush2.msra.mxu0 0.0
    %4917 = vmatprep.subr.mxu0 0.0
    %4918 = vmatpush2.msra.mxu0 0.0
    %4919 = vmatprep.mubr.f32.mxu0 0.0
    %4920 = vmatmul.mubr.f32.gmra.mxu0 %v4853
    %v4921 = vpop.f32.mrf.mxu0
    %v4922 = vadd.f32 %v4847, %v4921
    %v4923 = vpop.f32.mrf.mxu0
    %4924 = vdwg.mxu0
    %v4926 = vlaneseq
    %v4927 = vshrl.u32 %v4926, 7
    %v4928 = vsub.s32 0, %v4927
    %v4929 = vrot.slane %v4779, %v4928
    %v4931 = vadd.f32 %v4922, %v4929
    %v4932 = vxor.u32 %v4931, 2147483648
    %v4933 = vmul.f32 %v4932, 1.442695
    %v4934 = vpow.pop %v4933
    %v4935 = vadd.f32 %v4934, 1.0
    %v4936 = vrcp.pop %v4935
    %v4937 = vmul.f32 1.0, %v4936
    %v4938 = vtanh.pop %v4931
    %v4939 = vmul.f32 %v4937, %v4460
    %4941 = vrot.lane.b32.xlu0 %v4938, 64
    %v4942 = vpop.permute.xlu0 %4941
    %v4944 = vmul.f32 %v4937, %v4942
    %4946 = vrot.lane.b32.xlu0 %v4944, 32
    %v4947 = vpop.permute.xlu0 %4946
    %v4949 = vadd.f32 %v4939, %v4947
    %v4950 = vtanh.pop %v4949
    %4952 = vrot.lane.b32.xlu0 %v4950, 64
    %v4953 = vpop.permute.xlu0 %4952
    %v4955 = vmul.f32 %v4937, %v4953
    %4957 = vrot.lane.b32.xlu0 %v4955, 32
    %v4958 = vpop.permute.xlu0 %4957
    %v4959 = vsel %vm49, %v4958, 0
    %4961 = vmatprep.subr.mxu0 0.0
    %4962 = vmatpush1.msra.mxu0 0.0
    %4963 = vmatprep.subr.mxu0 0.0
    %4964 = vmatpush1.msra.mxu0 0.0
    %4965 = vmatprep.subr.mxu0 0.0
    %4966 = vmatpush1.msra.mxu0 0.0
    %4967 = vmatprep.subr.mxu0 0.0
    %4968 = vmatpush1.msra.mxu0 0.0
    %4969 = vmatprep.subr.mxu0 0.0
    %4970 = vmatpush1.msra.mxu0 0.0
    %4971 = vmatprep.subr.mxu0 0.0
    %4972 = vmatpush1.msra.mxu0 0.0
    %4973 = vmatprep.subr.mxu0 0.0
    %4974 = vmatpush1.msra.mxu0 0.0
    %4975 = vmatprep.subr.mxu0 0.0
    %4976 = vmatpush1.msra.mxu0 0.0
    %4977 = vmatprep.subr.mxu0 0.0
    %4978 = vmatpush1.msra.mxu0 0.0
    %4979 = vmatprep.subr.mxu0 0.0
    %4980 = vmatpush1.msra.mxu0 0.0
    %4981 = vmatprep.subr.mxu0 0.0
    %4982 = vmatpush1.msra.mxu0 0.0
    %4983 = vmatprep.subr.mxu0 0.0
    %4984 = vmatpush1.msra.mxu0 0.0
    %4985 = vmatprep.subr.mxu0 0.0
    %4986 = vmatpush1.msra.mxu0 %v2670
    %4987 = vmatprep.subr.mxu0 0.0
    %4988 = vmatpush1.msra.mxu0 %v2669
    %4989 = vmatprep.subr.mxu0 0.0
    %4990 = vmatpush1.msra.mxu0 %v2668
    %4991 = vmatprep.subr.mxu0 0.0
    %4992 = vmatpush1.msra.mxu0 %v2667
    %4993 = vmatprep.subr.mxu0 0.0
    %4994 = vmatpush2.msra.mxu0 0.0
    %4995 = vmatprep.subr.mxu0 0.0
    %4996 = vmatpush2.msra.mxu0 0.0
    %4997 = vmatprep.subr.mxu0 0.0
    %4998 = vmatpush2.msra.mxu0 0.0
    %4999 = vmatprep.subr.mxu0 0.0
    %5000 = vmatpush2.msra.mxu0 0.0
    %5001 = vmatprep.subr.mxu0 0.0
    %5002 = vmatpush2.msra.mxu0 0.0
    %5003 = vmatprep.subr.mxu0 0.0
    %5004 = vmatpush2.msra.mxu0 0.0
    %5005 = vmatprep.subr.mxu0 0.0
    %5006 = vmatpush2.msra.mxu0 0.0
    %5007 = vmatprep.subr.mxu0 0.0
    %5008 = vmatpush2.msra.mxu0 0.0
    %5009 = vmatprep.subr.mxu0 0.0
    %5010 = vmatpush2.msra.mxu0 0.0
    %5011 = vmatprep.subr.mxu0 0.0
    %5012 = vmatpush2.msra.mxu0 0.0
    %5013 = vmatprep.subr.mxu0 0.0
    %5014 = vmatpush2.msra.mxu0 0.0
    %5015 = vmatprep.subr.mxu0 0.0
    %5016 = vmatpush2.msra.mxu0 0.0
    %5017 = vmatprep.subr.mxu0 0.0
    %5018 = vmatpush2.msra.mxu0 0.0
    %5019 = vmatprep.subr.mxu0 0.0
    %5020 = vmatpush2.msra.mxu0 0.0
    %5021 = vmatprep.subr.mxu0 0.0
    %5022 = vmatpush2.msra.mxu0 0.0
    %5023 = vmatprep.subr.mxu0 0.0
    %5024 = vmatpush2.msra.mxu0 0.0
    %5025 = vmatprep.mubr.f32.mxu0 0.0
    %5026 = vmatmul.mubr.f32.gmra.mxu0 %v4959
    %v5027 = vpop.f32.mrf.mxu0
    %v5028 = vadd.f32 0.0, %v5027
    %v5029 = vpop.f32.mrf.mxu0
    %5030 = vdwg.mxu0
    %v5033 = vunpack.c.l.s4 1966171168
    %v5034 = vunpack.c.0.s8 %v5033
    %v5035 = vlaneseq
    %v5036 = vshrl.u32 %v5035, 7
    %v5037 = vsub.s32 %v5034, %v5036
    %v5038 = vrot.slane %v5028, %v5037
    %v5039 = vcombine.high %v5038, %v5038
    %v5041 = vunpack.c.l.s4 1966171168
    %v5042 = vunpack.c.0.s8 %v5041
    %v5043 = vlaneseq
    %v5044 = vshrl.u32 %v5043, 7
    %v5045 = vsub.s32 %v5042, %v5044
    %v5046 = vrot.slane %v5038, %v5045
    %v5048 = vunpack.c.l.s4 1966171168
    %v5049 = vunpack.c.0.s8 %v5048
    %v5050 = vlaneseq
    %v5051 = vshrl.u32 %v5050, 7
    %v5052 = vsub.s32 %v5049, %v5051
    %v5053 = vrot.slane %v5039, %v5052
    %5056 = vst [vmem:[#allocation4 + $0x4] sm:$0x1] %v5046
    %5057 = vst [vmem:[#allocation4 + $0xc] sm:$0x1] %v5053
    %v5058 = vsel %vm2674, %v5028, -1e+30
    %v5059 = vsel %vm3081, %v5058, -inf
    %5060 = vmax.xlane.f32.xlu0 %v5059
    %v5061 = vpop.xlane.xlu0 %5060
    %vm5062 = vcmp.eq.f32.partialorder %v5058, %v5061
    %v5063 = vsel %vm5062, %v2673, 128.0
    %v5064 = vsel %vm3081, %v5063, inf
    %5065 = vmin.xlane.f32.xlu0 %v5064
    %v5066 = vpop.xlane.xlu0 %5065
    %vm5067 = vcmp.eq.f32.partialorder %v2673, %v5066
    %v5068 = vsel %vm5067, 1, 0
    %v5069 = vcvt.s32.f32 %v5068
    %5070 = vmatprep.subr.mxu0 0.0
    %5071 = vmatpush1.msra.mxu0 %v2664
    %5072 = vmatprep.subr.mxu0 0.0
    %5073 = vmatpush1.msra.mxu0 %v2659
    %5074 = vmatprep.subr.mxu0 0.0
    %5075 = vmatpush1.msra.mxu0 %v2654
    %5076 = vmatprep.subr.mxu0 0.0
    %5077 = vmatpush1.msra.mxu0 %v2649
    %5078 = vmatprep.subr.mxu0 0.0
    %5079 = vmatpush1.msra.mxu0 %v2644
    %5080 = vmatprep.subr.mxu0 0.0
    %5081 = vmatpush1.msra.mxu0 %v2639
    %5082 = vmatprep.subr.mxu0 0.0
    %5083 = vmatpush1.msra.mxu0 %v2634
    %5084 = vmatprep.subr.mxu0 0.0
    %5085 = vmatpush1.msra.mxu0 %v2629
    %5086 = vmatprep.subr.mxu0 0.0
    %5087 = vmatpush1.msra.mxu0 %v2624
    %5088 = vmatprep.subr.mxu0 0.0
    %5089 = vmatpush1.msra.mxu0 %v2619
    %5090 = vmatprep.subr.mxu0 0.0
    %5091 = vmatpush1.msra.mxu0 %v2614
    %5092 = vmatprep.subr.mxu0 0.0
    %5093 = vmatpush1.msra.mxu0 %v2609
    %5094 = vmatprep.subr.mxu0 0.0
    %5095 = vmatpush1.msra.mxu0 %v2604
    %5096 = vmatprep.subr.mxu0 0.0
    %5097 = vmatpush1.msra.mxu0 %v2599
    %5098 = vmatprep.subr.mxu0 0.0
    %5099 = vmatpush1.msra.mxu0 %v2594
    %5100 = vmatprep.subr.mxu0 0.0
    %5101 = vmatpush1.msra.mxu0 %v2589
    %5102 = vmatprep.subr.mxu0 0.0
    %5103 = vmatpush2.msra.mxu0 0.0
    %5104 = vmatprep.subr.mxu0 0.0
    %5105 = vmatpush2.msra.mxu0 0.0
    %5106 = vmatprep.subr.mxu0 0.0
    %5107 = vmatpush2.msra.mxu0 0.0
    %5108 = vmatprep.subr.mxu0 0.0
    %5109 = vmatpush2.msra.mxu0 0.0
    %5110 = vmatprep.subr.mxu0 0.0
    %5111 = vmatpush2.msra.mxu0 0.0
    %5112 = vmatprep.subr.mxu0 0.0
    %5113 = vmatpush2.msra.mxu0 0.0
    %5114 = vmatprep.subr.mxu0 0.0
    %5115 = vmatpush2.msra.mxu0 0.0
    %5116 = vmatprep.subr.mxu0 0.0
    %5117 = vmatpush2.msra.mxu0 0.0
    %5118 = vmatprep.subr.mxu0 0.0
    %5119 = vmatpush2.msra.mxu0 0.0
    %5120 = vmatprep.subr.mxu0 0.0
    %5121 = vmatpush2.msra.mxu0 0.0
    %5122 = vmatprep.subr.mxu0 0.0
    %5123 = vmatpush2.msra.mxu0 0.0
    %5124 = vmatprep.subr.mxu0 0.0
    %5125 = vmatpush2.msra.mxu0 0.0
    %5126 = vmatprep.subr.mxu0 0.0
    %5127 = vmatpush2.msra.mxu0 0.0
    %5128 = vmatprep.subr.mxu0 0.0
    %5129 = vmatpush2.msra.mxu0 0.0
    %5130 = vmatprep.subr.mxu0 0.0
    %5131 = vmatpush2.msra.mxu0 0.0
    %5132 = vmatprep.subr.mxu0 0.0
    %5133 = vmatpush2.msra.mxu0 0.0
    %5134 = vmatprep.mubr.f32.mxu0 0.0
    %5135 = vmatmul.mubr.f32.gmra.mxu0 %v5069
    %v5136 = vpop.f32.mrf.mxu0
    %v5137 = vadd.f32 0.0, %v5136
    %v5138 = vpop.f32.mrf.mxu0
    %5139 = vdwg.mxu0
    %s5140 = sld [smem:[#allocation3 + $0x4]]
    %p5141 = scmp.gt.s32.totalorder %s5140, 0
    %s5142 = scalar_select %p5141, 1, 0
    %s5143 = scvt.s32.f32 %s5142
    %v5144 = vstv %s5143
    %v5145 = vmul.f32 %v5144, %v2455
    %s5146 = ssub.f32 1.0, %s5143
    %v5147 = vstv %s5146
    %v5148 = vmul.f32 %v5147, %v5137
    %v5150 = vrot.slane %v5148, 6
    %v5152 = vadd.f32 %v5145, %v5150
    %v5153 = vld [vmem:[%s7] sm:$0xff]
    %v5154 = vld [vmem:[%s7 + $0x8] sm:$0xff]
    %v5155 = vld [vmem:[%s7 + $0x10] sm:$0xff]
    %v5156 = vld [vmem:[%s7 + $0x18] sm:$0xff]
    %v5157 = vld [vmem:[%s8] sm:$0x1]
    %5158 = vmatprep.subr.mxu0 0.0
    %5159 = vmatpush1.msra.mxu0 0.0
    %5160 = vmatprep.subr.mxu0 0.0
    %5161 = vmatpush1.msra.mxu0 0.0
    %5162 = vmatprep.subr.mxu0 0.0
    %5163 = vmatpush1.msra.mxu0 0.0
    %5164 = vmatprep.subr.mxu0 0.0
    %5165 = vmatpush1.msra.mxu0 0.0
    %5166 = vmatprep.subr.mxu0 0.0
    %5167 = vmatpush1.msra.mxu0 0.0
    %5168 = vmatprep.subr.mxu0 0.0
    %5169 = vmatpush1.msra.mxu0 0.0
    %5170 = vmatprep.subr.mxu0 0.0
    %5171 = vmatpush1.msra.mxu0 0.0
    %5172 = vmatprep.subr.mxu0 0.0
    %5173 = vmatpush1.msra.mxu0 0.0
    %5174 = vmatprep.subr.mxu0 0.0
    %5175 = vmatpush1.msra.mxu0 0.0
    %5176 = vmatprep.subr.mxu0 0.0
    %5177 = vmatpush1.msra.mxu0 0.0
    %5178 = vmatprep.subr.mxu0 0.0
    %5179 = vmatpush1.msra.mxu0 0.0
    %5180 = vmatprep.subr.mxu0 0.0
    %5181 = vmatpush1.msra.mxu0 0.0
    %5182 = vmatprep.subr.mxu0 0.0
    %5183 = vmatpush1.msra.mxu0 %v5156
    %5184 = vmatprep.subr.mxu0 0.0
    %5185 = vmatpush1.msra.mxu0 %v5155
    %5186 = vmatprep.subr.mxu0 0.0
    %5187 = vmatpush1.msra.mxu0 %v5154
    %5188 = vmatprep.subr.mxu0 0.0
    %5189 = vmatpush1.msra.mxu0 %v5153
    %5190 = vmatprep.subr.mxu0 0.0
    %5191 = vmatpush2.msra.mxu0 0.0
    %5192 = vmatprep.subr.mxu0 0.0
    %5193 = vmatpush2.msra.mxu0 0.0
    %5194 = vmatprep.subr.mxu0 0.0
    %5195 = vmatpush2.msra.mxu0 0.0
    %5196 = vmatprep.subr.mxu0 0.0
    %5197 = vmatpush2.msra.mxu0 0.0
    %5198 = vmatprep.subr.mxu0 0.0
    %5199 = vmatpush2.msra.mxu0 0.0
    %5200 = vmatprep.subr.mxu0 0.0
    %5201 = vmatpush2.msra.mxu0 0.0
    %5202 = vmatprep.subr.mxu0 0.0
    %5203 = vmatpush2.msra.mxu0 0.0
    %5204 = vmatprep.subr.mxu0 0.0
    %5205 = vmatpush2.msra.mxu0 0.0
    %5206 = vmatprep.subr.mxu0 0.0
    %5207 = vmatpush2.msra.mxu0 0.0
    %5208 = vmatprep.subr.mxu0 0.0
    %5209 = vmatpush2.msra.mxu0 0.0
    %5210 = vmatprep.subr.mxu0 0.0
    %5211 = vmatpush2.msra.mxu0 0.0
    %5212 = vmatprep.subr.mxu0 0.0
    %5213 = vmatpush2.msra.mxu0 0.0
    %5214 = vmatprep.subr.mxu0 0.0
    %5215 = vmatpush2.msra.mxu0 0.0
    %5216 = vmatprep.subr.mxu0 0.0
    %5217 = vmatpush2.msra.mxu0 0.0
    %5218 = vmatprep.subr.mxu0 0.0
    %5219 = vmatpush2.msra.mxu0 0.0
    %5220 = vmatprep.subr.mxu0 0.0
    %5221 = vmatpush2.msra.mxu0 0.0
    %5222 = vmatprep.mubr.f32.mxu0 0.0
    %5223 = vmatmul.mubr.f32.gmra.mxu0 %v4853
    %v5224 = vpop.f32.mrf.mxu0
    %v5225 = vadd.f32 0.0, %v5224
    %v5226 = vpop.f32.mrf.mxu0
    %5227 = vdwg.mxu0
    %v5229 = vrot.slane %v5225, 6
    %v5231 = vadd.f32 %v5152, %v5229
    %v5233 = vlaneseq
    %v5234 = vshrl.u32 %v5233, 7
    %v5235 = vsub.s32 0, %v5234
    %v5236 = vrot.slane %v5157, %v5235
    %v5238 = vadd.f32 %v5231, %v5236
    %v5239 = vxor.u32 %v5238, 2147483648
    %v5240 = vmul.f32 %v5239, 1.442695
    %v5241 = vpow.pop %v5240
    %v5242 = vadd.f32 %v5241, 1.0
    %v5243 = vrcp.pop %v5242
    %v5244 = vmul.f32 1.0, %v5243
    %v5245 = vtanh.pop %v5238
    %v5247 = vrot.slane %v4764, 6
    %v5249 = vmul.f32 %v5244, %v5247
    %5251 = vrot.lane.b32.xlu0 %v5245, 64
    %v5252 = vpop.permute.xlu0 %5251
    %v5254 = vmul.f32 %v5244, %v5252
    %5256 = vrot.lane.b32.xlu0 %v5254, 32
    %v5257 = vpop.permute.xlu0 %5256
    %v5259 = vadd.f32 %v5249, %v5257
    %v5260 = vtanh.pop %v5259
    %5262 = vrot.lane.b32.xlu0 %v5260, 64
    %v5263 = vpop.permute.xlu0 %5262
    %v5265 = vmul.f32 %v5244, %v5263
    %v5266 = vld [vmem:[%s2785] sm:$0xff]
    %v5267 = vld [vmem:[%s2785 + $0x8] sm:$0xff]
    %v5268 = vld [vmem:[%s2785 + $0x10] sm:$0xff]
    %v5269 = vld [vmem:[%s2785 + $0x18] sm:$0xff]
    %v5270 = vld [vmem:[%s2790] sm:$0xff]
    %v5271 = vld [vmem:[%s2790 + $0x8] sm:$0xff]
    %v5272 = vld [vmem:[%s2790 + $0x10] sm:$0xff]
    %v5273 = vld [vmem:[%s2790 + $0x18] sm:$0xff]
    %v5274 = vld [vmem:[%s2795] sm:$0x1]
    %5275 = vmatprep.subr.mxu0 0.0
    %5276 = vmatpush1.msra.mxu0 0.0
    %5277 = vmatprep.subr.mxu0 0.0
    %5278 = vmatpush1.msra.mxu0 0.0
    %5279 = vmatprep.subr.mxu0 0.0
    %5280 = vmatpush1.msra.mxu0 0.0
    %5281 = vmatprep.subr.mxu0 0.0
    %5282 = vmatpush1.msra.mxu0 0.0
    %5283 = vmatprep.subr.mxu0 0.0
    %5284 = vmatpush1.msra.mxu0 0.0
    %5285 = vmatprep.subr.mxu0 0.0
    %5286 = vmatpush1.msra.mxu0 0.0
    %5287 = vmatprep.subr.mxu0 0.0
    %5288 = vmatpush1.msra.mxu0 0.0
    %5289 = vmatprep.subr.mxu0 0.0
    %5290 = vmatpush1.msra.mxu0 0.0
    %5291 = vmatprep.subr.mxu0 0.0
    %5292 = vmatpush1.msra.mxu0 0.0
    %5293 = vmatprep.subr.mxu0 0.0
    %5294 = vmatpush1.msra.mxu0 0.0
    %5295 = vmatprep.subr.mxu0 0.0
    %5296 = vmatpush1.msra.mxu0 0.0
    %5297 = vmatprep.subr.mxu0 0.0
    %5298 = vmatpush1.msra.mxu0 0.0
    %5299 = vmatprep.subr.mxu0 0.0
    %5300 = vmatpush1.msra.mxu0 %v5273
    %5301 = vmatprep.subr.mxu0 0.0
    %5302 = vmatpush1.msra.mxu0 %v5272
    %5303 = vmatprep.subr.mxu0 0.0
    %5304 = vmatpush1.msra.mxu0 %v5271
    %5305 = vmatprep.subr.mxu0 0.0
    %5306 = vmatpush1.msra.mxu0 %v5270
    %5307 = vmatprep.subr.mxu0 0.0
    %5308 = vmatpush2.msra.mxu0 0.0
    %5309 = vmatprep.subr.mxu0 0.0
    %5310 = vmatpush2.msra.mxu0 0.0
    %5311 = vmatprep.subr.mxu0 0.0
    %5312 = vmatpush2.msra.mxu0 0.0
    %5313 = vmatprep.subr.mxu0 0.0
    %5314 = vmatpush2.msra.mxu0 0.0
    %5315 = vmatprep.subr.mxu0 0.0
    %5316 = vmatpush2.msra.mxu0 0.0
    %5317 = vmatprep.subr.mxu0 0.0
    %5318 = vmatpush2.msra.mxu0 0.0
    %5319 = vmatprep.subr.mxu0 0.0
    %5320 = vmatpush2.msra.mxu0 0.0
    %5321 = vmatprep.subr.mxu0 0.0
    %5322 = vmatpush2.msra.mxu0 0.0
    %5323 = vmatprep.subr.mxu0 0.0
    %5324 = vmatpush2.msra.mxu0 0.0
    %5325 = vmatprep.subr.mxu0 0.0
    %5326 = vmatpush2.msra.mxu0 0.0
    %5327 = vmatprep.subr.mxu0 0.0
    %5328 = vmatpush2.msra.mxu0 0.0
    %5329 = vmatprep.subr.mxu0 0.0
    %5330 = vmatpush2.msra.mxu0 0.0
    %5331 = vmatprep.subr.mxu0 0.0
    %5332 = vmatpush2.msra.mxu0 0.0
    %5333 = vmatprep.subr.mxu0 0.0
    %5334 = vmatpush2.msra.mxu0 0.0
    %5335 = vmatprep.subr.mxu0 0.0
    %5336 = vmatpush2.msra.mxu0 0.0
    %5337 = vmatprep.subr.mxu0 0.0
    %5338 = vmatpush2.msra.mxu0 0.0
    %5339 = vmatprep.mubr.f32.mxu0 0.0
    %5340 = vmatmul.mubr.f32.gmra.mxu0 %v4959
    %v5341 = vpop.f32.mrf.mxu0
    %v5342 = vadd.f32 0.0, %v5341
    %v5343 = vpop.f32.mrf.mxu0
    %5344 = vdwg.mxu0
    %v5346 = vrot.slane %v5265, 2
    %5347 = vrot.lane.b32.xlu0 %v5346, 32
    %v5348 = vpop.permute.xlu0 %5347
    %v5349 = vsel %vm49, %v5348, 0
    %5351 = vmatprep.subr.mxu0 0.0
    %5352 = vmatpush1.msra.mxu0 0.0
    %5353 = vmatprep.subr.mxu0 0.0
    %5354 = vmatpush1.msra.mxu0 0.0
    %5355 = vmatprep.subr.mxu0 0.0
    %5356 = vmatpush1.msra.mxu0 0.0
    %5357 = vmatprep.subr.mxu0 0.0
    %5358 = vmatpush1.msra.mxu0 0.0
    %5359 = vmatprep.subr.mxu0 0.0
    %5360 = vmatpush1.msra.mxu0 0.0
    %5361 = vmatprep.subr.mxu0 0.0
    %5362 = vmatpush1.msra.mxu0 0.0
    %5363 = vmatprep.subr.mxu0 0.0
    %5364 = vmatpush1.msra.mxu0 0.0
    %5365 = vmatprep.subr.mxu0 0.0
    %5366 = vmatpush1.msra.mxu0 0.0
    %5367 = vmatprep.subr.mxu0 0.0
    %5368 = vmatpush1.msra.mxu0 0.0
    %5369 = vmatprep.subr.mxu0 0.0
    %5370 = vmatpush1.msra.mxu0 0.0
    %5371 = vmatprep.subr.mxu0 0.0
    %5372 = vmatpush1.msra.mxu0 0.0
    %5373 = vmatprep.subr.mxu0 0.0
    %5374 = vmatpush1.msra.mxu0 0.0
    %5375 = vmatprep.subr.mxu0 0.0
    %5376 = vmatpush1.msra.mxu0 %v5269
    %5377 = vmatprep.subr.mxu0 0.0
    %5378 = vmatpush1.msra.mxu0 %v5268
    %5379 = vmatprep.subr.mxu0 0.0
    %5380 = vmatpush1.msra.mxu0 %v5267
    %5381 = vmatprep.subr.mxu0 0.0
    %5382 = vmatpush1.msra.mxu0 %v5266
    %5383 = vmatprep.subr.mxu0 0.0
    %5384 = vmatpush2.msra.mxu0 0.0
    %5385 = vmatprep.subr.mxu0 0.0
    %5386 = vmatpush2.msra.mxu0 0.0
    %5387 = vmatprep.subr.mxu0 0.0
    %5388 = vmatpush2.msra.mxu0 0.0
    %5389 = vmatprep.subr.mxu0 0.0
    %5390 = vmatpush2.msra.mxu0 0.0
    %5391 = vmatprep.subr.mxu0 0.0
    %5392 = vmatpush2.msra.mxu0 0.0
    %5393 = vmatprep.subr.mxu0 0.0
    %5394 = vmatpush2.msra.mxu0 0.0
    %5395 = vmatprep.subr.mxu0 0.0
    %5396 = vmatpush2.msra.mxu0 0.0
    %5397 = vmatprep.subr.mxu0 0.0
    %5398 = vmatpush2.msra.mxu0 0.0
    %5399 = vmatprep.subr.mxu0 0.0
    %5400 = vmatpush2.msra.mxu0 0.0
    %5401 = vmatprep.subr.mxu0 0.0
    %5402 = vmatpush2.msra.mxu0 0.0
    %5403 = vmatprep.subr.mxu0 0.0
    %5404 = vmatpush2.msra.mxu0 0.0
    %5405 = vmatprep.subr.mxu0 0.0
    %5406 = vmatpush2.msra.mxu0 0.0
    %5407 = vmatprep.subr.mxu0 0.0
    %5408 = vmatpush2.msra.mxu0 0.0
    %5409 = vmatprep.subr.mxu0 0.0
    %5410 = vmatpush2.msra.mxu0 0.0
    %5411 = vmatprep.subr.mxu0 0.0
    %5412 = vmatpush2.msra.mxu0 0.0
    %5413 = vmatprep.subr.mxu0 0.0
    %5414 = vmatpush2.msra.mxu0 0.0
    %5415 = vmatprep.mubr.f32.mxu0 0.0
    %5416 = vmatmul.mubr.f32.gmra.mxu0 %v5349
    %v5417 = vpop.f32.mrf.mxu0
    %v5418 = vadd.f32 %v5342, %v5417
    %v5419 = vpop.f32.mrf.mxu0
    %5420 = vdwg.mxu0
    %v5422 = vlaneseq
    %v5423 = vshrl.u32 %v5422, 7
    %v5424 = vsub.s32 0, %v5423
    %v5425 = vrot.slane %v5274, %v5424
    %v5427 = vadd.f32 %v5418, %v5425
    %v5428 = vxor.u32 %v5427, 2147483648
    %v5429 = vmul.f32 %v5428, 1.442695
    %v5430 = vpow.pop %v5429
    %v5431 = vadd.f32 %v5430, 1.0
    %v5432 = vrcp.pop %v5431
    %v5433 = vmul.f32 1.0, %v5432
    %v5434 = vtanh.pop %v5427
    %v5435 = vmul.f32 %v5433, %v4949
    %5437 = vrot.lane.b32.xlu0 %v5434, 64
    %v5438 = vpop.permute.xlu0 %5437
    %v5440 = vmul.f32 %v5433, %v5438
    %5442 = vrot.lane.b32.xlu0 %v5440, 32
    %v5443 = vpop.permute.xlu0 %5442
    %v5445 = vadd.f32 %v5435, %v5443
    %v5446 = vtanh.pop %v5445
    %5448 = vrot.lane.b32.xlu0 %v5446, 64
    %v5449 = vpop.permute.xlu0 %5448
    %v5451 = vmul.f32 %v5433, %v5449
    %5453 = vrot.lane.b32.xlu0 %v5451, 32
    %v5454 = vpop.permute.xlu0 %5453
    %v5455 = vsel %vm49, %v5454, 0
    %5457 = vmatprep.subr.mxu0 0.0
    %5458 = vmatpush1.msra.mxu0 0.0
    %5459 = vmatprep.subr.mxu0 0.0
    %5460 = vmatpush1.msra.mxu0 0.0
    %5461 = vmatprep.subr.mxu0 0.0
    %5462 = vmatpush1.msra.mxu0 0.0
    %5463 = vmatprep.subr.mxu0 0.0
    %5464 = vmatpush1.msra.mxu0 0.0
    %5465 = vmatprep.subr.mxu0 0.0
    %5466 = vmatpush1.msra.mxu0 0.0
    %5467 = vmatprep.subr.mxu0 0.0
    %5468 = vmatpush1.msra.mxu0 0.0
    %5469 = vmatprep.subr.mxu0 0.0
    %5470 = vmatpush1.msra.mxu0 0.0
    %5471 = vmatprep.subr.mxu0 0.0
    %5472 = vmatpush1.msra.mxu0 0.0
    %5473 = vmatprep.subr.mxu0 0.0
    %5474 = vmatpush1.msra.mxu0 0.0
    %5475 = vmatprep.subr.mxu0 0.0
    %5476 = vmatpush1.msra.mxu0 0.0
    %5477 = vmatprep.subr.mxu0 0.0
    %5478 = vmatpush1.msra.mxu0 0.0
    %5479 = vmatprep.subr.mxu0 0.0
    %5480 = vmatpush1.msra.mxu0 0.0
    %5481 = vmatprep.subr.mxu0 0.0
    %5482 = vmatpush1.msra.mxu0 %v2670
    %5483 = vmatprep.subr.mxu0 0.0
    %5484 = vmatpush1.msra.mxu0 %v2669
    %5485 = vmatprep.subr.mxu0 0.0
    %5486 = vmatpush1.msra.mxu0 %v2668
    %5487 = vmatprep.subr.mxu0 0.0
    %5488 = vmatpush1.msra.mxu0 %v2667
    %5489 = vmatprep.subr.mxu0 0.0
    %5490 = vmatpush2.msra.mxu0 0.0
    %5491 = vmatprep.subr.mxu0 0.0
    %5492 = vmatpush2.msra.mxu0 0.0
    %5493 = vmatprep.subr.mxu0 0.0
    %5494 = vmatpush2.msra.mxu0 0.0
    %5495 = vmatprep.subr.mxu0 0.0
    %5496 = vmatpush2.msra.mxu0 0.0
    %5497 = vmatprep.subr.mxu0 0.0
    %5498 = vmatpush2.msra.mxu0 0.0
    %5499 = vmatprep.subr.mxu0 0.0
    %5500 = vmatpush2.msra.mxu0 0.0
    %5501 = vmatprep.subr.mxu0 0.0
    %5502 = vmatpush2.msra.mxu0 0.0
    %5503 = vmatprep.subr.mxu0 0.0
    %5504 = vmatpush2.msra.mxu0 0.0
    %5505 = vmatprep.subr.mxu0 0.0
    %5506 = vmatpush2.msra.mxu0 0.0
    %5507 = vmatprep.subr.mxu0 0.0
    %5508 = vmatpush2.msra.mxu0 0.0
    %5509 = vmatprep.subr.mxu0 0.0
    %5510 = vmatpush2.msra.mxu0 0.0
    %5511 = vmatprep.subr.mxu0 0.0
    %5512 = vmatpush2.msra.mxu0 0.0
    %5513 = vmatprep.subr.mxu0 0.0
    %5514 = vmatpush2.msra.mxu0 0.0
    %5515 = vmatprep.subr.mxu0 0.0
    %5516 = vmatpush2.msra.mxu0 0.0
    %5517 = vmatprep.subr.mxu0 0.0
    %5518 = vmatpush2.msra.mxu0 0.0
    %5519 = vmatprep.subr.mxu0 0.0
    %5520 = vmatpush2.msra.mxu0 0.0
    %5521 = vmatprep.mubr.f32.mxu0 0.0
    %5522 = vmatmul.mubr.f32.gmra.mxu0 %v5455
    %v5523 = vpop.f32.mrf.mxu0
    %v5524 = vadd.f32 0.0, %v5523
    %v5525 = vpop.f32.mrf.mxu0
    %5526 = vdwg.mxu0
    %v5529 = vunpack.c.l.s4 1966171168
    %v5530 = vunpack.c.0.s8 %v5529
    %v5531 = vlaneseq
    %v5532 = vshrl.u32 %v5531, 7
    %v5533 = vsub.s32 %v5530, %v5532
    %v5534 = vrot.slane %v5524, %v5533
    %v5535 = vcombine.high %v5534, %v5534
    %v5537 = vunpack.c.l.s4 1966171168
    %v5538 = vunpack.c.0.s8 %v5537
    %v5539 = vlaneseq
    %v5540 = vshrl.u32 %v5539, 7
    %v5541 = vsub.s32 %v5538, %v5540
    %v5542 = vrot.slane %v5534, %v5541
    %v5544 = vunpack.c.l.s4 1966171168
    %v5545 = vunpack.c.0.s8 %v5544
    %v5546 = vlaneseq
    %v5547 = vshrl.u32 %v5546, 7
    %v5548 = vsub.s32 %v5545, %v5547
    %v5549 = vrot.slane %v5535, %v5548
    %5552 = vst [vmem:[#allocation4 + $0x5] sm:$0x1] %v5542
    %5553 = vst [vmem:[#allocation4 + $0xd] sm:$0x1] %v5549
    %v5554 = vsel %vm2674, %v5524, -1e+30
    %v5555 = vsel %vm3081, %v5554, -inf
    %5556 = vmax.xlane.f32.xlu0 %v5555
    %v5557 = vpop.xlane.xlu0 %5556
    %vm5558 = vcmp.eq.f32.partialorder %v5554, %v5557
    %v5559 = vsel %vm5558, %v2673, 128.0
    %v5560 = vsel %vm3081, %v5559, inf
    %5561 = vmin.xlane.f32.xlu0 %v5560
    %v5562 = vpop.xlane.xlu0 %5561
    %vm5563 = vcmp.eq.f32.partialorder %v2673, %v5562
    %v5564 = vsel %vm5563, 1, 0
    %v5565 = vcvt.s32.f32 %v5564
    %5566 = vmatprep.subr.mxu0 0.0
    %5567 = vmatpush1.msra.mxu0 %v2664
    %5568 = vmatprep.subr.mxu0 0.0
    %5569 = vmatpush1.msra.mxu0 %v2659
    %5570 = vmatprep.subr.mxu0 0.0
    %5571 = vmatpush1.msra.mxu0 %v2654
    %5572 = vmatprep.subr.mxu0 0.0
    %5573 = vmatpush1.msra.mxu0 %v2649
    %5574 = vmatprep.subr.mxu0 0.0
    %5575 = vmatpush1.msra.mxu0 %v2644
    %5576 = vmatprep.subr.mxu0 0.0
    %5577 = vmatpush1.msra.mxu0 %v2639
    %5578 = vmatprep.subr.mxu0 0.0
    %5579 = vmatpush1.msra.mxu0 %v2634
    %5580 = vmatprep.subr.mxu0 0.0
    %5581 = vmatpush1.msra.mxu0 %v2629
    %5582 = vmatprep.subr.mxu0 0.0
    %5583 = vmatpush1.msra.mxu0 %v2624
    %5584 = vmatprep.subr.mxu0 0.0
    %5585 = vmatpush1.msra.mxu0 %v2619
    %5586 = vmatprep.subr.mxu0 0.0
    %5587 = vmatpush1.msra.mxu0 %v2614
    %5588 = vmatprep.subr.mxu0 0.0
    %5589 = vmatpush1.msra.mxu0 %v2609
    %5590 = vmatprep.subr.mxu0 0.0
    %5591 = vmatpush1.msra.mxu0 %v2604
    %5592 = vmatprep.subr.mxu0 0.0
    %5593 = vmatpush1.msra.mxu0 %v2599
    %5594 = vmatprep.subr.mxu0 0.0
    %5595 = vmatpush1.msra.mxu0 %v2594
    %5596 = vmatprep.subr.mxu0 0.0
    %5597 = vmatpush1.msra.mxu0 %v2589
    %5598 = vmatprep.subr.mxu0 0.0
    %5599 = vmatpush2.msra.mxu0 0.0
    %5600 = vmatprep.subr.mxu0 0.0
    %5601 = vmatpush2.msra.mxu0 0.0
    %5602 = vmatprep.subr.mxu0 0.0
    %5603 = vmatpush2.msra.mxu0 0.0
    %5604 = vmatprep.subr.mxu0 0.0
    %5605 = vmatpush2.msra.mxu0 0.0
    %5606 = vmatprep.subr.mxu0 0.0
    %5607 = vmatpush2.msra.mxu0 0.0
    %5608 = vmatprep.subr.mxu0 0.0
    %5609 = vmatpush2.msra.mxu0 0.0
    %5610 = vmatprep.subr.mxu0 0.0
    %5611 = vmatpush2.msra.mxu0 0.0
    %5612 = vmatprep.subr.mxu0 0.0
    %5613 = vmatpush2.msra.mxu0 0.0
    %5614 = vmatprep.subr.mxu0 0.0
    %5615 = vmatpush2.msra.mxu0 0.0
    %5616 = vmatprep.subr.mxu0 0.0
    %5617 = vmatpush2.msra.mxu0 0.0
    %5618 = vmatprep.subr.mxu0 0.0
    %5619 = vmatpush2.msra.mxu0 0.0
    %5620 = vmatprep.subr.mxu0 0.0
    %5621 = vmatpush2.msra.mxu0 0.0
    %5622 = vmatprep.subr.mxu0 0.0
    %5623 = vmatpush2.msra.mxu0 0.0
    %5624 = vmatprep.subr.mxu0 0.0
    %5625 = vmatpush2.msra.mxu0 0.0
    %5626 = vmatprep.subr.mxu0 0.0
    %5627 = vmatpush2.msra.mxu0 0.0
    %5628 = vmatprep.subr.mxu0 0.0
    %5629 = vmatpush2.msra.mxu0 0.0
    %5630 = vmatprep.mubr.f32.mxu0 0.0
    %5631 = vmatmul.mubr.f32.gmra.mxu0 %v5565
    %v5632 = vpop.f32.mrf.mxu0
    %v5633 = vadd.f32 0.0, %v5632
    %v5634 = vpop.f32.mrf.mxu0
    %5635 = vdwg.mxu0
    %s5636 = sld [smem:[#allocation3 + $0x5]]
    %p5637 = scmp.gt.s32.totalorder %s5636, 0
    %s5638 = scalar_select %p5637, 1, 0
    %s5639 = scvt.s32.f32 %s5638
    %v5640 = vstv %s5639
    %v5641 = vmul.f32 %v5640, %v2455
    %s5642 = ssub.f32 1.0, %s5639
    %v5643 = vstv %s5642
    %v5644 = vmul.f32 %v5643, %v5633
    %v5646 = vrot.slane %v5644, 4
    %v5648 = vadd.f32 %v5641, %v5646
    %v5649 = vld [vmem:[%s7] sm:$0xff]
    %v5650 = vld [vmem:[%s7 + $0x8] sm:$0xff]
    %v5651 = vld [vmem:[%s7 + $0x10] sm:$0xff]
    %v5652 = vld [vmem:[%s7 + $0x18] sm:$0xff]
    %v5653 = vld [vmem:[%s8] sm:$0x1]
    %5654 = vmatprep.subr.mxu0 0.0
    %5655 = vmatpush1.msra.mxu0 0.0
    %5656 = vmatprep.subr.mxu0 0.0
    %5657 = vmatpush1.msra.mxu0 0.0
    %5658 = vmatprep.subr.mxu0 0.0
    %5659 = vmatpush1.msra.mxu0 0.0
    %5660 = vmatprep.subr.mxu0 0.0
    %5661 = vmatpush1.msra.mxu0 0.0
    %5662 = vmatprep.subr.mxu0 0.0
    %5663 = vmatpush1.msra.mxu0 0.0
    %5664 = vmatprep.subr.mxu0 0.0
    %5665 = vmatpush1.msra.mxu0 0.0
    %5666 = vmatprep.subr.mxu0 0.0
    %5667 = vmatpush1.msra.mxu0 0.0
    %5668 = vmatprep.subr.mxu0 0.0
    %5669 = vmatpush1.msra.mxu0 0.0
    %5670 = vmatprep.subr.mxu0 0.0
    %5671 = vmatpush1.msra.mxu0 0.0
    %5672 = vmatprep.subr.mxu0 0.0
    %5673 = vmatpush1.msra.mxu0 0.0
    %5674 = vmatprep.subr.mxu0 0.0
    %5675 = vmatpush1.msra.mxu0 0.0
    %5676 = vmatprep.subr.mxu0 0.0
    %5677 = vmatpush1.msra.mxu0 0.0
    %5678 = vmatprep.subr.mxu0 0.0
    %5679 = vmatpush1.msra.mxu0 %v5652
    %5680 = vmatprep.subr.mxu0 0.0
    %5681 = vmatpush1.msra.mxu0 %v5651
    %5682 = vmatprep.subr.mxu0 0.0
    %5683 = vmatpush1.msra.mxu0 %v5650
    %5684 = vmatprep.subr.mxu0 0.0
    %5685 = vmatpush1.msra.mxu0 %v5649
    %5686 = vmatprep.subr.mxu0 0.0
    %5687 = vmatpush2.msra.mxu0 0.0
    %5688 = vmatprep.subr.mxu0 0.0
    %5689 = vmatpush2.msra.mxu0 0.0
    %5690 = vmatprep.subr.mxu0 0.0
    %5691 = vmatpush2.msra.mxu0 0.0
    %5692 = vmatprep.subr.mxu0 0.0
    %5693 = vmatpush2.msra.mxu0 0.0
    %5694 = vmatprep.subr.mxu0 0.0
    %5695 = vmatpush2.msra.mxu0 0.0
    %5696 = vmatprep.subr.mxu0 0.0
    %5697 = vmatpush2.msra.mxu0 0.0
    %5698 = vmatprep.subr.mxu0 0.0
    %5699 = vmatpush2.msra.mxu0 0.0
    %5700 = vmatprep.subr.mxu0 0.0
    %5701 = vmatpush2.msra.mxu0 0.0
    %5702 = vmatprep.subr.mxu0 0.0
    %5703 = vmatpush2.msra.mxu0 0.0
    %5704 = vmatprep.subr.mxu0 0.0
    %5705 = vmatpush2.msra.mxu0 0.0
    %5706 = vmatprep.subr.mxu0 0.0
    %5707 = vmatpush2.msra.mxu0 0.0
    %5708 = vmatprep.subr.mxu0 0.0
    %5709 = vmatpush2.msra.mxu0 0.0
    %5710 = vmatprep.subr.mxu0 0.0
    %5711 = vmatpush2.msra.mxu0 0.0
    %5712 = vmatprep.subr.mxu0 0.0
    %5713 = vmatpush2.msra.mxu0 0.0
    %5714 = vmatprep.subr.mxu0 0.0
    %5715 = vmatpush2.msra.mxu0 0.0
    %5716 = vmatprep.subr.mxu0 0.0
    %5717 = vmatpush2.msra.mxu0 0.0
    %5718 = vmatprep.mubr.f32.mxu0 0.0
    %5719 = vmatmul.mubr.f32.gmra.mxu0 %v5349
    %v5720 = vpop.f32.mrf.mxu0
    %v5721 = vadd.f32 0.0, %v5720
    %v5722 = vpop.f32.mrf.mxu0
    %5723 = vdwg.mxu0
    %v5725 = vrot.slane %v5721, 4
    %v5727 = vadd.f32 %v5648, %v5725
    %v5729 = vlaneseq
    %v5730 = vshrl.u32 %v5729, 7
    %v5731 = vsub.s32 0, %v5730
    %v5732 = vrot.slane %v5653, %v5731
    %v5734 = vadd.f32 %v5727, %v5732
    %v5735 = vxor.u32 %v5734, 2147483648
    %v5736 = vmul.f32 %v5735, 1.442695
    %v5737 = vpow.pop %v5736
    %v5738 = vadd.f32 %v5737, 1.0
    %v5739 = vrcp.pop %v5738
    %v5740 = vmul.f32 1.0, %v5739
    %v5741 = vtanh.pop %v5734
    %v5743 = vrot.slane %v5259, 6
    %v5745 = vmul.f32 %v5740, %v5743
    %5747 = vrot.lane.b32.xlu0 %v5741, 64
    %v5748 = vpop.permute.xlu0 %5747
    %v5750 = vmul.f32 %v5740, %v5748
    %5752 = vrot.lane.b32.xlu0 %v5750, 32
    %v5753 = vpop.permute.xlu0 %5752
    %v5755 = vadd.f32 %v5745, %v5753
    %v5756 = vtanh.pop %v5755
    %5758 = vrot.lane.b32.xlu0 %v5756, 64
    %v5759 = vpop.permute.xlu0 %5758
    %v5761 = vmul.f32 %v5740, %v5759
    %v5762 = vld [vmem:[%s2785] sm:$0xff]
    %v5763 = vld [vmem:[%s2785 + $0x8] sm:$0xff]
    %v5764 = vld [vmem:[%s2785 + $0x10] sm:$0xff]
    %v5765 = vld [vmem:[%s2785 + $0x18] sm:$0xff]
    %v5766 = vld [vmem:[%s2790] sm:$0xff]
    %v5767 = vld [vmem:[%s2790 + $0x8] sm:$0xff]
    %v5768 = vld [vmem:[%s2790 + $0x10] sm:$0xff]
    %v5769 = vld [vmem:[%s2790 + $0x18] sm:$0xff]
    %v5770 = vld [vmem:[%s2795] sm:$0x1]
    %5771 = vmatprep.subr.mxu0 0.0
    %5772 = vmatpush1.msra.mxu0 0.0
    %5773 = vmatprep.subr.mxu0 0.0
    %5774 = vmatpush1.msra.mxu0 0.0
    %5775 = vmatprep.subr.mxu0 0.0
    %5776 = vmatpush1.msra.mxu0 0.0
    %5777 = vmatprep.subr.mxu0 0.0
    %5778 = vmatpush1.msra.mxu0 0.0
    %5779 = vmatprep.subr.mxu0 0.0
    %5780 = vmatpush1.msra.mxu0 0.0
    %5781 = vmatprep.subr.mxu0 0.0
    %5782 = vmatpush1.msra.mxu0 0.0
    %5783 = vmatprep.subr.mxu0 0.0
    %5784 = vmatpush1.msra.mxu0 0.0
    %5785 = vmatprep.subr.mxu0 0.0
    %5786 = vmatpush1.msra.mxu0 0.0
    %5787 = vmatprep.subr.mxu0 0.0
    %5788 = vmatpush1.msra.mxu0 0.0
    %5789 = vmatprep.subr.mxu0 0.0
    %5790 = vmatpush1.msra.mxu0 0.0
    %5791 = vmatprep.subr.mxu0 0.0
    %5792 = vmatpush1.msra.mxu0 0.0
    %5793 = vmatprep.subr.mxu0 0.0
    %5794 = vmatpush1.msra.mxu0 0.0
    %5795 = vmatprep.subr.mxu0 0.0
    %5796 = vmatpush1.msra.mxu0 %v5769
    %5797 = vmatprep.subr.mxu0 0.0
    %5798 = vmatpush1.msra.mxu0 %v5768
    %5799 = vmatprep.subr.mxu0 0.0
    %5800 = vmatpush1.msra.mxu0 %v5767
    %5801 = vmatprep.subr.mxu0 0.0
    %5802 = vmatpush1.msra.mxu0 %v5766
    %5803 = vmatprep.subr.mxu0 0.0
    %5804 = vmatpush2.msra.mxu0 0.0
    %5805 = vmatprep.subr.mxu0 0.0
    %5806 = vmatpush2.msra.mxu0 0.0
    %5807 = vmatprep.subr.mxu0 0.0
    %5808 = vmatpush2.msra.mxu0 0.0
    %5809 = vmatprep.subr.mxu0 0.0
    %5810 = vmatpush2.msra.mxu0 0.0
    %5811 = vmatprep.subr.mxu0 0.0
    %5812 = vmatpush2.msra.mxu0 0.0
    %5813 = vmatprep.subr.mxu0 0.0
    %5814 = vmatpush2.msra.mxu0 0.0
    %5815 = vmatprep.subr.mxu0 0.0
    %5816 = vmatpush2.msra.mxu0 0.0
    %5817 = vmatprep.subr.mxu0 0.0
    %5818 = vmatpush2.msra.mxu0 0.0
    %5819 = vmatprep.subr.mxu0 0.0
    %5820 = vmatpush2.msra.mxu0 0.0
    %5821 = vmatprep.subr.mxu0 0.0
    %5822 = vmatpush2.msra.mxu0 0.0
    %5823 = vmatprep.subr.mxu0 0.0
    %5824 = vmatpush2.msra.mxu0 0.0
    %5825 = vmatprep.subr.mxu0 0.0
    %5826 = vmatpush2.msra.mxu0 0.0
    %5827 = vmatprep.subr.mxu0 0.0
    %5828 = vmatpush2.msra.mxu0 0.0
    %5829 = vmatprep.subr.mxu0 0.0
    %5830 = vmatpush2.msra.mxu0 0.0
    %5831 = vmatprep.subr.mxu0 0.0
    %5832 = vmatpush2.msra.mxu0 0.0
    %5833 = vmatprep.subr.mxu0 0.0
    %5834 = vmatpush2.msra.mxu0 0.0
    %5835 = vmatprep.mubr.f32.mxu0 0.0
    %5836 = vmatmul.mubr.f32.gmra.mxu0 %v5455
    %v5837 = vpop.f32.mrf.mxu0
    %v5838 = vadd.f32 0.0, %v5837
    %v5839 = vpop.f32.mrf.mxu0
    %5840 = vdwg.mxu0
    %v5842 = vrot.slane %v5761, 4
    %5843 = vrot.lane.b32.xlu0 %v5842, 32
    %v5844 = vpop.permute.xlu0 %5843
    %v5845 = vsel %vm49, %v5844, 0
    %5847 = vmatprep.subr.mxu0 0.0
    %5848 = vmatpush1.msra.mxu0 0.0
    %5849 = vmatprep.subr.mxu0 0.0
    %5850 = vmatpush1.msra.mxu0 0.0
    %5851 = vmatprep.subr.mxu0 0.0
    %5852 = vmatpush1.msra.mxu0 0.0
    %5853 = vmatprep.subr.mxu0 0.0
    %5854 = vmatpush1.msra.mxu0 0.0
    %5855 = vmatprep.subr.mxu0 0.0
    %5856 = vmatpush1.msra.mxu0 0.0
    %5857 = vmatprep.subr.mxu0 0.0
    %5858 = vmatpush1.msra.mxu0 0.0
    %5859 = vmatprep.subr.mxu0 0.0
    %5860 = vmatpush1.msra.mxu0 0.0
    %5861 = vmatprep.subr.mxu0 0.0
    %5862 = vmatpush1.msra.mxu0 0.0
    %5863 = vmatprep.subr.mxu0 0.0
    %5864 = vmatpush1.msra.mxu0 0.0
    %5865 = vmatprep.subr.mxu0 0.0
    %5866 = vmatpush1.msra.mxu0 0.0
    %5867 = vmatprep.subr.mxu0 0.0
    %5868 = vmatpush1.msra.mxu0 0.0
    %5869 = vmatprep.subr.mxu0 0.0
    %5870 = vmatpush1.msra.mxu0 0.0
    %5871 = vmatprep.subr.mxu0 0.0
    %5872 = vmatpush1.msra.mxu0 %v5765
    %5873 = vmatprep.subr.mxu0 0.0
    %5874 = vmatpush1.msra.mxu0 %v5764
    %5875 = vmatprep.subr.mxu0 0.0
    %5876 = vmatpush1.msra.mxu0 %v5763
    %5877 = vmatprep.subr.mxu0 0.0
    %5878 = vmatpush1.msra.mxu0 %v5762
    %5879 = vmatprep.subr.mxu0 0.0
    %5880 = vmatpush2.msra.mxu0 0.0
    %5881 = vmatprep.subr.mxu0 0.0
    %5882 = vmatpush2.msra.mxu0 0.0
    %5883 = vmatprep.subr.mxu0 0.0
    %5884 = vmatpush2.msra.mxu0 0.0
    %5885 = vmatprep.subr.mxu0 0.0
    %5886 = vmatpush2.msra.mxu0 0.0
    %5887 = vmatprep.subr.mxu0 0.0
    %5888 = vmatpush2.msra.mxu0 0.0
    %5889 = vmatprep.subr.mxu0 0.0
    %5890 = vmatpush2.msra.mxu0 0.0
    %5891 = vmatprep.subr.mxu0 0.0
    %5892 = vmatpush2.msra.mxu0 0.0
    %5893 = vmatprep.subr.mxu0 0.0
    %5894 = vmatpush2.msra.mxu0 0.0
    %5895 = vmatprep.subr.mxu0 0.0
    %5896 = vmatpush2.msra.mxu0 0.0
    %5897 = vmatprep.subr.mxu0 0.0
    %5898 = vmatpush2.msra.mxu0 0.0
    %5899 = vmatprep.subr.mxu0 0.0
    %5900 = vmatpush2.msra.mxu0 0.0
    %5901 = vmatprep.subr.mxu0 0.0
    %5902 = vmatpush2.msra.mxu0 0.0
    %5903 = vmatprep.subr.mxu0 0.0
    %5904 = vmatpush2.msra.mxu0 0.0
    %5905 = vmatprep.subr.mxu0 0.0
    %5906 = vmatpush2.msra.mxu0 0.0
    %5907 = vmatprep.subr.mxu0 0.0
    %5908 = vmatpush2.msra.mxu0 0.0
    %5909 = vmatprep.subr.mxu0 0.0
    %5910 = vmatpush2.msra.mxu0 0.0
    %5911 = vmatprep.mubr.f32.mxu0 0.0
    %5912 = vmatmul.mubr.f32.gmra.mxu0 %v5845
    %v5913 = vpop.f32.mrf.mxu0
    %v5914 = vadd.f32 %v5838, %v5913
    %v5915 = vpop.f32.mrf.mxu0
    %5916 = vdwg.mxu0
    %v5918 = vlaneseq
    %v5919 = vshrl.u32 %v5918, 7
    %v5920 = vsub.s32 0, %v5919
    %v5921 = vrot.slane %v5770, %v5920
    %v5923 = vadd.f32 %v5914, %v5921
    %v5924 = vxor.u32 %v5923, 2147483648
    %v5925 = vmul.f32 %v5924, 1.442695
    %v5926 = vpow.pop %v5925
    %v5927 = vadd.f32 %v5926, 1.0
    %v5928 = vrcp.pop %v5927
    %v5929 = vmul.f32 1.0, %v5928
    %v5930 = vtanh.pop %v5923
    %v5931 = vmul.f32 %v5929, %v5445
    %5933 = vrot.lane.b32.xlu0 %v5930, 64
    %v5934 = vpop.permute.xlu0 %5933
    %v5936 = vmul.f32 %v5929, %v5934
    %5938 = vrot.lane.b32.xlu0 %v5936, 32
    %v5939 = vpop.permute.xlu0 %5938
    %v5941 = vadd.f32 %v5931, %v5939
    %v5942 = vtanh.pop %v5941
    %5944 = vrot.lane.b32.xlu0 %v5942, 64
    %v5945 = vpop.permute.xlu0 %5944
    %v5947 = vmul.f32 %v5929, %v5945
    %5949 = vrot.lane.b32.xlu0 %v5947, 32
    %v5950 = vpop.permute.xlu0 %5949
    %v5951 = vsel %vm49, %v5950, 0
    %5953 = vmatprep.subr.mxu0 0.0
    %5954 = vmatpush1.msra.mxu0 0.0
    %5955 = vmatprep.subr.mxu0 0.0
    %5956 = vmatpush1.msra.mxu0 0.0
    %5957 = vmatprep.subr.mxu0 0.0
    %5958 = vmatpush1.msra.mxu0 0.0
    %5959 = vmatprep.subr.mxu0 0.0
    %5960 = vmatpush1.msra.mxu0 0.0
    %5961 = vmatprep.subr.mxu0 0.0
    %5962 = vmatpush1.msra.mxu0 0.0
    %5963 = vmatprep.subr.mxu0 0.0
    %5964 = vmatpush1.msra.mxu0 0.0
    %5965 = vmatprep.subr.mxu0 0.0
    %5966 = vmatpush1.msra.mxu0 0.0
    %5967 = vmatprep.subr.mxu0 0.0
    %5968 = vmatpush1.msra.mxu0 0.0
    %5969 = vmatprep.subr.mxu0 0.0
    %5970 = vmatpush1.msra.mxu0 0.0
    %5971 = vmatprep.subr.mxu0 0.0
    %5972 = vmatpush1.msra.mxu0 0.0
    %5973 = vmatprep.subr.mxu0 0.0
    %5974 = vmatpush1.msra.mxu0 0.0
    %5975 = vmatprep.subr.mxu0 0.0
    %5976 = vmatpush1.msra.mxu0 0.0
    %5977 = vmatprep.subr.mxu0 0.0
    %5978 = vmatpush1.msra.mxu0 %v2670
    %5979 = vmatprep.subr.mxu0 0.0
    %5980 = vmatpush1.msra.mxu0 %v2669
    %5981 = vmatprep.subr.mxu0 0.0
    %5982 = vmatpush1.msra.mxu0 %v2668
    %5983 = vmatprep.subr.mxu0 0.0
    %5984 = vmatpush1.msra.mxu0 %v2667
    %5985 = vmatprep.subr.mxu0 0.0
    %5986 = vmatpush2.msra.mxu0 0.0
    %5987 = vmatprep.subr.mxu0 0.0
    %5988 = vmatpush2.msra.mxu0 0.0
    %5989 = vmatprep.subr.mxu0 0.0
    %5990 = vmatpush2.msra.mxu0 0.0
    %5991 = vmatprep.subr.mxu0 0.0
    %5992 = vmatpush2.msra.mxu0 0.0
    %5993 = vmatprep.subr.mxu0 0.0
    %5994 = vmatpush2.msra.mxu0 0.0
    %5995 = vmatprep.subr.mxu0 0.0
    %5996 = vmatpush2.msra.mxu0 0.0
    %5997 = vmatprep.subr.mxu0 0.0
    %5998 = vmatpush2.msra.mxu0 0.0
    %5999 = vmatprep.subr.mxu0 0.0
    %6000 = vmatpush2.msra.mxu0 0.0
    %6001 = vmatprep.subr.mxu0 0.0
    %6002 = vmatpush2.msra.mxu0 0.0
    %6003 = vmatprep.subr.mxu0 0.0
    %6004 = vmatpush2.msra.mxu0 0.0
    %6005 = vmatprep.subr.mxu0 0.0
    %6006 = vmatpush2.msra.mxu0 0.0
    %6007 = vmatprep.subr.mxu0 0.0
    %6008 = vmatpush2.msra.mxu0 0.0
    %6009 = vmatprep.subr.mxu0 0.0
    %6010 = vmatpush2.msra.mxu0 0.0
    %6011 = vmatprep.subr.mxu0 0.0
    %6012 = vmatpush2.msra.mxu0 0.0
    %6013 = vmatprep.subr.mxu0 0.0
    %6014 = vmatpush2.msra.mxu0 0.0
    %6015 = vmatprep.subr.mxu0 0.0
    %6016 = vmatpush2.msra.mxu0 0.0
    %6017 = vmatprep.mubr.f32.mxu0 0.0
    %6018 = vmatmul.mubr.f32.gmra.mxu0 %v5951
    %v6019 = vpop.f32.mrf.mxu0
    %v6020 = vadd.f32 0.0, %v6019
    %v6021 = vpop.f32.mrf.mxu0
    %6022 = vdwg.mxu0
    %v6025 = vunpack.c.l.s4 1966171168
    %v6026 = vunpack.c.0.s8 %v6025
    %v6027 = vlaneseq
    %v6028 = vshrl.u32 %v6027, 7
    %v6029 = vsub.s32 %v6026, %v6028
    %v6030 = vrot.slane %v6020, %v6029
    %v6031 = vcombine.high %v6030, %v6030
    %v6033 = vunpack.c.l.s4 1966171168
    %v6034 = vunpack.c.0.s8 %v6033
    %v6035 = vlaneseq
    %v6036 = vshrl.u32 %v6035, 7
    %v6037 = vsub.s32 %v6034, %v6036
    %v6038 = vrot.slane %v6030, %v6037
    %v6040 = vunpack.c.l.s4 1966171168
    %v6041 = vunpack.c.0.s8 %v6040
    %v6042 = vlaneseq
    %v6043 = vshrl.u32 %v6042, 7
    %v6044 = vsub.s32 %v6041, %v6043
    %v6045 = vrot.slane %v6031, %v6044
    %6048 = vst [vmem:[#allocation4 + $0x6] sm:$0x1] %v6038
    %6049 = vst [vmem:[#allocation4 + $0xe] sm:$0x1] %v6045
    %v6050 = vsel %vm2674, %v6020, -1e+30
    %v6051 = vsel %vm3081, %v6050, -inf
    %6052 = vmax.xlane.f32.xlu0 %v6051
    %v6053 = vpop.xlane.xlu0 %6052
    %vm6054 = vcmp.eq.f32.partialorder %v6050, %v6053
    %v6055 = vsel %vm6054, %v2673, 128.0
    %v6056 = vsel %vm3081, %v6055, inf
    %6057 = vmin.xlane.f32.xlu0 %v6056
    %v6058 = vpop.xlane.xlu0 %6057
    %vm6059 = vcmp.eq.f32.partialorder %v2673, %v6058
    %v6060 = vsel %vm6059, 1, 0
    %v6061 = vcvt.s32.f32 %v6060
    %6062 = vmatprep.subr.mxu0 0.0
    %6063 = vmatpush1.msra.mxu0 %v2664
    %6064 = vmatprep.subr.mxu0 0.0
    %6065 = vmatpush1.msra.mxu0 %v2659
    %6066 = vmatprep.subr.mxu0 0.0
    %6067 = vmatpush1.msra.mxu0 %v2654
    %6068 = vmatprep.subr.mxu0 0.0
    %6069 = vmatpush1.msra.mxu0 %v2649
    %6070 = vmatprep.subr.mxu0 0.0
    %6071 = vmatpush1.msra.mxu0 %v2644
    %6072 = vmatprep.subr.mxu0 0.0
    %6073 = vmatpush1.msra.mxu0 %v2639
    %6074 = vmatprep.subr.mxu0 0.0
    %6075 = vmatpush1.msra.mxu0 %v2634
    %6076 = vmatprep.subr.mxu0 0.0
    %6077 = vmatpush1.msra.mxu0 %v2629
    %6078 = vmatprep.subr.mxu0 0.0
    %6079 = vmatpush1.msra.mxu0 %v2624
    %6080 = vmatprep.subr.mxu0 0.0
    %6081 = vmatpush1.msra.mxu0 %v2619
    %6082 = vmatprep.subr.mxu0 0.0
    %6083 = vmatpush1.msra.mxu0 %v2614
    %6084 = vmatprep.subr.mxu0 0.0
    %6085 = vmatpush1.msra.mxu0 %v2609
    %6086 = vmatprep.subr.mxu0 0.0
    %6087 = vmatpush1.msra.mxu0 %v2604
    %6088 = vmatprep.subr.mxu0 0.0
    %6089 = vmatpush1.msra.mxu0 %v2599
    %6090 = vmatprep.subr.mxu0 0.0
    %6091 = vmatpush1.msra.mxu0 %v2594
    %6092 = vmatprep.subr.mxu0 0.0
    %6093 = vmatpush1.msra.mxu0 %v2589
    %6094 = vmatprep.subr.mxu0 0.0
    %6095 = vmatpush2.msra.mxu0 0.0
    %6096 = vmatprep.subr.mxu0 0.0
    %6097 = vmatpush2.msra.mxu0 0.0
    %6098 = vmatprep.subr.mxu0 0.0
    %6099 = vmatpush2.msra.mxu0 0.0
    %6100 = vmatprep.subr.mxu0 0.0
    %6101 = vmatpush2.msra.mxu0 0.0
    %6102 = vmatprep.subr.mxu0 0.0
    %6103 = vmatpush2.msra.mxu0 0.0
    %6104 = vmatprep.subr.mxu0 0.0
    %6105 = vmatpush2.msra.mxu0 0.0
    %6106 = vmatprep.subr.mxu0 0.0
    %6107 = vmatpush2.msra.mxu0 0.0
    %6108 = vmatprep.subr.mxu0 0.0
    %6109 = vmatpush2.msra.mxu0 0.0
    %6110 = vmatprep.subr.mxu0 0.0
    %6111 = vmatpush2.msra.mxu0 0.0
    %6112 = vmatprep.subr.mxu0 0.0
    %6113 = vmatpush2.msra.mxu0 0.0
    %6114 = vmatprep.subr.mxu0 0.0
    %6115 = vmatpush2.msra.mxu0 0.0
    %6116 = vmatprep.subr.mxu0 0.0
    %6117 = vmatpush2.msra.mxu0 0.0
    %6118 = vmatprep.subr.mxu0 0.0
    %6119 = vmatpush2.msra.mxu0 0.0
    %6120 = vmatprep.subr.mxu0 0.0
    %6121 = vmatpush2.msra.mxu0 0.0
    %6122 = vmatprep.subr.mxu0 0.0
    %6123 = vmatpush2.msra.mxu0 0.0
    %6124 = vmatprep.subr.mxu0 0.0
    %6125 = vmatpush2.msra.mxu0 0.0
    %6126 = vmatprep.mubr.f32.mxu0 0.0
    %6127 = vmatmul.mubr.f32.gmra.mxu0 %v6061
    %v6128 = vpop.f32.mrf.mxu0
    %v6129 = vadd.f32 0.0, %v6128
    %v6130 = vpop.f32.mrf.mxu0
    %6131 = vdwg.mxu0
    %s6132 = sld [smem:[#allocation3 + $0x6]]
    %p6133 = scmp.gt.s32.totalorder %s6132, 0
    %s6134 = scalar_select %p6133, 1, 0
    %s6135 = scvt.s32.f32 %s6134
    %v6136 = vstv %s6135
    %v6137 = vmul.f32 %v6136, %v2455
    %s6138 = ssub.f32 1.0, %s6135
    %v6139 = vstv %s6138
    %v6140 = vmul.f32 %v6139, %v6129
    %v6142 = vrot.slane %v6140, 2
    %v6144 = vadd.f32 %v6137, %v6142
    %v6145 = vld [vmem:[%s7] sm:$0xff]
    %v6146 = vld [vmem:[%s7 + $0x8] sm:$0xff]
    %v6147 = vld [vmem:[%s7 + $0x10] sm:$0xff]
    %v6148 = vld [vmem:[%s7 + $0x18] sm:$0xff]
    %v6149 = vld [vmem:[%s8] sm:$0x1]
    %6150 = vmatprep.subr.mxu0 0.0
    %6151 = vmatpush1.msra.mxu0 0.0
    %6152 = vmatprep.subr.mxu0 0.0
    %6153 = vmatpush1.msra.mxu0 0.0
    %6154 = vmatprep.subr.mxu0 0.0
    %6155 = vmatpush1.msra.mxu0 0.0
    %6156 = vmatprep.subr.mxu0 0.0
    %6157 = vmatpush1.msra.mxu0 0.0
    %6158 = vmatprep.subr.mxu0 0.0
    %6159 = vmatpush1.msra.mxu0 0.0
    %6160 = vmatprep.subr.mxu0 0.0
    %6161 = vmatpush1.msra.mxu0 0.0
    %6162 = vmatprep.subr.mxu0 0.0
    %6163 = vmatpush1.msra.mxu0 0.0
    %6164 = vmatprep.subr.mxu0 0.0
    %6165 = vmatpush1.msra.mxu0 0.0
    %6166 = vmatprep.subr.mxu0 0.0
    %6167 = vmatpush1.msra.mxu0 0.0
    %6168 = vmatprep.subr.mxu0 0.0
    %6169 = vmatpush1.msra.mxu0 0.0
    %6170 = vmatprep.subr.mxu0 0.0
    %6171 = vmatpush1.msra.mxu0 0.0
    %6172 = vmatprep.subr.mxu0 0.0
    %6173 = vmatpush1.msra.mxu0 0.0
    %6174 = vmatprep.subr.mxu0 0.0
    %6175 = vmatpush1.msra.mxu0 %v6148
    %6176 = vmatprep.subr.mxu0 0.0
    %6177 = vmatpush1.msra.mxu0 %v6147
    %6178 = vmatprep.subr.mxu0 0.0
    %6179 = vmatpush1.msra.mxu0 %v6146
    %6180 = vmatprep.subr.mxu0 0.0
    %6181 = vmatpush1.msra.mxu0 %v6145
    %6182 = vmatprep.subr.mxu0 0.0
    %6183 = vmatpush2.msra.mxu0 0.0
    %6184 = vmatprep.subr.mxu0 0.0
    %6185 = vmatpush2.msra.mxu0 0.0
    %6186 = vmatprep.subr.mxu0 0.0
    %6187 = vmatpush2.msra.mxu0 0.0
    %6188 = vmatprep.subr.mxu0 0.0
    %6189 = vmatpush2.msra.mxu0 0.0
    %6190 = vmatprep.subr.mxu0 0.0
    %6191 = vmatpush2.msra.mxu0 0.0
    %6192 = vmatprep.subr.mxu0 0.0
    %6193 = vmatpush2.msra.mxu0 0.0
    %6194 = vmatprep.subr.mxu0 0.0
    %6195 = vmatpush2.msra.mxu0 0.0
    %6196 = vmatprep.subr.mxu0 0.0
    %6197 = vmatpush2.msra.mxu0 0.0
    %6198 = vmatprep.subr.mxu0 0.0
    %6199 = vmatpush2.msra.mxu0 0.0
    %6200 = vmatprep.subr.mxu0 0.0
    %6201 = vmatpush2.msra.mxu0 0.0
    %6202 = vmatprep.subr.mxu0 0.0
    %6203 = vmatpush2.msra.mxu0 0.0
    %6204 = vmatprep.subr.mxu0 0.0
    %6205 = vmatpush2.msra.mxu0 0.0
    %6206 = vmatprep.subr.mxu0 0.0
    %6207 = vmatpush2.msra.mxu0 0.0
    %6208 = vmatprep.subr.mxu0 0.0
    %6209 = vmatpush2.msra.mxu0 0.0
    %6210 = vmatprep.subr.mxu0 0.0
    %6211 = vmatpush2.msra.mxu0 0.0
    %6212 = vmatprep.subr.mxu0 0.0
    %6213 = vmatpush2.msra.mxu0 0.0
    %6214 = vmatprep.mubr.f32.mxu0 0.0
    %6215 = vmatmul.mubr.f32.gmra.mxu0 %v5845
    %v6216 = vpop.f32.mrf.mxu0
    %v6217 = vadd.f32 0.0, %v6216
    %v6218 = vpop.f32.mrf.mxu0
    %6219 = vdwg.mxu0
    %v6221 = vrot.slane %v6217, 2
    %v6223 = vadd.f32 %v6144, %v6221
    %v6225 = vlaneseq
    %v6226 = vshrl.u32 %v6225, 7
    %v6227 = vsub.s32 0, %v6226
    %v6228 = vrot.slane %v6149, %v6227
    %v6230 = vadd.f32 %v6223, %v6228
    %v6231 = vxor.u32 %v6230, 2147483648
    %v6232 = vmul.f32 %v6231, 1.442695
    %v6233 = vpow.pop %v6232
    %v6234 = vadd.f32 %v6233, 1.0
    %v6235 = vrcp.pop %v6234
    %v6236 = vmul.f32 1.0, %v6235
    %v6237 = vtanh.pop %v6230
    %v6239 = vrot.slane %v5755, 6
    %v6241 = vmul.f32 %v6236, %v6239
    %6243 = vrot.lane.b32.xlu0 %v6237, 64
    %v6244 = vpop.permute.xlu0 %6243
    %v6246 = vmul.f32 %v6236, %v6244
    %6248 = vrot.lane.b32.xlu0 %v6246, 32
    %v6249 = vpop.permute.xlu0 %6248
    %v6251 = vadd.f32 %v6241, %v6249
    %v6252 = vtanh.pop %v6251
    %6254 = vrot.lane.b32.xlu0 %v6252, 64
    %v6255 = vpop.permute.xlu0 %6254
    %v6257 = vmul.f32 %v6236, %v6255
    %v6258 = vld [vmem:[%s2785] sm:$0xff]
    %v6259 = vld [vmem:[%s2785 + $0x8] sm:$0xff]
    %v6260 = vld [vmem:[%s2785 + $0x10] sm:$0xff]
    %v6261 = vld [vmem:[%s2785 + $0x18] sm:$0xff]
    %v6262 = vld [vmem:[%s2790] sm:$0xff]
    %v6263 = vld [vmem:[%s2790 + $0x8] sm:$0xff]
    %v6264 = vld [vmem:[%s2790 + $0x10] sm:$0xff]
    %v6265 = vld [vmem:[%s2790 + $0x18] sm:$0xff]
    %v6266 = vld [vmem:[%s2795] sm:$0x1]
    %6267 = vmatprep.subr.mxu0 0.0
    %6268 = vmatpush1.msra.mxu0 0.0
    %6269 = vmatprep.subr.mxu0 0.0
    %6270 = vmatpush1.msra.mxu0 0.0
    %6271 = vmatprep.subr.mxu0 0.0
    %6272 = vmatpush1.msra.mxu0 0.0
    %6273 = vmatprep.subr.mxu0 0.0
    %6274 = vmatpush1.msra.mxu0 0.0
    %6275 = vmatprep.subr.mxu0 0.0
    %6276 = vmatpush1.msra.mxu0 0.0
    %6277 = vmatprep.subr.mxu0 0.0
    %6278 = vmatpush1.msra.mxu0 0.0
    %6279 = vmatprep.subr.mxu0 0.0
    %6280 = vmatpush1.msra.mxu0 0.0
    %6281 = vmatprep.subr.mxu0 0.0
    %6282 = vmatpush1.msra.mxu0 0.0
    %6283 = vmatprep.subr.mxu0 0.0
    %6284 = vmatpush1.msra.mxu0 0.0
    %6285 = vmatprep.subr.mxu0 0.0
    %6286 = vmatpush1.msra.mxu0 0.0
    %6287 = vmatprep.subr.mxu0 0.0
    %6288 = vmatpush1.msra.mxu0 0.0
    %6289 = vmatprep.subr.mxu0 0.0
    %6290 = vmatpush1.msra.mxu0 0.0
    %6291 = vmatprep.subr.mxu0 0.0
    %6292 = vmatpush1.msra.mxu0 %v6265
    %6293 = vmatprep.subr.mxu0 0.0
    %6294 = vmatpush1.msra.mxu0 %v6264
    %6295 = vmatprep.subr.mxu0 0.0
    %6296 = vmatpush1.msra.mxu0 %v6263
    %6297 = vmatprep.subr.mxu0 0.0
    %6298 = vmatpush1.msra.mxu0 %v6262
    %6299 = vmatprep.subr.mxu0 0.0
    %6300 = vmatpush2.msra.mxu0 0.0
    %6301 = vmatprep.subr.mxu0 0.0
    %6302 = vmatpush2.msra.mxu0 0.0
    %6303 = vmatprep.subr.mxu0 0.0
    %6304 = vmatpush2.msra.mxu0 0.0
    %6305 = vmatprep.subr.mxu0 0.0
    %6306 = vmatpush2.msra.mxu0 0.0
    %6307 = vmatprep.subr.mxu0 0.0
    %6308 = vmatpush2.msra.mxu0 0.0
    %6309 = vmatprep.subr.mxu0 0.0
    %6310 = vmatpush2.msra.mxu0 0.0
    %6311 = vmatprep.subr.mxu0 0.0
    %6312 = vmatpush2.msra.mxu0 0.0
    %6313 = vmatprep.subr.mxu0 0.0
    %6314 = vmatpush2.msra.mxu0 0.0
    %6315 = vmatprep.subr.mxu0 0.0
    %6316 = vmatpush2.msra.mxu0 0.0
    %6317 = vmatprep.subr.mxu0 0.0
    %6318 = vmatpush2.msra.mxu0 0.0
    %6319 = vmatprep.subr.mxu0 0.0
    %6320 = vmatpush2.msra.mxu0 0.0
    %6321 = vmatprep.subr.mxu0 0.0
    %6322 = vmatpush2.msra.mxu0 0.0
    %6323 = vmatprep.subr.mxu0 0.0
    %6324 = vmatpush2.msra.mxu0 0.0
    %6325 = vmatprep.subr.mxu0 0.0
    %6326 = vmatpush2.msra.mxu0 0.0
    %6327 = vmatprep.subr.mxu0 0.0
    %6328 = vmatpush2.msra.mxu0 0.0
    %6329 = vmatprep.subr.mxu0 0.0
    %6330 = vmatpush2.msra.mxu0 0.0
    %6331 = vmatprep.mubr.f32.mxu0 0.0
    %6332 = vmatmul.mubr.f32.gmra.mxu0 %v5951
    %v6333 = vpop.f32.mrf.mxu0
    %v6334 = vadd.f32 0.0, %v6333
    %v6335 = vpop.f32.mrf.mxu0
    %6336 = vdwg.mxu0
    %v6338 = vrot.slane %v6257, 6
    %6339 = vrot.lane.b32.xlu0 %v6338, 32
    %v6340 = vpop.permute.xlu0 %6339
    %v6341 = vsel %vm49, %v6340, 0
    %6343 = vmatprep.subr.mxu0 0.0
    %6344 = vmatpush1.msra.mxu0 0.0
    %6345 = vmatprep.subr.mxu0 0.0
    %6346 = vmatpush1.msra.mxu0 0.0
    %6347 = vmatprep.subr.mxu0 0.0
    %6348 = vmatpush1.msra.mxu0 0.0
    %6349 = vmatprep.subr.mxu0 0.0
    %6350 = vmatpush1.msra.mxu0 0.0
    %6351 = vmatprep.subr.mxu0 0.0
    %6352 = vmatpush1.msra.mxu0 0.0
    %6353 = vmatprep.subr.mxu0 0.0
    %6354 = vmatpush1.msra.mxu0 0.0
    %6355 = vmatprep.subr.mxu0 0.0
    %6356 = vmatpush1.msra.mxu0 0.0
    %6357 = vmatprep.subr.mxu0 0.0
    %6358 = vmatpush1.msra.mxu0 0.0
    %6359 = vmatprep.subr.mxu0 0.0
    %6360 = vmatpush1.msra.mxu0 0.0
    %6361 = vmatprep.subr.mxu0 0.0
    %6362 = vmatpush1.msra.mxu0 0.0
    %6363 = vmatprep.subr.mxu0 0.0
    %6364 = vmatpush1.msra.mxu0 0.0
    %6365 = vmatprep.subr.mxu0 0.0
    %6366 = vmatpush1.msra.mxu0 0.0
    %6367 = vmatprep.subr.mxu0 0.0
    %6368 = vmatpush1.msra.mxu0 %v6261
    %6369 = vmatprep.subr.mxu0 0.0
    %6370 = vmatpush1.msra.mxu0 %v6260
    %6371 = vmatprep.subr.mxu0 0.0
    %6372 = vmatpush1.msra.mxu0 %v6259
    %6373 = vmatprep.subr.mxu0 0.0
    %6374 = vmatpush1.msra.mxu0 %v6258
    %6375 = vmatprep.subr.mxu0 0.0
    %6376 = vmatpush2.msra.mxu0 0.0
    %6377 = vmatprep.subr.mxu0 0.0
    %6378 = vmatpush2.msra.mxu0 0.0
    %6379 = vmatprep.subr.mxu0 0.0
    %6380 = vmatpush2.msra.mxu0 0.0
    %6381 = vmatprep.subr.mxu0 0.0
    %6382 = vmatpush2.msra.mxu0 0.0
    %6383 = vmatprep.subr.mxu0 0.0
    %6384 = vmatpush2.msra.mxu0 0.0
    %6385 = vmatprep.subr.mxu0 0.0
    %6386 = vmatpush2.msra.mxu0 0.0
    %6387 = vmatprep.subr.mxu0 0.0
    %6388 = vmatpush2.msra.mxu0 0.0
    %6389 = vmatprep.subr.mxu0 0.0
    %6390 = vmatpush2.msra.mxu0 0.0
    %6391 = vmatprep.subr.mxu0 0.0
    %6392 = vmatpush2.msra.mxu0 0.0
    %6393 = vmatprep.subr.mxu0 0.0
    %6394 = vmatpush2.msra.mxu0 0.0
    %6395 = vmatprep.subr.mxu0 0.0
    %6396 = vmatpush2.msra.mxu0 0.0
    %6397 = vmatprep.subr.mxu0 0.0
    %6398 = vmatpush2.msra.mxu0 0.0
    %6399 = vmatprep.subr.mxu0 0.0
    %6400 = vmatpush2.msra.mxu0 0.0
    %6401 = vmatprep.subr.mxu0 0.0
    %6402 = vmatpush2.msra.mxu0 0.0
    %6403 = vmatprep.subr.mxu0 0.0
    %6404 = vmatpush2.msra.mxu0 0.0
    %6405 = vmatprep.subr.mxu0 0.0
    %6406 = vmatpush2.msra.mxu0 0.0
    %6407 = vmatprep.mubr.f32.mxu0 0.0
    %6408 = vmatmul.mubr.f32.gmra.mxu0 %v6341
    %v6409 = vpop.f32.mrf.mxu0
    %v6410 = vadd.f32 %v6334, %v6409
    %v6411 = vpop.f32.mrf.mxu0
    %6412 = vdwg.mxu0
    %v6414 = vlaneseq
    %v6415 = vshrl.u32 %v6414, 7
    %v6416 = vsub.s32 0, %v6415
    %v6417 = vrot.slane %v6266, %v6416
    %v6419 = vadd.f32 %v6410, %v6417
    %v6420 = vxor.u32 %v6419, 2147483648
    %v6421 = vmul.f32 %v6420, 1.442695
    %v6422 = vpow.pop %v6421
    %v6423 = vadd.f32 %v6422, 1.0
    %v6424 = vrcp.pop %v6423
    %v6425 = vmul.f32 1.0, %v6424
    %v6426 = vtanh.pop %v6419
    %v6427 = vmul.f32 %v6425, %v5941
    %6429 = vrot.lane.b32.xlu0 %v6426, 64
    %v6430 = vpop.permute.xlu0 %6429
    %v6432 = vmul.f32 %v6425, %v6430
    %6434 = vrot.lane.b32.xlu0 %v6432, 32
    %v6435 = vpop.permute.xlu0 %6434
    %v6437 = vadd.f32 %v6427, %v6435
    %v6438 = vtanh.pop %v6437
    %6440 = vrot.lane.b32.xlu0 %v6438, 64
    %v6441 = vpop.permute.xlu0 %6440
    %v6443 = vmul.f32 %v6425, %v6441
    %6445 = vrot.lane.b32.xlu0 %v6443, 32
    %v6446 = vpop.permute.xlu0 %6445
    %v6447 = vsel %vm49, %v6446, 0
    %6449 = vmatprep.subr.mxu0 0.0
    %6450 = vmatpush1.msra.mxu0 0.0
    %6451 = vmatprep.subr.mxu0 0.0
    %6452 = vmatpush1.msra.mxu0 0.0
    %6453 = vmatprep.subr.mxu0 0.0
    %6454 = vmatpush1.msra.mxu0 0.0
    %6455 = vmatprep.subr.mxu0 0.0
    %6456 = vmatpush1.msra.mxu0 0.0
    %6457 = vmatprep.subr.mxu0 0.0
    %6458 = vmatpush1.msra.mxu0 0.0
    %6459 = vmatprep.subr.mxu0 0.0
    %6460 = vmatpush1.msra.mxu0 0.0
    %6461 = vmatprep.subr.mxu0 0.0
    %6462 = vmatpush1.msra.mxu0 0.0
    %6463 = vmatprep.subr.mxu0 0.0
    %6464 = vmatpush1.msra.mxu0 0.0
    %6465 = vmatprep.subr.mxu0 0.0
    %6466 = vmatpush1.msra.mxu0 0.0
    %6467 = vmatprep.subr.mxu0 0.0
    %6468 = vmatpush1.msra.mxu0 0.0
    %6469 = vmatprep.subr.mxu0 0.0
    %6470 = vmatpush1.msra.mxu0 0.0
    %6471 = vmatprep.subr.mxu0 0.0
    %6472 = vmatpush1.msra.mxu0 0.0
    %6473 = vmatprep.subr.mxu0 0.0
    %6474 = vmatpush1.msra.mxu0 %v2670
    %6475 = vmatprep.subr.mxu0 0.0
    %6476 = vmatpush1.msra.mxu0 %v2669
    %6477 = vmatprep.subr.mxu0 0.0
    %6478 = vmatpush1.msra.mxu0 %v2668
    %6479 = vmatprep.subr.mxu0 0.0
    %6480 = vmatpush1.msra.mxu0 %v2667
    %6481 = vmatprep.subr.mxu0 0.0
    %6482 = vmatpush2.msra.mxu0 0.0
    %6483 = vmatprep.subr.mxu0 0.0
    %6484 = vmatpush2.msra.mxu0 0.0
    %6485 = vmatprep.subr.mxu0 0.0
    %6486 = vmatpush2.msra.mxu0 0.0
    %6487 = vmatprep.subr.mxu0 0.0
    %6488 = vmatpush2.msra.mxu0 0.0
    %6489 = vmatprep.subr.mxu0 0.0
    %6490 = vmatpush2.msra.mxu0 0.0
    %6491 = vmatprep.subr.mxu0 0.0
    %6492 = vmatpush2.msra.mxu0 0.0
    %6493 = vmatprep.subr.mxu0 0.0
    %6494 = vmatpush2.msra.mxu0 0.0
    %6495 = vmatprep.subr.mxu0 0.0
    %6496 = vmatpush2.msra.mxu0 0.0
    %6497 = vmatprep.subr.mxu0 0.0
    %6498 = vmatpush2.msra.mxu0 0.0
    %6499 = vmatprep.subr.mxu0 0.0
    %6500 = vmatpush2.msra.mxu0 0.0
    %6501 = vmatprep.subr.mxu0 0.0
    %6502 = vmatpush2.msra.mxu0 0.0
    %6503 = vmatprep.subr.mxu0 0.0
    %6504 = vmatpush2.msra.mxu0 0.0
    %6505 = vmatprep.subr.mxu0 0.0
    %6506 = vmatpush2.msra.mxu0 0.0
    %6507 = vmatprep.subr.mxu0 0.0
    %6508 = vmatpush2.msra.mxu0 0.0
    %6509 = vmatprep.subr.mxu0 0.0
    %6510 = vmatpush2.msra.mxu0 0.0
    %6511 = vmatprep.subr.mxu0 0.0
    %6512 = vmatpush2.msra.mxu0 0.0
    %6513 = vmatprep.mubr.f32.mxu0 0.0
    %6514 = vmatmul.mubr.f32.gmra.mxu0 %v6447
    %v6515 = vpop.f32.mrf.mxu0
    %v6516 = vadd.f32 0.0, %v6515
    %v6517 = vpop.f32.mrf.mxu0
    %6518 = vdwg.mxu0
    %v6521 = vunpack.c.l.s4 1966171168
    %v6522 = vunpack.c.0.s8 %v6521
    %v6523 = vlaneseq
    %v6524 = vshrl.u32 %v6523, 7
    %v6525 = vsub.s32 %v6522, %v6524
    %v6526 = vrot.slane %v6516, %v6525
    %v6527 = vcombine.high %v6526, %v6526
    %v6529 = vunpack.c.l.s4 1966171168
    %v6530 = vunpack.c.0.s8 %v6529
    %v6531 = vlaneseq
    %v6532 = vshrl.u32 %v6531, 7
    %v6533 = vsub.s32 %v6530, %v6532
    %v6534 = vrot.slane %v6526, %v6533
    %v6536 = vunpack.c.l.s4 1966171168
    %v6537 = vunpack.c.0.s8 %v6536
    %v6538 = vlaneseq
    %v6539 = vshrl.u32 %v6538, 7
    %v6540 = vsub.s32 %v6537, %v6539
    %v6541 = vrot.slane %v6527, %v6540
    %6544 = vst [vmem:[#allocation4 + $0x7] sm:$0x1] %v6534
    %6545 = vst [vmem:[#allocation4 + $0xf] sm:$0x1] %v6541
    // Predicated region
    $region42: #{seq2seq_forward.1} parent=1 // pred_check
      _
    $region43: #{seq2seq_forward.1} parent=1 // pred_check_branch
      %6547 = sbr.rel (0) target = $region45
    $region44: #{seq2seq_forward.1} parent=1 // pred_region
      %s6549 = ssub.s32 256, 256
      %6550 = vsyncadd [#allocation5], %s6549
      %s6551 = sshll.u32 [#allocation4], 4
      %s6552 = int_to_ptr.vmem [resolvable:$true] %s6551
      %6557 = dma.vmem_to_hbm [thread:$0]  %s6552, 256, %s11, [#allocation5], 128, 128, 8
    $region45: #{seq2seq_forward.1} parent=1 // pred_fallthru
      _
    // Predicated region
    $region46: #{seq2seq_forward.1} parent=1 // pred_check
      _
    $region47: #{seq2seq_forward.1} parent=1 // pred_check_branch
      %6559 = sbr.rel (0) target = $region49
    $region48: #{seq2seq_forward.1} parent=1 // pred_region
      %6560 = dma.done [#allocation5], 256
    $region49: #{seq2seq_forward.1} parent=1 // pred_fallthru
      _
    %6561 = vsyncpa [#allocation5], 1

</llo_original>
